<compile_context>
chip_gen: v5e
topology: v5e:2x2
jax: 0.10.0
libtpu: 0.0.40
codegen_flags: <defaults>
</compile_context>

<pallas_src>
import functools
import math

import jax
import jax.numpy as jnp
from jax import lax
from jax.experimental import pallas as pl
from jax.experimental.pallas import tpu as pltpu

# ---- model constants (mirror peptdeep defaults) ----
HIDDEN = 128
MOD_HIDDEN = 8
MOD_FIX_K = 6
AA_VOCAB = 27                          # 26 amino acids + padding idx 0
MOD_FEATURE_SIZE = 109                 # mod chemical-feature vector size
FEAT_DIM = AA_VOCAB + MOD_FEATURE_SIZE # merged embedding input (136)
N_LAYERS = 4
N_HEADS = 8
HEAD_DIM = HIDDEN // N_HEADS
FFN = 4 * HIDDEN
LN_EPS = 1e-12                         # HF BertConfig layer_norm_eps
DEC_HIDDEN = 64
ATTN_SCALE = 1.0 / math.sqrt(HEAD_DIM)
MAX_TILE_ROWS = 512                    # flattened (batch*seq) rows per grid step


def _layernorm(x, g, b):
    mu = jnp.mean(x, axis=-1, keepdims=True)
    var = jnp.mean((x - mu) ** 2, axis=-1, keepdims=True)
    return (x - mu) * lax.rsqrt(var + LN_EPS) * g + b


def rt_transformer_kernel(
    feat_ref, pos_ref, emb_ref,                          # merged (onehot|mod) feats, pos enc, embedding
    wqkv_ref, bqkv_ref,                                  # fused QKV projection (stacked on axis 0)
    wo_ref, bo_ref, ln1g_ref, ln1b_ref,                  # attention out proj + post-LN
    wi_ref, bi_ref, wo2_ref, bo2_ref, ln2g_ref, ln2b_ref,  # FFN params
    attnw_ref,                                           # SeqAttentionSum weight row (1, H)
    dw1_ref, db1_ref, dw2_ref,                           # Decoder_Linear dense params
    scal_ref,                                            # SMEM: [prelu_alpha, decoder_bias2]
    out_ref,                                             # (bt, HIDDEN): scalar broadcast over lanes
    *, seq_len,
):
    f32 = jnp.float32
    bf16 = jnp.bfloat16
    M = feat_ref.shape[0]        # bt * seq_len rows flattened into the matmul M dimension
    bt = M // seq_len

    # ---- input embedding: single merged (M,136)x(136,128) matmul + positional encoding ----
    x = jnp.dot(feat_ref[...], emb_ref[...], preferred_element_type=f32)
    x = (x.reshape(bt, seq_len, HIDDEN) + pos_ref[...]).reshape(M, HIDDEN)
    # (Dropout after input embedding: identity in eval mode.)

    # ---- 4 BERT-style transformer encoder layers (statically unrolled) ----
    for l in range(N_LAYERS):
        xb = x.astype(bf16)
        # fused QKV projection: one (M,128)x(128,384) matmul, lane-aligned splits
        qkv = jnp.dot(xb, wqkv_ref[l], preferred_element_type=f32) + bqkv_ref[l]
        q = qkv[:, :HIDDEN] * ATTN_SCALE          # fold 1/sqrt(d) into q once
        k = qkv[:, HIDDEN:2 * HIDDEN]
        v = qkv[:, 2 * HIDDEN:]
        q3 = q.reshape(bt, seq_len, HIDDEN).astype(bf16)
        k3 = k.reshape(bt, seq_len, HIDDEN).astype(bf16)
        v3 = v.reshape(bt, seq_len, HIDDEN).astype(bf16)

        ctx_heads = []
        for h in range(N_HEADS):
            lo = h * HEAD_DIM
            qh = q3[:, :, lo:lo + HEAD_DIM]
            kh = k3[:, :, lo:lo + HEAD_DIM]
            vh = v3[:, :, lo:lo + HEAD_DIM]
            s = jnp.einsum("bqd,bkd->bqk", qh, kh, preferred_element_type=f32)
            s = s - jnp.max(s, axis=-1, keepdims=True)
            p = jnp.exp(s)
            p = p / jnp.sum(p, axis=-1, keepdims=True)
            ctx_heads.append(
                jnp.einsum("bqk,bkd->bqd", p.astype(bf16), vh,
                           preferred_element_type=f32))
        # heads are contiguous 16-col blocks -> one fused output projection
        ctx = jnp.concatenate(ctx_heads, axis=-1).reshape(M, HIDDEN)

        attn_out = jnp.dot(ctx.astype(bf16), wo_ref[l],
                           preferred_element_type=f32) + bo_ref[l]
        x = _layernorm(x + attn_out, ln1g_ref[l], ln1b_ref[l])

        hmid = jnp.dot(x.astype(bf16), wi_ref[l], preferred_element_type=f32) + bi_ref[l]
        # TODO(synk): HF BERT uses exact erf-GELU; tanh-approx GELU used here for guaranteed Mosaic lowering.
        hmid = jax.nn.gelu(hmid, approximate=True)
        ffn = jnp.dot(hmid.astype(bf16), wo2_ref[l], preferred_element_type=f32) + bo2_ref[l]
        x = _layernorm(x + ffn, ln2g_ref[l], ln2b_ref[l])

    # ---- SeqAttentionSum: softmax over sequence, weighted sum (lane reduce, no N=1 matmul) ----
    x3 = x.reshape(bt, seq_len, HIDDEN)
    lg = jnp.sum(x3 * attnw_ref[...], axis=-1, keepdims=True)          # (bt, S, 1)
    lg = lg - jnp.max(lg, axis=1, keepdims=True)
    e = jnp.exp(lg)
    a = e / jnp.sum(e, axis=1, keepdims=True)                          # (bt, S, 1)
    pooled = jnp.sum(x3 * a, axis=1)                                   # (bt, HIDDEN)
    # (Module-level Dropout: identity in eval mode.)

    # ---- Decoder_Linear: 128 -> 64 -> PReLU -> 1 ----
    h1 = jnp.dot(pooled.astype(bf16), dw1_ref[...],
                 preferred_element_type=f32) + db1_ref[...]            # (bt, 64)
    alpha = scal_ref[0]
    h1 = jnp.where(h1 >= 0.0, h1, h1 * alpha)                          # PReLU (single alpha)
    outv = jnp.sum(h1 * dw2_ref[...], axis=-1, keepdims=True) + scal_ref[1]  # (bt, 1)

    # single lane-dense store of the whole batch tile
    out_ref[...] = jnp.broadcast_to(outv, (bt, HIDDEN))


def init_params(key, S):
    keys = iter(jax.random.split(key, 16))
    bf16 = jnp.bfloat16

    def nrm(shape, scale=0.02):
        return (scale * jax.random.normal(next(keys), shape)).astype(jnp.float32)

    # AA embedding (padding_idx=0 row is zero), in cols [0, 120) of the merged embedding.
    aa_emb = nrm((AA_VOCAB, HIDDEN - MOD_HIDDEN)).at[0].set(0.0)
    e_aa = jnp.zeros((AA_VOCAB, HIDDEN), jnp.float32).at[:, : HIDDEN - MOD_HIDDEN].set(aa_emb)

    # Mod mapping: reproduces cat(mod[:, :, :6], mod[:, :, 6:] @ W) placed in cols [120, 128).
    base = HIDDEN - MOD_HIDDEN
    mod_w = nrm((MOD_FEATURE_SIZE - MOD_FIX_K, MOD_HIDDEN - MOD_FIX_K))
    e_mod = jnp.zeros((MOD_FEATURE_SIZE, HIDDEN), jnp.float32)
    e_mod = e_mod.at[jnp.arange(MOD_FIX_K), base + jnp.arange(MOD_FIX_K)].set(1.0)
    e_mod = e_mod.at[MOD_FIX_K:, base + MOD_FIX_K:].set(mod_w)

    # Merged embedding matrix: rows [0,27) AA one-hot part, rows [27,136) mod-feature part.
    emb = jnp.concatenate([e_aa, e_mod], axis=0).astype(bf16)          # (136, 128)

    # Sinusoidal positional encoding (first S rows).
    position = jnp.arange(S, dtype=jnp.float32)[:, None]
    div_term = jnp.exp(jnp.arange(0, HIDDEN, 2, dtype=jnp.float32) * (-math.log(10000.0) / HIDDEN))
    pos = jnp.zeros((S, HIDDEN), jnp.float32)
    pos = pos.at[:, 0::2].set(jnp.sin(position * div_term))
    pos = pos.at[:, 1::2].set(jnp.cos(position * div_term))

    L, H = N_LAYERS, HIDDEN
    wq = nrm((L, H, H)); wk = nrm((L, H, H)); wv = nrm((L, H, H))
    wqkv = jnp.concatenate([wq, wk, wv], axis=-1).astype(bf16)         # (L, 128, 384) fused QKV
    bqkv = jnp.zeros((L, 1, 3 * H), jnp.float32)
    wo = nrm((L, H, H)).astype(bf16)
    bo = jnp.zeros((L, 1, H), jnp.float32)
    ln1g = jnp.ones((L, 1, H), jnp.float32); ln1b = jnp.zeros((L, 1, H), jnp.float32)
    wi = nrm((L, H, FFN)).astype(bf16); bi = jnp.zeros((L, 1, FFN), jnp.float32)
    wo2 = nrm((L, FFN, H)).astype(bf16); bo2 = jnp.zeros((L, 1, H), jnp.float32)
    ln2g = jnp.ones((L, 1, H), jnp.float32); ln2b = jnp.zeros((L, 1, H), jnp.float32)

    attnw = nrm((1, H))                                                # SeqAttentionSum weight row
    dw1 = nrm((H, DEC_HIDDEN)).astype(bf16)
    db1 = jnp.zeros((1, DEC_HIDDEN), jnp.float32)
    dw2 = nrm((1, DEC_HIDDEN))                                         # final Linear(64,1) weight row
    scalars = jnp.array([0.25, 0.0], jnp.float32)                      # [PReLU alpha, decoder bias2]

    return (
        emb, pos,
        wqkv, bqkv, wo, bo, ln1g, ln1b,
        wi, bi, wo2, bo2, ln2g, ln2b,
        attnw, dw1, db1, dw2, scalars,
    )


def rt_transformer_forward(aa_indices, mod_x, params):
    B, S = aa_indices.shape
    # adaptive batch tile: keep the flattened matmul M dim up to MAX_TILE_ROWS rows per grid step
    bt = max(1, min(B, MAX_TILE_ROWS // max(S, 1)))
    n_tiles = -(-B // bt)
    Bp = n_tiles * bt

    # merged embedding input: (aa one-hot | mod features) -> (B*S, 136) in bf16
    aa_onehot = jax.nn.one_hot(aa_indices, AA_VOCAB, dtype=jnp.float32)
    feat = jnp.concatenate([aa_onehot, mod_x.astype(jnp.float32)], axis=-1)
    if Bp != B:
        feat = jnp.pad(feat, ((0, Bp - B), (0, 0), (0, 0)))
    feat = feat.reshape(Bp * S, FEAT_DIM).astype(jnp.bfloat16)

    emb, pos = params[0], params[1]
    rest = params[2:]                                   # wqkv ... dw2, scalars

    def _fixed(arr):
        nd = arr.ndim
        return pl.BlockSpec(arr.shape, lambda i, _n=nd: (0,) * _n)

    in_specs = [pl.BlockSpec((bt * S, FEAT_DIM), lambda i: (i, 0)),    # batch-tiled features
                _fixed(pos), _fixed(emb)]
    in_specs += [_fixed(p) for p in rest[:-1]]                         # weights resident (block 0)
    in_specs.append(pl.BlockSpec(memory_space=pltpu.MemorySpace.SMEM))  # true scalars

    args = (feat, pos, emb) + tuple(rest)

    out = pl.pallas_call(
        functools.partial(rt_transformer_kernel, seq_len=S),
        out_shape=jax.ShapeDtypeStruct((Bp, HIDDEN), jnp.float32),
        grid=(n_tiles,),
        in_specs=in_specs,
        out_specs=pl.BlockSpec((bt, HIDDEN), lambda i: (i, 0)),
        compiler_params=pltpu.CompilerParams(
            dimension_semantics=("parallel",)),
    )(*args)
    return out[:B, 0]  # == decoder(x).squeeze(1)


if __name__ == "__main__":
    key = jax.random.PRNGKey(0)
    k_aa, k_mod, k_par = jax.random.split(key, 3)

    B, S = 2, 8
    aa_indices = jax.random.randint(k_aa, (B, S), 1, AA_VOCAB)          # peptide AA indices
    mod_x = jax.random.uniform(k_mod, (B, S, MOD_FEATURE_SIZE), dtype=jnp.float32)
    params = init_params(k_par, S)

    out = rt_transformer_forward(aa_indices, mod_x, params)
    out = jax.block_until_ready(out)

    assert out.shape == (B,), out.shape
    assert bool(jnp.all(jnp.isfinite(out)))
    print("KERNEL_OK")
</pallas_src>

<mosaic_0001>
module attributes {stable_mosaic.version = 11 : i64} {
  func.func @rt_transformer_kernel(%arg0: i32, %arg1: memref<16x136xbf16, #tpu.memory_space<vmem>>, %arg2: memref<8x128xf32, #tpu.memory_space<vmem>>, %arg3: memref<136x128xbf16, #tpu.memory_space<vmem>>, %arg4: memref<4x128x384xbf16, #tpu.memory_space<vmem>>, %arg5: memref<4x1x384xf32, #tpu.memory_space<vmem>>, %arg6: memref<4x128x128xbf16, #tpu.memory_space<vmem>>, %arg7: memref<4x1x128xf32, #tpu.memory_space<vmem>>, %arg8: memref<4x1x128xf32, #tpu.memory_space<vmem>>, %arg9: memref<4x1x128xf32, #tpu.memory_space<vmem>>, %arg10: memref<4x128x512xbf16, #tpu.memory_space<vmem>>, %arg11: memref<4x1x512xf32, #tpu.memory_space<vmem>>, %arg12: memref<4x512x128xbf16, #tpu.memory_space<vmem>>, %arg13: memref<4x1x128xf32, #tpu.memory_space<vmem>>, %arg14: memref<4x1x128xf32, #tpu.memory_space<vmem>>, %arg15: memref<4x1x128xf32, #tpu.memory_space<vmem>>, %arg16: memref<1x128xf32, #tpu.memory_space<vmem>>, %arg17: memref<128x64xbf16, #tpu.memory_space<vmem>>, %arg18: memref<1x64xf32, #tpu.memory_space<vmem>>, %arg19: memref<1x64xf32, #tpu.memory_space<vmem>>, %arg20: memref<2xf32, #tpu.memory_space<smem>>, %arg21: memref<2x128xf32, #tpu.memory_space<vmem>>) attributes {dimension_semantics = [#tpu.dimension_semantics<parallel>], iteration_bounds = array<i64: 1>, scalar_prefetch = 0 : i64, scratch_operands = 0 : i64, tpu.core_type = #tpu.core_type<tc>, window_params = [{transform_indices = @transform_0, window_bounds = array<i64: 16, 136>}, {pipeline_mode = #tpu.pipeline_mode<synchronous>, transform_indices = @transform_1, window_bounds = array<i64: 8, 128>}, {pipeline_mode = #tpu.pipeline_mode<synchronous>, transform_indices = @transform_2, window_bounds = array<i64: 136, 128>}, {pipeline_mode = #tpu.pipeline_mode<synchronous>, transform_indices = @transform_3, window_bounds = array<i64: 4, 128, 384>}, {pipeline_mode = #tpu.pipeline_mode<synchronous>, transform_indices = @transform_4, window_bounds = array<i64: 4, 1, 384>}, {pipeline_mode = #tpu.pipeline_mode<synchronous>, transform_indices = @transform_5, window_bounds = array<i64: 4, 128, 128>}, {pipeline_mode = #tpu.pipeline_mode<synchronous>, transform_indices = @transform_6, window_bounds = array<i64: 4, 1, 128>}, {pipeline_mode = #tpu.pipeline_mode<synchronous>, transform_indices = @transform_7, window_bounds = array<i64: 4, 1, 128>}, {pipeline_mode = #tpu.pipeline_mode<synchronous>, transform_indices = @transform_8, window_bounds = array<i64: 4, 1, 128>}, {pipeline_mode = #tpu.pipeline_mode<synchronous>, transform_indices = @transform_9, window_bounds = array<i64: 4, 128, 512>}, {pipeline_mode = #tpu.pipeline_mode<synchronous>, transform_indices = @transform_10, window_bounds = array<i64: 4, 1, 512>}, {pipeline_mode = #tpu.pipeline_mode<synchronous>, transform_indices = @transform_11, window_bounds = array<i64: 4, 512, 128>}, {pipeline_mode = #tpu.pipeline_mode<synchronous>, transform_indices = @transform_12, window_bounds = array<i64: 4, 1, 128>}, {pipeline_mode = #tpu.pipeline_mode<synchronous>, transform_indices = @transform_13, window_bounds = array<i64: 4, 1, 128>}, {pipeline_mode = #tpu.pipeline_mode<synchronous>, transform_indices = @transform_14, window_bounds = array<i64: 4, 1, 128>}, {pipeline_mode = #tpu.pipeline_mode<synchronous>, transform_indices = @transform_15, window_bounds = array<i64: 1, 128>}, {pipeline_mode = #tpu.pipeline_mode<synchronous>, transform_indices = @transform_16, window_bounds = array<i64: 128, 64>}, {pipeline_mode = #tpu.pipeline_mode<synchronous>, transform_indices = @transform_17, window_bounds = array<i64: 1, 64>}, {pipeline_mode = #tpu.pipeline_mode<synchronous>, transform_indices = @transform_18, window_bounds = array<i64: 1, 64>}, {transform_indices = @transform_19, window_bounds = array<i64: 2>}, {transform_indices = @transform_20, window_bounds = array<i64: 2, 128>}]} {
    %c0 = arith.constant 0 : index
    %c0_0 = arith.constant 0 : index
    %0 = vector.load %arg1[%c0, %c0_0] : memref<16x136xbf16, #tpu.memory_space<vmem>>, vector<16x136xbf16>
    %c0_1 = arith.constant 0 : index
    %c0_2 = arith.constant 0 : index
    %1 = vector.load %arg3[%c0_1, %c0_2] : memref<136x128xbf16, #tpu.memory_space<vmem>>, vector<136x128xbf16>
    %cst = arith.constant dense<0.000000e+00> : vector<16x128xf32>
    %2 = tpu.matmul %0, %1, %cst {dimension_numbers = #tpu.dot_dimension_numbers<[1], [0], [0], [1], [0, 0, 1, 1], [], []>} : vector<16x136xbf16>, vector<136x128xbf16>, vector<16x128xf32> -> vector<16x128xf32>
    %3 = vector.shape_cast %2 : vector<16x128xf32> to vector<2x8x128xf32>
    %c0_3 = arith.constant 0 : index
    %c0_4 = arith.constant 0 : index
    %4 = vector.load %arg2[%c0_3, %c0_4] : memref<8x128xf32, #tpu.memory_space<vmem>>, vector<8x128xf32>
    %5 = vector.shape_cast %4 : vector<8x128xf32> to vector<1x8x128xf32>
    %6 = vector.broadcast %5 : vector<1x8x128xf32> to vector<2x8x128xf32>
    %7 = arith.addf %3, %6 : vector<2x8x128xf32>
    %8 = vector.shape_cast %7 : vector<2x8x128xf32> to vector<16x128xf32>
    %9 = arith.truncf %8 : vector<16x128xf32> to vector<16x128xbf16>
    %c0_5 = arith.constant 0 : index
    %c0_6 = arith.constant 0 : index
    %c0_7 = arith.constant 0 : index
    %10 = vector.load %arg4[%c0_5, %c0_6, %c0_7] : memref<4x128x384xbf16, #tpu.memory_space<vmem>>, vector<1x128x384xbf16>
    %11 = vector.shape_cast %10 : vector<1x128x384xbf16> to vector<128x384xbf16>
    %cst_8 = arith.constant dense<0.000000e+00> : vector<16x384xf32>
    %12 = tpu.matmul %9, %11, %cst_8 {dimension_numbers = #tpu.dot_dimension_numbers<[1], [0], [0], [1], [0, 0, 1, 1], [], []>} : vector<16x128xbf16>, vector<128x384xbf16>, vector<16x384xf32> -> vector<16x384xf32>
    %c0_9 = arith.constant 0 : index
    %c0_10 = arith.constant 0 : index
    %c0_11 = arith.constant 0 : index
    %13 = vector.load %arg5[%c0_9, %c0_10, %c0_11] : memref<4x1x384xf32, #tpu.memory_space<vmem>>, vector<1x1x384xf32>
    %14 = vector.shape_cast %13 : vector<1x1x384xf32> to vector<1x384xf32>
    %15 = vector.broadcast %14 : vector<1x384xf32> to vector<16x384xf32>
    %16 = arith.addf %12, %15 : vector<16x384xf32>
    %17 = vector.extract_strided_slice %16 {offsets = [0, 0], sizes = [16, 128], strides = [1, 1]} : vector<16x384xf32> to vector<16x128xf32>
    %cst_12 = arith.constant 2.500000e-01 : f32
    %18 = vector.broadcast %cst_12 : f32 to vector<16x128xf32>
    %19 = arith.mulf %17, %18 : vector<16x128xf32>
    %20 = vector.extract_strided_slice %16 {offsets = [0, 128], sizes = [16, 128], strides = [1, 1]} : vector<16x384xf32> to vector<16x128xf32>
    %21 = vector.extract_strided_slice %16 {offsets = [0, 256], sizes = [16, 128], strides = [1, 1]} : vector<16x384xf32> to vector<16x128xf32>
    %22 = vector.shape_cast %19 : vector<16x128xf32> to vector<2x8x128xf32>
    %23 = arith.truncf %22 : vector<2x8x128xf32> to vector<2x8x128xbf16>
    %24 = vector.shape_cast %20 : vector<16x128xf32> to vector<2x8x128xf32>
    %25 = arith.truncf %24 : vector<2x8x128xf32> to vector<2x8x128xbf16>
    %26 = vector.shape_cast %21 : vector<16x128xf32> to vector<2x8x128xf32>
    %27 = arith.truncf %26 : vector<2x8x128xf32> to vector<2x8x128xbf16>
    %28 = vector.extract_strided_slice %23 {offsets = [0, 0, 0], sizes = [2, 8, 16], strides = [1, 1, 1]} : vector<2x8x128xbf16> to vector<2x8x16xbf16>
    %29 = vector.extract_strided_slice %25 {offsets = [0, 0, 0], sizes = [2, 8, 16], strides = [1, 1, 1]} : vector<2x8x128xbf16> to vector<2x8x16xbf16>
    %30 = vector.extract_strided_slice %27 {offsets = [0, 0, 0], sizes = [2, 8, 16], strides = [1, 1, 1]} : vector<2x8x128xbf16> to vector<2x8x16xbf16>
    "tpu.trace_start"() <{level = 10 : i32, message = "bqd,bkd->bqk"}> : () -> ()
    %cst_13 = arith.constant dense<0.000000e+00> : vector<2x8x8xf32>
    %31 = tpu.matmul %28, %29, %cst_13 {dimension_numbers = #tpu.dot_dimension_numbers<[2], [2], [1], [1], [0, 0, 0, 1, 1, 1], [0], [0]>} : vector<2x8x16xbf16>, vector<2x8x16xbf16>, vector<2x8x8xf32> -> vector<2x8x8xf32>
    "tpu.trace_stop"() : () -> ()
    %cst_14 = arith.constant dense<0xFF800000> : vector<2x8xf32>
    %32 = vector.multi_reduction <maximumf>, %31, %cst_14 [2] : vector<2x8x8xf32> to vector<2x8xf32>
    %33 = vector.shape_cast %32 : vector<2x8xf32> to vector<2x8x1xf32>
    %34 = vector.broadcast %33 : vector<2x8x1xf32> to vector<2x8x8xf32>
    %35 = arith.subf %31, %34 : vector<2x8x8xf32>
    %36 = math.exp %35 : vector<2x8x8xf32>
    %cst_15 = arith.constant dense<0.000000e+00> : vector<2x8xf32>
    %37 = vector.multi_reduction <add>, %36, %cst_15 [2] : vector<2x8x8xf32> to vector<2x8xf32>
    %38 = vector.shape_cast %37 : vector<2x8xf32> to vector<2x8x1xf32>
    %39 = vector.broadcast %38 : vector<2x8x1xf32> to vector<2x8x8xf32>
    %40 = arith.divf %36, %39 : vector<2x8x8xf32>
    %41 = arith.truncf %40 : vector<2x8x8xf32> to vector<2x8x8xbf16>
    "tpu.trace_start"() <{level = 10 : i32, message = "bqk,bkd->bqd"}> : () -> ()
    %cst_16 = arith.constant dense<0.000000e+00> : vector<2x8x16xf32>
    %42 = tpu.matmul %41, %30, %cst_16 {dimension_numbers = #tpu.dot_dimension_numbers<[2], [1], [1], [2], [0, 0, 0, 1, 1, 2], [0], [0]>} : vector<2x8x8xbf16>, vector<2x8x16xbf16>, vector<2x8x16xf32> -> vector<2x8x16xf32>
    "tpu.trace_stop"() : () -> ()
    %43 = vector.extract_strided_slice %23 {offsets = [0, 0, 16], sizes = [2, 8, 16], strides = [1, 1, 1]} : vector<2x8x128xbf16> to vector<2x8x16xbf16>
    %44 = vector.extract_strided_slice %25 {offsets = [0, 0, 16], sizes = [2, 8, 16], strides = [1, 1, 1]} : vector<2x8x128xbf16> to vector<2x8x16xbf16>
    %45 = vector.extract_strided_slice %27 {offsets = [0, 0, 16], sizes = [2, 8, 16], strides = [1, 1, 1]} : vector<2x8x128xbf16> to vector<2x8x16xbf16>
    "tpu.trace_start"() <{level = 10 : i32, message = "bqd,bkd->bqk"}> : () -> ()
    %cst_17 = arith.constant dense<0.000000e+00> : vector<2x8x8xf32>
    %46 = tpu.matmul %43, %44, %cst_17 {dimension_numbers = #tpu.dot_dimension_numbers<[2], [2], [1], [1], [0, 0, 0, 1, 1, 1], [0], [0]>} : vector<2x8x16xbf16>, vector<2x8x16xbf16>, vector<2x8x8xf32> -> vector<2x8x8xf32>
    "tpu.trace_stop"() : () -> ()
    %cst_18 = arith.constant dense<0xFF800000> : vector<2x8xf32>
    %47 = vector.multi_reduction <maximumf>, %46, %cst_18 [2] : vector<2x8x8xf32> to vector<2x8xf32>
    %48 = vector.shape_cast %47 : vector<2x8xf32> to vector<2x8x1xf32>
    %49 = vector.broadcast %48 : vector<2x8x1xf32> to vector<2x8x8xf32>
    %50 = arith.subf %46, %49 : vector<2x8x8xf32>
    %51 = math.exp %50 : vector<2x8x8xf32>
    %cst_19 = arith.constant dense<0.000000e+00> : vector<2x8xf32>
    %52 = vector.multi_reduction <add>, %51, %cst_19 [2] : vector<2x8x8xf32> to vector<2x8xf32>
    %53 = vector.shape_cast %52 : vector<2x8xf32> to vector<2x8x1xf32>
    %54 = vector.broadcast %53 : vector<2x8x1xf32> to vector<2x8x8xf32>
    %55 = arith.divf %51, %54 : vector<2x8x8xf32>
    %56 = arith.truncf %55 : vector<2x8x8xf32> to vector<2x8x8xbf16>
    "tpu.trace_start"() <{level = 10 : i32, message = "bqk,bkd->bqd"}> : () -> ()
    %cst_20 = arith.constant dense<0.000000e+00> : vector<2x8x16xf32>
    %57 = tpu.matmul %56, %45, %cst_20 {dimension_numbers = #tpu.dot_dimension_numbers<[2], [1], [1], [2], [0, 0, 0, 1, 1, 2], [0], [0]>} : vector<2x8x8xbf16>, vector<2x8x16xbf16>, vector<2x8x16xf32> -> vector<2x8x16xf32>
    "tpu.trace_stop"() : () -> ()
    %58 = vector.extract_strided_slice %23 {offsets = [0, 0, 32], sizes = [2, 8, 16], strides = [1, 1, 1]} : vector<2x8x128xbf16> to vector<2x8x16xbf16>
    %59 = vector.extract_strided_slice %25 {offsets = [0, 0, 32], sizes = [2, 8, 16], strides = [1, 1, 1]} : vector<2x8x128xbf16> to vector<2x8x16xbf16>
    %60 = vector.extract_strided_slice %27 {offsets = [0, 0, 32], sizes = [2, 8, 16], strides = [1, 1, 1]} : vector<2x8x128xbf16> to vector<2x8x16xbf16>
    "tpu.trace_start"() <{level = 10 : i32, message = "bqd,bkd->bqk"}> : () -> ()
    %cst_21 = arith.constant dense<0.000000e+00> : vector<2x8x8xf32>
    %61 = tpu.matmul %58, %59, %cst_21 {dimension_numbers = #tpu.dot_dimension_numbers<[2], [2], [1], [1], [0, 0, 0, 1, 1, 1], [0], [0]>} : vector<2x8x16xbf16>, vector<2x8x16xbf16>, vector<2x8x8xf32> -> vector<2x8x8xf32>
    "tpu.trace_stop"() : () -> ()
    %cst_22 = arith.constant dense<0xFF800000> : vector<2x8xf32>
    %62 = vector.multi_reduction <maximumf>, %61, %cst_22 [2] : vector<2x8x8xf32> to vector<2x8xf32>
    %63 = vector.shape_cast %62 : vector<2x8xf32> to vector<2x8x1xf32>
    %64 = vector.broadcast %63 : vector<2x8x1xf32> to vector<2x8x8xf32>
    %65 = arith.subf %61, %64 : vector<2x8x8xf32>
    %66 = math.exp %65 : vector<2x8x8xf32>
    %cst_23 = arith.constant dense<0.000000e+00> : vector<2x8xf32>
    %67 = vector.multi_reduction <add>, %66, %cst_23 [2] : vector<2x8x8xf32> to vector<2x8xf32>
    %68 = vector.shape_cast %67 : vector<2x8xf32> to vector<2x8x1xf32>
    %69 = vector.broadcast %68 : vector<2x8x1xf32> to vector<2x8x8xf32>
    %70 = arith.divf %66, %69 : vector<2x8x8xf32>
    %71 = arith.truncf %70 : vector<2x8x8xf32> to vector<2x8x8xbf16>
    "tpu.trace_start"() <{level = 10 : i32, message = "bqk,bkd->bqd"}> : () -> ()
    %cst_24 = arith.constant dense<0.000000e+00> : vector<2x8x16xf32>
    %72 = tpu.matmul %71, %60, %cst_24 {dimension_numbers = #tpu.dot_dimension_numbers<[2], [1], [1], [2], [0, 0, 0, 1, 1, 2], [0], [0]>} : vector<2x8x8xbf16>, vector<2x8x16xbf16>, vector<2x8x16xf32> -> vector<2x8x16xf32>
    "tpu.trace_stop"() : () -> ()
    %73 = vector.extract_strided_slice %23 {offsets = [0, 0, 48], sizes = [2, 8, 16], strides = [1, 1, 1]} : vector<2x8x128xbf16> to vector<2x8x16xbf16>
    %74 = vector.extract_strided_slice %25 {offsets = [0, 0, 48], sizes = [2, 8, 16], strides = [1, 1, 1]} : vector<2x8x128xbf16> to vector<2x8x16xbf16>
    %75 = vector.extract_strided_slice %27 {offsets = [0, 0, 48], sizes = [2, 8, 16], strides = [1, 1, 1]} : vector<2x8x128xbf16> to vector<2x8x16xbf16>
    "tpu.trace_start"() <{level = 10 : i32, message = "bqd,bkd->bqk"}> : () -> ()
    %cst_25 = arith.constant dense<0.000000e+00> : vector<2x8x8xf32>
    %76 = tpu.matmul %73, %74, %cst_25 {dimension_numbers = #tpu.dot_dimension_numbers<[2], [2], [1], [1], [0, 0, 0, 1, 1, 1], [0], [0]>} : vector<2x8x16xbf16>, vector<2x8x16xbf16>, vector<2x8x8xf32> -> vector<2x8x8xf32>
    "tpu.trace_stop"() : () -> ()
    %cst_26 = arith.constant dense<0xFF800000> : vector<2x8xf32>
    %77 = vector.multi_reduction <maximumf>, %76, %cst_26 [2] : vector<2x8x8xf32> to vector<2x8xf32>
    %78 = vector.shape_cast %77 : vector<2x8xf32> to vector<2x8x1xf32>
    %79 = vector.broadcast %78 : vector<2x8x1xf32> to vector<2x8x8xf32>
    %80 = arith.subf %76, %79 : vector<2x8x8xf32>
    %81 = math.exp %80 : vector<2x8x8xf32>
    %cst_27 = arith.constant dense<0.000000e+00> : vector<2x8xf32>
    %82 = vector.multi_reduction <add>, %81, %cst_27 [2] : vector<2x8x8xf32> to vector<2x8xf32>
    %83 = vector.shape_cast %82 : vector<2x8xf32> to vector<2x8x1xf32>
    %84 = vector.broadcast %83 : vector<2x8x1xf32> to vector<2x8x8xf32>
    %85 = arith.divf %81, %84 : vector<2x8x8xf32>
    %86 = arith.truncf %85 : vector<2x8x8xf32> to vector<2x8x8xbf16>
    "tpu.trace_start"() <{level = 10 : i32, message = "bqk,bkd->bqd"}> : () -> ()
    %cst_28 = arith.constant dense<0.000000e+00> : vector<2x8x16xf32>
    %87 = tpu.matmul %86, %75, %cst_28 {dimension_numbers = #tpu.dot_dimension_numbers<[2], [1], [1], [2], [0, 0, 0, 1, 1, 2], [0], [0]>} : vector<2x8x8xbf16>, vector<2x8x16xbf16>, vector<2x8x16xf32> -> vector<2x8x16xf32>
    "tpu.trace_stop"() : () -> ()
    %88 = vector.extract_strided_slice %23 {offsets = [0, 0, 64], sizes = [2, 8, 16], strides = [1, 1, 1]} : vector<2x8x128xbf16> to vector<2x8x16xbf16>
    %89 = vector.extract_strided_slice %25 {offsets = [0, 0, 64], sizes = [2, 8, 16], strides = [1, 1, 1]} : vector<2x8x128xbf16> to vector<2x8x16xbf16>
    %90 = vector.extract_strided_slice %27 {offsets = [0, 0, 64], sizes = [2, 8, 16], strides = [1, 1, 1]} : vector<2x8x128xbf16> to vector<2x8x16xbf16>
    "tpu.trace_start"() <{level = 10 : i32, message = "bqd,bkd->bqk"}> : () -> ()
    %cst_29 = arith.constant dense<0.000000e+00> : vector<2x8x8xf32>
    %91 = tpu.matmul %88, %89, %cst_29 {dimension_numbers = #tpu.dot_dimension_numbers<[2], [2], [1], [1], [0, 0, 0, 1, 1, 1], [0], [0]>} : vector<2x8x16xbf16>, vector<2x8x16xbf16>, vector<2x8x8xf32> -> vector<2x8x8xf32>
    "tpu.trace_stop"() : () -> ()
    %cst_30 = arith.constant dense<0xFF800000> : vector<2x8xf32>
    %92 = vector.multi_reduction <maximumf>, %91, %cst_30 [2] : vector<2x8x8xf32> to vector<2x8xf32>
    %93 = vector.shape_cast %92 : vector<2x8xf32> to vector<2x8x1xf32>
    %94 = vector.broadcast %93 : vector<2x8x1xf32> to vector<2x8x8xf32>
    %95 = arith.subf %91, %94 : vector<2x8x8xf32>
    %96 = math.exp %95 : vector<2x8x8xf32>
    %cst_31 = arith.constant dense<0.000000e+00> : vector<2x8xf32>
    %97 = vector.multi_reduction <add>, %96, %cst_31 [2] : vector<2x8x8xf32> to vector<2x8xf32>
    %98 = vector.shape_cast %97 : vector<2x8xf32> to vector<2x8x1xf32>
    %99 = vector.broadcast %98 : vector<2x8x1xf32> to vector<2x8x8xf32>
    %100 = arith.divf %96, %99 : vector<2x8x8xf32>
    %101 = arith.truncf %100 : vector<2x8x8xf32> to vector<2x8x8xbf16>
    "tpu.trace_start"() <{level = 10 : i32, message = "bqk,bkd->bqd"}> : () -> ()
    %cst_32 = arith.constant dense<0.000000e+00> : vector<2x8x16xf32>
    %102 = tpu.matmul %101, %90, %cst_32 {dimension_numbers = #tpu.dot_dimension_numbers<[2], [1], [1], [2], [0, 0, 0, 1, 1, 2], [0], [0]>} : vector<2x8x8xbf16>, vector<2x8x16xbf16>, vector<2x8x16xf32> -> vector<2x8x16xf32>
    "tpu.trace_stop"() : () -> ()
    %103 = vector.extract_strided_slice %23 {offsets = [0, 0, 80], sizes = [2, 8, 16], strides = [1, 1, 1]} : vector<2x8x128xbf16> to vector<2x8x16xbf16>
    %104 = vector.extract_strided_slice %25 {offsets = [0, 0, 80], sizes = [2, 8, 16], strides = [1, 1, 1]} : vector<2x8x128xbf16> to vector<2x8x16xbf16>
    %105 = vector.extract_strided_slice %27 {offsets = [0, 0, 80], sizes = [2, 8, 16], strides = [1, 1, 1]} : vector<2x8x128xbf16> to vector<2x8x16xbf16>
    "tpu.trace_start"() <{level = 10 : i32, message = "bqd,bkd->bqk"}> : () -> ()
    %cst_33 = arith.constant dense<0.000000e+00> : vector<2x8x8xf32>
    %106 = tpu.matmul %103, %104, %cst_33 {dimension_numbers = #tpu.dot_dimension_numbers<[2], [2], [1], [1], [0, 0, 0, 1, 1, 1], [0], [0]>} : vector<2x8x16xbf16>, vector<2x8x16xbf16>, vector<2x8x8xf32> -> vector<2x8x8xf32>
    "tpu.trace_stop"() : () -> ()
    %cst_34 = arith.constant dense<0xFF800000> : vector<2x8xf32>
    %107 = vector.multi_reduction <maximumf>, %106, %cst_34 [2] : vector<2x8x8xf32> to vector<2x8xf32>
    %108 = vector.shape_cast %107 : vector<2x8xf32> to vector<2x8x1xf32>
    %109 = vector.broadcast %108 : vector<2x8x1xf32> to vector<2x8x8xf32>
    %110 = arith.subf %106, %109 : vector<2x8x8xf32>
    %111 = math.exp %110 : vector<2x8x8xf32>
    %cst_35 = arith.constant dense<0.000000e+00> : vector<2x8xf32>
    %112 = vector.multi_reduction <add>, %111, %cst_35 [2] : vector<2x8x8xf32> to vector<2x8xf32>
    %113 = vector.shape_cast %112 : vector<2x8xf32> to vector<2x8x1xf32>
    %114 = vector.broadcast %113 : vector<2x8x1xf32> to vector<2x8x8xf32>
    %115 = arith.divf %111, %114 : vector<2x8x8xf32>
    %116 = arith.truncf %115 : vector<2x8x8xf32> to vector<2x8x8xbf16>
    "tpu.trace_start"() <{level = 10 : i32, message = "bqk,bkd->bqd"}> : () -> ()
    %cst_36 = arith.constant dense<0.000000e+00> : vector<2x8x16xf32>
    %117 = tpu.matmul %116, %105, %cst_36 {dimension_numbers = #tpu.dot_dimension_numbers<[2], [1], [1], [2], [0, 0, 0, 1, 1, 2], [0], [0]>} : vector<2x8x8xbf16>, vector<2x8x16xbf16>, vector<2x8x16xf32> -> vector<2x8x16xf32>
    "tpu.trace_stop"() : () -> ()
    %118 = vector.extract_strided_slice %23 {offsets = [0, 0, 96], sizes = [2, 8, 16], strides = [1, 1, 1]} : vector<2x8x128xbf16> to vector<2x8x16xbf16>
    %119 = vector.extract_strided_slice %25 {offsets = [0, 0, 96], sizes = [2, 8, 16], strides = [1, 1, 1]} : vector<2x8x128xbf16> to vector<2x8x16xbf16>
    %120 = vector.extract_strided_slice %27 {offsets = [0, 0, 96], sizes = [2, 8, 16], strides = [1, 1, 1]} : vector<2x8x128xbf16> to vector<2x8x16xbf16>
    "tpu.trace_start"() <{level = 10 : i32, message = "bqd,bkd->bqk"}> : () -> ()
    %cst_37 = arith.constant dense<0.000000e+00> : vector<2x8x8xf32>
    %121 = tpu.matmul %118, %119, %cst_37 {dimension_numbers = #tpu.dot_dimension_numbers<[2], [2], [1], [1], [0, 0, 0, 1, 1, 1], [0], [0]>} : vector<2x8x16xbf16>, vector<2x8x16xbf16>, vector<2x8x8xf32> -> vector<2x8x8xf32>
    "tpu.trace_stop"() : () -> ()
    %cst_38 = arith.constant dense<0xFF800000> : vector<2x8xf32>
    %122 = vector.multi_reduction <maximumf>, %121, %cst_38 [2] : vector<2x8x8xf32> to vector<2x8xf32>
    %123 = vector.shape_cast %122 : vector<2x8xf32> to vector<2x8x1xf32>
    %124 = vector.broadcast %123 : vector<2x8x1xf32> to vector<2x8x8xf32>
    %125 = arith.subf %121, %124 : vector<2x8x8xf32>
    %126 = math.exp %125 : vector<2x8x8xf32>
    %cst_39 = arith.constant dense<0.000000e+00> : vector<2x8xf32>
    %127 = vector.multi_reduction <add>, %126, %cst_39 [2] : vector<2x8x8xf32> to vector<2x8xf32>
    %128 = vector.shape_cast %127 : vector<2x8xf32> to vector<2x8x1xf32>
    %129 = vector.broadcast %128 : vector<2x8x1xf32> to vector<2x8x8xf32>
    %130 = arith.divf %126, %129 : vector<2x8x8xf32>
    %131 = arith.truncf %130 : vector<2x8x8xf32> to vector<2x8x8xbf16>
    "tpu.trace_start"() <{level = 10 : i32, message = "bqk,bkd->bqd"}> : () -> ()
    %cst_40 = arith.constant dense<0.000000e+00> : vector<2x8x16xf32>
    %132 = tpu.matmul %131, %120, %cst_40 {dimension_numbers = #tpu.dot_dimension_numbers<[2], [1], [1], [2], [0, 0, 0, 1, 1, 2], [0], [0]>} : vector<2x8x8xbf16>, vector<2x8x16xbf16>, vector<2x8x16xf32> -> vector<2x8x16xf32>
    "tpu.trace_stop"() : () -> ()
    %133 = vector.extract_strided_slice %23 {offsets = [0, 0, 112], sizes = [2, 8, 16], strides = [1, 1, 1]} : vector<2x8x128xbf16> to vector<2x8x16xbf16>
    %134 = vector.extract_strided_slice %25 {offsets = [0, 0, 112], sizes = [2, 8, 16], strides = [1, 1, 1]} : vector<2x8x128xbf16> to vector<2x8x16xbf16>
    %135 = vector.extract_strided_slice %27 {offsets = [0, 0, 112], sizes = [2, 8, 16], strides = [1, 1, 1]} : vector<2x8x128xbf16> to vector<2x8x16xbf16>
    "tpu.trace_start"() <{level = 10 : i32, message = "bqd,bkd->bqk"}> : () -> ()
    %cst_41 = arith.constant dense<0.000000e+00> : vector<2x8x8xf32>
    %136 = tpu.matmul %133, %134, %cst_41 {dimension_numbers = #tpu.dot_dimension_numbers<[2], [2], [1], [1], [0, 0, 0, 1, 1, 1], [0], [0]>} : vector<2x8x16xbf16>, vector<2x8x16xbf16>, vector<2x8x8xf32> -> vector<2x8x8xf32>
    "tpu.trace_stop"() : () -> ()
    %cst_42 = arith.constant dense<0xFF800000> : vector<2x8xf32>
    %137 = vector.multi_reduction <maximumf>, %136, %cst_42 [2] : vector<2x8x8xf32> to vector<2x8xf32>
    %138 = vector.shape_cast %137 : vector<2x8xf32> to vector<2x8x1xf32>
    %139 = vector.broadcast %138 : vector<2x8x1xf32> to vector<2x8x8xf32>
    %140 = arith.subf %136, %139 : vector<2x8x8xf32>
    %141 = math.exp %140 : vector<2x8x8xf32>
    %cst_43 = arith.constant dense<0.000000e+00> : vector<2x8xf32>
    %142 = vector.multi_reduction <add>, %141, %cst_43 [2] : vector<2x8x8xf32> to vector<2x8xf32>
    %143 = vector.shape_cast %142 : vector<2x8xf32> to vector<2x8x1xf32>
    %144 = vector.broadcast %143 : vector<2x8x1xf32> to vector<2x8x8xf32>
    %145 = arith.divf %141, %144 : vector<2x8x8xf32>
    %146 = arith.truncf %145 : vector<2x8x8xf32> to vector<2x8x8xbf16>
    "tpu.trace_start"() <{level = 10 : i32, message = "bqk,bkd->bqd"}> : () -> ()
    %cst_44 = arith.constant dense<0.000000e+00> : vector<2x8x16xf32>
    %147 = tpu.matmul %146, %135, %cst_44 {dimension_numbers = #tpu.dot_dimension_numbers<[2], [1], [1], [2], [0, 0, 0, 1, 1, 2], [0], [0]>} : vector<2x8x8xbf16>, vector<2x8x16xbf16>, vector<2x8x16xf32> -> vector<2x8x16xf32>
    "tpu.trace_stop"() : () -> ()
    %148 = tpu.concatenate %42, %57, %72, %87, %102, %117, %132, %147 in 2 : vector<2x8x16xf32>, vector<2x8x16xf32>, vector<2x8x16xf32>, vector<2x8x16xf32>, vector<2x8x16xf32>, vector<2x8x16xf32>, vector<2x8x16xf32>, vector<2x8x16xf32> -> vector<2x8x128xf32>
    %149 = vector.shape_cast %148 : vector<2x8x128xf32> to vector<16x128xf32>
    %150 = arith.truncf %149 : vector<16x128xf32> to vector<16x128xbf16>
    %c0_45 = arith.constant 0 : index
    %c0_46 = arith.constant 0 : index
    %c0_47 = arith.constant 0 : index
    %151 = vector.load %arg6[%c0_45, %c0_46, %c0_47] : memref<4x128x128xbf16, #tpu.memory_space<vmem>>, vector<1x128x128xbf16>
    %152 = vector.shape_cast %151 : vector<1x128x128xbf16> to vector<128x128xbf16>
    %cst_48 = arith.constant dense<0.000000e+00> : vector<16x128xf32>
    %153 = tpu.matmul %150, %152, %cst_48 {dimension_numbers = #tpu.dot_dimension_numbers<[1], [0], [0], [1], [0, 0, 1, 1], [], []>} : vector<16x128xbf16>, vector<128x128xbf16>, vector<16x128xf32> -> vector<16x128xf32>
    %c0_49 = arith.constant 0 : index
    %c0_50 = arith.constant 0 : index
    %c0_51 = arith.constant 0 : index
    %154 = vector.load %arg7[%c0_49, %c0_50, %c0_51] : memref<4x1x128xf32, #tpu.memory_space<vmem>>, vector<1x1x128xf32>
    %155 = vector.shape_cast %154 : vector<1x1x128xf32> to vector<1x128xf32>
    %156 = vector.broadcast %155 : vector<1x128xf32> to vector<16x128xf32>
    %157 = arith.addf %153, %156 : vector<16x128xf32>
    %158 = arith.addf %8, %157 : vector<16x128xf32>
    %c0_52 = arith.constant 0 : index
    %c0_53 = arith.constant 0 : index
    %c0_54 = arith.constant 0 : index
    %159 = vector.load %arg8[%c0_52, %c0_53, %c0_54] : memref<4x1x128xf32, #tpu.memory_space<vmem>>, vector<1x1x128xf32>
    %160 = vector.shape_cast %159 : vector<1x1x128xf32> to vector<1x128xf32>
    %c0_55 = arith.constant 0 : index
    %c0_56 = arith.constant 0 : index
    %c0_57 = arith.constant 0 : index
    %161 = vector.load %arg9[%c0_55, %c0_56, %c0_57] : memref<4x1x128xf32, #tpu.memory_space<vmem>>, vector<1x1x128xf32>
    %162 = vector.shape_cast %161 : vector<1x1x128xf32> to vector<1x128xf32>
    %cst_58 = arith.constant dense<0.000000e+00> : vector<16xf32>
    %163 = vector.multi_reduction <add>, %158, %cst_58 [1] : vector<16x128xf32> to vector<16xf32>
    %164 = vector.shape_cast %163 : vector<16xf32> to vector<16x1xf32>
    %cst_59 = arith.constant 1.280000e+02 : f32
    %165 = vector.broadcast %cst_59 : f32 to vector<16x1xf32>
    %166 = arith.divf %164, %165 : vector<16x1xf32>
    %167 = vector.broadcast %166 : vector<16x1xf32> to vector<16x128xf32>
    %168 = arith.subf %158, %167 : vector<16x128xf32>
    %169 = arith.mulf %168, %168 : vector<16x128xf32>
    %cst_60 = arith.constant dense<0.000000e+00> : vector<16xf32>
    %170 = vector.multi_reduction <add>, %169, %cst_60 [1] : vector<16x128xf32> to vector<16xf32>
    %171 = vector.shape_cast %170 : vector<16xf32> to vector<16x1xf32>
    %cst_61 = arith.constant 1.280000e+02 : f32
    %172 = vector.broadcast %cst_61 : f32 to vector<16x1xf32>
    %173 = arith.divf %171, %172 : vector<16x1xf32>
    %174 = vector.broadcast %166 : vector<16x1xf32> to vector<16x128xf32>
    %175 = arith.subf %158, %174 : vector<16x128xf32>
    %cst_62 = arith.constant 9.99999996E-13 : f32
    %176 = vector.broadcast %cst_62 : f32 to vector<16x1xf32>
    %177 = arith.addf %173, %176 : vector<16x1xf32>
    %178 = math.rsqrt %177 : vector<16x1xf32>
    %179 = vector.broadcast %178 : vector<16x1xf32> to vector<16x128xf32>
    %180 = arith.mulf %175, %179 : vector<16x128xf32>
    %181 = vector.broadcast %160 : vector<1x128xf32> to vector<16x128xf32>
    %182 = arith.mulf %180, %181 : vector<16x128xf32>
    %183 = vector.broadcast %162 : vector<1x128xf32> to vector<16x128xf32>
    %184 = arith.addf %182, %183 : vector<16x128xf32>
    %185 = arith.truncf %184 : vector<16x128xf32> to vector<16x128xbf16>
    %c0_63 = arith.constant 0 : index
    %c0_64 = arith.constant 0 : index
    %c0_65 = arith.constant 0 : index
    %186 = vector.load %arg10[%c0_63, %c0_64, %c0_65] : memref<4x128x512xbf16, #tpu.memory_space<vmem>>, vector<1x128x512xbf16>
    %187 = vector.shape_cast %186 : vector<1x128x512xbf16> to vector<128x512xbf16>
    %cst_66 = arith.constant dense<0.000000e+00> : vector<16x512xf32>
    %188 = tpu.matmul %185, %187, %cst_66 {dimension_numbers = #tpu.dot_dimension_numbers<[1], [0], [0], [1], [0, 0, 1, 1], [], []>} : vector<16x128xbf16>, vector<128x512xbf16>, vector<16x512xf32> -> vector<16x512xf32>
    %c0_67 = arith.constant 0 : index
    %c0_68 = arith.constant 0 : index
    %c0_69 = arith.constant 0 : index
    %189 = vector.load %arg11[%c0_67, %c0_68, %c0_69] : memref<4x1x512xf32, #tpu.memory_space<vmem>>, vector<1x1x512xf32>
    %190 = vector.shape_cast %189 : vector<1x1x512xf32> to vector<1x512xf32>
    %191 = vector.broadcast %190 : vector<1x512xf32> to vector<16x512xf32>
    %192 = arith.addf %188, %191 : vector<16x512xf32>
    %193 = arith.mulf %192, %192 : vector<16x512xf32>
    %194 = arith.mulf %192, %193 : vector<16x512xf32>
    %cst_70 = arith.constant 4.471500e-02 : f32
    %195 = vector.broadcast %cst_70 : f32 to vector<16x512xf32>
    %196 = arith.mulf %195, %194 : vector<16x512xf32>
    %197 = arith.addf %192, %196 : vector<16x512xf32>
    %cst_71 = arith.constant 0.797884583 : f32
    %198 = vector.broadcast %cst_71 : f32 to vector<16x512xf32>
    %199 = arith.mulf %198, %197 : vector<16x512xf32>
    %200 = math.tanh %199 : vector<16x512xf32>
    %cst_72 = arith.constant 1.000000e+00 : f32
    %201 = vector.broadcast %cst_72 : f32 to vector<16x512xf32>
    %202 = arith.addf %201, %200 : vector<16x512xf32>
    %cst_73 = arith.constant 5.000000e-01 : f32
    %203 = vector.broadcast %cst_73 : f32 to vector<16x512xf32>
    %204 = arith.mulf %203, %202 : vector<16x512xf32>
    %205 = arith.mulf %192, %204 : vector<16x512xf32>
    %206 = arith.truncf %205 : vector<16x512xf32> to vector<16x512xbf16>
    %c0_74 = arith.constant 0 : index
    %c0_75 = arith.constant 0 : index
    %c0_76 = arith.constant 0 : index
    %207 = vector.load %arg12[%c0_74, %c0_75, %c0_76] : memref<4x512x128xbf16, #tpu.memory_space<vmem>>, vector<1x512x128xbf16>
    %208 = vector.shape_cast %207 : vector<1x512x128xbf16> to vector<512x128xbf16>
    %cst_77 = arith.constant dense<0.000000e+00> : vector<16x128xf32>
    %209 = tpu.matmul %206, %208, %cst_77 {dimension_numbers = #tpu.dot_dimension_numbers<[1], [0], [0], [1], [0, 0, 1, 1], [], []>} : vector<16x512xbf16>, vector<512x128xbf16>, vector<16x128xf32> -> vector<16x128xf32>
    %c0_78 = arith.constant 0 : index
    %c0_79 = arith.constant 0 : index
    %c0_80 = arith.constant 0 : index
    %210 = vector.load %arg13[%c0_78, %c0_79, %c0_80] : memref<4x1x128xf32, #tpu.memory_space<vmem>>, vector<1x1x128xf32>
    %211 = vector.shape_cast %210 : vector<1x1x128xf32> to vector<1x128xf32>
    %212 = vector.broadcast %211 : vector<1x128xf32> to vector<16x128xf32>
    %213 = arith.addf %209, %212 : vector<16x128xf32>
    %214 = arith.addf %184, %213 : vector<16x128xf32>
    %c0_81 = arith.constant 0 : index
    %c0_82 = arith.constant 0 : index
    %c0_83 = arith.constant 0 : index
    %215 = vector.load %arg14[%c0_81, %c0_82, %c0_83] : memref<4x1x128xf32, #tpu.memory_space<vmem>>, vector<1x1x128xf32>
    %216 = vector.shape_cast %215 : vector<1x1x128xf32> to vector<1x128xf32>
    %c0_84 = arith.constant 0 : index
    %c0_85 = arith.constant 0 : index
    %c0_86 = arith.constant 0 : index
    %217 = vector.load %arg15[%c0_84, %c0_85, %c0_86] : memref<4x1x128xf32, #tpu.memory_space<vmem>>, vector<1x1x128xf32>
    %218 = vector.shape_cast %217 : vector<1x1x128xf32> to vector<1x128xf32>
    %cst_87 = arith.constant dense<0.000000e+00> : vector<16xf32>
    %219 = vector.multi_reduction <add>, %214, %cst_87 [1] : vector<16x128xf32> to vector<16xf32>
    %220 = vector.shape_cast %219 : vector<16xf32> to vector<16x1xf32>
    %cst_88 = arith.constant 1.280000e+02 : f32
    %221 = vector.broadcast %cst_88 : f32 to vector<16x1xf32>
    %222 = arith.divf %220, %221 : vector<16x1xf32>
    %223 = vector.broadcast %222 : vector<16x1xf32> to vector<16x128xf32>
    %224 = arith.subf %214, %223 : vector<16x128xf32>
    %225 = arith.mulf %224, %224 : vector<16x128xf32>
    %cst_89 = arith.constant dense<0.000000e+00> : vector<16xf32>
    %226 = vector.multi_reduction <add>, %225, %cst_89 [1] : vector<16x128xf32> to vector<16xf32>
    %227 = vector.shape_cast %226 : vector<16xf32> to vector<16x1xf32>
    %cst_90 = arith.constant 1.280000e+02 : f32
    %228 = vector.broadcast %cst_90 : f32 to vector<16x1xf32>
    %229 = arith.divf %227, %228 : vector<16x1xf32>
    %230 = vector.broadcast %222 : vector<16x1xf32> to vector<16x128xf32>
    %231 = arith.subf %214, %230 : vector<16x128xf32>
    %cst_91 = arith.constant 9.99999996E-13 : f32
    %232 = vector.broadcast %cst_91 : f32 to vector<16x1xf32>
    %233 = arith.addf %229, %232 : vector<16x1xf32>
    %234 = math.rsqrt %233 : vector<16x1xf32>
    %235 = vector.broadcast %234 : vector<16x1xf32> to vector<16x128xf32>
    %236 = arith.mulf %231, %235 : vector<16x128xf32>
    %237 = vector.broadcast %216 : vector<1x128xf32> to vector<16x128xf32>
    %238 = arith.mulf %236, %237 : vector<16x128xf32>
    %239 = vector.broadcast %218 : vector<1x128xf32> to vector<16x128xf32>
    %240 = arith.addf %238, %239 : vector<16x128xf32>
    %241 = arith.truncf %240 : vector<16x128xf32> to vector<16x128xbf16>
    %c1 = arith.constant 1 : index
    %c0_92 = arith.constant 0 : index
    %c0_93 = arith.constant 0 : index
    %242 = vector.load %arg4[%c1, %c0_92, %c0_93] : memref<4x128x384xbf16, #tpu.memory_space<vmem>>, vector<1x128x384xbf16>
    %243 = vector.shape_cast %242 : vector<1x128x384xbf16> to vector<128x384xbf16>
    %cst_94 = arith.constant dense<0.000000e+00> : vector<16x384xf32>
    %244 = tpu.matmul %241, %243, %cst_94 {dimension_numbers = #tpu.dot_dimension_numbers<[1], [0], [0], [1], [0, 0, 1, 1], [], []>} : vector<16x128xbf16>, vector<128x384xbf16>, vector<16x384xf32> -> vector<16x384xf32>
    %c1_95 = arith.constant 1 : index
    %c0_96 = arith.constant 0 : index
    %c0_97 = arith.constant 0 : index
    %245 = vector.load %arg5[%c1_95, %c0_96, %c0_97] : memref<4x1x384xf32, #tpu.memory_space<vmem>>, vector<1x1x384xf32>
    %246 = vector.shape_cast %245 : vector<1x1x384xf32> to vector<1x384xf32>
    %247 = vector.broadcast %246 : vector<1x384xf32> to vector<16x384xf32>
    %248 = arith.addf %244, %247 : vector<16x384xf32>
    %249 = vector.extract_strided_slice %248 {offsets = [0, 0], sizes = [16, 128], strides = [1, 1]} : vector<16x384xf32> to vector<16x128xf32>
    %cst_98 = arith.constant 2.500000e-01 : f32
    %250 = vector.broadcast %cst_98 : f32 to vector<16x128xf32>
    %251 = arith.mulf %249, %250 : vector<16x128xf32>
    %252 = vector.extract_strided_slice %248 {offsets = [0, 128], sizes = [16, 128], strides = [1, 1]} : vector<16x384xf32> to vector<16x128xf32>
    %253 = vector.extract_strided_slice %248 {offsets = [0, 256], sizes = [16, 128], strides = [1, 1]} : vector<16x384xf32> to vector<16x128xf32>
    %254 = vector.shape_cast %251 : vector<16x128xf32> to vector<2x8x128xf32>
    %255 = arith.truncf %254 : vector<2x8x128xf32> to vector<2x8x128xbf16>
    %256 = vector.shape_cast %252 : vector<16x128xf32> to vector<2x8x128xf32>
    %257 = arith.truncf %256 : vector<2x8x128xf32> to vector<2x8x128xbf16>
    %258 = vector.shape_cast %253 : vector<16x128xf32> to vector<2x8x128xf32>
    %259 = arith.truncf %258 : vector<2x8x128xf32> to vector<2x8x128xbf16>
    %260 = vector.extract_strided_slice %255 {offsets = [0, 0, 0], sizes = [2, 8, 16], strides = [1, 1, 1]} : vector<2x8x128xbf16> to vector<2x8x16xbf16>
    %261 = vector.extract_strided_slice %257 {offsets = [0, 0, 0], sizes = [2, 8, 16], strides = [1, 1, 1]} : vector<2x8x128xbf16> to vector<2x8x16xbf16>
    %262 = vector.extract_strided_slice %259 {offsets = [0, 0, 0], sizes = [2, 8, 16], strides = [1, 1, 1]} : vector<2x8x128xbf16> to vector<2x8x16xbf16>
    "tpu.trace_start"() <{level = 10 : i32, message = "bqd,bkd->bqk"}> : () -> ()
    %cst_99 = arith.constant dense<0.000000e+00> : vector<2x8x8xf32>
    %263 = tpu.matmul %260, %261, %cst_99 {dimension_numbers = #tpu.dot_dimension_numbers<[2], [2], [1], [1], [0, 0, 0, 1, 1, 1], [0], [0]>} : vector<2x8x16xbf16>, vector<2x8x16xbf16>, vector<2x8x8xf32> -> vector<2x8x8xf32>
    "tpu.trace_stop"() : () -> ()
    %cst_100 = arith.constant dense<0xFF800000> : vector<2x8xf32>
    %264 = vector.multi_reduction <maximumf>, %263, %cst_100 [2] : vector<2x8x8xf32> to vector<2x8xf32>
    %265 = vector.shape_cast %264 : vector<2x8xf32> to vector<2x8x1xf32>
    %266 = vector.broadcast %265 : vector<2x8x1xf32> to vector<2x8x8xf32>
    %267 = arith.subf %263, %266 : vector<2x8x8xf32>
    %268 = math.exp %267 : vector<2x8x8xf32>
    %cst_101 = arith.constant dense<0.000000e+00> : vector<2x8xf32>
    %269 = vector.multi_reduction <add>, %268, %cst_101 [2] : vector<2x8x8xf32> to vector<2x8xf32>
    %270 = vector.shape_cast %269 : vector<2x8xf32> to vector<2x8x1xf32>
    %271 = vector.broadcast %270 : vector<2x8x1xf32> to vector<2x8x8xf32>
    %272 = arith.divf %268, %271 : vector<2x8x8xf32>
    %273 = arith.truncf %272 : vector<2x8x8xf32> to vector<2x8x8xbf16>
    "tpu.trace_start"() <{level = 10 : i32, message = "bqk,bkd->bqd"}> : () -> ()
    %cst_102 = arith.constant dense<0.000000e+00> : vector<2x8x16xf32>
    %274 = tpu.matmul %273, %262, %cst_102 {dimension_numbers = #tpu.dot_dimension_numbers<[2], [1], [1], [2], [0, 0, 0, 1, 1, 2], [0], [0]>} : vector<2x8x8xbf16>, vector<2x8x16xbf16>, vector<2x8x16xf32> -> vector<2x8x16xf32>
    "tpu.trace_stop"() : () -> ()
    %275 = vector.extract_strided_slice %255 {offsets = [0, 0, 16], sizes = [2, 8, 16], strides = [1, 1, 1]} : vector<2x8x128xbf16> to vector<2x8x16xbf16>
    %276 = vector.extract_strided_slice %257 {offsets = [0, 0, 16], sizes = [2, 8, 16], strides = [1, 1, 1]} : vector<2x8x128xbf16> to vector<2x8x16xbf16>
    %277 = vector.extract_strided_slice %259 {offsets = [0, 0, 16], sizes = [2, 8, 16], strides = [1, 1, 1]} : vector<2x8x128xbf16> to vector<2x8x16xbf16>
    "tpu.trace_start"() <{level = 10 : i32, message = "bqd,bkd->bqk"}> : () -> ()
    %cst_103 = arith.constant dense<0.000000e+00> : vector<2x8x8xf32>
    %278 = tpu.matmul %275, %276, %cst_103 {dimension_numbers = #tpu.dot_dimension_numbers<[2], [2], [1], [1], [0, 0, 0, 1, 1, 1], [0], [0]>} : vector<2x8x16xbf16>, vector<2x8x16xbf16>, vector<2x8x8xf32> -> vector<2x8x8xf32>
    "tpu.trace_stop"() : () -> ()
    %cst_104 = arith.constant dense<0xFF800000> : vector<2x8xf32>
    %279 = vector.multi_reduction <maximumf>, %278, %cst_104 [2] : vector<2x8x8xf32> to vector<2x8xf32>
    %280 = vector.shape_cast %279 : vector<2x8xf32> to vector<2x8x1xf32>
    %281 = vector.broadcast %280 : vector<2x8x1xf32> to vector<2x8x8xf32>
    %282 = arith.subf %278, %281 : vector<2x8x8xf32>
    %283 = math.exp %282 : vector<2x8x8xf32>
    %cst_105 = arith.constant dense<0.000000e+00> : vector<2x8xf32>
    %284 = vector.multi_reduction <add>, %283, %cst_105 [2] : vector<2x8x8xf32> to vector<2x8xf32>
    %285 = vector.shape_cast %284 : vector<2x8xf32> to vector<2x8x1xf32>
    %286 = vector.broadcast %285 : vector<2x8x1xf32> to vector<2x8x8xf32>
    %287 = arith.divf %283, %286 : vector<2x8x8xf32>
    %288 = arith.truncf %287 : vector<2x8x8xf32> to vector<2x8x8xbf16>
    "tpu.trace_start"() <{level = 10 : i32, message = "bqk,bkd->bqd"}> : () -> ()
    %cst_106 = arith.constant dense<0.000000e+00> : vector<2x8x16xf32>
    %289 = tpu.matmul %288, %277, %cst_106 {dimension_numbers = #tpu.dot_dimension_numbers<[2], [1], [1], [2], [0, 0, 0, 1, 1, 2], [0], [0]>} : vector<2x8x8xbf16>, vector<2x8x16xbf16>, vector<2x8x16xf32> -> vector<2x8x16xf32>
    "tpu.trace_stop"() : () -> ()
    %290 = vector.extract_strided_slice %255 {offsets = [0, 0, 32], sizes = [2, 8, 16], strides = [1, 1, 1]} : vector<2x8x128xbf16> to vector<2x8x16xbf16>
    %291 = vector.extract_strided_slice %257 {offsets = [0, 0, 32], sizes = [2, 8, 16], strides = [1, 1, 1]} : vector<2x8x128xbf16> to vector<2x8x16xbf16>
    %292 = vector.extract_strided_slice %259 {offsets = [0, 0, 32], sizes = [2, 8, 16], strides = [1, 1, 1]} : vector<2x8x128xbf16> to vector<2x8x16xbf16>
    "tpu.trace_start"() <{level = 10 : i32, message = "bqd,bkd->bqk"}> : () -> ()
    %cst_107 = arith.constant dense<0.000000e+00> : vector<2x8x8xf32>
    %293 = tpu.matmul %290, %291, %cst_107 {dimension_numbers = #tpu.dot_dimension_numbers<[2], [2], [1], [1], [0, 0, 0, 1, 1, 1], [0], [0]>} : vector<2x8x16xbf16>, vector<2x8x16xbf16>, vector<2x8x8xf32> -> vector<2x8x8xf32>
    "tpu.trace_stop"() : () -> ()
    %cst_108 = arith.constant dense<0xFF800000> : vector<2x8xf32>
    %294 = vector.multi_reduction <maximumf>, %293, %cst_108 [2] : vector<2x8x8xf32> to vector<2x8xf32>
    %295 = vector.shape_cast %294 : vector<2x8xf32> to vector<2x8x1xf32>
    %296 = vector.broadcast %295 : vector<2x8x1xf32> to vector<2x8x8xf32>
    %297 = arith.subf %293, %296 : vector<2x8x8xf32>
    %298 = math.exp %297 : vector<2x8x8xf32>
    %cst_109 = arith.constant dense<0.000000e+00> : vector<2x8xf32>
    %299 = vector.multi_reduction <add>, %298, %cst_109 [2] : vector<2x8x8xf32> to vector<2x8xf32>
    %300 = vector.shape_cast %299 : vector<2x8xf32> to vector<2x8x1xf32>
    %301 = vector.broadcast %300 : vector<2x8x1xf32> to vector<2x8x8xf32>
    %302 = arith.divf %298, %301 : vector<2x8x8xf32>
    %303 = arith.truncf %302 : vector<2x8x8xf32> to vector<2x8x8xbf16>
    "tpu.trace_start"() <{level = 10 : i32, message = "bqk,bkd->bqd"}> : () -> ()
    %cst_110 = arith.constant dense<0.000000e+00> : vector<2x8x16xf32>
    %304 = tpu.matmul %303, %292, %cst_110 {dimension_numbers = #tpu.dot_dimension_numbers<[2], [1], [1], [2], [0, 0, 0, 1, 1, 2], [0], [0]>} : vector<2x8x8xbf16>, vector<2x8x16xbf16>, vector<2x8x16xf32> -> vector<2x8x16xf32>
    "tpu.trace_stop"() : () -> ()
    %305 = vector.extract_strided_slice %255 {offsets = [0, 0, 48], sizes = [2, 8, 16], strides = [1, 1, 1]} : vector<2x8x128xbf16> to vector<2x8x16xbf16>
    %306 = vector.extract_strided_slice %257 {offsets = [0, 0, 48], sizes = [2, 8, 16], strides = [1, 1, 1]} : vector<2x8x128xbf16> to vector<2x8x16xbf16>
    %307 = vector.extract_strided_slice %259 {offsets = [0, 0, 48], sizes = [2, 8, 16], strides = [1, 1, 1]} : vector<2x8x128xbf16> to vector<2x8x16xbf16>
    "tpu.trace_start"() <{level = 10 : i32, message = "bqd,bkd->bqk"}> : () -> ()
    %cst_111 = arith.constant dense<0.000000e+00> : vector<2x8x8xf32>
    %308 = tpu.matmul %305, %306, %cst_111 {dimension_numbers = #tpu.dot_dimension_numbers<[2], [2], [1], [1], [0, 0, 0, 1, 1, 1], [0], [0]>} : vector<2x8x16xbf16>, vector<2x8x16xbf16>, vector<2x8x8xf32> -> vector<2x8x8xf32>
    "tpu.trace_stop"() : () -> ()
    %cst_112 = arith.constant dense<0xFF800000> : vector<2x8xf32>
    %309 = vector.multi_reduction <maximumf>, %308, %cst_112 [2] : vector<2x8x8xf32> to vector<2x8xf32>
    %310 = vector.shape_cast %309 : vector<2x8xf32> to vector<2x8x1xf32>
    %311 = vector.broadcast %310 : vector<2x8x1xf32> to vector<2x8x8xf32>
    %312 = arith.subf %308, %311 : vector<2x8x8xf32>
    %313 = math.exp %312 : vector<2x8x8xf32>
    %cst_113 = arith.constant dense<0.000000e+00> : vector<2x8xf32>
    %314 = vector.multi_reduction <add>, %313, %cst_113 [2] : vector<2x8x8xf32> to vector<2x8xf32>
    %315 = vector.shape_cast %314 : vector<2x8xf32> to vector<2x8x1xf32>
    %316 = vector.broadcast %315 : vector<2x8x1xf32> to vector<2x8x8xf32>
    %317 = arith.divf %313, %316 : vector<2x8x8xf32>
    %318 = arith.truncf %317 : vector<2x8x8xf32> to vector<2x8x8xbf16>
    "tpu.trace_start"() <{level = 10 : i32, message = "bqk,bkd->bqd"}> : () -> ()
    %cst_114 = arith.constant dense<0.000000e+00> : vector<2x8x16xf32>
    %319 = tpu.matmul %318, %307, %cst_114 {dimension_numbers = #tpu.dot_dimension_numbers<[2], [1], [1], [2], [0, 0, 0, 1, 1, 2], [0], [0]>} : vector<2x8x8xbf16>, vector<2x8x16xbf16>, vector<2x8x16xf32> -> vector<2x8x16xf32>
    "tpu.trace_stop"() : () -> ()
    %320 = vector.extract_strided_slice %255 {offsets = [0, 0, 64], sizes = [2, 8, 16], strides = [1, 1, 1]} : vector<2x8x128xbf16> to vector<2x8x16xbf16>
    %321 = vector.extract_strided_slice %257 {offsets = [0, 0, 64], sizes = [2, 8, 16], strides = [1, 1, 1]} : vector<2x8x128xbf16> to vector<2x8x16xbf16>
    %322 = vector.extract_strided_slice %259 {offsets = [0, 0, 64], sizes = [2, 8, 16], strides = [1, 1, 1]} : vector<2x8x128xbf16> to vector<2x8x16xbf16>
    "tpu.trace_start"() <{level = 10 : i32, message = "bqd,bkd->bqk"}> : () -> ()
    %cst_115 = arith.constant dense<0.000000e+00> : vector<2x8x8xf32>
    %323 = tpu.matmul %320, %321, %cst_115 {dimension_numbers = #tpu.dot_dimension_numbers<[2], [2], [1], [1], [0, 0, 0, 1, 1, 1], [0], [0]>} : vector<2x8x16xbf16>, vector<2x8x16xbf16>, vector<2x8x8xf32> -> vector<2x8x8xf32>
    "tpu.trace_stop"() : () -> ()
    %cst_116 = arith.constant dense<0xFF800000> : vector<2x8xf32>
    %324 = vector.multi_reduction <maximumf>, %323, %cst_116 [2] : vector<2x8x8xf32> to vector<2x8xf32>
    %325 = vector.shape_cast %324 : vector<2x8xf32> to vector<2x8x1xf32>
    %326 = vector.broadcast %325 : vector<2x8x1xf32> to vector<2x8x8xf32>
    %327 = arith.subf %323, %326 : vector<2x8x8xf32>
    %328 = math.exp %327 : vector<2x8x8xf32>
    %cst_117 = arith.constant dense<0.000000e+00> : vector<2x8xf32>
    %329 = vector.multi_reduction <add>, %328, %cst_117 [2] : vector<2x8x8xf32> to vector<2x8xf32>
    %330 = vector.shape_cast %329 : vector<2x8xf32> to vector<2x8x1xf32>
    %331 = vector.broadcast %330 : vector<2x8x1xf32> to vector<2x8x8xf32>
    %332 = arith.divf %328, %331 : vector<2x8x8xf32>
    %333 = arith.truncf %332 : vector<2x8x8xf32> to vector<2x8x8xbf16>
    "tpu.trace_start"() <{level = 10 : i32, message = "bqk,bkd->bqd"}> : () -> ()
    %cst_118 = arith.constant dense<0.000000e+00> : vector<2x8x16xf32>
    %334 = tpu.matmul %333, %322, %cst_118 {dimension_numbers = #tpu.dot_dimension_numbers<[2], [1], [1], [2], [0, 0, 0, 1, 1, 2], [0], [0]>} : vector<2x8x8xbf16>, vector<2x8x16xbf16>, vector<2x8x16xf32> -> vector<2x8x16xf32>
    "tpu.trace_stop"() : () -> ()
    %335 = vector.extract_strided_slice %255 {offsets = [0, 0, 80], sizes = [2, 8, 16], strides = [1, 1, 1]} : vector<2x8x128xbf16> to vector<2x8x16xbf16>
    %336 = vector.extract_strided_slice %257 {offsets = [0, 0, 80], sizes = [2, 8, 16], strides = [1, 1, 1]} : vector<2x8x128xbf16> to vector<2x8x16xbf16>
    %337 = vector.extract_strided_slice %259 {offsets = [0, 0, 80], sizes = [2, 8, 16], strides = [1, 1, 1]} : vector<2x8x128xbf16> to vector<2x8x16xbf16>
    "tpu.trace_start"() <{level = 10 : i32, message = "bqd,bkd->bqk"}> : () -> ()
    %cst_119 = arith.constant dense<0.000000e+00> : vector<2x8x8xf32>
    %338 = tpu.matmul %335, %336, %cst_119 {dimension_numbers = #tpu.dot_dimension_numbers<[2], [2], [1], [1], [0, 0, 0, 1, 1, 1], [0], [0]>} : vector<2x8x16xbf16>, vector<2x8x16xbf16>, vector<2x8x8xf32> -> vector<2x8x8xf32>
    "tpu.trace_stop"() : () -> ()
    %cst_120 = arith.constant dense<0xFF800000> : vector<2x8xf32>
    %339 = vector.multi_reduction <maximumf>, %338, %cst_120 [2] : vector<2x8x8xf32> to vector<2x8xf32>
    %340 = vector.shape_cast %339 : vector<2x8xf32> to vector<2x8x1xf32>
    %341 = vector.broadcast %340 : vector<2x8x1xf32> to vector<2x8x8xf32>
    %342 = arith.subf %338, %341 : vector<2x8x8xf32>
    %343 = math.exp %342 : vector<2x8x8xf32>
    %cst_121 = arith.constant dense<0.000000e+00> : vector<2x8xf32>
    %344 = vector.multi_reduction <add>, %343, %cst_121 [2] : vector<2x8x8xf32> to vector<2x8xf32>
    %345 = vector.shape_cast %344 : vector<2x8xf32> to vector<2x8x1xf32>
    %346 = vector.broadcast %345 : vector<2x8x1xf32> to vector<2x8x8xf32>
    %347 = arith.divf %343, %346 : vector<2x8x8xf32>
    %348 = arith.truncf %347 : vector<2x8x8xf32> to vector<2x8x8xbf16>
    "tpu.trace_start"() <{level = 10 : i32, message = "bqk,bkd->bqd"}> : () -> ()
    %cst_122 = arith.constant dense<0.000000e+00> : vector<2x8x16xf32>
    %349 = tpu.matmul %348, %337, %cst_122 {dimension_numbers = #tpu.dot_dimension_numbers<[2], [1], [1], [2], [0, 0, 0, 1, 1, 2], [0], [0]>} : vector<2x8x8xbf16>, vector<2x8x16xbf16>, vector<2x8x16xf32> -> vector<2x8x16xf32>
    "tpu.trace_stop"() : () -> ()
    %350 = vector.extract_strided_slice %255 {offsets = [0, 0, 96], sizes = [2, 8, 16], strides = [1, 1, 1]} : vector<2x8x128xbf16> to vector<2x8x16xbf16>
    %351 = vector.extract_strided_slice %257 {offsets = [0, 0, 96], sizes = [2, 8, 16], strides = [1, 1, 1]} : vector<2x8x128xbf16> to vector<2x8x16xbf16>
    %352 = vector.extract_strided_slice %259 {offsets = [0, 0, 96], sizes = [2, 8, 16], strides = [1, 1, 1]} : vector<2x8x128xbf16> to vector<2x8x16xbf16>
    "tpu.trace_start"() <{level = 10 : i32, message = "bqd,bkd->bqk"}> : () -> ()
    %cst_123 = arith.constant dense<0.000000e+00> : vector<2x8x8xf32>
    %353 = tpu.matmul %350, %351, %cst_123 {dimension_numbers = #tpu.dot_dimension_numbers<[2], [2], [1], [1], [0, 0, 0, 1, 1, 1], [0], [0]>} : vector<2x8x16xbf16>, vector<2x8x16xbf16>, vector<2x8x8xf32> -> vector<2x8x8xf32>
    "tpu.trace_stop"() : () -> ()
    %cst_124 = arith.constant dense<0xFF800000> : vector<2x8xf32>
    %354 = vector.multi_reduction <maximumf>, %353, %cst_124 [2] : vector<2x8x8xf32> to vector<2x8xf32>
    %355 = vector.shape_cast %354 : vector<2x8xf32> to vector<2x8x1xf32>
    %356 = vector.broadcast %355 : vector<2x8x1xf32> to vector<2x8x8xf32>
    %357 = arith.subf %353, %356 : vector<2x8x8xf32>
    %358 = math.exp %357 : vector<2x8x8xf32>
    %cst_125 = arith.constant dense<0.000000e+00> : vector<2x8xf32>
    %359 = vector.multi_reduction <add>, %358, %cst_125 [2] : vector<2x8x8xf32> to vector<2x8xf32>
    %360 = vector.shape_cast %359 : vector<2x8xf32> to vector<2x8x1xf32>
    %361 = vector.broadcast %360 : vector<2x8x1xf32> to vector<2x8x8xf32>
    %362 = arith.divf %358, %361 : vector<2x8x8xf32>
    %363 = arith.truncf %362 : vector<2x8x8xf32> to vector<2x8x8xbf16>
    "tpu.trace_start"() <{level = 10 : i32, message = "bqk,bkd->bqd"}> : () -> ()
    %cst_126 = arith.constant dense<0.000000e+00> : vector<2x8x16xf32>
    %364 = tpu.matmul %363, %352, %cst_126 {dimension_numbers = #tpu.dot_dimension_numbers<[2], [1], [1], [2], [0, 0, 0, 1, 1, 2], [0], [0]>} : vector<2x8x8xbf16>, vector<2x8x16xbf16>, vector<2x8x16xf32> -> vector<2x8x16xf32>
    "tpu.trace_stop"() : () -> ()
    %365 = vector.extract_strided_slice %255 {offsets = [0, 0, 112], sizes = [2, 8, 16], strides = [1, 1, 1]} : vector<2x8x128xbf16> to vector<2x8x16xbf16>
    %366 = vector.extract_strided_slice %257 {offsets = [0, 0, 112], sizes = [2, 8, 16], strides = [1, 1, 1]} : vector<2x8x128xbf16> to vector<2x8x16xbf16>
    %367 = vector.extract_strided_slice %259 {offsets = [0, 0, 112], sizes = [2, 8, 16], strides = [1, 1, 1]} : vector<2x8x128xbf16> to vector<2x8x16xbf16>
    "tpu.trace_start"() <{level = 10 : i32, message = "bqd,bkd->bqk"}> : () -> ()
    %cst_127 = arith.constant dense<0.000000e+00> : vector<2x8x8xf32>
    %368 = tpu.matmul %365, %366, %cst_127 {dimension_numbers = #tpu.dot_dimension_numbers<[2], [2], [1], [1], [0, 0, 0, 1, 1, 1], [0], [0]>} : vector<2x8x16xbf16>, vector<2x8x16xbf16>, vector<2x8x8xf32> -> vector<2x8x8xf32>
    "tpu.trace_stop"() : () -> ()
    %cst_128 = arith.constant dense<0xFF800000> : vector<2x8xf32>
    %369 = vector.multi_reduction <maximumf>, %368, %cst_128 [2] : vector<2x8x8xf32> to vector<2x8xf32>
    %370 = vector.shape_cast %369 : vector<2x8xf32> to vector<2x8x1xf32>
    %371 = vector.broadcast %370 : vector<2x8x1xf32> to vector<2x8x8xf32>
    %372 = arith.subf %368, %371 : vector<2x8x8xf32>
    %373 = math.exp %372 : vector<2x8x8xf32>
    %cst_129 = arith.constant dense<0.000000e+00> : vector<2x8xf32>
    %374 = vector.multi_reduction <add>, %373, %cst_129 [2] : vector<2x8x8xf32> to vector<2x8xf32>
    %375 = vector.shape_cast %374 : vector<2x8xf32> to vector<2x8x1xf32>
    %376 = vector.broadcast %375 : vector<2x8x1xf32> to vector<2x8x8xf32>
    %377 = arith.divf %373, %376 : vector<2x8x8xf32>
    %378 = arith.truncf %377 : vector<2x8x8xf32> to vector<2x8x8xbf16>
    "tpu.trace_start"() <{level = 10 : i32, message = "bqk,bkd->bqd"}> : () -> ()
    %cst_130 = arith.constant dense<0.000000e+00> : vector<2x8x16xf32>
    %379 = tpu.matmul %378, %367, %cst_130 {dimension_numbers = #tpu.dot_dimension_numbers<[2], [1], [1], [2], [0, 0, 0, 1, 1, 2], [0], [0]>} : vector<2x8x8xbf16>, vector<2x8x16xbf16>, vector<2x8x16xf32> -> vector<2x8x16xf32>
    "tpu.trace_stop"() : () -> ()
    %380 = tpu.concatenate %274, %289, %304, %319, %334, %349, %364, %379 in 2 : vector<2x8x16xf32>, vector<2x8x16xf32>, vector<2x8x16xf32>, vector<2x8x16xf32>, vector<2x8x16xf32>, vector<2x8x16xf32>, vector<2x8x16xf32>, vector<2x8x16xf32> -> vector<2x8x128xf32>
    %381 = vector.shape_cast %380 : vector<2x8x128xf32> to vector<16x128xf32>
    %382 = arith.truncf %381 : vector<16x128xf32> to vector<16x128xbf16>
    %c1_131 = arith.constant 1 : index
    %c0_132 = arith.constant 0 : index
    %c0_133 = arith.constant 0 : index
    %383 = vector.load %arg6[%c1_131, %c0_132, %c0_133] : memref<4x128x128xbf16, #tpu.memory_space<vmem>>, vector<1x128x128xbf16>
    %384 = vector.shape_cast %383 : vector<1x128x128xbf16> to vector<128x128xbf16>
    %cst_134 = arith.constant dense<0.000000e+00> : vector<16x128xf32>
    %385 = tpu.matmul %382, %384, %cst_134 {dimension_numbers = #tpu.dot_dimension_numbers<[1], [0], [0], [1], [0, 0, 1, 1], [], []>} : vector<16x128xbf16>, vector<128x128xbf16>, vector<16x128xf32> -> vector<16x128xf32>
    %c1_135 = arith.constant 1 : index
    %c0_136 = arith.constant 0 : index
    %c0_137 = arith.constant 0 : index
    %386 = vector.load %arg7[%c1_135, %c0_136, %c0_137] : memref<4x1x128xf32, #tpu.memory_space<vmem>>, vector<1x1x128xf32>
    %387 = vector.shape_cast %386 : vector<1x1x128xf32> to vector<1x128xf32>
    %388 = vector.broadcast %387 : vector<1x128xf32> to vector<16x128xf32>
    %389 = arith.addf %385, %388 : vector<16x128xf32>
    %390 = arith.addf %240, %389 : vector<16x128xf32>
    %c1_138 = arith.constant 1 : index
    %c0_139 = arith.constant 0 : index
    %c0_140 = arith.constant 0 : index
    %391 = vector.load %arg8[%c1_138, %c0_139, %c0_140] : memref<4x1x128xf32, #tpu.memory_space<vmem>>, vector<1x1x128xf32>
    %392 = vector.shape_cast %391 : vector<1x1x128xf32> to vector<1x128xf32>
    %c1_141 = arith.constant 1 : index
    %c0_142 = arith.constant 0 : index
    %c0_143 = arith.constant 0 : index
    %393 = vector.load %arg9[%c1_141, %c0_142, %c0_143] : memref<4x1x128xf32, #tpu.memory_space<vmem>>, vector<1x1x128xf32>
    %394 = vector.shape_cast %393 : vector<1x1x128xf32> to vector<1x128xf32>
    %cst_144 = arith.constant dense<0.000000e+00> : vector<16xf32>
    %395 = vector.multi_reduction <add>, %390, %cst_144 [1] : vector<16x128xf32> to vector<16xf32>
    %396 = vector.shape_cast %395 : vector<16xf32> to vector<16x1xf32>
    %cst_145 = arith.constant 1.280000e+02 : f32
    %397 = vector.broadcast %cst_145 : f32 to vector<16x1xf32>
    %398 = arith.divf %396, %397 : vector<16x1xf32>
    %399 = vector.broadcast %398 : vector<16x1xf32> to vector<16x128xf32>
    %400 = arith.subf %390, %399 : vector<16x128xf32>
    %401 = arith.mulf %400, %400 : vector<16x128xf32>
    %cst_146 = arith.constant dense<0.000000e+00> : vector<16xf32>
    %402 = vector.multi_reduction <add>, %401, %cst_146 [1] : vector<16x128xf32> to vector<16xf32>
    %403 = vector.shape_cast %402 : vector<16xf32> to vector<16x1xf32>
    %cst_147 = arith.constant 1.280000e+02 : f32
    %404 = vector.broadcast %cst_147 : f32 to vector<16x1xf32>
    %405 = arith.divf %403, %404 : vector<16x1xf32>
    %406 = vector.broadcast %398 : vector<16x1xf32> to vector<16x128xf32>
    %407 = arith.subf %390, %406 : vector<16x128xf32>
    %cst_148 = arith.constant 9.99999996E-13 : f32
    %408 = vector.broadcast %cst_148 : f32 to vector<16x1xf32>
    %409 = arith.addf %405, %408 : vector<16x1xf32>
    %410 = math.rsqrt %409 : vector<16x1xf32>
    %411 = vector.broadcast %410 : vector<16x1xf32> to vector<16x128xf32>
    %412 = arith.mulf %407, %411 : vector<16x128xf32>
    %413 = vector.broadcast %392 : vector<1x128xf32> to vector<16x128xf32>
    %414 = arith.mulf %412, %413 : vector<16x128xf32>
    %415 = vector.broadcast %394 : vector<1x128xf32> to vector<16x128xf32>
    %416 = arith.addf %414, %415 : vector<16x128xf32>
    %417 = arith.truncf %416 : vector<16x128xf32> to vector<16x128xbf16>
    %c1_149 = arith.constant 1 : index
    %c0_150 = arith.constant 0 : index
    %c0_151 = arith.constant 0 : index
    %418 = vector.load %arg10[%c1_149, %c0_150, %c0_151] : memref<4x128x512xbf16, #tpu.memory_space<vmem>>, vector<1x128x512xbf16>
    %419 = vector.shape_cast %418 : vector<1x128x512xbf16> to vector<128x512xbf16>
    %cst_152 = arith.constant dense<0.000000e+00> : vector<16x512xf32>
    %420 = tpu.matmul %417, %419, %cst_152 {dimension_numbers = #tpu.dot_dimension_numbers<[1], [0], [0], [1], [0, 0, 1, 1], [], []>} : vector<16x128xbf16>, vector<128x512xbf16>, vector<16x512xf32> -> vector<16x512xf32>
    %c1_153 = arith.constant 1 : index
    %c0_154 = arith.constant 0 : index
    %c0_155 = arith.constant 0 : index
    %421 = vector.load %arg11[%c1_153, %c0_154, %c0_155] : memref<4x1x512xf32, #tpu.memory_space<vmem>>, vector<1x1x512xf32>
    %422 = vector.shape_cast %421 : vector<1x1x512xf32> to vector<1x512xf32>
    %423 = vector.broadcast %422 : vector<1x512xf32> to vector<16x512xf32>
    %424 = arith.addf %420, %423 : vector<16x512xf32>
    %425 = arith.mulf %424, %424 : vector<16x512xf32>
    %426 = arith.mulf %424, %425 : vector<16x512xf32>
    %cst_156 = arith.constant 4.471500e-02 : f32
    %427 = vector.broadcast %cst_156 : f32 to vector<16x512xf32>
    %428 = arith.mulf %427, %426 : vector<16x512xf32>
    %429 = arith.addf %424, %428 : vector<16x512xf32>
    %cst_157 = arith.constant 0.797884583 : f32
    %430 = vector.broadcast %cst_157 : f32 to vector<16x512xf32>
    %431 = arith.mulf %430, %429 : vector<16x512xf32>
    %432 = math.tanh %431 : vector<16x512xf32>
    %cst_158 = arith.constant 1.000000e+00 : f32
    %433 = vector.broadcast %cst_158 : f32 to vector<16x512xf32>
    %434 = arith.addf %433, %432 : vector<16x512xf32>
    %cst_159 = arith.constant 5.000000e-01 : f32
    %435 = vector.broadcast %cst_159 : f32 to vector<16x512xf32>
    %436 = arith.mulf %435, %434 : vector<16x512xf32>
    %437 = arith.mulf %424, %436 : vector<16x512xf32>
    %438 = arith.truncf %437 : vector<16x512xf32> to vector<16x512xbf16>
    %c1_160 = arith.constant 1 : index
    %c0_161 = arith.constant 0 : index
    %c0_162 = arith.constant 0 : index
    %439 = vector.load %arg12[%c1_160, %c0_161, %c0_162] : memref<4x512x128xbf16, #tpu.memory_space<vmem>>, vector<1x512x128xbf16>
    %440 = vector.shape_cast %439 : vector<1x512x128xbf16> to vector<512x128xbf16>
    %cst_163 = arith.constant dense<0.000000e+00> : vector<16x128xf32>
    %441 = tpu.matmul %438, %440, %cst_163 {dimension_numbers = #tpu.dot_dimension_numbers<[1], [0], [0], [1], [0, 0, 1, 1], [], []>} : vector<16x512xbf16>, vector<512x128xbf16>, vector<16x128xf32> -> vector<16x128xf32>
    %c1_164 = arith.constant 1 : index
    %c0_165 = arith.constant 0 : index
    %c0_166 = arith.constant 0 : index
    %442 = vector.load %arg13[%c1_164, %c0_165, %c0_166] : memref<4x1x128xf32, #tpu.memory_space<vmem>>, vector<1x1x128xf32>
    %443 = vector.shape_cast %442 : vector<1x1x128xf32> to vector<1x128xf32>
    %444 = vector.broadcast %443 : vector<1x128xf32> to vector<16x128xf32>
    %445 = arith.addf %441, %444 : vector<16x128xf32>
    %446 = arith.addf %416, %445 : vector<16x128xf32>
    %c1_167 = arith.constant 1 : index
    %c0_168 = arith.constant 0 : index
    %c0_169 = arith.constant 0 : index
    %447 = vector.load %arg14[%c1_167, %c0_168, %c0_169] : memref<4x1x128xf32, #tpu.memory_space<vmem>>, vector<1x1x128xf32>
    %448 = vector.shape_cast %447 : vector<1x1x128xf32> to vector<1x128xf32>
    %c1_170 = arith.constant 1 : index
    %c0_171 = arith.constant 0 : index
    %c0_172 = arith.constant 0 : index
    %449 = vector.load %arg15[%c1_170, %c0_171, %c0_172] : memref<4x1x128xf32, #tpu.memory_space<vmem>>, vector<1x1x128xf32>
    %450 = vector.shape_cast %449 : vector<1x1x128xf32> to vector<1x128xf32>
    %cst_173 = arith.constant dense<0.000000e+00> : vector<16xf32>
    %451 = vector.multi_reduction <add>, %446, %cst_173 [1] : vector<16x128xf32> to vector<16xf32>
    %452 = vector.shape_cast %451 : vector<16xf32> to vector<16x1xf32>
    %cst_174 = arith.constant 1.280000e+02 : f32
    %453 = vector.broadcast %cst_174 : f32 to vector<16x1xf32>
    %454 = arith.divf %452, %453 : vector<16x1xf32>
    %455 = vector.broadcast %454 : vector<16x1xf32> to vector<16x128xf32>
    %456 = arith.subf %446, %455 : vector<16x128xf32>
    %457 = arith.mulf %456, %456 : vector<16x128xf32>
    %cst_175 = arith.constant dense<0.000000e+00> : vector<16xf32>
    %458 = vector.multi_reduction <add>, %457, %cst_175 [1] : vector<16x128xf32> to vector<16xf32>
    %459 = vector.shape_cast %458 : vector<16xf32> to vector<16x1xf32>
    %cst_176 = arith.constant 1.280000e+02 : f32
    %460 = vector.broadcast %cst_176 : f32 to vector<16x1xf32>
    %461 = arith.divf %459, %460 : vector<16x1xf32>
    %462 = vector.broadcast %454 : vector<16x1xf32> to vector<16x128xf32>
    %463 = arith.subf %446, %462 : vector<16x128xf32>
    %cst_177 = arith.constant 9.99999996E-13 : f32
    %464 = vector.broadcast %cst_177 : f32 to vector<16x1xf32>
    %465 = arith.addf %461, %464 : vector<16x1xf32>
    %466 = math.rsqrt %465 : vector<16x1xf32>
    %467 = vector.broadcast %466 : vector<16x1xf32> to vector<16x128xf32>
    %468 = arith.mulf %463, %467 : vector<16x128xf32>
    %469 = vector.broadcast %448 : vector<1x128xf32> to vector<16x128xf32>
    %470 = arith.mulf %468, %469 : vector<16x128xf32>
    %471 = vector.broadcast %450 : vector<1x128xf32> to vector<16x128xf32>
    %472 = arith.addf %470, %471 : vector<16x128xf32>
    %473 = arith.truncf %472 : vector<16x128xf32> to vector<16x128xbf16>
    %c2 = arith.constant 2 : index
    %c0_178 = arith.constant 0 : index
    %c0_179 = arith.constant 0 : index
    %474 = vector.load %arg4[%c2, %c0_178, %c0_179] : memref<4x128x384xbf16, #tpu.memory_space<vmem>>, vector<1x128x384xbf16>
    %475 = vector.shape_cast %474 : vector<1x128x384xbf16> to vector<128x384xbf16>
    %cst_180 = arith.constant dense<0.000000e+00> : vector<16x384xf32>
    %476 = tpu.matmul %473, %475, %cst_180 {dimension_numbers = #tpu.dot_dimension_numbers<[1], [0], [0], [1], [0, 0, 1, 1], [], []>} : vector<16x128xbf16>, vector<128x384xbf16>, vector<16x384xf32> -> vector<16x384xf32>
    %c2_181 = arith.constant 2 : index
    %c0_182 = arith.constant 0 : index
    %c0_183 = arith.constant 0 : index
    %477 = vector.load %arg5[%c2_181, %c0_182, %c0_183] : memref<4x1x384xf32, #tpu.memory_space<vmem>>, vector<1x1x384xf32>
    %478 = vector.shape_cast %477 : vector<1x1x384xf32> to vector<1x384xf32>
    %479 = vector.broadcast %478 : vector<1x384xf32> to vector<16x384xf32>
    %480 = arith.addf %476, %479 : vector<16x384xf32>
    %481 = vector.extract_strided_slice %480 {offsets = [0, 0], sizes = [16, 128], strides = [1, 1]} : vector<16x384xf32> to vector<16x128xf32>
    %cst_184 = arith.constant 2.500000e-01 : f32
    %482 = vector.broadcast %cst_184 : f32 to vector<16x128xf32>
    %483 = arith.mulf %481, %482 : vector<16x128xf32>
    %484 = vector.extract_strided_slice %480 {offsets = [0, 128], sizes = [16, 128], strides = [1, 1]} : vector<16x384xf32> to vector<16x128xf32>
    %485 = vector.extract_strided_slice %480 {offsets = [0, 256], sizes = [16, 128], strides = [1, 1]} : vector<16x384xf32> to vector<16x128xf32>
    %486 = vector.shape_cast %483 : vector<16x128xf32> to vector<2x8x128xf32>
    %487 = arith.truncf %486 : vector<2x8x128xf32> to vector<2x8x128xbf16>
    %488 = vector.shape_cast %484 : vector<16x128xf32> to vector<2x8x128xf32>
    %489 = arith.truncf %488 : vector<2x8x128xf32> to vector<2x8x128xbf16>
    %490 = vector.shape_cast %485 : vector<16x128xf32> to vector<2x8x128xf32>
    %491 = arith.truncf %490 : vector<2x8x128xf32> to vector<2x8x128xbf16>
    %492 = vector.extract_strided_slice %487 {offsets = [0, 0, 0], sizes = [2, 8, 16], strides = [1, 1, 1]} : vector<2x8x128xbf16> to vector<2x8x16xbf16>
    %493 = vector.extract_strided_slice %489 {offsets = [0, 0, 0], sizes = [2, 8, 16], strides = [1, 1, 1]} : vector<2x8x128xbf16> to vector<2x8x16xbf16>
    %494 = vector.extract_strided_slice %491 {offsets = [0, 0, 0], sizes = [2, 8, 16], strides = [1, 1, 1]} : vector<2x8x128xbf16> to vector<2x8x16xbf16>
    "tpu.trace_start"() <{level = 10 : i32, message = "bqd,bkd->bqk"}> : () -> ()
    %cst_185 = arith.constant dense<0.000000e+00> : vector<2x8x8xf32>
    %495 = tpu.matmul %492, %493, %cst_185 {dimension_numbers = #tpu.dot_dimension_numbers<[2], [2], [1], [1], [0, 0, 0, 1, 1, 1], [0], [0]>} : vector<2x8x16xbf16>, vector<2x8x16xbf16>, vector<2x8x8xf32> -> vector<2x8x8xf32>
    "tpu.trace_stop"() : () -> ()
    %cst_186 = arith.constant dense<0xFF800000> : vector<2x8xf32>
    %496 = vector.multi_reduction <maximumf>, %495, %cst_186 [2] : vector<2x8x8xf32> to vector<2x8xf32>
    %497 = vector.shape_cast %496 : vector<2x8xf32> to vector<2x8x1xf32>
    %498 = vector.broadcast %497 : vector<2x8x1xf32> to vector<2x8x8xf32>
    %499 = arith.subf %495, %498 : vector<2x8x8xf32>
    %500 = math.exp %499 : vector<2x8x8xf32>
    %cst_187 = arith.constant dense<0.000000e+00> : vector<2x8xf32>
    %501 = vector.multi_reduction <add>, %500, %cst_187 [2] : vector<2x8x8xf32> to vector<2x8xf32>
    %502 = vector.shape_cast %501 : vector<2x8xf32> to vector<2x8x1xf32>
    %503 = vector.broadcast %502 : vector<2x8x1xf32> to vector<2x8x8xf32>
    %504 = arith.divf %500, %503 : vector<2x8x8xf32>
    %505 = arith.truncf %504 : vector<2x8x8xf32> to vector<2x8x8xbf16>
    "tpu.trace_start"() <{level = 10 : i32, message = "bqk,bkd->bqd"}> : () -> ()
    %cst_188 = arith.constant dense<0.000000e+00> : vector<2x8x16xf32>
    %506 = tpu.matmul %505, %494, %cst_188 {dimension_numbers = #tpu.dot_dimension_numbers<[2], [1], [1], [2], [0, 0, 0, 1, 1, 2], [0], [0]>} : vector<2x8x8xbf16>, vector<2x8x16xbf16>, vector<2x8x16xf32> -> vector<2x8x16xf32>
    "tpu.trace_stop"() : () -> ()
    %507 = vector.extract_strided_slice %487 {offsets = [0, 0, 16], sizes = [2, 8, 16], strides = [1, 1, 1]} : vector<2x8x128xbf16> to vector<2x8x16xbf16>
    %508 = vector.extract_strided_slice %489 {offsets = [0, 0, 16], sizes = [2, 8, 16], strides = [1, 1, 1]} : vector<2x8x128xbf16> to vector<2x8x16xbf16>
    %509 = vector.extract_strided_slice %491 {offsets = [0, 0, 16], sizes = [2, 8, 16], strides = [1, 1, 1]} : vector<2x8x128xbf16> to vector<2x8x16xbf16>
    "tpu.trace_start"() <{level = 10 : i32, message = "bqd,bkd->bqk"}> : () -> ()
    %cst_189 = arith.constant dense<0.000000e+00> : vector<2x8x8xf32>
    %510 = tpu.matmul %507, %508, %cst_189 {dimension_numbers = #tpu.dot_dimension_numbers<[2], [2], [1], [1], [0, 0, 0, 1, 1, 1], [0], [0]>} : vector<2x8x16xbf16>, vector<2x8x16xbf16>, vector<2x8x8xf32> -> vector<2x8x8xf32>
    "tpu.trace_stop"() : () -> ()
    %cst_190 = arith.constant dense<0xFF800000> : vector<2x8xf32>
    %511 = vector.multi_reduction <maximumf>, %510, %cst_190 [2] : vector<2x8x8xf32> to vector<2x8xf32>
    %512 = vector.shape_cast %511 : vector<2x8xf32> to vector<2x8x1xf32>
    %513 = vector.broadcast %512 : vector<2x8x1xf32> to vector<2x8x8xf32>
    %514 = arith.subf %510, %513 : vector<2x8x8xf32>
    %515 = math.exp %514 : vector<2x8x8xf32>
    %cst_191 = arith.constant dense<0.000000e+00> : vector<2x8xf32>
    %516 = vector.multi_reduction <add>, %515, %cst_191 [2] : vector<2x8x8xf32> to vector<2x8xf32>
    %517 = vector.shape_cast %516 : vector<2x8xf32> to vector<2x8x1xf32>
    %518 = vector.broadcast %517 : vector<2x8x1xf32> to vector<2x8x8xf32>
    %519 = arith.divf %515, %518 : vector<2x8x8xf32>
    %520 = arith.truncf %519 : vector<2x8x8xf32> to vector<2x8x8xbf16>
    "tpu.trace_start"() <{level = 10 : i32, message = "bqk,bkd->bqd"}> : () -> ()
    %cst_192 = arith.constant dense<0.000000e+00> : vector<2x8x16xf32>
    %521 = tpu.matmul %520, %509, %cst_192 {dimension_numbers = #tpu.dot_dimension_numbers<[2], [1], [1], [2], [0, 0, 0, 1, 1, 2], [0], [0]>} : vector<2x8x8xbf16>, vector<2x8x16xbf16>, vector<2x8x16xf32> -> vector<2x8x16xf32>
    "tpu.trace_stop"() : () -> ()
    %522 = vector.extract_strided_slice %487 {offsets = [0, 0, 32], sizes = [2, 8, 16], strides = [1, 1, 1]} : vector<2x8x128xbf16> to vector<2x8x16xbf16>
    %523 = vector.extract_strided_slice %489 {offsets = [0, 0, 32], sizes = [2, 8, 16], strides = [1, 1, 1]} : vector<2x8x128xbf16> to vector<2x8x16xbf16>
    %524 = vector.extract_strided_slice %491 {offsets = [0, 0, 32], sizes = [2, 8, 16], strides = [1, 1, 1]} : vector<2x8x128xbf16> to vector<2x8x16xbf16>
    "tpu.trace_start"() <{level = 10 : i32, message = "bqd,bkd->bqk"}> : () -> ()
    %cst_193 = arith.constant dense<0.000000e+00> : vector<2x8x8xf32>
    %525 = tpu.matmul %522, %523, %cst_193 {dimension_numbers = #tpu.dot_dimension_numbers<[2], [2], [1], [1], [0, 0, 0, 1, 1, 1], [0], [0]>} : vector<2x8x16xbf16>, vector<2x8x16xbf16>, vector<2x8x8xf32> -> vector<2x8x8xf32>
    "tpu.trace_stop"() : () -> ()
    %cst_194 = arith.constant dense<0xFF800000> : vector<2x8xf32>
    %526 = vector.multi_reduction <maximumf>, %525, %cst_194 [2] : vector<2x8x8xf32> to vector<2x8xf32>
    %527 = vector.shape_cast %526 : vector<2x8xf32> to vector<2x8x1xf32>
    %528 = vector.broadcast %527 : vector<2x8x1xf32> to vector<2x8x8xf32>
    %529 = arith.subf %525, %528 : vector<2x8x8xf32>
    %530 = math.exp %529 : vector<2x8x8xf32>
    %cst_195 = arith.constant dense<0.000000e+00> : vector<2x8xf32>
    %531 = vector.multi_reduction <add>, %530, %cst_195 [2] : vector<2x8x8xf32> to vector<2x8xf32>
    %532 = vector.shape_cast %531 : vector<2x8xf32> to vector<2x8x1xf32>
    %533 = vector.broadcast %532 : vector<2x8x1xf32> to vector<2x8x8xf32>
    %534 = arith.divf %530, %533 : vector<2x8x8xf32>
    %535 = arith.truncf %534 : vector<2x8x8xf32> to vector<2x8x8xbf16>
    "tpu.trace_start"() <{level = 10 : i32, message = "bqk,bkd->bqd"}> : () -> ()
    %cst_196 = arith.constant dense<0.000000e+00> : vector<2x8x16xf32>
    %536 = tpu.matmul %535, %524, %cst_196 {dimension_numbers = #tpu.dot_dimension_numbers<[2], [1], [1], [2], [0, 0, 0, 1, 1, 2], [0], [0]>} : vector<2x8x8xbf16>, vector<2x8x16xbf16>, vector<2x8x16xf32> -> vector<2x8x16xf32>
    "tpu.trace_stop"() : () -> ()
    %537 = vector.extract_strided_slice %487 {offsets = [0, 0, 48], sizes = [2, 8, 16], strides = [1, 1, 1]} : vector<2x8x128xbf16> to vector<2x8x16xbf16>
    %538 = vector.extract_strided_slice %489 {offsets = [0, 0, 48], sizes = [2, 8, 16], strides = [1, 1, 1]} : vector<2x8x128xbf16> to vector<2x8x16xbf16>
    %539 = vector.extract_strided_slice %491 {offsets = [0, 0, 48], sizes = [2, 8, 16], strides = [1, 1, 1]} : vector<2x8x128xbf16> to vector<2x8x16xbf16>
    "tpu.trace_start"() <{level = 10 : i32, message = "bqd,bkd->bqk"}> : () -> ()
    %cst_197 = arith.constant dense<0.000000e+00> : vector<2x8x8xf32>
    %540 = tpu.matmul %537, %538, %cst_197 {dimension_numbers = #tpu.dot_dimension_numbers<[2], [2], [1], [1], [0, 0, 0, 1, 1, 1], [0], [0]>} : vector<2x8x16xbf16>, vector<2x8x16xbf16>, vector<2x8x8xf32> -> vector<2x8x8xf32>
    "tpu.trace_stop"() : () -> ()
    %cst_198 = arith.constant dense<0xFF800000> : vector<2x8xf32>
    %541 = vector.multi_reduction <maximumf>, %540, %cst_198 [2] : vector<2x8x8xf32> to vector<2x8xf32>
    %542 = vector.shape_cast %541 : vector<2x8xf32> to vector<2x8x1xf32>
    %543 = vector.broadcast %542 : vector<2x8x1xf32> to vector<2x8x8xf32>
    %544 = arith.subf %540, %543 : vector<2x8x8xf32>
    %545 = math.exp %544 : vector<2x8x8xf32>
    %cst_199 = arith.constant dense<0.000000e+00> : vector<2x8xf32>
    %546 = vector.multi_reduction <add>, %545, %cst_199 [2] : vector<2x8x8xf32> to vector<2x8xf32>
    %547 = vector.shape_cast %546 : vector<2x8xf32> to vector<2x8x1xf32>
    %548 = vector.broadcast %547 : vector<2x8x1xf32> to vector<2x8x8xf32>
    %549 = arith.divf %545, %548 : vector<2x8x8xf32>
    %550 = arith.truncf %549 : vector<2x8x8xf32> to vector<2x8x8xbf16>
    "tpu.trace_start"() <{level = 10 : i32, message = "bqk,bkd->bqd"}> : () -> ()
    %cst_200 = arith.constant dense<0.000000e+00> : vector<2x8x16xf32>
    %551 = tpu.matmul %550, %539, %cst_200 {dimension_numbers = #tpu.dot_dimension_numbers<[2], [1], [1], [2], [0, 0, 0, 1, 1, 2], [0], [0]>} : vector<2x8x8xbf16>, vector<2x8x16xbf16>, vector<2x8x16xf32> -> vector<2x8x16xf32>
    "tpu.trace_stop"() : () -> ()
    %552 = vector.extract_strided_slice %487 {offsets = [0, 0, 64], sizes = [2, 8, 16], strides = [1, 1, 1]} : vector<2x8x128xbf16> to vector<2x8x16xbf16>
    %553 = vector.extract_strided_slice %489 {offsets = [0, 0, 64], sizes = [2, 8, 16], strides = [1, 1, 1]} : vector<2x8x128xbf16> to vector<2x8x16xbf16>
    %554 = vector.extract_strided_slice %491 {offsets = [0, 0, 64], sizes = [2, 8, 16], strides = [1, 1, 1]} : vector<2x8x128xbf16> to vector<2x8x16xbf16>
    "tpu.trace_start"() <{level = 10 : i32, message = "bqd,bkd->bqk"}> : () -> ()
    %cst_201 = arith.constant dense<0.000000e+00> : vector<2x8x8xf32>
    %555 = tpu.matmul %552, %553, %cst_201 {dimension_numbers = #tpu.dot_dimension_numbers<[2], [2], [1], [1], [0, 0, 0, 1, 1, 1], [0], [0]>} : vector<2x8x16xbf16>, vector<2x8x16xbf16>, vector<2x8x8xf32> -> vector<2x8x8xf32>
    "tpu.trace_stop"() : () -> ()
    %cst_202 = arith.constant dense<0xFF800000> : vector<2x8xf32>
    %556 = vector.multi_reduction <maximumf>, %555, %cst_202 [2] : vector<2x8x8xf32> to vector<2x8xf32>
    %557 = vector.shape_cast %556 : vector<2x8xf32> to vector<2x8x1xf32>
    %558 = vector.broadcast %557 : vector<2x8x1xf32> to vector<2x8x8xf32>
    %559 = arith.subf %555, %558 : vector<2x8x8xf32>
    %560 = math.exp %559 : vector<2x8x8xf32>
    %cst_203 = arith.constant dense<0.000000e+00> : vector<2x8xf32>
    %561 = vector.multi_reduction <add>, %560, %cst_203 [2] : vector<2x8x8xf32> to vector<2x8xf32>
    %562 = vector.shape_cast %561 : vector<2x8xf32> to vector<2x8x1xf32>
    %563 = vector.broadcast %562 : vector<2x8x1xf32> to vector<2x8x8xf32>
    %564 = arith.divf %560, %563 : vector<2x8x8xf32>
    %565 = arith.truncf %564 : vector<2x8x8xf32> to vector<2x8x8xbf16>
    "tpu.trace_start"() <{level = 10 : i32, message = "bqk,bkd->bqd"}> : () -> ()
    %cst_204 = arith.constant dense<0.000000e+00> : vector<2x8x16xf32>
    %566 = tpu.matmul %565, %554, %cst_204 {dimension_numbers = #tpu.dot_dimension_numbers<[2], [1], [1], [2], [0, 0, 0, 1, 1, 2], [0], [0]>} : vector<2x8x8xbf16>, vector<2x8x16xbf16>, vector<2x8x16xf32> -> vector<2x8x16xf32>
    "tpu.trace_stop"() : () -> ()
    %567 = vector.extract_strided_slice %487 {offsets = [0, 0, 80], sizes = [2, 8, 16], strides = [1, 1, 1]} : vector<2x8x128xbf16> to vector<2x8x16xbf16>
    %568 = vector.extract_strided_slice %489 {offsets = [0, 0, 80], sizes = [2, 8, 16], strides = [1, 1, 1]} : vector<2x8x128xbf16> to vector<2x8x16xbf16>
    %569 = vector.extract_strided_slice %491 {offsets = [0, 0, 80], sizes = [2, 8, 16], strides = [1, 1, 1]} : vector<2x8x128xbf16> to vector<2x8x16xbf16>
    "tpu.trace_start"() <{level = 10 : i32, message = "bqd,bkd->bqk"}> : () -> ()
    %cst_205 = arith.constant dense<0.000000e+00> : vector<2x8x8xf32>
    %570 = tpu.matmul %567, %568, %cst_205 {dimension_numbers = #tpu.dot_dimension_numbers<[2], [2], [1], [1], [0, 0, 0, 1, 1, 1], [0], [0]>} : vector<2x8x16xbf16>, vector<2x8x16xbf16>, vector<2x8x8xf32> -> vector<2x8x8xf32>
    "tpu.trace_stop"() : () -> ()
    %cst_206 = arith.constant dense<0xFF800000> : vector<2x8xf32>
    %571 = vector.multi_reduction <maximumf>, %570, %cst_206 [2] : vector<2x8x8xf32> to vector<2x8xf32>
    %572 = vector.shape_cast %571 : vector<2x8xf32> to vector<2x8x1xf32>
    %573 = vector.broadcast %572 : vector<2x8x1xf32> to vector<2x8x8xf32>
    %574 = arith.subf %570, %573 : vector<2x8x8xf32>
    %575 = math.exp %574 : vector<2x8x8xf32>
    %cst_207 = arith.constant dense<0.000000e+00> : vector<2x8xf32>
    %576 = vector.multi_reduction <add>, %575, %cst_207 [2] : vector<2x8x8xf32> to vector<2x8xf32>
    %577 = vector.shape_cast %576 : vector<2x8xf32> to vector<2x8x1xf32>
    %578 = vector.broadcast %577 : vector<2x8x1xf32> to vector<2x8x8xf32>
    %579 = arith.divf %575, %578 : vector<2x8x8xf32>
    %580 = arith.truncf %579 : vector<2x8x8xf32> to vector<2x8x8xbf16>
    "tpu.trace_start"() <{level = 10 : i32, message = "bqk,bkd->bqd"}> : () -> ()
    %cst_208 = arith.constant dense<0.000000e+00> : vector<2x8x16xf32>
    %581 = tpu.matmul %580, %569, %cst_208 {dimension_numbers = #tpu.dot_dimension_numbers<[2], [1], [1], [2], [0, 0, 0, 1, 1, 2], [0], [0]>} : vector<2x8x8xbf16>, vector<2x8x16xbf16>, vector<2x8x16xf32> -> vector<2x8x16xf32>
    "tpu.trace_stop"() : () -> ()
    %582 = vector.extract_strided_slice %487 {offsets = [0, 0, 96], sizes = [2, 8, 16], strides = [1, 1, 1]} : vector<2x8x128xbf16> to vector<2x8x16xbf16>
    %583 = vector.extract_strided_slice %489 {offsets = [0, 0, 96], sizes = [2, 8, 16], strides = [1, 1, 1]} : vector<2x8x128xbf16> to vector<2x8x16xbf16>
    %584 = vector.extract_strided_slice %491 {offsets = [0, 0, 96], sizes = [2, 8, 16], strides = [1, 1, 1]} : vector<2x8x128xbf16> to vector<2x8x16xbf16>
    "tpu.trace_start"() <{level = 10 : i32, message = "bqd,bkd->bqk"}> : () -> ()
    %cst_209 = arith.constant dense<0.000000e+00> : vector<2x8x8xf32>
    %585 = tpu.matmul %582, %583, %cst_209 {dimension_numbers = #tpu.dot_dimension_numbers<[2], [2], [1], [1], [0, 0, 0, 1, 1, 1], [0], [0]>} : vector<2x8x16xbf16>, vector<2x8x16xbf16>, vector<2x8x8xf32> -> vector<2x8x8xf32>
    "tpu.trace_stop"() : () -> ()
    %cst_210 = arith.constant dense<0xFF800000> : vector<2x8xf32>
    %586 = vector.multi_reduction <maximumf>, %585, %cst_210 [2] : vector<2x8x8xf32> to vector<2x8xf32>
    %587 = vector.shape_cast %586 : vector<2x8xf32> to vector<2x8x1xf32>
    %588 = vector.broadcast %587 : vector<2x8x1xf32> to vector<2x8x8xf32>
    %589 = arith.subf %585, %588 : vector<2x8x8xf32>
    %590 = math.exp %589 : vector<2x8x8xf32>
    %cst_211 = arith.constant dense<0.000000e+00> : vector<2x8xf32>
    %591 = vector.multi_reduction <add>, %590, %cst_211 [2] : vector<2x8x8xf32> to vector<2x8xf32>
    %592 = vector.shape_cast %591 : vector<2x8xf32> to vector<2x8x1xf32>
    %593 = vector.broadcast %592 : vector<2x8x1xf32> to vector<2x8x8xf32>
    %594 = arith.divf %590, %593 : vector<2x8x8xf32>
    %595 = arith.truncf %594 : vector<2x8x8xf32> to vector<2x8x8xbf16>
    "tpu.trace_start"() <{level = 10 : i32, message = "bqk,bkd->bqd"}> : () -> ()
    %cst_212 = arith.constant dense<0.000000e+00> : vector<2x8x16xf32>
    %596 = tpu.matmul %595, %584, %cst_212 {dimension_numbers = #tpu.dot_dimension_numbers<[2], [1], [1], [2], [0, 0, 0, 1, 1, 2], [0], [0]>} : vector<2x8x8xbf16>, vector<2x8x16xbf16>, vector<2x8x16xf32> -> vector<2x8x16xf32>
    "tpu.trace_stop"() : () -> ()
    %597 = vector.extract_strided_slice %487 {offsets = [0, 0, 112], sizes = [2, 8, 16], strides = [1, 1, 1]} : vector<2x8x128xbf16> to vector<2x8x16xbf16>
    %598 = vector.extract_strided_slice %489 {offsets = [0, 0, 112], sizes = [2, 8, 16], strides = [1, 1, 1]} : vector<2x8x128xbf16> to vector<2x8x16xbf16>
    %599 = vector.extract_strided_slice %491 {offsets = [0, 0, 112], sizes = [2, 8, 16], strides = [1, 1, 1]} : vector<2x8x128xbf16> to vector<2x8x16xbf16>
    "tpu.trace_start"() <{level = 10 : i32, message = "bqd,bkd->bqk"}> : () -> ()
    %cst_213 = arith.constant dense<0.000000e+00> : vector<2x8x8xf32>
    %600 = tpu.matmul %597, %598, %cst_213 {dimension_numbers = #tpu.dot_dimension_numbers<[2], [2], [1], [1], [0, 0, 0, 1, 1, 1], [0], [0]>} : vector<2x8x16xbf16>, vector<2x8x16xbf16>, vector<2x8x8xf32> -> vector<2x8x8xf32>
    "tpu.trace_stop"() : () -> ()
    %cst_214 = arith.constant dense<0xFF800000> : vector<2x8xf32>
    %601 = vector.multi_reduction <maximumf>, %600, %cst_214 [2] : vector<2x8x8xf32> to vector<2x8xf32>
    %602 = vector.shape_cast %601 : vector<2x8xf32> to vector<2x8x1xf32>
    %603 = vector.broadcast %602 : vector<2x8x1xf32> to vector<2x8x8xf32>
    %604 = arith.subf %600, %603 : vector<2x8x8xf32>
    %605 = math.exp %604 : vector<2x8x8xf32>
    %cst_215 = arith.constant dense<0.000000e+00> : vector<2x8xf32>
    %606 = vector.multi_reduction <add>, %605, %cst_215 [2] : vector<2x8x8xf32> to vector<2x8xf32>
    %607 = vector.shape_cast %606 : vector<2x8xf32> to vector<2x8x1xf32>
    %608 = vector.broadcast %607 : vector<2x8x1xf32> to vector<2x8x8xf32>
    %609 = arith.divf %605, %608 : vector<2x8x8xf32>
    %610 = arith.truncf %609 : vector<2x8x8xf32> to vector<2x8x8xbf16>
    "tpu.trace_start"() <{level = 10 : i32, message = "bqk,bkd->bqd"}> : () -> ()
    %cst_216 = arith.constant dense<0.000000e+00> : vector<2x8x16xf32>
    %611 = tpu.matmul %610, %599, %cst_216 {dimension_numbers = #tpu.dot_dimension_numbers<[2], [1], [1], [2], [0, 0, 0, 1, 1, 2], [0], [0]>} : vector<2x8x8xbf16>, vector<2x8x16xbf16>, vector<2x8x16xf32> -> vector<2x8x16xf32>
    "tpu.trace_stop"() : () -> ()
    %612 = tpu.concatenate %506, %521, %536, %551, %566, %581, %596, %611 in 2 : vector<2x8x16xf32>, vector<2x8x16xf32>, vector<2x8x16xf32>, vector<2x8x16xf32>, vector<2x8x16xf32>, vector<2x8x16xf32>, vector<2x8x16xf32>, vector<2x8x16xf32> -> vector<2x8x128xf32>
    %613 = vector.shape_cast %612 : vector<2x8x128xf32> to vector<16x128xf32>
    %614 = arith.truncf %613 : vector<16x128xf32> to vector<16x128xbf16>
    %c2_217 = arith.constant 2 : index
    %c0_218 = arith.constant 0 : index
    %c0_219 = arith.constant 0 : index
    %615 = vector.load %arg6[%c2_217, %c0_218, %c0_219] : memref<4x128x128xbf16, #tpu.memory_space<vmem>>, vector<1x128x128xbf16>
    %616 = vector.shape_cast %615 : vector<1x128x128xbf16> to vector<128x128xbf16>
    %cst_220 = arith.constant dense<0.000000e+00> : vector<16x128xf32>
    %617 = tpu.matmul %614, %616, %cst_220 {dimension_numbers = #tpu.dot_dimension_numbers<[1], [0], [0], [1], [0, 0, 1, 1], [], []>} : vector<16x128xbf16>, vector<128x128xbf16>, vector<16x128xf32> -> vector<16x128xf32>
    %c2_221 = arith.constant 2 : index
    %c0_222 = arith.constant 0 : index
    %c0_223 = arith.constant 0 : index
    %618 = vector.load %arg7[%c2_221, %c0_222, %c0_223] : memref<4x1x128xf32, #tpu.memory_space<vmem>>, vector<1x1x128xf32>
    %619 = vector.shape_cast %618 : vector<1x1x128xf32> to vector<1x128xf32>
    %620 = vector.broadcast %619 : vector<1x128xf32> to vector<16x128xf32>
    %621 = arith.addf %617, %620 : vector<16x128xf32>
    %622 = arith.addf %472, %621 : vector<16x128xf32>
    %c2_224 = arith.constant 2 : index
    %c0_225 = arith.constant 0 : index
    %c0_226 = arith.constant 0 : index
    %623 = vector.load %arg8[%c2_224, %c0_225, %c0_226] : memref<4x1x128xf32, #tpu.memory_space<vmem>>, vector<1x1x128xf32>
    %624 = vector.shape_cast %623 : vector<1x1x128xf32> to vector<1x128xf32>
    %c2_227 = arith.constant 2 : index
    %c0_228 = arith.constant 0 : index
    %c0_229 = arith.constant 0 : index
    %625 = vector.load %arg9[%c2_227, %c0_228, %c0_229] : memref<4x1x128xf32, #tpu.memory_space<vmem>>, vector<1x1x128xf32>
    %626 = vector.shape_cast %625 : vector<1x1x128xf32> to vector<1x128xf32>
    %cst_230 = arith.constant dense<0.000000e+00> : vector<16xf32>
    %627 = vector.multi_reduction <add>, %622, %cst_230 [1] : vector<16x128xf32> to vector<16xf32>
    %628 = vector.shape_cast %627 : vector<16xf32> to vector<16x1xf32>
    %cst_231 = arith.constant 1.280000e+02 : f32
    %629 = vector.broadcast %cst_231 : f32 to vector<16x1xf32>
    %630 = arith.divf %628, %629 : vector<16x1xf32>
    %631 = vector.broadcast %630 : vector<16x1xf32> to vector<16x128xf32>
    %632 = arith.subf %622, %631 : vector<16x128xf32>
    %633 = arith.mulf %632, %632 : vector<16x128xf32>
    %cst_232 = arith.constant dense<0.000000e+00> : vector<16xf32>
    %634 = vector.multi_reduction <add>, %633, %cst_232 [1] : vector<16x128xf32> to vector<16xf32>
    %635 = vector.shape_cast %634 : vector<16xf32> to vector<16x1xf32>
    %cst_233 = arith.constant 1.280000e+02 : f32
    %636 = vector.broadcast %cst_233 : f32 to vector<16x1xf32>
    %637 = arith.divf %635, %636 : vector<16x1xf32>
    %638 = vector.broadcast %630 : vector<16x1xf32> to vector<16x128xf32>
    %639 = arith.subf %622, %638 : vector<16x128xf32>
    %cst_234 = arith.constant 9.99999996E-13 : f32
    %640 = vector.broadcast %cst_234 : f32 to vector<16x1xf32>
    %641 = arith.addf %637, %640 : vector<16x1xf32>
    %642 = math.rsqrt %641 : vector<16x1xf32>
    %643 = vector.broadcast %642 : vector<16x1xf32> to vector<16x128xf32>
    %644 = arith.mulf %639, %643 : vector<16x128xf32>
    %645 = vector.broadcast %624 : vector<1x128xf32> to vector<16x128xf32>
    %646 = arith.mulf %644, %645 : vector<16x128xf32>
    %647 = vector.broadcast %626 : vector<1x128xf32> to vector<16x128xf32>
    %648 = arith.addf %646, %647 : vector<16x128xf32>
    %649 = arith.truncf %648 : vector<16x128xf32> to vector<16x128xbf16>
    %c2_235 = arith.constant 2 : index
    %c0_236 = arith.constant 0 : index
    %c0_237 = arith.constant 0 : index
    %650 = vector.load %arg10[%c2_235, %c0_236, %c0_237] : memref<4x128x512xbf16, #tpu.memory_space<vmem>>, vector<1x128x512xbf16>
    %651 = vector.shape_cast %650 : vector<1x128x512xbf16> to vector<128x512xbf16>
    %cst_238 = arith.constant dense<0.000000e+00> : vector<16x512xf32>
    %652 = tpu.matmul %649, %651, %cst_238 {dimension_numbers = #tpu.dot_dimension_numbers<[1], [0], [0], [1], [0, 0, 1, 1], [], []>} : vector<16x128xbf16>, vector<128x512xbf16>, vector<16x512xf32> -> vector<16x512xf32>
    %c2_239 = arith.constant 2 : index
    %c0_240 = arith.constant 0 : index
    %c0_241 = arith.constant 0 : index
    %653 = vector.load %arg11[%c2_239, %c0_240, %c0_241] : memref<4x1x512xf32, #tpu.memory_space<vmem>>, vector<1x1x512xf32>
    %654 = vector.shape_cast %653 : vector<1x1x512xf32> to vector<1x512xf32>
    %655 = vector.broadcast %654 : vector<1x512xf32> to vector<16x512xf32>
    %656 = arith.addf %652, %655 : vector<16x512xf32>
    %657 = arith.mulf %656, %656 : vector<16x512xf32>
    %658 = arith.mulf %656, %657 : vector<16x512xf32>
    %cst_242 = arith.constant 4.471500e-02 : f32
    %659 = vector.broadcast %cst_242 : f32 to vector<16x512xf32>
    %660 = arith.mulf %659, %658 : vector<16x512xf32>
    %661 = arith.addf %656, %660 : vector<16x512xf32>
    %cst_243 = arith.constant 0.797884583 : f32
    %662 = vector.broadcast %cst_243 : f32 to vector<16x512xf32>
    %663 = arith.mulf %662, %661 : vector<16x512xf32>
    %664 = math.tanh %663 : vector<16x512xf32>
    %cst_244 = arith.constant 1.000000e+00 : f32
    %665 = vector.broadcast %cst_244 : f32 to vector<16x512xf32>
    %666 = arith.addf %665, %664 : vector<16x512xf32>
    %cst_245 = arith.constant 5.000000e-01 : f32
    %667 = vector.broadcast %cst_245 : f32 to vector<16x512xf32>
    %668 = arith.mulf %667, %666 : vector<16x512xf32>
    %669 = arith.mulf %656, %668 : vector<16x512xf32>
    %670 = arith.truncf %669 : vector<16x512xf32> to vector<16x512xbf16>
    %c2_246 = arith.constant 2 : index
    %c0_247 = arith.constant 0 : index
    %c0_248 = arith.constant 0 : index
    %671 = vector.load %arg12[%c2_246, %c0_247, %c0_248] : memref<4x512x128xbf16, #tpu.memory_space<vmem>>, vector<1x512x128xbf16>
    %672 = vector.shape_cast %671 : vector<1x512x128xbf16> to vector<512x128xbf16>
    %cst_249 = arith.constant dense<0.000000e+00> : vector<16x128xf32>
    %673 = tpu.matmul %670, %672, %cst_249 {dimension_numbers = #tpu.dot_dimension_numbers<[1], [0], [0], [1], [0, 0, 1, 1], [], []>} : vector<16x512xbf16>, vector<512x128xbf16>, vector<16x128xf32> -> vector<16x128xf32>
    %c2_250 = arith.constant 2 : index
    %c0_251 = arith.constant 0 : index
    %c0_252 = arith.constant 0 : index
    %674 = vector.load %arg13[%c2_250, %c0_251, %c0_252] : memref<4x1x128xf32, #tpu.memory_space<vmem>>, vector<1x1x128xf32>
    %675 = vector.shape_cast %674 : vector<1x1x128xf32> to vector<1x128xf32>
    %676 = vector.broadcast %675 : vector<1x128xf32> to vector<16x128xf32>
    %677 = arith.addf %673, %676 : vector<16x128xf32>
    %678 = arith.addf %648, %677 : vector<16x128xf32>
    %c2_253 = arith.constant 2 : index
    %c0_254 = arith.constant 0 : index
    %c0_255 = arith.constant 0 : index
    %679 = vector.load %arg14[%c2_253, %c0_254, %c0_255] : memref<4x1x128xf32, #tpu.memory_space<vmem>>, vector<1x1x128xf32>
    %680 = vector.shape_cast %679 : vector<1x1x128xf32> to vector<1x128xf32>
    %c2_256 = arith.constant 2 : index
    %c0_257 = arith.constant 0 : index
    %c0_258 = arith.constant 0 : index
    %681 = vector.load %arg15[%c2_256, %c0_257, %c0_258] : memref<4x1x128xf32, #tpu.memory_space<vmem>>, vector<1x1x128xf32>
    %682 = vector.shape_cast %681 : vector<1x1x128xf32> to vector<1x128xf32>
    %cst_259 = arith.constant dense<0.000000e+00> : vector<16xf32>
    %683 = vector.multi_reduction <add>, %678, %cst_259 [1] : vector<16x128xf32> to vector<16xf32>
    %684 = vector.shape_cast %683 : vector<16xf32> to vector<16x1xf32>
    %cst_260 = arith.constant 1.280000e+02 : f32
    %685 = vector.broadcast %cst_260 : f32 to vector<16x1xf32>
    %686 = arith.divf %684, %685 : vector<16x1xf32>
    %687 = vector.broadcast %686 : vector<16x1xf32> to vector<16x128xf32>
    %688 = arith.subf %678, %687 : vector<16x128xf32>
    %689 = arith.mulf %688, %688 : vector<16x128xf32>
    %cst_261 = arith.constant dense<0.000000e+00> : vector<16xf32>
    %690 = vector.multi_reduction <add>, %689, %cst_261 [1] : vector<16x128xf32> to vector<16xf32>
    %691 = vector.shape_cast %690 : vector<16xf32> to vector<16x1xf32>
    %cst_262 = arith.constant 1.280000e+02 : f32
    %692 = vector.broadcast %cst_262 : f32 to vector<16x1xf32>
    %693 = arith.divf %691, %692 : vector<16x1xf32>
    %694 = vector.broadcast %686 : vector<16x1xf32> to vector<16x128xf32>
    %695 = arith.subf %678, %694 : vector<16x128xf32>
    %cst_263 = arith.constant 9.99999996E-13 : f32
    %696 = vector.broadcast %cst_263 : f32 to vector<16x1xf32>
    %697 = arith.addf %693, %696 : vector<16x1xf32>
    %698 = math.rsqrt %697 : vector<16x1xf32>
    %699 = vector.broadcast %698 : vector<16x1xf32> to vector<16x128xf32>
    %700 = arith.mulf %695, %699 : vector<16x128xf32>
    %701 = vector.broadcast %680 : vector<1x128xf32> to vector<16x128xf32>
    %702 = arith.mulf %700, %701 : vector<16x128xf32>
    %703 = vector.broadcast %682 : vector<1x128xf32> to vector<16x128xf32>
    %704 = arith.addf %702, %703 : vector<16x128xf32>
    %705 = arith.truncf %704 : vector<16x128xf32> to vector<16x128xbf16>
    %c3 = arith.constant 3 : index
    %c0_264 = arith.constant 0 : index
    %c0_265 = arith.constant 0 : index
    %706 = vector.load %arg4[%c3, %c0_264, %c0_265] : memref<4x128x384xbf16, #tpu.memory_space<vmem>>, vector<1x128x384xbf16>
    %707 = vector.shape_cast %706 : vector<1x128x384xbf16> to vector<128x384xbf16>
    %cst_266 = arith.constant dense<0.000000e+00> : vector<16x384xf32>
    %708 = tpu.matmul %705, %707, %cst_266 {dimension_numbers = #tpu.dot_dimension_numbers<[1], [0], [0], [1], [0, 0, 1, 1], [], []>} : vector<16x128xbf16>, vector<128x384xbf16>, vector<16x384xf32> -> vector<16x384xf32>
    %c3_267 = arith.constant 3 : index
    %c0_268 = arith.constant 0 : index
    %c0_269 = arith.constant 0 : index
    %709 = vector.load %arg5[%c3_267, %c0_268, %c0_269] : memref<4x1x384xf32, #tpu.memory_space<vmem>>, vector<1x1x384xf32>
    %710 = vector.shape_cast %709 : vector<1x1x384xf32> to vector<1x384xf32>
    %711 = vector.broadcast %710 : vector<1x384xf32> to vector<16x384xf32>
    %712 = arith.addf %708, %711 : vector<16x384xf32>
    %713 = vector.extract_strided_slice %712 {offsets = [0, 0], sizes = [16, 128], strides = [1, 1]} : vector<16x384xf32> to vector<16x128xf32>
    %cst_270 = arith.constant 2.500000e-01 : f32
    %714 = vector.broadcast %cst_270 : f32 to vector<16x128xf32>
    %715 = arith.mulf %713, %714 : vector<16x128xf32>
    %716 = vector.extract_strided_slice %712 {offsets = [0, 128], sizes = [16, 128], strides = [1, 1]} : vector<16x384xf32> to vector<16x128xf32>
    %717 = vector.extract_strided_slice %712 {offsets = [0, 256], sizes = [16, 128], strides = [1, 1]} : vector<16x384xf32> to vector<16x128xf32>
    %718 = vector.shape_cast %715 : vector<16x128xf32> to vector<2x8x128xf32>
    %719 = arith.truncf %718 : vector<2x8x128xf32> to vector<2x8x128xbf16>
    %720 = vector.shape_cast %716 : vector<16x128xf32> to vector<2x8x128xf32>
    %721 = arith.truncf %720 : vector<2x8x128xf32> to vector<2x8x128xbf16>
    %722 = vector.shape_cast %717 : vector<16x128xf32> to vector<2x8x128xf32>
    %723 = arith.truncf %722 : vector<2x8x128xf32> to vector<2x8x128xbf16>
    %724 = vector.extract_strided_slice %719 {offsets = [0, 0, 0], sizes = [2, 8, 16], strides = [1, 1, 1]} : vector<2x8x128xbf16> to vector<2x8x16xbf16>
    %725 = vector.extract_strided_slice %721 {offsets = [0, 0, 0], sizes = [2, 8, 16], strides = [1, 1, 1]} : vector<2x8x128xbf16> to vector<2x8x16xbf16>
    %726 = vector.extract_strided_slice %723 {offsets = [0, 0, 0], sizes = [2, 8, 16], strides = [1, 1, 1]} : vector<2x8x128xbf16> to vector<2x8x16xbf16>
    "tpu.trace_start"() <{level = 10 : i32, message = "bqd,bkd->bqk"}> : () -> ()
    %cst_271 = arith.constant dense<0.000000e+00> : vector<2x8x8xf32>
    %727 = tpu.matmul %724, %725, %cst_271 {dimension_numbers = #tpu.dot_dimension_numbers<[2], [2], [1], [1], [0, 0, 0, 1, 1, 1], [0], [0]>} : vector<2x8x16xbf16>, vector<2x8x16xbf16>, vector<2x8x8xf32> -> vector<2x8x8xf32>
    "tpu.trace_stop"() : () -> ()
    %cst_272 = arith.constant dense<0xFF800000> : vector<2x8xf32>
    %728 = vector.multi_reduction <maximumf>, %727, %cst_272 [2] : vector<2x8x8xf32> to vector<2x8xf32>
    %729 = vector.shape_cast %728 : vector<2x8xf32> to vector<2x8x1xf32>
    %730 = vector.broadcast %729 : vector<2x8x1xf32> to vector<2x8x8xf32>
    %731 = arith.subf %727, %730 : vector<2x8x8xf32>
    %732 = math.exp %731 : vector<2x8x8xf32>
    %cst_273 = arith.constant dense<0.000000e+00> : vector<2x8xf32>
    %733 = vector.multi_reduction <add>, %732, %cst_273 [2] : vector<2x8x8xf32> to vector<2x8xf32>
    %734 = vector.shape_cast %733 : vector<2x8xf32> to vector<2x8x1xf32>
    %735 = vector.broadcast %734 : vector<2x8x1xf32> to vector<2x8x8xf32>
    %736 = arith.divf %732, %735 : vector<2x8x8xf32>
    %737 = arith.truncf %736 : vector<2x8x8xf32> to vector<2x8x8xbf16>
    "tpu.trace_start"() <{level = 10 : i32, message = "bqk,bkd->bqd"}> : () -> ()
    %cst_274 = arith.constant dense<0.000000e+00> : vector<2x8x16xf32>
    %738 = tpu.matmul %737, %726, %cst_274 {dimension_numbers = #tpu.dot_dimension_numbers<[2], [1], [1], [2], [0, 0, 0, 1, 1, 2], [0], [0]>} : vector<2x8x8xbf16>, vector<2x8x16xbf16>, vector<2x8x16xf32> -> vector<2x8x16xf32>
    "tpu.trace_stop"() : () -> ()
    %739 = vector.extract_strided_slice %719 {offsets = [0, 0, 16], sizes = [2, 8, 16], strides = [1, 1, 1]} : vector<2x8x128xbf16> to vector<2x8x16xbf16>
    %740 = vector.extract_strided_slice %721 {offsets = [0, 0, 16], sizes = [2, 8, 16], strides = [1, 1, 1]} : vector<2x8x128xbf16> to vector<2x8x16xbf16>
    %741 = vector.extract_strided_slice %723 {offsets = [0, 0, 16], sizes = [2, 8, 16], strides = [1, 1, 1]} : vector<2x8x128xbf16> to vector<2x8x16xbf16>
    "tpu.trace_start"() <{level = 10 : i32, message = "bqd,bkd->bqk"}> : () -> ()
    %cst_275 = arith.constant dense<0.000000e+00> : vector<2x8x8xf32>
    %742 = tpu.matmul %739, %740, %cst_275 {dimension_numbers = #tpu.dot_dimension_numbers<[2], [2], [1], [1], [0, 0, 0, 1, 1, 1], [0], [0]>} : vector<2x8x16xbf16>, vector<2x8x16xbf16>, vector<2x8x8xf32> -> vector<2x8x8xf32>
    "tpu.trace_stop"() : () -> ()
    %cst_276 = arith.constant dense<0xFF800000> : vector<2x8xf32>
    %743 = vector.multi_reduction <maximumf>, %742, %cst_276 [2] : vector<2x8x8xf32> to vector<2x8xf32>
    %744 = vector.shape_cast %743 : vector<2x8xf32> to vector<2x8x1xf32>
    %745 = vector.broadcast %744 : vector<2x8x1xf32> to vector<2x8x8xf32>
    %746 = arith.subf %742, %745 : vector<2x8x8xf32>
    %747 = math.exp %746 : vector<2x8x8xf32>
    %cst_277 = arith.constant dense<0.000000e+00> : vector<2x8xf32>
    %748 = vector.multi_reduction <add>, %747, %cst_277 [2] : vector<2x8x8xf32> to vector<2x8xf32>
    %749 = vector.shape_cast %748 : vector<2x8xf32> to vector<2x8x1xf32>
    %750 = vector.broadcast %749 : vector<2x8x1xf32> to vector<2x8x8xf32>
    %751 = arith.divf %747, %750 : vector<2x8x8xf32>
    %752 = arith.truncf %751 : vector<2x8x8xf32> to vector<2x8x8xbf16>
    "tpu.trace_start"() <{level = 10 : i32, message = "bqk,bkd->bqd"}> : () -> ()
    %cst_278 = arith.constant dense<0.000000e+00> : vector<2x8x16xf32>
    %753 = tpu.matmul %752, %741, %cst_278 {dimension_numbers = #tpu.dot_dimension_numbers<[2], [1], [1], [2], [0, 0, 0, 1, 1, 2], [0], [0]>} : vector<2x8x8xbf16>, vector<2x8x16xbf16>, vector<2x8x16xf32> -> vector<2x8x16xf32>
    "tpu.trace_stop"() : () -> ()
    %754 = vector.extract_strided_slice %719 {offsets = [0, 0, 32], sizes = [2, 8, 16], strides = [1, 1, 1]} : vector<2x8x128xbf16> to vector<2x8x16xbf16>
    %755 = vector.extract_strided_slice %721 {offsets = [0, 0, 32], sizes = [2, 8, 16], strides = [1, 1, 1]} : vector<2x8x128xbf16> to vector<2x8x16xbf16>
    %756 = vector.extract_strided_slice %723 {offsets = [0, 0, 32], sizes = [2, 8, 16], strides = [1, 1, 1]} : vector<2x8x128xbf16> to vector<2x8x16xbf16>
    "tpu.trace_start"() <{level = 10 : i32, message = "bqd,bkd->bqk"}> : () -> ()
    %cst_279 = arith.constant dense<0.000000e+00> : vector<2x8x8xf32>
    %757 = tpu.matmul %754, %755, %cst_279 {dimension_numbers = #tpu.dot_dimension_numbers<[2], [2], [1], [1], [0, 0, 0, 1, 1, 1], [0], [0]>} : vector<2x8x16xbf16>, vector<2x8x16xbf16>, vector<2x8x8xf32> -> vector<2x8x8xf32>
    "tpu.trace_stop"() : () -> ()
    %cst_280 = arith.constant dense<0xFF800000> : vector<2x8xf32>
    %758 = vector.multi_reduction <maximumf>, %757, %cst_280 [2] : vector<2x8x8xf32> to vector<2x8xf32>
    %759 = vector.shape_cast %758 : vector<2x8xf32> to vector<2x8x1xf32>
    %760 = vector.broadcast %759 : vector<2x8x1xf32> to vector<2x8x8xf32>
    %761 = arith.subf %757, %760 : vector<2x8x8xf32>
    %762 = math.exp %761 : vector<2x8x8xf32>
    %cst_281 = arith.constant dense<0.000000e+00> : vector<2x8xf32>
    %763 = vector.multi_reduction <add>, %762, %cst_281 [2] : vector<2x8x8xf32> to vector<2x8xf32>
    %764 = vector.shape_cast %763 : vector<2x8xf32> to vector<2x8x1xf32>
    %765 = vector.broadcast %764 : vector<2x8x1xf32> to vector<2x8x8xf32>
    %766 = arith.divf %762, %765 : vector<2x8x8xf32>
    %767 = arith.truncf %766 : vector<2x8x8xf32> to vector<2x8x8xbf16>
    "tpu.trace_start"() <{level = 10 : i32, message = "bqk,bkd->bqd"}> : () -> ()
    %cst_282 = arith.constant dense<0.000000e+00> : vector<2x8x16xf32>
    %768 = tpu.matmul %767, %756, %cst_282 {dimension_numbers = #tpu.dot_dimension_numbers<[2], [1], [1], [2], [0, 0, 0, 1, 1, 2], [0], [0]>} : vector<2x8x8xbf16>, vector<2x8x16xbf16>, vector<2x8x16xf32> -> vector<2x8x16xf32>
    "tpu.trace_stop"() : () -> ()
    %769 = vector.extract_strided_slice %719 {offsets = [0, 0, 48], sizes = [2, 8, 16], strides = [1, 1, 1]} : vector<2x8x128xbf16> to vector<2x8x16xbf16>
    %770 = vector.extract_strided_slice %721 {offsets = [0, 0, 48], sizes = [2, 8, 16], strides = [1, 1, 1]} : vector<2x8x128xbf16> to vector<2x8x16xbf16>
    %771 = vector.extract_strided_slice %723 {offsets = [0, 0, 48], sizes = [2, 8, 16], strides = [1, 1, 1]} : vector<2x8x128xbf16> to vector<2x8x16xbf16>
    "tpu.trace_start"() <{level = 10 : i32, message = "bqd,bkd->bqk"}> : () -> ()
    %cst_283 = arith.constant dense<0.000000e+00> : vector<2x8x8xf32>
    %772 = tpu.matmul %769, %770, %cst_283 {dimension_numbers = #tpu.dot_dimension_numbers<[2], [2], [1], [1], [0, 0, 0, 1, 1, 1], [0], [0]>} : vector<2x8x16xbf16>, vector<2x8x16xbf16>, vector<2x8x8xf32> -> vector<2x8x8xf32>
    "tpu.trace_stop"() : () -> ()
    %cst_284 = arith.constant dense<0xFF800000> : vector<2x8xf32>
    %773 = vector.multi_reduction <maximumf>, %772, %cst_284 [2] : vector<2x8x8xf32> to vector<2x8xf32>
    %774 = vector.shape_cast %773 : vector<2x8xf32> to vector<2x8x1xf32>
    %775 = vector.broadcast %774 : vector<2x8x1xf32> to vector<2x8x8xf32>
    %776 = arith.subf %772, %775 : vector<2x8x8xf32>
    %777 = math.exp %776 : vector<2x8x8xf32>
    %cst_285 = arith.constant dense<0.000000e+00> : vector<2x8xf32>
    %778 = vector.multi_reduction <add>, %777, %cst_285 [2] : vector<2x8x8xf32> to vector<2x8xf32>
    %779 = vector.shape_cast %778 : vector<2x8xf32> to vector<2x8x1xf32>
    %780 = vector.broadcast %779 : vector<2x8x1xf32> to vector<2x8x8xf32>
    %781 = arith.divf %777, %780 : vector<2x8x8xf32>
    %782 = arith.truncf %781 : vector<2x8x8xf32> to vector<2x8x8xbf16>
    "tpu.trace_start"() <{level = 10 : i32, message = "bqk,bkd->bqd"}> : () -> ()
    %cst_286 = arith.constant dense<0.000000e+00> : vector<2x8x16xf32>
    %783 = tpu.matmul %782, %771, %cst_286 {dimension_numbers = #tpu.dot_dimension_numbers<[2], [1], [1], [2], [0, 0, 0, 1, 1, 2], [0], [0]>} : vector<2x8x8xbf16>, vector<2x8x16xbf16>, vector<2x8x16xf32> -> vector<2x8x16xf32>
    "tpu.trace_stop"() : () -> ()
    %784 = vector.extract_strided_slice %719 {offsets = [0, 0, 64], sizes = [2, 8, 16], strides = [1, 1, 1]} : vector<2x8x128xbf16> to vector<2x8x16xbf16>
    %785 = vector.extract_strided_slice %721 {offsets = [0, 0, 64], sizes = [2, 8, 16], strides = [1, 1, 1]} : vector<2x8x128xbf16> to vector<2x8x16xbf16>
    %786 = vector.extract_strided_slice %723 {offsets = [0, 0, 64], sizes = [2, 8, 16], strides = [1, 1, 1]} : vector<2x8x128xbf16> to vector<2x8x16xbf16>
    "tpu.trace_start"() <{level = 10 : i32, message = "bqd,bkd->bqk"}> : () -> ()
    %cst_287 = arith.constant dense<0.000000e+00> : vector<2x8x8xf32>
    %787 = tpu.matmul %784, %785, %cst_287 {dimension_numbers = #tpu.dot_dimension_numbers<[2], [2], [1], [1], [0, 0, 0, 1, 1, 1], [0], [0]>} : vector<2x8x16xbf16>, vector<2x8x16xbf16>, vector<2x8x8xf32> -> vector<2x8x8xf32>
    "tpu.trace_stop"() : () -> ()
    %cst_288 = arith.constant dense<0xFF800000> : vector<2x8xf32>
    %788 = vector.multi_reduction <maximumf>, %787, %cst_288 [2] : vector<2x8x8xf32> to vector<2x8xf32>
    %789 = vector.shape_cast %788 : vector<2x8xf32> to vector<2x8x1xf32>
    %790 = vector.broadcast %789 : vector<2x8x1xf32> to vector<2x8x8xf32>
    %791 = arith.subf %787, %790 : vector<2x8x8xf32>
    %792 = math.exp %791 : vector<2x8x8xf32>
    %cst_289 = arith.constant dense<0.000000e+00> : vector<2x8xf32>
    %793 = vector.multi_reduction <add>, %792, %cst_289 [2] : vector<2x8x8xf32> to vector<2x8xf32>
    %794 = vector.shape_cast %793 : vector<2x8xf32> to vector<2x8x1xf32>
    %795 = vector.broadcast %794 : vector<2x8x1xf32> to vector<2x8x8xf32>
    %796 = arith.divf %792, %795 : vector<2x8x8xf32>
    %797 = arith.truncf %796 : vector<2x8x8xf32> to vector<2x8x8xbf16>
    "tpu.trace_start"() <{level = 10 : i32, message = "bqk,bkd->bqd"}> : () -> ()
    %cst_290 = arith.constant dense<0.000000e+00> : vector<2x8x16xf32>
    %798 = tpu.matmul %797, %786, %cst_290 {dimension_numbers = #tpu.dot_dimension_numbers<[2], [1], [1], [2], [0, 0, 0, 1, 1, 2], [0], [0]>} : vector<2x8x8xbf16>, vector<2x8x16xbf16>, vector<2x8x16xf32> -> vector<2x8x16xf32>
    "tpu.trace_stop"() : () -> ()
    %799 = vector.extract_strided_slice %719 {offsets = [0, 0, 80], sizes = [2, 8, 16], strides = [1, 1, 1]} : vector<2x8x128xbf16> to vector<2x8x16xbf16>
    %800 = vector.extract_strided_slice %721 {offsets = [0, 0, 80], sizes = [2, 8, 16], strides = [1, 1, 1]} : vector<2x8x128xbf16> to vector<2x8x16xbf16>
    %801 = vector.extract_strided_slice %723 {offsets = [0, 0, 80], sizes = [2, 8, 16], strides = [1, 1, 1]} : vector<2x8x128xbf16> to vector<2x8x16xbf16>
    "tpu.trace_start"() <{level = 10 : i32, message = "bqd,bkd->bqk"}> : () -> ()
    %cst_291 = arith.constant dense<0.000000e+00> : vector<2x8x8xf32>
    %802 = tpu.matmul %799, %800, %cst_291 {dimension_numbers = #tpu.dot_dimension_numbers<[2], [2], [1], [1], [0, 0, 0, 1, 1, 1], [0], [0]>} : vector<2x8x16xbf16>, vector<2x8x16xbf16>, vector<2x8x8xf32> -> vector<2x8x8xf32>
    "tpu.trace_stop"() : () -> ()
    %cst_292 = arith.constant dense<0xFF800000> : vector<2x8xf32>
    %803 = vector.multi_reduction <maximumf>, %802, %cst_292 [2] : vector<2x8x8xf32> to vector<2x8xf32>
    %804 = vector.shape_cast %803 : vector<2x8xf32> to vector<2x8x1xf32>
    %805 = vector.broadcast %804 : vector<2x8x1xf32> to vector<2x8x8xf32>
    %806 = arith.subf %802, %805 : vector<2x8x8xf32>
    %807 = math.exp %806 : vector<2x8x8xf32>
    %cst_293 = arith.constant dense<0.000000e+00> : vector<2x8xf32>
    %808 = vector.multi_reduction <add>, %807, %cst_293 [2] : vector<2x8x8xf32> to vector<2x8xf32>
    %809 = vector.shape_cast %808 : vector<2x8xf32> to vector<2x8x1xf32>
    %810 = vector.broadcast %809 : vector<2x8x1xf32> to vector<2x8x8xf32>
    %811 = arith.divf %807, %810 : vector<2x8x8xf32>
    %812 = arith.truncf %811 : vector<2x8x8xf32> to vector<2x8x8xbf16>
    "tpu.trace_start"() <{level = 10 : i32, message = "bqk,bkd->bqd"}> : () -> ()
    %cst_294 = arith.constant dense<0.000000e+00> : vector<2x8x16xf32>
    %813 = tpu.matmul %812, %801, %cst_294 {dimension_numbers = #tpu.dot_dimension_numbers<[2], [1], [1], [2], [0, 0, 0, 1, 1, 2], [0], [0]>} : vector<2x8x8xbf16>, vector<2x8x16xbf16>, vector<2x8x16xf32> -> vector<2x8x16xf32>
    "tpu.trace_stop"() : () -> ()
    %814 = vector.extract_strided_slice %719 {offsets = [0, 0, 96], sizes = [2, 8, 16], strides = [1, 1, 1]} : vector<2x8x128xbf16> to vector<2x8x16xbf16>
    %815 = vector.extract_strided_slice %721 {offsets = [0, 0, 96], sizes = [2, 8, 16], strides = [1, 1, 1]} : vector<2x8x128xbf16> to vector<2x8x16xbf16>
    %816 = vector.extract_strided_slice %723 {offsets = [0, 0, 96], sizes = [2, 8, 16], strides = [1, 1, 1]} : vector<2x8x128xbf16> to vector<2x8x16xbf16>
    "tpu.trace_start"() <{level = 10 : i32, message = "bqd,bkd->bqk"}> : () -> ()
    %cst_295 = arith.constant dense<0.000000e+00> : vector<2x8x8xf32>
    %817 = tpu.matmul %814, %815, %cst_295 {dimension_numbers = #tpu.dot_dimension_numbers<[2], [2], [1], [1], [0, 0, 0, 1, 1, 1], [0], [0]>} : vector<2x8x16xbf16>, vector<2x8x16xbf16>, vector<2x8x8xf32> -> vector<2x8x8xf32>
    "tpu.trace_stop"() : () -> ()
    %cst_296 = arith.constant dense<0xFF800000> : vector<2x8xf32>
    %818 = vector.multi_reduction <maximumf>, %817, %cst_296 [2] : vector<2x8x8xf32> to vector<2x8xf32>
    %819 = vector.shape_cast %818 : vector<2x8xf32> to vector<2x8x1xf32>
    %820 = vector.broadcast %819 : vector<2x8x1xf32> to vector<2x8x8xf32>
    %821 = arith.subf %817, %820 : vector<2x8x8xf32>
    %822 = math.exp %821 : vector<2x8x8xf32>
    %cst_297 = arith.constant dense<0.000000e+00> : vector<2x8xf32>
    %823 = vector.multi_reduction <add>, %822, %cst_297 [2] : vector<2x8x8xf32> to vector<2x8xf32>
    %824 = vector.shape_cast %823 : vector<2x8xf32> to vector<2x8x1xf32>
    %825 = vector.broadcast %824 : vector<2x8x1xf32> to vector<2x8x8xf32>
    %826 = arith.divf %822, %825 : vector<2x8x8xf32>
    %827 = arith.truncf %826 : vector<2x8x8xf32> to vector<2x8x8xbf16>
    "tpu.trace_start"() <{level = 10 : i32, message = "bqk,bkd->bqd"}> : () -> ()
    %cst_298 = arith.constant dense<0.000000e+00> : vector<2x8x16xf32>
    %828 = tpu.matmul %827, %816, %cst_298 {dimension_numbers = #tpu.dot_dimension_numbers<[2], [1], [1], [2], [0, 0, 0, 1, 1, 2], [0], [0]>} : vector<2x8x8xbf16>, vector<2x8x16xbf16>, vector<2x8x16xf32> -> vector<2x8x16xf32>
    "tpu.trace_stop"() : () -> ()
    %829 = vector.extract_strided_slice %719 {offsets = [0, 0, 112], sizes = [2, 8, 16], strides = [1, 1, 1]} : vector<2x8x128xbf16> to vector<2x8x16xbf16>
    %830 = vector.extract_strided_slice %721 {offsets = [0, 0, 112], sizes = [2, 8, 16], strides = [1, 1, 1]} : vector<2x8x128xbf16> to vector<2x8x16xbf16>
    %831 = vector.extract_strided_slice %723 {offsets = [0, 0, 112], sizes = [2, 8, 16], strides = [1, 1, 1]} : vector<2x8x128xbf16> to vector<2x8x16xbf16>
    "tpu.trace_start"() <{level = 10 : i32, message = "bqd,bkd->bqk"}> : () -> ()
    %cst_299 = arith.constant dense<0.000000e+00> : vector<2x8x8xf32>
    %832 = tpu.matmul %829, %830, %cst_299 {dimension_numbers = #tpu.dot_dimension_numbers<[2], [2], [1], [1], [0, 0, 0, 1, 1, 1], [0], [0]>} : vector<2x8x16xbf16>, vector<2x8x16xbf16>, vector<2x8x8xf32> -> vector<2x8x8xf32>
    "tpu.trace_stop"() : () -> ()
    %cst_300 = arith.constant dense<0xFF800000> : vector<2x8xf32>
    %833 = vector.multi_reduction <maximumf>, %832, %cst_300 [2] : vector<2x8x8xf32> to vector<2x8xf32>
    %834 = vector.shape_cast %833 : vector<2x8xf32> to vector<2x8x1xf32>
    %835 = vector.broadcast %834 : vector<2x8x1xf32> to vector<2x8x8xf32>
    %836 = arith.subf %832, %835 : vector<2x8x8xf32>
    %837 = math.exp %836 : vector<2x8x8xf32>
    %cst_301 = arith.constant dense<0.000000e+00> : vector<2x8xf32>
    %838 = vector.multi_reduction <add>, %837, %cst_301 [2] : vector<2x8x8xf32> to vector<2x8xf32>
    %839 = vector.shape_cast %838 : vector<2x8xf32> to vector<2x8x1xf32>
    %840 = vector.broadcast %839 : vector<2x8x1xf32> to vector<2x8x8xf32>
    %841 = arith.divf %837, %840 : vector<2x8x8xf32>
    %842 = arith.truncf %841 : vector<2x8x8xf32> to vector<2x8x8xbf16>
    "tpu.trace_start"() <{level = 10 : i32, message = "bqk,bkd->bqd"}> : () -> ()
    %cst_302 = arith.constant dense<0.000000e+00> : vector<2x8x16xf32>
    %843 = tpu.matmul %842, %831, %cst_302 {dimension_numbers = #tpu.dot_dimension_numbers<[2], [1], [1], [2], [0, 0, 0, 1, 1, 2], [0], [0]>} : vector<2x8x8xbf16>, vector<2x8x16xbf16>, vector<2x8x16xf32> -> vector<2x8x16xf32>
    "tpu.trace_stop"() : () -> ()
    %844 = tpu.concatenate %738, %753, %768, %783, %798, %813, %828, %843 in 2 : vector<2x8x16xf32>, vector<2x8x16xf32>, vector<2x8x16xf32>, vector<2x8x16xf32>, vector<2x8x16xf32>, vector<2x8x16xf32>, vector<2x8x16xf32>, vector<2x8x16xf32> -> vector<2x8x128xf32>
    %845 = vector.shape_cast %844 : vector<2x8x128xf32> to vector<16x128xf32>
    %846 = arith.truncf %845 : vector<16x128xf32> to vector<16x128xbf16>
    %c3_303 = arith.constant 3 : index
    %c0_304 = arith.constant 0 : index
    %c0_305 = arith.constant 0 : index
    %847 = vector.load %arg6[%c3_303, %c0_304, %c0_305] : memref<4x128x128xbf16, #tpu.memory_space<vmem>>, vector<1x128x128xbf16>
    %848 = vector.shape_cast %847 : vector<1x128x128xbf16> to vector<128x128xbf16>
    %cst_306 = arith.constant dense<0.000000e+00> : vector<16x128xf32>
    %849 = tpu.matmul %846, %848, %cst_306 {dimension_numbers = #tpu.dot_dimension_numbers<[1], [0], [0], [1], [0, 0, 1, 1], [], []>} : vector<16x128xbf16>, vector<128x128xbf16>, vector<16x128xf32> -> vector<16x128xf32>
    %c3_307 = arith.constant 3 : index
    %c0_308 = arith.constant 0 : index
    %c0_309 = arith.constant 0 : index
    %850 = vector.load %arg7[%c3_307, %c0_308, %c0_309] : memref<4x1x128xf32, #tpu.memory_space<vmem>>, vector<1x1x128xf32>
    %851 = vector.shape_cast %850 : vector<1x1x128xf32> to vector<1x128xf32>
    %852 = vector.broadcast %851 : vector<1x128xf32> to vector<16x128xf32>
    %853 = arith.addf %849, %852 : vector<16x128xf32>
    %854 = arith.addf %704, %853 : vector<16x128xf32>
    %c3_310 = arith.constant 3 : index
    %c0_311 = arith.constant 0 : index
    %c0_312 = arith.constant 0 : index
    %855 = vector.load %arg8[%c3_310, %c0_311, %c0_312] : memref<4x1x128xf32, #tpu.memory_space<vmem>>, vector<1x1x128xf32>
    %856 = vector.shape_cast %855 : vector<1x1x128xf32> to vector<1x128xf32>
    %c3_313 = arith.constant 3 : index
    %c0_314 = arith.constant 0 : index
    %c0_315 = arith.constant 0 : index
    %857 = vector.load %arg9[%c3_313, %c0_314, %c0_315] : memref<4x1x128xf32, #tpu.memory_space<vmem>>, vector<1x1x128xf32>
    %858 = vector.shape_cast %857 : vector<1x1x128xf32> to vector<1x128xf32>
    %cst_316 = arith.constant dense<0.000000e+00> : vector<16xf32>
    %859 = vector.multi_reduction <add>, %854, %cst_316 [1] : vector<16x128xf32> to vector<16xf32>
    %860 = vector.shape_cast %859 : vector<16xf32> to vector<16x1xf32>
    %cst_317 = arith.constant 1.280000e+02 : f32
    %861 = vector.broadcast %cst_317 : f32 to vector<16x1xf32>
    %862 = arith.divf %860, %861 : vector<16x1xf32>
    %863 = vector.broadcast %862 : vector<16x1xf32> to vector<16x128xf32>
    %864 = arith.subf %854, %863 : vector<16x128xf32>
    %865 = arith.mulf %864, %864 : vector<16x128xf32>
    %cst_318 = arith.constant dense<0.000000e+00> : vector<16xf32>
    %866 = vector.multi_reduction <add>, %865, %cst_318 [1] : vector<16x128xf32> to vector<16xf32>
    %867 = vector.shape_cast %866 : vector<16xf32> to vector<16x1xf32>
    %cst_319 = arith.constant 1.280000e+02 : f32
    %868 = vector.broadcast %cst_319 : f32 to vector<16x1xf32>
    %869 = arith.divf %867, %868 : vector<16x1xf32>
    %870 = vector.broadcast %862 : vector<16x1xf32> to vector<16x128xf32>
    %871 = arith.subf %854, %870 : vector<16x128xf32>
    %cst_320 = arith.constant 9.99999996E-13 : f32
    %872 = vector.broadcast %cst_320 : f32 to vector<16x1xf32>
    %873 = arith.addf %869, %872 : vector<16x1xf32>
    %874 = math.rsqrt %873 : vector<16x1xf32>
    %875 = vector.broadcast %874 : vector<16x1xf32> to vector<16x128xf32>
    %876 = arith.mulf %871, %875 : vector<16x128xf32>
    %877 = vector.broadcast %856 : vector<1x128xf32> to vector<16x128xf32>
    %878 = arith.mulf %876, %877 : vector<16x128xf32>
    %879 = vector.broadcast %858 : vector<1x128xf32> to vector<16x128xf32>
    %880 = arith.addf %878, %879 : vector<16x128xf32>
    %881 = arith.truncf %880 : vector<16x128xf32> to vector<16x128xbf16>
    %c3_321 = arith.constant 3 : index
    %c0_322 = arith.constant 0 : index
    %c0_323 = arith.constant 0 : index
    %882 = vector.load %arg10[%c3_321, %c0_322, %c0_323] : memref<4x128x512xbf16, #tpu.memory_space<vmem>>, vector<1x128x512xbf16>
    %883 = vector.shape_cast %882 : vector<1x128x512xbf16> to vector<128x512xbf16>
    %cst_324 = arith.constant dense<0.000000e+00> : vector<16x512xf32>
    %884 = tpu.matmul %881, %883, %cst_324 {dimension_numbers = #tpu.dot_dimension_numbers<[1], [0], [0], [1], [0, 0, 1, 1], [], []>} : vector<16x128xbf16>, vector<128x512xbf16>, vector<16x512xf32> -> vector<16x512xf32>
    %c3_325 = arith.constant 3 : index
    %c0_326 = arith.constant 0 : index
    %c0_327 = arith.constant 0 : index
    %885 = vector.load %arg11[%c3_325, %c0_326, %c0_327] : memref<4x1x512xf32, #tpu.memory_space<vmem>>, vector<1x1x512xf32>
    %886 = vector.shape_cast %885 : vector<1x1x512xf32> to vector<1x512xf32>
    %887 = vector.broadcast %886 : vector<1x512xf32> to vector<16x512xf32>
    %888 = arith.addf %884, %887 : vector<16x512xf32>
    %889 = arith.mulf %888, %888 : vector<16x512xf32>
    %890 = arith.mulf %888, %889 : vector<16x512xf32>
    %cst_328 = arith.constant 4.471500e-02 : f32
    %891 = vector.broadcast %cst_328 : f32 to vector<16x512xf32>
    %892 = arith.mulf %891, %890 : vector<16x512xf32>
    %893 = arith.addf %888, %892 : vector<16x512xf32>
    %cst_329 = arith.constant 0.797884583 : f32
    %894 = vector.broadcast %cst_329 : f32 to vector<16x512xf32>
    %895 = arith.mulf %894, %893 : vector<16x512xf32>
    %896 = math.tanh %895 : vector<16x512xf32>
    %cst_330 = arith.constant 1.000000e+00 : f32
    %897 = vector.broadcast %cst_330 : f32 to vector<16x512xf32>
    %898 = arith.addf %897, %896 : vector<16x512xf32>
    %cst_331 = arith.constant 5.000000e-01 : f32
    %899 = vector.broadcast %cst_331 : f32 to vector<16x512xf32>
    %900 = arith.mulf %899, %898 : vector<16x512xf32>
    %901 = arith.mulf %888, %900 : vector<16x512xf32>
    %902 = arith.truncf %901 : vector<16x512xf32> to vector<16x512xbf16>
    %c3_332 = arith.constant 3 : index
    %c0_333 = arith.constant 0 : index
    %c0_334 = arith.constant 0 : index
    %903 = vector.load %arg12[%c3_332, %c0_333, %c0_334] : memref<4x512x128xbf16, #tpu.memory_space<vmem>>, vector<1x512x128xbf16>
    %904 = vector.shape_cast %903 : vector<1x512x128xbf16> to vector<512x128xbf16>
    %cst_335 = arith.constant dense<0.000000e+00> : vector<16x128xf32>
    %905 = tpu.matmul %902, %904, %cst_335 {dimension_numbers = #tpu.dot_dimension_numbers<[1], [0], [0], [1], [0, 0, 1, 1], [], []>} : vector<16x512xbf16>, vector<512x128xbf16>, vector<16x128xf32> -> vector<16x128xf32>
    %c3_336 = arith.constant 3 : index
    %c0_337 = arith.constant 0 : index
    %c0_338 = arith.constant 0 : index
    %906 = vector.load %arg13[%c3_336, %c0_337, %c0_338] : memref<4x1x128xf32, #tpu.memory_space<vmem>>, vector<1x1x128xf32>
    %907 = vector.shape_cast %906 : vector<1x1x128xf32> to vector<1x128xf32>
    %908 = vector.broadcast %907 : vector<1x128xf32> to vector<16x128xf32>
    %909 = arith.addf %905, %908 : vector<16x128xf32>
    %910 = arith.addf %880, %909 : vector<16x128xf32>
    %c3_339 = arith.constant 3 : index
    %c0_340 = arith.constant 0 : index
    %c0_341 = arith.constant 0 : index
    %911 = vector.load %arg14[%c3_339, %c0_340, %c0_341] : memref<4x1x128xf32, #tpu.memory_space<vmem>>, vector<1x1x128xf32>
    %912 = vector.shape_cast %911 : vector<1x1x128xf32> to vector<1x128xf32>
    %c3_342 = arith.constant 3 : index
    %c0_343 = arith.constant 0 : index
    %c0_344 = arith.constant 0 : index
    %913 = vector.load %arg15[%c3_342, %c0_343, %c0_344] : memref<4x1x128xf32, #tpu.memory_space<vmem>>, vector<1x1x128xf32>
    %914 = vector.shape_cast %913 : vector<1x1x128xf32> to vector<1x128xf32>
    %cst_345 = arith.constant dense<0.000000e+00> : vector<16xf32>
    %915 = vector.multi_reduction <add>, %910, %cst_345 [1] : vector<16x128xf32> to vector<16xf32>
    %916 = vector.shape_cast %915 : vector<16xf32> to vector<16x1xf32>
    %cst_346 = arith.constant 1.280000e+02 : f32
    %917 = vector.broadcast %cst_346 : f32 to vector<16x1xf32>
    %918 = arith.divf %916, %917 : vector<16x1xf32>
    %919 = vector.broadcast %918 : vector<16x1xf32> to vector<16x128xf32>
    %920 = arith.subf %910, %919 : vector<16x128xf32>
    %921 = arith.mulf %920, %920 : vector<16x128xf32>
    %cst_347 = arith.constant dense<0.000000e+00> : vector<16xf32>
    %922 = vector.multi_reduction <add>, %921, %cst_347 [1] : vector<16x128xf32> to vector<16xf32>
    %923 = vector.shape_cast %922 : vector<16xf32> to vector<16x1xf32>
    %cst_348 = arith.constant 1.280000e+02 : f32
    %924 = vector.broadcast %cst_348 : f32 to vector<16x1xf32>
    %925 = arith.divf %923, %924 : vector<16x1xf32>
    %926 = vector.broadcast %918 : vector<16x1xf32> to vector<16x128xf32>
    %927 = arith.subf %910, %926 : vector<16x128xf32>
    %cst_349 = arith.constant 9.99999996E-13 : f32
    %928 = vector.broadcast %cst_349 : f32 to vector<16x1xf32>
    %929 = arith.addf %925, %928 : vector<16x1xf32>
    %930 = math.rsqrt %929 : vector<16x1xf32>
    %931 = vector.broadcast %930 : vector<16x1xf32> to vector<16x128xf32>
    %932 = arith.mulf %927, %931 : vector<16x128xf32>
    %933 = vector.broadcast %912 : vector<1x128xf32> to vector<16x128xf32>
    %934 = arith.mulf %932, %933 : vector<16x128xf32>
    %935 = vector.broadcast %914 : vector<1x128xf32> to vector<16x128xf32>
    %936 = arith.addf %934, %935 : vector<16x128xf32>
    %937 = vector.shape_cast %936 : vector<16x128xf32> to vector<2x8x128xf32>
    %c0_350 = arith.constant 0 : index
    %c0_351 = arith.constant 0 : index
    %938 = vector.load %arg16[%c0_350, %c0_351] : memref<1x128xf32, #tpu.memory_space<vmem>>, vector<1x128xf32>
    %939 = vector.shape_cast %938 : vector<1x128xf32> to vector<1x1x128xf32>
    %940 = vector.broadcast %939 : vector<1x1x128xf32> to vector<2x8x128xf32>
    %941 = arith.mulf %937, %940 : vector<2x8x128xf32>
    %cst_352 = arith.constant dense<0.000000e+00> : vector<2x8xf32>
    %942 = vector.multi_reduction <add>, %941, %cst_352 [2] : vector<2x8x128xf32> to vector<2x8xf32>
    %943 = vector.shape_cast %942 : vector<2x8xf32> to vector<2x8x1xf32>
    %cst_353 = arith.constant dense<0xFF800000> : vector<2x1xf32>
    %944 = vector.multi_reduction <maximumf>, %943, %cst_353 [1] : vector<2x8x1xf32> to vector<2x1xf32>
    %945 = vector.shape_cast %944 : vector<2x1xf32> to vector<2x1x1xf32>
    %946 = vector.broadcast %945 : vector<2x1x1xf32> to vector<2x8x1xf32>
    %947 = arith.subf %943, %946 : vector<2x8x1xf32>
    %948 = math.exp %947 : vector<2x8x1xf32>
    %cst_354 = arith.constant dense<0.000000e+00> : vector<2x1xf32>
    %949 = vector.multi_reduction <add>, %948, %cst_354 [1] : vector<2x8x1xf32> to vector<2x1xf32>
    %950 = vector.shape_cast %949 : vector<2x1xf32> to vector<2x1x1xf32>
    %951 = vector.broadcast %950 : vector<2x1x1xf32> to vector<2x8x1xf32>
    %952 = arith.divf %948, %951 : vector<2x8x1xf32>
    %953 = vector.broadcast %952 : vector<2x8x1xf32> to vector<2x8x128xf32>
    %954 = arith.mulf %937, %953 : vector<2x8x128xf32>
    %cst_355 = arith.constant dense<0.000000e+00> : vector<2x128xf32>
    %955 = vector.multi_reduction <add>, %954, %cst_355 [1] : vector<2x8x128xf32> to vector<2x128xf32>
    %956 = arith.truncf %955 : vector<2x128xf32> to vector<2x128xbf16>
    %c0_356 = arith.constant 0 : index
    %c0_357 = arith.constant 0 : index
    %957 = vector.load %arg17[%c0_356, %c0_357] : memref<128x64xbf16, #tpu.memory_space<vmem>>, vector<128x64xbf16>
    %cst_358 = arith.constant dense<0.000000e+00> : vector<2x64xf32>
    %958 = tpu.matmul %956, %957, %cst_358 {dimension_numbers = #tpu.dot_dimension_numbers<[1], [0], [0], [1], [0, 0, 1, 1], [], []>} : vector<2x128xbf16>, vector<128x64xbf16>, vector<2x64xf32> -> vector<2x64xf32>
    %c0_359 = arith.constant 0 : index
    %c0_360 = arith.constant 0 : index
    %959 = vector.load %arg18[%c0_359, %c0_360] : memref<1x64xf32, #tpu.memory_space<vmem>>, vector<1x64xf32>
    %960 = vector.broadcast %959 : vector<1x64xf32> to vector<2x64xf32>
    %961 = arith.addf %958, %960 : vector<2x64xf32>
    %c0_361 = arith.constant 0 : index
    %962 = memref.load %arg20[%c0_361] : memref<2xf32, #tpu.memory_space<smem>>
    %cst_362 = arith.constant 0.000000e+00 : f32
    %963 = vector.broadcast %cst_362 : f32 to vector<2x64xf32>
    %964 = arith.cmpf oge, %961, %963 : vector<2x64xf32>
    %965 = vector.broadcast %962 : f32 to vector<2x64xf32>
    %966 = arith.mulf %961, %965 : vector<2x64xf32>
    %967 = arith.select %964, %961, %966 : vector<2x64xi1>, vector<2x64xf32>
    %c0_363 = arith.constant 0 : index
    %c0_364 = arith.constant 0 : index
    %968 = vector.load %arg19[%c0_363, %c0_364] : memref<1x64xf32, #tpu.memory_space<vmem>>, vector<1x64xf32>
    %969 = vector.broadcast %968 : vector<1x64xf32> to vector<2x64xf32>
    %970 = arith.mulf %967, %969 : vector<2x64xf32>
    %cst_365 = arith.constant dense<0.000000e+00> : vector<2xf32>
    %971 = vector.multi_reduction <add>, %970, %cst_365 [1] : vector<2x64xf32> to vector<2xf32>
    %972 = vector.shape_cast %971 : vector<2xf32> to vector<2x1xf32>
    %c1_366 = arith.constant 1 : index
    %973 = memref.load %arg20[%c1_366] : memref<2xf32, #tpu.memory_space<smem>>
    %974 = vector.broadcast %973 : f32 to vector<2x1xf32>
    %975 = arith.addf %972, %974 : vector<2x1xf32>
    %976 = vector.shape_cast %975 : vector<2x1xf32> to vector<2x1xf32>
    %977 = vector.broadcast %976 : vector<2x1xf32> to vector<2x128xf32>
    %c0_367 = arith.constant 0 : index
    %c0_368 = arith.constant 0 : index
    %978 = vector.load %arg21[%c0_367, %c0_368] : memref<2x128xf32, #tpu.memory_space<vmem>>, vector<2x128xf32>
    tpu.vector_store %arg21[%c0_367, %c0_368], %977 {strides = array<i32>} : memref<2x128xf32, #tpu.memory_space<vmem>>, vector<2x128xf32>,
    return
  }
  func.func @transform_0(%arg0: i32) -> (i32, i32) {
    %c0_i32 = arith.constant 0 : i32
    %c0_i32_0 = arith.constant 0 : i32
    return %arg0, %c0_i32 : i32, i32
  }
  func.func @transform_1(%arg0: i32) -> (i32, i32) {
    %c0_i32 = arith.constant 0 : i32
    %c0_i32_0 = arith.constant 0 : i32
    %c0_i32_1 = arith.constant 0 : i32
    return %c0_i32, %c0_i32_0 : i32, i32
  }
  func.func @transform_2(%arg0: i32) -> (i32, i32) {
    %c0_i32 = arith.constant 0 : i32
    %c0_i32_0 = arith.constant 0 : i32
    %c0_i32_1 = arith.constant 0 : i32
    return %c0_i32, %c0_i32_0 : i32, i32
  }
  func.func @transform_3(%arg0: i32) -> (i32, i32, i32) {
    %c0_i32 = arith.constant 0 : i32
    %c0_i32_0 = arith.constant 0 : i32
    %c0_i32_1 = arith.constant 0 : i32
    %c0_i32_2 = arith.constant 0 : i32
    return %c0_i32, %c0_i32_0, %c0_i32_1 : i32, i32, i32
  }
  func.func @transform_4(%arg0: i32) -> (i32, i32, i32) {
    %c0_i32 = arith.constant 0 : i32
    %c0_i32_0 = arith.constant 0 : i32
    %c0_i32_1 = arith.constant 0 : i32
    %c0_i32_2 = arith.constant 0 : i32
    return %c0_i32, %c0_i32_0, %c0_i32_1 : i32, i32, i32
  }
  func.func @transform_5(%arg0: i32) -> (i32, i32, i32) {
    %c0_i32 = arith.constant 0 : i32
    %c0_i32_0 = arith.constant 0 : i32
    %c0_i32_1 = arith.constant 0 : i32
    %c0_i32_2 = arith.constant 0 : i32
    return %c0_i32, %c0_i32_0, %c0_i32_1 : i32, i32, i32
  }
  func.func @transform_6(%arg0: i32) -> (i32, i32, i32) {
    %c0_i32 = arith.constant 0 : i32
    %c0_i32_0 = arith.constant 0 : i32
    %c0_i32_1 = arith.constant 0 : i32
    %c0_i32_2 = arith.constant 0 : i32
    return %c0_i32, %c0_i32_0, %c0_i32_1 : i32, i32, i32
  }
  func.func @transform_7(%arg0: i32) -> (i32, i32, i32) {
    %c0_i32 = arith.constant 0 : i32
    %c0_i32_0 = arith.constant 0 : i32
    %c0_i32_1 = arith.constant 0 : i32
    %c0_i32_2 = arith.constant 0 : i32
    return %c0_i32, %c0_i32_0, %c0_i32_1 : i32, i32, i32
  }
  func.func @transform_8(%arg0: i32) -> (i32, i32, i32) {
    %c0_i32 = arith.constant 0 : i32
    %c0_i32_0 = arith.constant 0 : i32
    %c0_i32_1 = arith.constant 0 : i32
    %c0_i32_2 = arith.constant 0 : i32
    return %c0_i32, %c0_i32_0, %c0_i32_1 : i32, i32, i32
  }
  func.func @transform_9(%arg0: i32) -> (i32, i32, i32) {
    %c0_i32 = arith.constant 0 : i32
    %c0_i32_0 = arith.constant 0 : i32
    %c0_i32_1 = arith.constant 0 : i32
    %c0_i32_2 = arith.constant 0 : i32
    return %c0_i32, %c0_i32_0, %c0_i32_1 : i32, i32, i32
  }
  func.func @transform_10(%arg0: i32) -> (i32, i32, i32) {
    %c0_i32 = arith.constant 0 : i32
    %c0_i32_0 = arith.constant 0 : i32
    %c0_i32_1 = arith.constant 0 : i32
    %c0_i32_2 = arith.constant 0 : i32
    return %c0_i32, %c0_i32_0, %c0_i32_1 : i32, i32, i32
  }
  func.func @transform_11(%arg0: i32) -> (i32, i32, i32) {
    %c0_i32 = arith.constant 0 : i32
    %c0_i32_0 = arith.constant 0 : i32
    %c0_i32_1 = arith.constant 0 : i32
    %c0_i32_2 = arith.constant 0 : i32
    return %c0_i32, %c0_i32_0, %c0_i32_1 : i32, i32, i32
  }
  func.func @transform_12(%arg0: i32) -> (i32, i32, i32) {
    %c0_i32 = arith.constant 0 : i32
    %c0_i32_0 = arith.constant 0 : i32
    %c0_i32_1 = arith.constant 0 : i32
    %c0_i32_2 = arith.constant 0 : i32
    return %c0_i32, %c0_i32_0, %c0_i32_1 : i32, i32, i32
  }
  func.func @transform_13(%arg0: i32) -> (i32, i32, i32) {
    %c0_i32 = arith.constant 0 : i32
    %c0_i32_0 = arith.constant 0 : i32
    %c0_i32_1 = arith.constant 0 : i32
    %c0_i32_2 = arith.constant 0 : i32
    return %c0_i32, %c0_i32_0, %c0_i32_1 : i32, i32, i32
  }
  func.func @transform_14(%arg0: i32) -> (i32, i32, i32) {
    %c0_i32 = arith.constant 0 : i32
    %c0_i32_0 = arith.constant 0 : i32
    %c0_i32_1 = arith.constant 0 : i32
    %c0_i32_2 = arith.constant 0 : i32
    return %c0_i32, %c0_i32_0, %c0_i32_1 : i32, i32, i32
  }
  func.func @transform_15(%arg0: i32) -> (i32, i32) {
    %c0_i32 = arith.constant 0 : i32
    %c0_i32_0 = arith.constant 0 : i32
    %c0_i32_1 = arith.constant 0 : i32
    return %c0_i32, %c0_i32_0 : i32, i32
  }
  func.func @transform_16(%arg0: i32) -> (i32, i32) {
    %c0_i32 = arith.constant 0 : i32
    %c0_i32_0 = arith.constant 0 : i32
    %c0_i32_1 = arith.constant 0 : i32
    return %c0_i32, %c0_i32_0 : i32, i32
  }
  func.func @transform_17(%arg0: i32) -> (i32, i32) {
    %c0_i32 = arith.constant 0 : i32
    %c0_i32_0 = arith.constant 0 : i32
    %c0_i32_1 = arith.constant 0 : i32
    return %c0_i32, %c0_i32_0 : i32, i32
  }
  func.func @transform_18(%arg0: i32) -> (i32, i32) {
    %c0_i32 = arith.constant 0 : i32
    %c0_i32_0 = arith.constant 0 : i32
    %c0_i32_1 = arith.constant 0 : i32
    return %c0_i32, %c0_i32_0 : i32, i32
  }
  func.func @transform_19(%arg0: i32) -> i32 {
    %c0_i32 = arith.constant 0 : i32
    %c0_i32_0 = arith.constant 0 : i32
    return %c0_i32 : i32
  }
  func.func @transform_20(%arg0: i32) -> (i32, i32) {
    %c0_i32 = arith.constant 0 : i32
    %c0_i32_0 = arith.constant 0 : i32
    return %arg0, %c0_i32 : i32, i32
  }
}

</mosaic_0001>

<llo_original>
// kernel: tpu_custom_call.1
$region0: #{tpu_custom_call.1}
  #allocation0 [shape = 'u32[]', space=smem, size = 0x4, offset = 0x4, fixed_abs, tag = 'smem constant byte address 0x4 - core index']
  #allocation1 [shape = 'u32[72,128]{1,0:T(1,128)}', space=vmem, size = 0x9000, scoped, tag = 'internal scratch']
  %s0 = inlined_call_operand.vmem [shape: bf16[16,136], index: 0, kind: input, shape index: {}]
  %s1 = inlined_call_operand.hbm [shape: f32[8,128], index: 1, kind: input, shape index: {}]
  %s2 = inlined_call_operand.vmem [shape: bf16[136,128], index: 2, kind: input, shape index: {}]
  %s3 = inlined_call_operand.hbm [shape: bf16[4,128,384], index: 3, kind: input, shape index: {}]
  %s4 = inlined_call_operand.hbm [shape: f32[4,1,384], index: 4, kind: input, shape index: {}]
  %s5 = inlined_call_operand.hbm [shape: bf16[4,128,128], index: 5, kind: input, shape index: {}]
  %s6 = inlined_call_operand.hbm [shape: f32[4,1,128], index: 6, kind: input, shape index: {}]
  %s7 = inlined_call_operand.hbm [shape: f32[4,1,128], index: 7, kind: input, shape index: {}]
  %s8 = inlined_call_operand.hbm [shape: f32[4,1,128], index: 8, kind: input, shape index: {}]
  %s9 = inlined_call_operand.hbm [shape: bf16[4,128,512], index: 9, kind: input, shape index: {}]
  %s10 = inlined_call_operand.vmem [shape: f32[4,1,512], index: 10, kind: input, shape index: {}]
  %s11 = inlined_call_operand.hbm [shape: bf16[4,512,128], index: 11, kind: input, shape index: {}]
  %s12 = inlined_call_operand.vmem [shape: f32[4,1,128], index: 12, kind: input, shape index: {}]
  %s13 = inlined_call_operand.hbm [shape: f32[4,1,128], index: 13, kind: input, shape index: {}]
  %s14 = inlined_call_operand.vmem [shape: f32[4,1,128], index: 14, kind: input, shape index: {}]
  %s15 = inlined_call_operand.vmem [shape: f32[1,128], index: 15, kind: input, shape index: {}]
  %s16 = inlined_call_operand.vmem [shape: bf16[128,64], index: 16, kind: input, shape index: {}]
  %s17 = inlined_call_operand.vmem [shape: f32[1,64], index: 17, kind: input, shape index: {}]
  %s18 = inlined_call_operand.vmem [shape: f32[1,64], index: 18, kind: input, shape index: {}]
  %s19 = inlined_call_operand.vmem [shape: f32[2], index: 19, kind: input, shape index: {}]
  %s20 = inlined_call_operand.hbm [shape: f32[2,128], index: 20, kind: output, shape index: {}]
  %s21 = sld [smem:[#allocation0]]
  $region134: #{tpu_custom_call.1} parent=0
    _
  %s23 = ssub.s32 1, %s21
  %s24 = scalar_select 0, %s23, %s21
  $region1: #{tpu_custom_call.1} parent=0
    #allocation2 [shape = 'u8[4096]{0}', space=vmem, size = 0x1000, scoped, tag = 'input window, operand 1, single buffered']
    #allocation3 [shape = 's32[1]{0}', space=sflag, size = 0x4, scoped, tag = 'scoped memory for tpu_custom_call.1']
    #allocation4 [shape = 's32[1]{0}', space=sflag, size = 0x4, scoped, tag = 'scoped memory for tpu_custom_call.1']
    #allocation5 [shape = 's32[1]{0}', space=sflag, size = 0x4, scoped, tag = 'scoped memory for tpu_custom_call.1']
    #allocation6 [shape = 'u8[393216]{0}', space=vmem, size = 0x60000, scoped, tag = 'input window, operand 3, single buffered']
    #allocation7 [shape = 's32[1]{0}', space=sflag, size = 0x4, scoped, tag = 'scoped memory for tpu_custom_call.1']
    #allocation8 [shape = 'u8[6144]{0}', space=vmem, size = 0x1800, scoped, tag = 'input window, operand 4, single buffered']
    #allocation9 [shape = 'u8[131072]{0}', space=vmem, size = 0x20000, scoped, tag = 'input window, operand 5, single buffered']
    #allocation10 [shape = 's32[1]{0}', space=sflag, size = 0x4, scoped, tag = 'scoped memory for tpu_custom_call.1']
    #allocation11 [shape = 'u8[2048]{0}', space=vmem, size = 0x800, scoped, tag = 'input window, operand 6, single buffered']
    #allocation12 [shape = 'u8[2048]{0}', space=vmem, size = 0x800, scoped, tag = 'input window, operand 7, single buffered']
    #allocation13 [shape = 's32[1]{0}', space=sflag, size = 0x4, scoped, tag = 'scoped memory for tpu_custom_call.1']
    #allocation14 [shape = 'u8[2048]{0}', space=vmem, size = 0x800, scoped, tag = 'input window, operand 8, single buffered']
    #allocation15 [shape = 'u8[524288]{0}', space=vmem, size = 0x80000, scoped, tag = 'input window, operand 9, single buffered']
    #allocation16 [shape = 's32[1]{0}', space=sflag, size = 0x4, scoped, tag = 'scoped memory for tpu_custom_call.1']
    #allocation17 [shape = 'u8[524288]{0}', space=vmem, size = 0x80000, scoped, tag = 'input window, operand 11, single buffered']
    #allocation18 [shape = 'u8[2048]{0}', space=vmem, size = 0x800, scoped, tag = 'input window, operand 13, single buffered']
    #allocation19 [shape = 's32[1]{0}', space=sflag, size = 0x4, scoped, tag = 'scoped memory for tpu_custom_call.1']
    #allocation20 [shape = 'u8[512]{0}', space=smem, size = 0x200, scoped, tag = 'input window, operand 19, single buffered']
    #allocation21 [shape = 'u8[1024]{0}', space=vmem, size = 0x400, scoped, tag = 'output window, operand 0, single buffered']
    %25 = vsyncpa [#allocation3], 0
    %26 = vsyncpa [#allocation7], 0
    %27 = vsyncpa [#allocation10], 0
    %28 = vsyncpa [#allocation13], 0
    %29 = vsyncpa [#allocation16], 0
    %30 = vsyncpa [#allocation19], 0
    %31 = vsyncpa [#allocation5], 0
    %32 = vsyncpa [#allocation4], 0
    // Predicated region
    $region2: #{tpu_custom_call.1} parent=1 // pred_check
      _
    $region3: #{tpu_custom_call.1} parent=1 // pred_check_branch
      %34 = sbr.rel (0) target = $region5
    $region4: #{tpu_custom_call.1} parent=1 // pred_region
      _
    $region5: #{tpu_custom_call.1} parent=1 // pred_fallthru
      _
    // Predicated region
    $region6: #{tpu_custom_call.1} parent=1 // pred_check
      _
    $region7: #{tpu_custom_call.1} parent=1 // pred_check_branch
      %36 = sbr.rel (0) target = $region9
    $region8: #{tpu_custom_call.1} parent=1 // pred_region
      %38 = vsyncadd [#allocation3], 0
      %s40 = sshll.u32 %s1, 4
      %s41 = int_to_ptr.hbm [resolvable:$true] %s40
      %s42 = sshll.u32 [#allocation2], 4
      %s43 = int_to_ptr.vmem [resolvable:$true] %s42
      %45 = dma.hbm_to_vmem [thread:$0]  %s41, 128, %s43, [#allocation3]
    $region9: #{tpu_custom_call.1} parent=1 // pred_fallthru
      _
    // Predicated region
    $region10: #{tpu_custom_call.1} parent=1 // pred_check
      _
    $region11: #{tpu_custom_call.1} parent=1 // pred_check_branch
      %47 = sbr.rel (0) target = $region13
    $region12: #{tpu_custom_call.1} parent=1 // pred_region
      _
    $region13: #{tpu_custom_call.1} parent=1 // pred_fallthru
      _
    // Predicated region
    $region14: #{tpu_custom_call.1} parent=1 // pred_check
      _
    $region15: #{tpu_custom_call.1} parent=1 // pred_check_branch
      %49 = sbr.rel (0) target = $region17
    $region16: #{tpu_custom_call.1} parent=1 // pred_region
      %51 = vsyncadd [#allocation7], 0
      %s52 = sshll.u32 %s3, 4
      %s53 = int_to_ptr.hbm [resolvable:$true] %s52
      %s54 = sshll.u32 [#allocation6], 4
      %s55 = int_to_ptr.vmem [resolvable:$true] %s54
      %60 = dma.hbm_to_vmem [thread:$0]  %s53, 12288, %s55, [#allocation7], 192, 192, 12
    $region17: #{tpu_custom_call.1} parent=1 // pred_fallthru
      _
    // Predicated region
    $region18: #{tpu_custom_call.1} parent=1 // pred_check
      _
    $region19: #{tpu_custom_call.1} parent=1 // pred_check_branch
      %62 = sbr.rel (0) target = $region21
    $region20: #{tpu_custom_call.1} parent=1 // pred_region
      %64 = vsyncadd [#allocation7], 0
      %s65 = sshll.u32 %s4, 4
      %s66 = int_to_ptr.hbm [resolvable:$true] %s65
      %s67 = sshll.u32 [#allocation8], 4
      %s68 = int_to_ptr.vmem [resolvable:$true] %s67
      %73 = dma.hbm_to_vmem [thread:$0]  %s66, 192, %s68, [#allocation7], 48, 48, 3
    $region21: #{tpu_custom_call.1} parent=1 // pred_fallthru
      _
    // Predicated region
    $region22: #{tpu_custom_call.1} parent=1 // pred_check
      _
    $region23: #{tpu_custom_call.1} parent=1 // pred_check_branch
      %75 = sbr.rel (0) target = $region25
    $region24: #{tpu_custom_call.1} parent=1 // pred_region
      %77 = vsyncadd [#allocation10], 0
      %s78 = sshll.u32 %s5, 4
      %s79 = int_to_ptr.hbm [resolvable:$true] %s78
      %s80 = sshll.u32 [#allocation9], 4
      %s81 = int_to_ptr.vmem [resolvable:$true] %s80
      %86 = dma.hbm_to_vmem [thread:$0]  %s79, 4096, %s81, [#allocation10], 64, 64, 4
    $region25: #{tpu_custom_call.1} parent=1 // pred_fallthru
      _
    // Predicated region
    $region26: #{tpu_custom_call.1} parent=1 // pred_check
      _
    $region27: #{tpu_custom_call.1} parent=1 // pred_check_branch
      %88 = sbr.rel (0) target = $region29
    $region28: #{tpu_custom_call.1} parent=1 // pred_region
      %90 = vsyncadd [#allocation10], 0
      %s91 = sshll.u32 %s6, 4
      %s92 = int_to_ptr.hbm [resolvable:$true] %s91
      %s93 = sshll.u32 [#allocation11], 4
      %s94 = int_to_ptr.vmem [resolvable:$true] %s93
      %99 = dma.hbm_to_vmem [thread:$0]  %s92, 64, %s94, [#allocation10], 16, 16, 1
    $region29: #{tpu_custom_call.1} parent=1 // pred_fallthru
      _
    // Predicated region
    $region30: #{tpu_custom_call.1} parent=1 // pred_check
      _
    $region31: #{tpu_custom_call.1} parent=1 // pred_check_branch
      %101 = sbr.rel (0) target = $region33
    $region32: #{tpu_custom_call.1} parent=1 // pred_region
      %103 = vsyncadd [#allocation13], 0
      %s104 = sshll.u32 %s7, 4
      %s105 = int_to_ptr.hbm [resolvable:$true] %s104
      %s106 = sshll.u32 [#allocation12], 4
      %s107 = int_to_ptr.vmem [resolvable:$true] %s106
      %112 = dma.hbm_to_vmem [thread:$0]  %s105, 64, %s107, [#allocation13], 16, 16, 1
    $region33: #{tpu_custom_call.1} parent=1 // pred_fallthru
      _
    // Predicated region
    $region34: #{tpu_custom_call.1} parent=1 // pred_check
      _
    $region35: #{tpu_custom_call.1} parent=1 // pred_check_branch
      %114 = sbr.rel (0) target = $region37
    $region36: #{tpu_custom_call.1} parent=1 // pred_region
      %116 = vsyncadd [#allocation13], 0
      %s117 = sshll.u32 %s8, 4
      %s118 = int_to_ptr.hbm [resolvable:$true] %s117
      %s119 = sshll.u32 [#allocation14], 4
      %s120 = int_to_ptr.vmem [resolvable:$true] %s119
      %125 = dma.hbm_to_vmem [thread:$0]  %s118, 64, %s120, [#allocation13], 16, 16, 1
    $region37: #{tpu_custom_call.1} parent=1 // pred_fallthru
      _
    // Predicated region
    $region38: #{tpu_custom_call.1} parent=1 // pred_check
      _
    $region39: #{tpu_custom_call.1} parent=1 // pred_check_branch
      %127 = sbr.rel (0) target = $region41
    $region40: #{tpu_custom_call.1} parent=1 // pred_region
      %129 = vsyncadd [#allocation16], 0
      %s130 = sshll.u32 %s9, 4
      %s131 = int_to_ptr.hbm [resolvable:$true] %s130
      %s132 = sshll.u32 [#allocation15], 4
      %s133 = int_to_ptr.vmem [resolvable:$true] %s132
      %138 = dma.hbm_to_vmem [thread:$0]  %s131, 16384, %s133, [#allocation16], 256, 256, 16
    $region41: #{tpu_custom_call.1} parent=1 // pred_fallthru
      _
    // Predicated region
    $region42: #{tpu_custom_call.1} parent=1 // pred_check
      _
    $region43: #{tpu_custom_call.1} parent=1 // pred_check_branch
      %140 = sbr.rel (0) target = $region45
    $region44: #{tpu_custom_call.1} parent=1 // pred_region
      _
    $region45: #{tpu_custom_call.1} parent=1 // pred_fallthru
      _
    // Predicated region
    $region46: #{tpu_custom_call.1} parent=1 // pred_check
      _
    $region47: #{tpu_custom_call.1} parent=1 // pred_check_branch
      %142 = sbr.rel (0) target = $region49
    $region48: #{tpu_custom_call.1} parent=1 // pred_region
      %144 = vsyncadd [#allocation16], 0
      %s145 = sshll.u32 %s11, 4
      %s146 = int_to_ptr.hbm [resolvable:$true] %s145
      %s147 = sshll.u32 [#allocation17], 4
      %s148 = int_to_ptr.vmem [resolvable:$true] %s147
      %153 = dma.hbm_to_vmem [thread:$0]  %s146, 16384, %s148, [#allocation16], 64, 64, 4
    $region49: #{tpu_custom_call.1} parent=1 // pred_fallthru
      _
    // Predicated region
    $region50: #{tpu_custom_call.1} parent=1 // pred_check
      _
    $region51: #{tpu_custom_call.1} parent=1 // pred_check_branch
      %155 = sbr.rel (0) target = $region53
    $region52: #{tpu_custom_call.1} parent=1 // pred_region
      _
    $region53: #{tpu_custom_call.1} parent=1 // pred_fallthru
      _
    // Predicated region
    $region54: #{tpu_custom_call.1} parent=1 // pred_check
      _
    $region55: #{tpu_custom_call.1} parent=1 // pred_check_branch
      %157 = sbr.rel (0) target = $region57
    $region56: #{tpu_custom_call.1} parent=1 // pred_region
      %159 = vsyncadd [#allocation19], 0
      %s160 = sshll.u32 %s13, 4
      %s161 = int_to_ptr.hbm [resolvable:$true] %s160
      %s162 = sshll.u32 [#allocation18], 4
      %s163 = int_to_ptr.vmem [resolvable:$true] %s162
      %168 = dma.hbm_to_vmem [thread:$0]  %s161, 64, %s163, [#allocation19], 16, 16, 1
    $region57: #{tpu_custom_call.1} parent=1 // pred_fallthru
      _
    // Predicated region
    $region58: #{tpu_custom_call.1} parent=1 // pred_check
      _
    $region59: #{tpu_custom_call.1} parent=1 // pred_check_branch
      %170 = sbr.rel (0) target = $region61
    $region60: #{tpu_custom_call.1} parent=1 // pred_region
      _
    $region61: #{tpu_custom_call.1} parent=1 // pred_fallthru
      _
    // Predicated region
    $region62: #{tpu_custom_call.1} parent=1 // pred_check
      _
    $region63: #{tpu_custom_call.1} parent=1 // pred_check_branch
      %172 = sbr.rel (0) target = $region65
    $region64: #{tpu_custom_call.1} parent=1 // pred_region
      _
    $region65: #{tpu_custom_call.1} parent=1 // pred_fallthru
      _
    // Predicated region
    $region66: #{tpu_custom_call.1} parent=1 // pred_check
      _
    $region67: #{tpu_custom_call.1} parent=1 // pred_check_branch
      %174 = sbr.rel (0) target = $region69
    $region68: #{tpu_custom_call.1} parent=1 // pred_region
      _
    $region69: #{tpu_custom_call.1} parent=1 // pred_fallthru
      _
    // Predicated region
    $region70: #{tpu_custom_call.1} parent=1 // pred_check
      _
    $region71: #{tpu_custom_call.1} parent=1 // pred_check_branch
      %176 = sbr.rel (0) target = $region73
    $region72: #{tpu_custom_call.1} parent=1 // pred_region
      _
    $region73: #{tpu_custom_call.1} parent=1 // pred_fallthru
      _
    // Predicated region
    $region74: #{tpu_custom_call.1} parent=1 // pred_check
      _
    $region75: #{tpu_custom_call.1} parent=1 // pred_check_branch
      %178 = sbr.rel (0) target = $region77
    $region76: #{tpu_custom_call.1} parent=1 // pred_region
      _
    $region77: #{tpu_custom_call.1} parent=1 // pred_fallthru
      _
    // Predicated region
    $region78: #{tpu_custom_call.1} parent=1 // pred_check
      _
    $region79: #{tpu_custom_call.1} parent=1 // pred_check_branch
      %180 = sbr.rel (0) target = $region81
    $region80: #{tpu_custom_call.1} parent=1 // pred_region
      %182 = vsyncadd [#allocation5], 0
      %s184 = sshll.u32 %s19, 4
      %s185 = int_to_ptr.vmem [resolvable:$true] %s184
      %187 = dma.vmem_to_smem %s185, 16, [#allocation20], [#allocation5]
    $region81: #{tpu_custom_call.1} parent=1 // pred_fallthru
      _
    // Predicated region
    $region82: #{tpu_custom_call.1} parent=1 // pred_check
      _
    $region83: #{tpu_custom_call.1} parent=1 // pred_check_branch
      %189 = sbr.rel (0) target = $region85
    $region84: #{tpu_custom_call.1} parent=1 // pred_region
      %191 = dma.done [#allocation3], 128
    $region85: #{tpu_custom_call.1} parent=1 // pred_fallthru
      _
    // Predicated region
    $region86: #{tpu_custom_call.1} parent=1 // pred_check
      _
    $region87: #{tpu_custom_call.1} parent=1 // pred_check_branch
      %193 = sbr.rel (0) target = $region89
    $region88: #{tpu_custom_call.1} parent=1 // pred_region
      %195 = dma.done [#allocation7], 12288
    $region89: #{tpu_custom_call.1} parent=1 // pred_fallthru
      _
    // Predicated region
    $region90: #{tpu_custom_call.1} parent=1 // pred_check
      _
    $region91: #{tpu_custom_call.1} parent=1 // pred_check_branch
      %197 = sbr.rel (0) target = $region93
    $region92: #{tpu_custom_call.1} parent=1 // pred_region
      %199 = dma.done [#allocation7], 192
    $region93: #{tpu_custom_call.1} parent=1 // pred_fallthru
      _
    // Predicated region
    $region94: #{tpu_custom_call.1} parent=1 // pred_check
      _
    $region95: #{tpu_custom_call.1} parent=1 // pred_check_branch
      %201 = sbr.rel (0) target = $region97
    $region96: #{tpu_custom_call.1} parent=1 // pred_region
      %203 = dma.done [#allocation10], 4096
    $region97: #{tpu_custom_call.1} parent=1 // pred_fallthru
      _
    // Predicated region
    $region98: #{tpu_custom_call.1} parent=1 // pred_check
      _
    $region99: #{tpu_custom_call.1} parent=1 // pred_check_branch
      %205 = sbr.rel (0) target = $region101
    $region100: #{tpu_custom_call.1} parent=1 // pred_region
      %207 = dma.done [#allocation10], 64
    $region101: #{tpu_custom_call.1} parent=1 // pred_fallthru
      _
    // Predicated region
    $region102: #{tpu_custom_call.1} parent=1 // pred_check
      _
    $region103: #{tpu_custom_call.1} parent=1 // pred_check_branch
      %209 = sbr.rel (0) target = $region105
    $region104: #{tpu_custom_call.1} parent=1 // pred_region
      %211 = dma.done [#allocation13], 64
    $region105: #{tpu_custom_call.1} parent=1 // pred_fallthru
      _
    // Predicated region
    $region106: #{tpu_custom_call.1} parent=1 // pred_check
      _
    $region107: #{tpu_custom_call.1} parent=1 // pred_check_branch
      %213 = sbr.rel (0) target = $region109
    $region108: #{tpu_custom_call.1} parent=1 // pred_region
      %215 = dma.done [#allocation13], 64
    $region109: #{tpu_custom_call.1} parent=1 // pred_fallthru
      _
    // Predicated region
    $region110: #{tpu_custom_call.1} parent=1 // pred_check
      _
    $region111: #{tpu_custom_call.1} parent=1 // pred_check_branch
      %217 = sbr.rel (0) target = $region113
    $region112: #{tpu_custom_call.1} parent=1 // pred_region
      %219 = dma.done [#allocation16], 16384
    $region113: #{tpu_custom_call.1} parent=1 // pred_fallthru
      _
    // Predicated region
    $region114: #{tpu_custom_call.1} parent=1 // pred_check
      _
    $region115: #{tpu_custom_call.1} parent=1 // pred_check_branch
      %221 = sbr.rel (0) target = $region117
    $region116: #{tpu_custom_call.1} parent=1 // pred_region
      %223 = dma.done [#allocation16], 16384
    $region117: #{tpu_custom_call.1} parent=1 // pred_fallthru
      _
    // Predicated region
    $region118: #{tpu_custom_call.1} parent=1 // pred_check
      _
    $region119: #{tpu_custom_call.1} parent=1 // pred_check_branch
      %225 = sbr.rel (0) target = $region121
    $region120: #{tpu_custom_call.1} parent=1 // pred_region
      %227 = dma.done [#allocation19], 64
    $region121: #{tpu_custom_call.1} parent=1 // pred_fallthru
      _
    // Predicated region
    $region122: #{tpu_custom_call.1} parent=1 // pred_check
      _
    $region123: #{tpu_custom_call.1} parent=1 // pred_check_branch
      %229 = sbr.rel (0) target = $region125
    $region124: #{tpu_custom_call.1} parent=1 // pred_region
      %231 = dma.done [#allocation5], 16
    $region125: #{tpu_custom_call.1} parent=1 // pred_fallthru
      _
    %232 = sfence
    %v234 = vld [vmem:[%s0] sm:$0xff]
    %v235 = vld [vmem:[%s0 + $0x8] sm:$0xff]
    %v236 = vld [vmem:[%s2] sm:$0xf]
    %v237 = vld [vmem:[%s2 + $0x4] sm:$0xf]
    %v238 = vld [vmem:[%s2 + $0x8] sm:$0xf]
    %v239 = vld [vmem:[%s2 + $0xc] sm:$0xf]
    %v240 = vld [vmem:[%s2 + $0x10] sm:$0xf]
    %v241 = vld [vmem:[%s2 + $0x14] sm:$0xf]
    %v242 = vld [vmem:[%s2 + $0x18] sm:$0xf]
    %v243 = vld [vmem:[%s2 + $0x1c] sm:$0xf]
    %v244 = vld [vmem:[%s2 + $0x20] sm:$0xf]
    %v245 = vld [vmem:[%s2 + $0x24] sm:$0xf]
    %v246 = vld [vmem:[%s2 + $0x28] sm:$0xf]
    %v247 = vld [vmem:[%s2 + $0x2c] sm:$0xf]
    %v248 = vld [vmem:[%s2 + $0x30] sm:$0xf]
    %v249 = vld [vmem:[%s2 + $0x34] sm:$0xf]
    %v250 = vld [vmem:[%s2 + $0x38] sm:$0xf]
    %v251 = vld [vmem:[%s2 + $0x3c] sm:$0xf]
    %v252 = vld [vmem:[%s2 + $0x40] sm:$0xf]
    %v255 = vunpack.c.l.b16 %v234
    %v256 = vunpack.c.h.b16 %v234
    %v257 = vunpack.c.l.b16 %v235
    %v258 = vunpack.c.h.b16 %v235
    %v259 = vpack.c.b16 %v257, %v255
    %v260 = vpack.c.b16 %v258, %v256
    %v279 = vunpack.c.l.b16 %v236
    %v280 = vunpack.c.l.b16 %v237
    %v281 = vunpack.c.l.b16 %v238
    %v282 = vunpack.c.l.b16 %v239
    %v283 = vunpack.c.l.b16 %v240
    %v284 = vunpack.c.l.b16 %v241
    %v285 = vunpack.c.l.b16 %v242
    %v286 = vunpack.c.l.b16 %v243
    %v287 = vunpack.c.l.b16 %v244
    %v288 = vunpack.c.l.b16 %v245
    %v289 = vunpack.c.l.b16 %v246
    %v290 = vunpack.c.l.b16 %v247
    %v291 = vunpack.c.l.b16 %v248
    %v292 = vunpack.c.l.b16 %v249
    %v293 = vunpack.c.l.b16 %v250
    %v294 = vunpack.c.l.b16 %v251
    %v295 = vunpack.c.l.b16 %v252
    %v296 = vpack.c.b16 %v280, %v279
    %v297 = vpack.c.b16 %v282, %v281
    %v298 = vpack.c.b16 %v284, %v283
    %v299 = vpack.c.b16 %v286, %v285
    %v300 = vpack.c.b16 %v288, %v287
    %v301 = vpack.c.b16 %v290, %v289
    %v302 = vpack.c.b16 %v292, %v291
    %v303 = vpack.c.b16 %v294, %v293
    %v304 = vpack.c.b16 %v295, %v295
    %vm313 = vcmask 64512
    %v315 = vsel %vm313, %v260, 0
    %vm317 = vcmask 1043456
    %v319 = vsel %vm317, %v304, 0
    %321 = vmatpush.bf16.msra.mxu0 %v303
    %322 = vmatpush.bf16.msra.mxu0 %v302
    %323 = vmatpush.bf16.msra.mxu0 %v301
    %324 = vmatpush.bf16.msra.mxu0 %v300
    %325 = vmatpush.bf16.msra.mxu0 %v299
    %326 = vmatpush.bf16.msra.mxu0 %v298
    %327 = vmatpush.bf16.msra.mxu0 %v297
    %328 = vmatpush.bf16.msra.mxu0 %v296
    %329 = vmatmul.bf16.gmra.mxu0 %v259
    %v330 = vpop.f32.mrf.mxu0
    %v331 = vadd.f32 0.0, %v330
    %v332 = vpop.f32.mrf.mxu0
    %v333 = vadd.f32 0.0, %v332
    %334 = vdwg.mxu0
    %335 = vmatpush.bf16.msra.mxu0 0
    %336 = vmatpush.bf16.msra.mxu0 0
    %337 = vmatpush.bf16.msra.mxu0 0
    %338 = vmatpush.bf16.msra.mxu0 0
    %339 = vmatpush.bf16.msra.mxu0 0
    %340 = vmatpush.bf16.msra.mxu0 0
    %341 = vmatpush.bf16.msra.mxu0 0
    %342 = vmatpush.bf16.msra.mxu0 %v319
    %343 = vmatmul.bf16.gmra.mxu0 %v315
    %v344 = vpop.f32.mrf.mxu0
    %v345 = vadd.f32 %v331, %v344
    %v346 = vpop.f32.mrf.mxu0
    %v347 = vadd.f32 %v333, %v346
    %348 = vdwg.mxu0
    %v349 = vld [vmem:[#allocation2] sm:$0xff]
    %v350 = vadd.f32 %v345, %v349
    %v351 = vadd.f32 %v347, %v349
    %v352 = vpack.c.bf16 %v351, %v350
    %v353 = vld [vmem:[#allocation6] sm:$0xff]
    %v354 = vld [vmem:[#allocation6 + $0x8] sm:$0xf]
    %v355 = vld [vmem:[#allocation6 + $0xc] sm:$0xff]
    %v356 = vld [vmem:[#allocation6 + $0x14] sm:$0xf]
    %v357 = vld [vmem:[#allocation6 + $0x18] sm:$0xff]
    %v358 = vld [vmem:[#allocation6 + $0x20] sm:$0xf]
    %v359 = vld [vmem:[#allocation6 + $0x24] sm:$0xff]
    %v360 = vld [vmem:[#allocation6 + $0x2c] sm:$0xf]
    %v361 = vld [vmem:[#allocation6 + $0x30] sm:$0xff]
    %v362 = vld [vmem:[#allocation6 + $0x38] sm:$0xf]
    %v363 = vld [vmem:[#allocation6 + $0x3c] sm:$0xff]
    %v364 = vld [vmem:[#allocation6 + $0x44] sm:$0xf]
    %v365 = vld [vmem:[#allocation6 + $0x48] sm:$0xff]
    %v366 = vld [vmem:[#allocation6 + $0x50] sm:$0xf]
    %v367 = vld [vmem:[#allocation6 + $0x54] sm:$0xff]
    %v368 = vld [vmem:[#allocation6 + $0x5c] sm:$0xf]
    %v369 = vld [vmem:[#allocation6 + $0x60] sm:$0xff]
    %v370 = vld [vmem:[#allocation6 + $0x68] sm:$0xf]
    %v371 = vld [vmem:[#allocation6 + $0x6c] sm:$0xff]
    %v372 = vld [vmem:[#allocation6 + $0x74] sm:$0xf]
    %v373 = vld [vmem:[#allocation6 + $0x78] sm:$0xff]
    %v374 = vld [vmem:[#allocation6 + $0x80] sm:$0xf]
    %v375 = vld [vmem:[#allocation6 + $0x84] sm:$0xff]
    %v376 = vld [vmem:[#allocation6 + $0x8c] sm:$0xf]
    %v377 = vld [vmem:[#allocation6 + $0x90] sm:$0xff]
    %v378 = vld [vmem:[#allocation6 + $0x98] sm:$0xf]
    %v379 = vld [vmem:[#allocation6 + $0x9c] sm:$0xff]
    %v380 = vld [vmem:[#allocation6 + $0xa4] sm:$0xf]
    %v381 = vld [vmem:[#allocation6 + $0xa8] sm:$0xff]
    %v382 = vld [vmem:[#allocation6 + $0xb0] sm:$0xf]
    %v383 = vld [vmem:[#allocation6 + $0xb4] sm:$0xff]
    %v384 = vld [vmem:[#allocation6 + $0xbc] sm:$0xf]
    %v385 = vld [vmem:[#allocation8] sm:$0x7]
    %v387 = vperm.slane %v385, 0
    %v388 = vperm.slane %v385, 1
    %v389 = vperm.slane %v385, 2
    %v425 = vunpack.c.l.b16 %v353
    %v426 = vunpack.c.h.b16 %v353
    %v427 = vunpack.c.l.b16 %v354
    %v428 = vunpack.c.l.b16 %v355
    %v429 = vunpack.c.h.b16 %v355
    %v430 = vunpack.c.l.b16 %v356
    %v431 = vunpack.c.l.b16 %v357
    %v432 = vunpack.c.h.b16 %v357
    %v433 = vunpack.c.l.b16 %v358
    %v434 = vunpack.c.l.b16 %v359
    %v435 = vunpack.c.h.b16 %v359
    %v436 = vunpack.c.l.b16 %v360
    %v437 = vunpack.c.l.b16 %v361
    %v438 = vunpack.c.h.b16 %v361
    %v439 = vunpack.c.l.b16 %v362
    %v440 = vunpack.c.l.b16 %v363
    %v441 = vunpack.c.h.b16 %v363
    %v442 = vunpack.c.l.b16 %v364
    %v443 = vunpack.c.l.b16 %v365
    %v444 = vunpack.c.h.b16 %v365
    %v445 = vunpack.c.l.b16 %v366
    %v446 = vunpack.c.l.b16 %v367
    %v447 = vunpack.c.h.b16 %v367
    %v448 = vunpack.c.l.b16 %v368
    %v449 = vunpack.c.l.b16 %v369
    %v450 = vunpack.c.h.b16 %v369
    %v451 = vunpack.c.l.b16 %v370
    %v452 = vunpack.c.l.b16 %v371
    %v453 = vunpack.c.h.b16 %v371
    %v454 = vunpack.c.l.b16 %v372
    %v455 = vunpack.c.l.b16 %v373
    %v456 = vunpack.c.h.b16 %v373
    %v457 = vunpack.c.l.b16 %v374
    %v458 = vunpack.c.l.b16 %v375
    %v459 = vunpack.c.h.b16 %v375
    %v460 = vunpack.c.l.b16 %v376
    %v461 = vunpack.c.l.b16 %v377
    %v462 = vunpack.c.h.b16 %v377
    %v463 = vunpack.c.l.b16 %v378
    %v464 = vunpack.c.l.b16 %v379
    %v465 = vunpack.c.h.b16 %v379
    %v466 = vunpack.c.l.b16 %v380
    %v467 = vunpack.c.l.b16 %v381
    %v468 = vunpack.c.h.b16 %v381
    %v469 = vunpack.c.l.b16 %v382
    %v470 = vunpack.c.l.b16 %v383
    %v471 = vunpack.c.h.b16 %v383
    %v472 = vunpack.c.l.b16 %v384
    %v473 = vpack.c.b16 %v428, %v425
    %v474 = vpack.c.b16 %v429, %v426
    %v475 = vpack.c.b16 %v430, %v427
    %v476 = vpack.c.b16 %v434, %v431
    %v477 = vpack.c.b16 %v435, %v432
    %v478 = vpack.c.b16 %v436, %v433
    %v479 = vpack.c.b16 %v440, %v437
    %v480 = vpack.c.b16 %v441, %v438
    %v481 = vpack.c.b16 %v442, %v439
    %v482 = vpack.c.b16 %v446, %v443
    %v483 = vpack.c.b16 %v447, %v444
    %v484 = vpack.c.b16 %v448, %v445
    %v485 = vpack.c.b16 %v452, %v449
    %v486 = vpack.c.b16 %v453, %v450
    %v487 = vpack.c.b16 %v454, %v451
    %v488 = vpack.c.b16 %v458, %v455
    %v489 = vpack.c.b16 %v459, %v456
    %v490 = vpack.c.b16 %v460, %v457
    %v491 = vpack.c.b16 %v464, %v461
    %v492 = vpack.c.b16 %v465, %v462
    %v493 = vpack.c.b16 %v466, %v463
    %v494 = vpack.c.b16 %v470, %v467
    %v495 = vpack.c.b16 %v471, %v468
    %v496 = vpack.c.b16 %v472, %v469
    %521 = vmatpush.bf16.msra.mxu0 %v494
    %522 = vmatpush.bf16.msra.mxu0 %v491
    %523 = vmatpush.bf16.msra.mxu0 %v488
    %524 = vmatpush.bf16.msra.mxu0 %v485
    %525 = vmatpush.bf16.msra.mxu0 %v482
    %526 = vmatpush.bf16.msra.mxu0 %v479
    %527 = vmatpush.bf16.msra.mxu0 %v476
    %528 = vmatpush.bf16.msra.mxu0 %v473
    %529 = vmatmul.bf16.gmra.mxu0 %v352
    %v530 = vpop.f32.mrf.mxu0
    %v531 = vadd.f32 %v387, %v530
    %v532 = vpop.f32.mrf.mxu0
    %v533 = vadd.f32 %v387, %v532
    %534 = vdwg.mxu0
    %535 = vmatpush.bf16.msra.mxu0 %v495
    %536 = vmatpush.bf16.msra.mxu0 %v492
    %537 = vmatpush.bf16.msra.mxu0 %v489
    %538 = vmatpush.bf16.msra.mxu0 %v486
    %539 = vmatpush.bf16.msra.mxu0 %v483
    %540 = vmatpush.bf16.msra.mxu0 %v480
    %541 = vmatpush.bf16.msra.mxu0 %v477
    %542 = vmatpush.bf16.msra.mxu0 %v474
    %543 = vmatmul.bf16.gmra.mxu0 %v352
    %v544 = vpop.f32.mrf.mxu0
    %v545 = vadd.f32 %v388, %v544
    %v546 = vpop.f32.mrf.mxu0
    %v547 = vadd.f32 %v388, %v546
    %548 = vdwg.mxu0
    %549 = vmatpush.bf16.msra.mxu0 %v496
    %550 = vmatpush.bf16.msra.mxu0 %v493
    %551 = vmatpush.bf16.msra.mxu0 %v490
    %552 = vmatpush.bf16.msra.mxu0 %v487
    %553 = vmatpush.bf16.msra.mxu0 %v484
    %554 = vmatpush.bf16.msra.mxu0 %v481
    %555 = vmatpush.bf16.msra.mxu0 %v478
    %556 = vmatpush.bf16.msra.mxu0 %v475
    %557 = vmatmul.bf16.gmra.mxu0 %v352
    %v558 = vpop.f32.mrf.mxu0
    %v559 = vadd.f32 %v389, %v558
    %v560 = vpop.f32.mrf.mxu0
    %v561 = vadd.f32 %v389, %v560
    %562 = vdwg.mxu0
    %v563 = vmul.f32 %v531, 0.25
    %v564 = vmul.f32 %v533, 0.25
    %v565 = vpack.c.bf16 %v563, %v563
    %v566 = vpack.c.bf16 %v564, %v564
    %v567 = vpack.c.bf16 %v545, %v545
    %v568 = vpack.c.bf16 %v547, %v547
    %v569 = vpack.c.bf16 %v559, %v559
    %v570 = vpack.c.bf16 %v561, %v561
    %vm571 = vcmask 130048
    %v573 = vsel %vm571, %v565, 0
    %v576 = vsel %vm571, %v567, 0
    %578 = vmatpush.bf16.xpose.msra.mxu0 0
    %579 = vmatpush.bf16.xpose.msra.mxu0 0
    %580 = vmatpush.bf16.xpose.msra.mxu0 0
    %581 = vmatpush.bf16.xpose.msra.mxu0 0
    %582 = vmatpush.bf16.xpose.msra.mxu0 0
    %583 = vmatpush.bf16.xpose.msra.mxu0 0
    %584 = vmatpush.bf16.xpose.msra.mxu0 0
    %585 = vmatpush.bf16.xpose.msra.mxu0 %v576
    %586 = vmatmul.bf16.gmra.mxu0 %v573
    %v587 = vpop.f32.mrf.mxu0
    %v588 = vadd.f32 0.0, %v587
    %v589 = vpop.f32.mrf.mxu0
    %590 = vdwg.mxu0
    %v592 = vsel %vm571, %v566, 0
    %v595 = vsel %vm571, %v568, 0
    %597 = vmatpush.bf16.xpose.msra.mxu0 0
    %598 = vmatpush.bf16.xpose.msra.mxu0 0
    %599 = vmatpush.bf16.xpose.msra.mxu0 0
    %600 = vmatpush.bf16.xpose.msra.mxu0 0
    %601 = vmatpush.bf16.xpose.msra.mxu0 0
    %602 = vmatpush.bf16.xpose.msra.mxu0 0
    %603 = vmatpush.bf16.xpose.msra.mxu0 0
    %604 = vmatpush.bf16.xpose.msra.mxu0 %v595
    %605 = vmatmul.bf16.gmra.mxu0 %v592
    %v606 = vpop.f32.mrf.mxu0
    %v607 = vadd.f32 0.0, %v606
    %v608 = vpop.f32.mrf.mxu0
    %609 = vdwg.mxu0
    %v610 = vsel %vm313, %v588, -inf
    %611 = vmax.xlane.f32.xlu0 %v610
    %v612 = vpop.xlane.xlu0 %611
    %v613 = vsel %vm313, %v607, -inf
    %614 = vmax.xlane.f32.xlu0 %v613
    %v615 = vpop.xlane.xlu0 %614
    %v616 = vsub.f32 %v588, %v612
    %v617 = vsub.f32 %v607, %v615
    %v618 = vmul.f32 %v616, 1.442695
    %v619 = vpow.pop %v618
    %v620 = vmul.f32 %v617, 1.442695
    %v621 = vpow.pop %v620
    %v622 = vsel %vm313, %v619, 0.0
    %623 = vadd.xlane.f32.xlu0 %v622
    %v624 = vpop.xlane.xlu0 %623
    %v625 = vsel %vm313, %v621, 0.0
    %626 = vadd.xlane.f32.xlu0 %v625
    %v627 = vpop.xlane.xlu0 %626
    %v628 = vrcp.pop %v624
    %v629 = vmul.f32 %v624, %v628
    %v630 = vsub.f32 1.0, %v629
    %v631 = vmul.f32 %v628, %v630
    %v632 = vadd.f32 %v628, %v631
    %vm633 = vweird.f32 %v624
    %vm634 = vweird.f32 %v628
    %vm635 = vmor %vm633, %vm634
    %v636 = vsel %vm635, %v628, %v632
    %v637 = vand.u32 2147483647, %v624
    %vm638 = vcmp.eq.f32.partialorder %v637, 8.507059e+37
    %v639 = vand.u32 %v624, 2147483648
    %v640 = vor.u32 1.1754944e-38, %v639
    %v641 = vsel %vm638, %v640, %v636
    %v642 = vmul.f32 %v619, %v641
    %v643 = vrcp.pop %v627
    %v644 = vmul.f32 %v627, %v643
    %v645 = vsub.f32 1.0, %v644
    %v646 = vmul.f32 %v643, %v645
    %v647 = vadd.f32 %v643, %v646
    %vm648 = vweird.f32 %v627
    %vm649 = vweird.f32 %v643
    %vm650 = vmor %vm648, %vm649
    %v651 = vsel %vm650, %v643, %v647
    %v652 = vand.u32 2147483647, %v627
    %vm653 = vcmp.eq.f32.partialorder %v652, 8.507059e+37
    %v654 = vand.u32 %v627, 2147483648
    %v655 = vor.u32 1.1754944e-38, %v654
    %v656 = vsel %vm653, %v655, %v651
    %v657 = vmul.f32 %v621, %v656
    %v658 = vpack.c.bf16 %v642, %v642
    %v659 = vpack.c.bf16 %v657, %v657
    %v661 = vsel %vm313, %v658, 0
    %v664 = vsel %vm317, %v569, 0
    %666 = vmatpush.bf16.msra.mxu0 0
    %667 = vmatpush.bf16.msra.mxu0 0
    %668 = vmatpush.bf16.msra.mxu0 0
    %669 = vmatpush.bf16.msra.mxu0 0
    %670 = vmatpush.bf16.msra.mxu0 0
    %671 = vmatpush.bf16.msra.mxu0 0
    %672 = vmatpush.bf16.msra.mxu0 0
    %673 = vmatpush.bf16.msra.mxu0 %v664
    %674 = vmatmul.bf16.gmra.mxu0 %v661
    %v675 = vpop.f32.mrf.mxu0
    %v676 = vadd.f32 0.0, %v675
    %v677 = vpop.f32.mrf.mxu0
    %678 = vdwg.mxu0
    %v680 = vsel %vm313, %v659, 0
    %v683 = vsel %vm317, %v570, 0
    %685 = vmatpush.bf16.msra.mxu0 0
    %686 = vmatpush.bf16.msra.mxu0 0
    %687 = vmatpush.bf16.msra.mxu0 0
    %688 = vmatpush.bf16.msra.mxu0 0
    %689 = vmatpush.bf16.msra.mxu0 0
    %690 = vmatpush.bf16.msra.mxu0 0
    %691 = vmatpush.bf16.msra.mxu0 0
    %692 = vmatpush.bf16.msra.mxu0 %v683
    %693 = vmatmul.bf16.gmra.mxu0 %v680
    %v694 = vpop.f32.mrf.mxu0
    %v695 = vadd.f32 0.0, %v694
    %v696 = vpop.f32.mrf.mxu0
    %697 = vdwg.mxu0
    %v699 = vunpack.c.l.b16 %v565
    %v700 = vpack.c.b16 %v699, %v699
    %701 = vrot.lane.b32.xlu0 %v700, 112
    %v702 = vpop.permute.xlu0 %701
    %v704 = vunpack.c.l.b16 %v567
    %v705 = vpack.c.b16 %v704, %v704
    %706 = vrot.lane.b32.xlu0 %v705, 112
    %v707 = vpop.permute.xlu0 %706
    %v709 = vsel %vm571, %v702, 0
    %v712 = vsel %vm571, %v707, 0
    %714 = vmatpush.bf16.xpose.msra.mxu0 0
    %715 = vmatpush.bf16.xpose.msra.mxu0 0
    %716 = vmatpush.bf16.xpose.msra.mxu0 0
    %717 = vmatpush.bf16.xpose.msra.mxu0 0
    %718 = vmatpush.bf16.xpose.msra.mxu0 0
    %719 = vmatpush.bf16.xpose.msra.mxu0 0
    %720 = vmatpush.bf16.xpose.msra.mxu0 0
    %721 = vmatpush.bf16.xpose.msra.mxu0 %v712
    %722 = vmatmul.bf16.gmra.mxu0 %v709
    %v723 = vpop.f32.mrf.mxu0
    %v724 = vadd.f32 0.0, %v723
    %v725 = vpop.f32.mrf.mxu0
    %726 = vdwg.mxu0
    %v728 = vunpack.c.l.b16 %v566
    %v729 = vpack.c.b16 %v728, %v728
    %730 = vrot.lane.b32.xlu0 %v729, 112
    %v731 = vpop.permute.xlu0 %730
    %v733 = vunpack.c.l.b16 %v568
    %v734 = vpack.c.b16 %v733, %v733
    %735 = vrot.lane.b32.xlu0 %v734, 112
    %v736 = vpop.permute.xlu0 %735
    %v738 = vsel %vm571, %v731, 0
    %v741 = vsel %vm571, %v736, 0
    %743 = vmatpush.bf16.xpose.msra.mxu0 0
    %744 = vmatpush.bf16.xpose.msra.mxu0 0
    %745 = vmatpush.bf16.xpose.msra.mxu0 0
    %746 = vmatpush.bf16.xpose.msra.mxu0 0
    %747 = vmatpush.bf16.xpose.msra.mxu0 0
    %748 = vmatpush.bf16.xpose.msra.mxu0 0
    %749 = vmatpush.bf16.xpose.msra.mxu0 0
    %750 = vmatpush.bf16.xpose.msra.mxu0 %v741
    %751 = vmatmul.bf16.gmra.mxu0 %v738
    %v752 = vpop.f32.mrf.mxu0
    %v753 = vadd.f32 0.0, %v752
    %v754 = vpop.f32.mrf.mxu0
    %755 = vdwg.mxu0
    %v756 = vsel %vm313, %v724, -inf
    %757 = vmax.xlane.f32.xlu0 %v756
    %v758 = vpop.xlane.xlu0 %757
    %v759 = vsel %vm313, %v753, -inf
    %760 = vmax.xlane.f32.xlu0 %v759
    %v761 = vpop.xlane.xlu0 %760
    %v762 = vsub.f32 %v724, %v758
    %v763 = vsub.f32 %v753, %v761
    %v764 = vmul.f32 %v762, 1.442695
    %v765 = vpow.pop %v764
    %v766 = vmul.f32 %v763, 1.442695
    %v767 = vpow.pop %v766
    %v768 = vsel %vm313, %v765, 0.0
    %769 = vadd.xlane.f32.xlu0 %v768
    %v770 = vpop.xlane.xlu0 %769
    %v771 = vsel %vm313, %v767, 0.0
    %772 = vadd.xlane.f32.xlu0 %v771
    %v773 = vpop.xlane.xlu0 %772
    %v774 = vrcp.pop %v770
    %v775 = vmul.f32 %v770, %v774
    %v776 = vsub.f32 1.0, %v775
    %v777 = vmul.f32 %v774, %v776
    %v778 = vadd.f32 %v774, %v777
    %vm779 = vweird.f32 %v770
    %vm780 = vweird.f32 %v774
    %vm781 = vmor %vm779, %vm780
    %v782 = vsel %vm781, %v774, %v778
    %v783 = vand.u32 2147483647, %v770
    %vm784 = vcmp.eq.f32.partialorder %v783, 8.507059e+37
    %v785 = vand.u32 %v770, 2147483648
    %v786 = vor.u32 1.1754944e-38, %v785
    %v787 = vsel %vm784, %v786, %v782
    %v788 = vmul.f32 %v765, %v787
    %v789 = vrcp.pop %v773
    %v790 = vmul.f32 %v773, %v789
    %v791 = vsub.f32 1.0, %v790
    %v792 = vmul.f32 %v789, %v791
    %v793 = vadd.f32 %v789, %v792
    %vm794 = vweird.f32 %v773
    %vm795 = vweird.f32 %v789
    %vm796 = vmor %vm794, %vm795
    %v797 = vsel %vm796, %v789, %v793
    %v798 = vand.u32 2147483647, %v773
    %vm799 = vcmp.eq.f32.partialorder %v798, 8.507059e+37
    %v800 = vand.u32 %v773, 2147483648
    %v801 = vor.u32 1.1754944e-38, %v800
    %v802 = vsel %vm799, %v801, %v797
    %v803 = vmul.f32 %v767, %v802
    %v804 = vpack.c.bf16 %v788, %v788
    %v805 = vpack.c.bf16 %v803, %v803
    %v807 = vunpack.c.l.b16 %v569
    %v808 = vpack.c.b16 %v807, %v807
    %809 = vrot.lane.b32.xlu0 %v808, 112
    %v810 = vpop.permute.xlu0 %809
    %v812 = vsel %vm313, %v804, 0
    %v815 = vsel %vm317, %v810, 0
    %817 = vmatpush.bf16.msra.mxu0 0
    %818 = vmatpush.bf16.msra.mxu0 0
    %819 = vmatpush.bf16.msra.mxu0 0
    %820 = vmatpush.bf16.msra.mxu0 0
    %821 = vmatpush.bf16.msra.mxu0 0
    %822 = vmatpush.bf16.msra.mxu0 0
    %823 = vmatpush.bf16.msra.mxu0 0
    %824 = vmatpush.bf16.msra.mxu0 %v815
    %825 = vmatmul.bf16.gmra.mxu0 %v812
    %v826 = vpop.f32.mrf.mxu0
    %v827 = vadd.f32 0.0, %v826
    %v828 = vpop.f32.mrf.mxu0
    %829 = vdwg.mxu0
    %v831 = vunpack.c.l.b16 %v570
    %v832 = vpack.c.b16 %v831, %v831
    %833 = vrot.lane.b32.xlu0 %v832, 112
    %v834 = vpop.permute.xlu0 %833
    %v836 = vsel %vm313, %v805, 0
    %v839 = vsel %vm317, %v834, 0
    %841 = vmatpush.bf16.msra.mxu0 0
    %842 = vmatpush.bf16.msra.mxu0 0
    %843 = vmatpush.bf16.msra.mxu0 0
    %844 = vmatpush.bf16.msra.mxu0 0
    %845 = vmatpush.bf16.msra.mxu0 0
    %846 = vmatpush.bf16.msra.mxu0 0
    %847 = vmatpush.bf16.msra.mxu0 0
    %848 = vmatpush.bf16.msra.mxu0 %v839
    %849 = vmatmul.bf16.gmra.mxu0 %v836
    %v850 = vpop.f32.mrf.mxu0
    %v851 = vadd.f32 0.0, %v850
    %v852 = vpop.f32.mrf.mxu0
    %853 = vdwg.mxu0
    %854 = vrot.lane.b32.xlu0 %v700, 96
    %v855 = vpop.permute.xlu0 %854
    %856 = vrot.lane.b32.xlu0 %v705, 96
    %v857 = vpop.permute.xlu0 %856
    %v859 = vsel %vm571, %v855, 0
    %v862 = vsel %vm571, %v857, 0
    %864 = vmatpush.bf16.xpose.msra.mxu0 0
    %865 = vmatpush.bf16.xpose.msra.mxu0 0
    %866 = vmatpush.bf16.xpose.msra.mxu0 0
    %867 = vmatpush.bf16.xpose.msra.mxu0 0
    %868 = vmatpush.bf16.xpose.msra.mxu0 0
    %869 = vmatpush.bf16.xpose.msra.mxu0 0
    %870 = vmatpush.bf16.xpose.msra.mxu0 0
    %871 = vmatpush.bf16.xpose.msra.mxu0 %v862
    %872 = vmatmul.bf16.gmra.mxu0 %v859
    %v873 = vpop.f32.mrf.mxu0
    %v874 = vadd.f32 0.0, %v873
    %v875 = vpop.f32.mrf.mxu0
    %876 = vdwg.mxu0
    %877 = vrot.lane.b32.xlu0 %v729, 96
    %v878 = vpop.permute.xlu0 %877
    %879 = vrot.lane.b32.xlu0 %v734, 96
    %v880 = vpop.permute.xlu0 %879
    %v882 = vsel %vm571, %v878, 0
    %v885 = vsel %vm571, %v880, 0
    %887 = vmatpush.bf16.xpose.msra.mxu0 0
    %888 = vmatpush.bf16.xpose.msra.mxu0 0
    %889 = vmatpush.bf16.xpose.msra.mxu0 0
    %890 = vmatpush.bf16.xpose.msra.mxu0 0
    %891 = vmatpush.bf16.xpose.msra.mxu0 0
    %892 = vmatpush.bf16.xpose.msra.mxu0 0
    %893 = vmatpush.bf16.xpose.msra.mxu0 0
    %894 = vmatpush.bf16.xpose.msra.mxu0 %v885
    %895 = vmatmul.bf16.gmra.mxu0 %v882
    %v896 = vpop.f32.mrf.mxu0
    %v897 = vadd.f32 0.0, %v896
    %v898 = vpop.f32.mrf.mxu0
    %899 = vdwg.mxu0
    %v900 = vsel %vm313, %v874, -inf
    %901 = vmax.xlane.f32.xlu0 %v900
    %v902 = vpop.xlane.xlu0 %901
    %v903 = vsel %vm313, %v897, -inf
    %904 = vmax.xlane.f32.xlu0 %v903
    %v905 = vpop.xlane.xlu0 %904
    %v906 = vsub.f32 %v874, %v902
    %v907 = vsub.f32 %v897, %v905
    %v908 = vmul.f32 %v906, 1.442695
    %v909 = vpow.pop %v908
    %v910 = vmul.f32 %v907, 1.442695
    %v911 = vpow.pop %v910
    %v912 = vsel %vm313, %v909, 0.0
    %913 = vadd.xlane.f32.xlu0 %v912
    %v914 = vpop.xlane.xlu0 %913
    %v915 = vsel %vm313, %v911, 0.0
    %916 = vadd.xlane.f32.xlu0 %v915
    %v917 = vpop.xlane.xlu0 %916
    %v918 = vrcp.pop %v914
    %v919 = vmul.f32 %v914, %v918
    %v920 = vsub.f32 1.0, %v919
    %v921 = vmul.f32 %v918, %v920
    %v922 = vadd.f32 %v918, %v921
    %vm923 = vweird.f32 %v914
    %vm924 = vweird.f32 %v918
    %vm925 = vmor %vm923, %vm924
    %v926 = vsel %vm925, %v918, %v922
    %v927 = vand.u32 2147483647, %v914
    %vm928 = vcmp.eq.f32.partialorder %v927, 8.507059e+37
    %v929 = vand.u32 %v914, 2147483648
    %v930 = vor.u32 1.1754944e-38, %v929
    %v931 = vsel %vm928, %v930, %v926
    %v932 = vmul.f32 %v909, %v931
    %v933 = vrcp.pop %v917
    %v934 = vmul.f32 %v917, %v933
    %v935 = vsub.f32 1.0, %v934
    %v936 = vmul.f32 %v933, %v935
    %v937 = vadd.f32 %v933, %v936
    %vm938 = vweird.f32 %v917
    %vm939 = vweird.f32 %v933
    %vm940 = vmor %vm938, %vm939
    %v941 = vsel %vm940, %v933, %v937
    %v942 = vand.u32 2147483647, %v917
    %vm943 = vcmp.eq.f32.partialorder %v942, 8.507059e+37
    %v944 = vand.u32 %v917, 2147483648
    %v945 = vor.u32 1.1754944e-38, %v944
    %v946 = vsel %vm943, %v945, %v941
    %v947 = vmul.f32 %v911, %v946
    %v948 = vpack.c.bf16 %v932, %v932
    %v949 = vpack.c.bf16 %v947, %v947
    %950 = vrot.lane.b32.xlu0 %v808, 96
    %v951 = vpop.permute.xlu0 %950
    %v953 = vsel %vm313, %v948, 0
    %v956 = vsel %vm317, %v951, 0
    %958 = vmatpush.bf16.msra.mxu0 0
    %959 = vmatpush.bf16.msra.mxu0 0
    %960 = vmatpush.bf16.msra.mxu0 0
    %961 = vmatpush.bf16.msra.mxu0 0
    %962 = vmatpush.bf16.msra.mxu0 0
    %963 = vmatpush.bf16.msra.mxu0 0
    %964 = vmatpush.bf16.msra.mxu0 0
    %965 = vmatpush.bf16.msra.mxu0 %v956
    %966 = vmatmul.bf16.gmra.mxu0 %v953
    %v967 = vpop.f32.mrf.mxu0
    %v968 = vadd.f32 0.0, %v967
    %v969 = vpop.f32.mrf.mxu0
    %970 = vdwg.mxu0
    %971 = vrot.lane.b32.xlu0 %v832, 96
    %v972 = vpop.permute.xlu0 %971
    %v974 = vsel %vm313, %v949, 0
    %v977 = vsel %vm317, %v972, 0
    %979 = vmatpush.bf16.msra.mxu0 0
    %980 = vmatpush.bf16.msra.mxu0 0
    %981 = vmatpush.bf16.msra.mxu0 0
    %982 = vmatpush.bf16.msra.mxu0 0
    %983 = vmatpush.bf16.msra.mxu0 0
    %984 = vmatpush.bf16.msra.mxu0 0
    %985 = vmatpush.bf16.msra.mxu0 0
    %986 = vmatpush.bf16.msra.mxu0 %v977
    %987 = vmatmul.bf16.gmra.mxu0 %v974
    %v988 = vpop.f32.mrf.mxu0
    %v989 = vadd.f32 0.0, %v988
    %v990 = vpop.f32.mrf.mxu0
    %991 = vdwg.mxu0
    %992 = vrot.lane.b32.xlu0 %v700, 80
    %v993 = vpop.permute.xlu0 %992
    %994 = vrot.lane.b32.xlu0 %v705, 80
    %v995 = vpop.permute.xlu0 %994
    %v997 = vsel %vm571, %v993, 0
    %v1000 = vsel %vm571, %v995, 0
    %1002 = vmatpush.bf16.xpose.msra.mxu0 0
    %1003 = vmatpush.bf16.xpose.msra.mxu0 0
    %1004 = vmatpush.bf16.xpose.msra.mxu0 0
    %1005 = vmatpush.bf16.xpose.msra.mxu0 0
    %1006 = vmatpush.bf16.xpose.msra.mxu0 0
    %1007 = vmatpush.bf16.xpose.msra.mxu0 0
    %1008 = vmatpush.bf16.xpose.msra.mxu0 0
    %1009 = vmatpush.bf16.xpose.msra.mxu0 %v1000
    %1010 = vmatmul.bf16.gmra.mxu0 %v997
    %v1011 = vpop.f32.mrf.mxu0
    %v1012 = vadd.f32 0.0, %v1011
    %v1013 = vpop.f32.mrf.mxu0
    %1014 = vdwg.mxu0
    %1015 = vrot.lane.b32.xlu0 %v729, 80
    %v1016 = vpop.permute.xlu0 %1015
    %1017 = vrot.lane.b32.xlu0 %v734, 80
    %v1018 = vpop.permute.xlu0 %1017
    %v1020 = vsel %vm571, %v1016, 0
    %v1023 = vsel %vm571, %v1018, 0
    %1025 = vmatpush.bf16.xpose.msra.mxu0 0
    %1026 = vmatpush.bf16.xpose.msra.mxu0 0
    %1027 = vmatpush.bf16.xpose.msra.mxu0 0
    %1028 = vmatpush.bf16.xpose.msra.mxu0 0
    %1029 = vmatpush.bf16.xpose.msra.mxu0 0
    %1030 = vmatpush.bf16.xpose.msra.mxu0 0
    %1031 = vmatpush.bf16.xpose.msra.mxu0 0
    %1032 = vmatpush.bf16.xpose.msra.mxu0 %v1023
    %1033 = vmatmul.bf16.gmra.mxu0 %v1020
    %v1034 = vpop.f32.mrf.mxu0
    %v1035 = vadd.f32 0.0, %v1034
    %v1036 = vpop.f32.mrf.mxu0
    %1037 = vdwg.mxu0
    %v1038 = vsel %vm313, %v1012, -inf
    %1039 = vmax.xlane.f32.xlu0 %v1038
    %v1040 = vpop.xlane.xlu0 %1039
    %v1041 = vsel %vm313, %v1035, -inf
    %1042 = vmax.xlane.f32.xlu0 %v1041
    %v1043 = vpop.xlane.xlu0 %1042
    %v1044 = vsub.f32 %v1012, %v1040
    %v1045 = vsub.f32 %v1035, %v1043
    %v1046 = vmul.f32 %v1044, 1.442695
    %v1047 = vpow.pop %v1046
    %v1048 = vmul.f32 %v1045, 1.442695
    %v1049 = vpow.pop %v1048
    %v1050 = vsel %vm313, %v1047, 0.0
    %1051 = vadd.xlane.f32.xlu0 %v1050
    %v1052 = vpop.xlane.xlu0 %1051
    %v1053 = vsel %vm313, %v1049, 0.0
    %1054 = vadd.xlane.f32.xlu0 %v1053
    %v1055 = vpop.xlane.xlu0 %1054
    %v1056 = vrcp.pop %v1052
    %v1057 = vmul.f32 %v1052, %v1056
    %v1058 = vsub.f32 1.0, %v1057
    %v1059 = vmul.f32 %v1056, %v1058
    %v1060 = vadd.f32 %v1056, %v1059
    %vm1061 = vweird.f32 %v1052
    %vm1062 = vweird.f32 %v1056
    %vm1063 = vmor %vm1061, %vm1062
    %v1064 = vsel %vm1063, %v1056, %v1060
    %v1065 = vand.u32 2147483647, %v1052
    %vm1066 = vcmp.eq.f32.partialorder %v1065, 8.507059e+37
    %v1067 = vand.u32 %v1052, 2147483648
    %v1068 = vor.u32 1.1754944e-38, %v1067
    %v1069 = vsel %vm1066, %v1068, %v1064
    %v1070 = vmul.f32 %v1047, %v1069
    %v1071 = vrcp.pop %v1055
    %v1072 = vmul.f32 %v1055, %v1071
    %v1073 = vsub.f32 1.0, %v1072
    %v1074 = vmul.f32 %v1071, %v1073
    %v1075 = vadd.f32 %v1071, %v1074
    %vm1076 = vweird.f32 %v1055
    %vm1077 = vweird.f32 %v1071
    %vm1078 = vmor %vm1076, %vm1077
    %v1079 = vsel %vm1078, %v1071, %v1075
    %v1080 = vand.u32 2147483647, %v1055
    %vm1081 = vcmp.eq.f32.partialorder %v1080, 8.507059e+37
    %v1082 = vand.u32 %v1055, 2147483648
    %v1083 = vor.u32 1.1754944e-38, %v1082
    %v1084 = vsel %vm1081, %v1083, %v1079
    %v1085 = vmul.f32 %v1049, %v1084
    %v1086 = vpack.c.bf16 %v1070, %v1070
    %v1087 = vpack.c.bf16 %v1085, %v1085
    %1088 = vrot.lane.b32.xlu0 %v808, 80
    %v1089 = vpop.permute.xlu0 %1088
    %v1091 = vsel %vm313, %v1086, 0
    %v1094 = vsel %vm317, %v1089, 0
    %1096 = vmatpush.bf16.msra.mxu0 0
    %1097 = vmatpush.bf16.msra.mxu0 0
    %1098 = vmatpush.bf16.msra.mxu0 0
    %1099 = vmatpush.bf16.msra.mxu0 0
    %1100 = vmatpush.bf16.msra.mxu0 0
    %1101 = vmatpush.bf16.msra.mxu0 0
    %1102 = vmatpush.bf16.msra.mxu0 0
    %1103 = vmatpush.bf16.msra.mxu0 %v1094
    %1104 = vmatmul.bf16.gmra.mxu0 %v1091
    %v1105 = vpop.f32.mrf.mxu0
    %v1106 = vadd.f32 0.0, %v1105
    %v1107 = vpop.f32.mrf.mxu0
    %1108 = vdwg.mxu0
    %1109 = vrot.lane.b32.xlu0 %v832, 80
    %v1110 = vpop.permute.xlu0 %1109
    %v1112 = vsel %vm313, %v1087, 0
    %v1115 = vsel %vm317, %v1110, 0
    %1117 = vmatpush.bf16.msra.mxu0 0
    %1118 = vmatpush.bf16.msra.mxu0 0
    %1119 = vmatpush.bf16.msra.mxu0 0
    %1120 = vmatpush.bf16.msra.mxu0 0
    %1121 = vmatpush.bf16.msra.mxu0 0
    %1122 = vmatpush.bf16.msra.mxu0 0
    %1123 = vmatpush.bf16.msra.mxu0 0
    %1124 = vmatpush.bf16.msra.mxu0 %v1115
    %1125 = vmatmul.bf16.gmra.mxu0 %v1112
    %v1126 = vpop.f32.mrf.mxu0
    %v1127 = vadd.f32 0.0, %v1126
    %v1128 = vpop.f32.mrf.mxu0
    %1129 = vdwg.mxu0
    %1130 = vrot.lane.b32.xlu0 %v700, 64
    %v1131 = vpop.permute.xlu0 %1130
    %1132 = vrot.lane.b32.xlu0 %v705, 64
    %v1133 = vpop.permute.xlu0 %1132
    %v1135 = vsel %vm571, %v1131, 0
    %v1138 = vsel %vm571, %v1133, 0
    %1140 = vmatpush.bf16.xpose.msra.mxu0 0
    %1141 = vmatpush.bf16.xpose.msra.mxu0 0
    %1142 = vmatpush.bf16.xpose.msra.mxu0 0
    %1143 = vmatpush.bf16.xpose.msra.mxu0 0
    %1144 = vmatpush.bf16.xpose.msra.mxu0 0
    %1145 = vmatpush.bf16.xpose.msra.mxu0 0
    %1146 = vmatpush.bf16.xpose.msra.mxu0 0
    %1147 = vmatpush.bf16.xpose.msra.mxu0 %v1138
    %1148 = vmatmul.bf16.gmra.mxu0 %v1135
    %v1149 = vpop.f32.mrf.mxu0
    %v1150 = vadd.f32 0.0, %v1149
    %v1151 = vpop.f32.mrf.mxu0
    %1152 = vdwg.mxu0
    %1153 = vrot.lane.b32.xlu0 %v729, 64
    %v1154 = vpop.permute.xlu0 %1153
    %1155 = vrot.lane.b32.xlu0 %v734, 64
    %v1156 = vpop.permute.xlu0 %1155
    %v1158 = vsel %vm571, %v1154, 0
    %v1161 = vsel %vm571, %v1156, 0
    %1163 = vmatpush.bf16.xpose.msra.mxu0 0
    %1164 = vmatpush.bf16.xpose.msra.mxu0 0
    %1165 = vmatpush.bf16.xpose.msra.mxu0 0
    %1166 = vmatpush.bf16.xpose.msra.mxu0 0
    %1167 = vmatpush.bf16.xpose.msra.mxu0 0
    %1168 = vmatpush.bf16.xpose.msra.mxu0 0
    %1169 = vmatpush.bf16.xpose.msra.mxu0 0
    %1170 = vmatpush.bf16.xpose.msra.mxu0 %v1161
    %1171 = vmatmul.bf16.gmra.mxu0 %v1158
    %v1172 = vpop.f32.mrf.mxu0
    %v1173 = vadd.f32 0.0, %v1172
    %v1174 = vpop.f32.mrf.mxu0
    %1175 = vdwg.mxu0
    %v1176 = vsel %vm313, %v1150, -inf
    %1177 = vmax.xlane.f32.xlu0 %v1176
    %v1178 = vpop.xlane.xlu0 %1177
    %v1179 = vsel %vm313, %v1173, -inf
    %1180 = vmax.xlane.f32.xlu0 %v1179
    %v1181 = vpop.xlane.xlu0 %1180
    %v1182 = vsub.f32 %v1150, %v1178
    %v1183 = vsub.f32 %v1173, %v1181
    %v1184 = vmul.f32 %v1182, 1.442695
    %v1185 = vpow.pop %v1184
    %v1186 = vmul.f32 %v1183, 1.442695
    %v1187 = vpow.pop %v1186
    %v1188 = vsel %vm313, %v1185, 0.0
    %1189 = vadd.xlane.f32.xlu0 %v1188
    %v1190 = vpop.xlane.xlu0 %1189
    %v1191 = vsel %vm313, %v1187, 0.0
    %1192 = vadd.xlane.f32.xlu0 %v1191
    %v1193 = vpop.xlane.xlu0 %1192
    %v1194 = vrcp.pop %v1190
    %v1195 = vmul.f32 %v1190, %v1194
    %v1196 = vsub.f32 1.0, %v1195
    %v1197 = vmul.f32 %v1194, %v1196
    %v1198 = vadd.f32 %v1194, %v1197
    %vm1199 = vweird.f32 %v1190
    %vm1200 = vweird.f32 %v1194
    %vm1201 = vmor %vm1199, %vm1200
    %v1202 = vsel %vm1201, %v1194, %v1198
    %v1203 = vand.u32 2147483647, %v1190
    %vm1204 = vcmp.eq.f32.partialorder %v1203, 8.507059e+37
    %v1205 = vand.u32 %v1190, 2147483648
    %v1206 = vor.u32 1.1754944e-38, %v1205
    %v1207 = vsel %vm1204, %v1206, %v1202
    %v1208 = vmul.f32 %v1185, %v1207
    %v1209 = vrcp.pop %v1193
    %v1210 = vmul.f32 %v1193, %v1209
    %v1211 = vsub.f32 1.0, %v1210
    %v1212 = vmul.f32 %v1209, %v1211
    %v1213 = vadd.f32 %v1209, %v1212
    %vm1214 = vweird.f32 %v1193
    %vm1215 = vweird.f32 %v1209
    %vm1216 = vmor %vm1214, %vm1215
    %v1217 = vsel %vm1216, %v1209, %v1213
    %v1218 = vand.u32 2147483647, %v1193
    %vm1219 = vcmp.eq.f32.partialorder %v1218, 8.507059e+37
    %v1220 = vand.u32 %v1193, 2147483648
    %v1221 = vor.u32 1.1754944e-38, %v1220
    %v1222 = vsel %vm1219, %v1221, %v1217
    %v1223 = vmul.f32 %v1187, %v1222
    %v1224 = vpack.c.bf16 %v1208, %v1208
    %v1225 = vpack.c.bf16 %v1223, %v1223
    %1226 = vrot.lane.b32.xlu0 %v808, 64
    %v1227 = vpop.permute.xlu0 %1226
    %v1229 = vsel %vm313, %v1224, 0
    %v1232 = vsel %vm317, %v1227, 0
    %1234 = vmatpush.bf16.msra.mxu0 0
    %1235 = vmatpush.bf16.msra.mxu0 0
    %1236 = vmatpush.bf16.msra.mxu0 0
    %1237 = vmatpush.bf16.msra.mxu0 0
    %1238 = vmatpush.bf16.msra.mxu0 0
    %1239 = vmatpush.bf16.msra.mxu0 0
    %1240 = vmatpush.bf16.msra.mxu0 0
    %1241 = vmatpush.bf16.msra.mxu0 %v1232
    %1242 = vmatmul.bf16.gmra.mxu0 %v1229
    %v1243 = vpop.f32.mrf.mxu0
    %v1244 = vadd.f32 0.0, %v1243
    %v1245 = vpop.f32.mrf.mxu0
    %1246 = vdwg.mxu0
    %1247 = vrot.lane.b32.xlu0 %v832, 64
    %v1248 = vpop.permute.xlu0 %1247
    %v1250 = vsel %vm313, %v1225, 0
    %v1253 = vsel %vm317, %v1248, 0
    %1255 = vmatpush.bf16.msra.mxu0 0
    %1256 = vmatpush.bf16.msra.mxu0 0
    %1257 = vmatpush.bf16.msra.mxu0 0
    %1258 = vmatpush.bf16.msra.mxu0 0
    %1259 = vmatpush.bf16.msra.mxu0 0
    %1260 = vmatpush.bf16.msra.mxu0 0
    %1261 = vmatpush.bf16.msra.mxu0 0
    %1262 = vmatpush.bf16.msra.mxu0 %v1253
    %1263 = vmatmul.bf16.gmra.mxu0 %v1250
    %v1264 = vpop.f32.mrf.mxu0
    %v1265 = vadd.f32 0.0, %v1264
    %v1266 = vpop.f32.mrf.mxu0
    %1267 = vdwg.mxu0
    %1268 = vrot.lane.b32.xlu0 %v700, 48
    %v1269 = vpop.permute.xlu0 %1268
    %1270 = vrot.lane.b32.xlu0 %v705, 48
    %v1271 = vpop.permute.xlu0 %1270
    %v1273 = vsel %vm571, %v1269, 0
    %v1276 = vsel %vm571, %v1271, 0
    %1278 = vmatpush.bf16.xpose.msra.mxu0 0
    %1279 = vmatpush.bf16.xpose.msra.mxu0 0
    %1280 = vmatpush.bf16.xpose.msra.mxu0 0
    %1281 = vmatpush.bf16.xpose.msra.mxu0 0
    %1282 = vmatpush.bf16.xpose.msra.mxu0 0
    %1283 = vmatpush.bf16.xpose.msra.mxu0 0
    %1284 = vmatpush.bf16.xpose.msra.mxu0 0
    %1285 = vmatpush.bf16.xpose.msra.mxu0 %v1276
    %1286 = vmatmul.bf16.gmra.mxu0 %v1273
    %v1287 = vpop.f32.mrf.mxu0
    %v1288 = vadd.f32 0.0, %v1287
    %v1289 = vpop.f32.mrf.mxu0
    %1290 = vdwg.mxu0
    %1291 = vrot.lane.b32.xlu0 %v729, 48
    %v1292 = vpop.permute.xlu0 %1291
    %1293 = vrot.lane.b32.xlu0 %v734, 48
    %v1294 = vpop.permute.xlu0 %1293
    %v1296 = vsel %vm571, %v1292, 0
    %v1299 = vsel %vm571, %v1294, 0
    %1301 = vmatpush.bf16.xpose.msra.mxu0 0
    %1302 = vmatpush.bf16.xpose.msra.mxu0 0
    %1303 = vmatpush.bf16.xpose.msra.mxu0 0
    %1304 = vmatpush.bf16.xpose.msra.mxu0 0
    %1305 = vmatpush.bf16.xpose.msra.mxu0 0
    %1306 = vmatpush.bf16.xpose.msra.mxu0 0
    %1307 = vmatpush.bf16.xpose.msra.mxu0 0
    %1308 = vmatpush.bf16.xpose.msra.mxu0 %v1299
    %1309 = vmatmul.bf16.gmra.mxu0 %v1296
    %v1310 = vpop.f32.mrf.mxu0
    %v1311 = vadd.f32 0.0, %v1310
    %v1312 = vpop.f32.mrf.mxu0
    %1313 = vdwg.mxu0
    %v1314 = vsel %vm313, %v1288, -inf
    %1315 = vmax.xlane.f32.xlu0 %v1314
    %v1316 = vpop.xlane.xlu0 %1315
    %v1317 = vsel %vm313, %v1311, -inf
    %1318 = vmax.xlane.f32.xlu0 %v1317
    %v1319 = vpop.xlane.xlu0 %1318
    %v1320 = vsub.f32 %v1288, %v1316
    %v1321 = vsub.f32 %v1311, %v1319
    %v1322 = vmul.f32 %v1320, 1.442695
    %v1323 = vpow.pop %v1322
    %v1324 = vmul.f32 %v1321, 1.442695
    %v1325 = vpow.pop %v1324
    %v1326 = vsel %vm313, %v1323, 0.0
    %1327 = vadd.xlane.f32.xlu0 %v1326
    %v1328 = vpop.xlane.xlu0 %1327
    %v1329 = vsel %vm313, %v1325, 0.0
    %1330 = vadd.xlane.f32.xlu0 %v1329
    %v1331 = vpop.xlane.xlu0 %1330
    %v1332 = vrcp.pop %v1328
    %v1333 = vmul.f32 %v1328, %v1332
    %v1334 = vsub.f32 1.0, %v1333
    %v1335 = vmul.f32 %v1332, %v1334
    %v1336 = vadd.f32 %v1332, %v1335
    %vm1337 = vweird.f32 %v1328
    %vm1338 = vweird.f32 %v1332
    %vm1339 = vmor %vm1337, %vm1338
    %v1340 = vsel %vm1339, %v1332, %v1336
    %v1341 = vand.u32 2147483647, %v1328
    %vm1342 = vcmp.eq.f32.partialorder %v1341, 8.507059e+37
    %v1343 = vand.u32 %v1328, 2147483648
    %v1344 = vor.u32 1.1754944e-38, %v1343
    %v1345 = vsel %vm1342, %v1344, %v1340
    %v1346 = vmul.f32 %v1323, %v1345
    %v1347 = vrcp.pop %v1331
    %v1348 = vmul.f32 %v1331, %v1347
    %v1349 = vsub.f32 1.0, %v1348
    %v1350 = vmul.f32 %v1347, %v1349
    %v1351 = vadd.f32 %v1347, %v1350
    %vm1352 = vweird.f32 %v1331
    %vm1353 = vweird.f32 %v1347
    %vm1354 = vmor %vm1352, %vm1353
    %v1355 = vsel %vm1354, %v1347, %v1351
    %v1356 = vand.u32 2147483647, %v1331
    %vm1357 = vcmp.eq.f32.partialorder %v1356, 8.507059e+37
    %v1358 = vand.u32 %v1331, 2147483648
    %v1359 = vor.u32 1.1754944e-38, %v1358
    %v1360 = vsel %vm1357, %v1359, %v1355
    %v1361 = vmul.f32 %v1325, %v1360
    %v1362 = vpack.c.bf16 %v1346, %v1346
    %v1363 = vpack.c.bf16 %v1361, %v1361
    %1364 = vrot.lane.b32.xlu0 %v808, 48
    %v1365 = vpop.permute.xlu0 %1364
    %v1367 = vsel %vm313, %v1362, 0
    %v1370 = vsel %vm317, %v1365, 0
    %1372 = vmatpush.bf16.msra.mxu0 0
    %1373 = vmatpush.bf16.msra.mxu0 0
    %1374 = vmatpush.bf16.msra.mxu0 0
    %1375 = vmatpush.bf16.msra.mxu0 0
    %1376 = vmatpush.bf16.msra.mxu0 0
    %1377 = vmatpush.bf16.msra.mxu0 0
    %1378 = vmatpush.bf16.msra.mxu0 0
    %1379 = vmatpush.bf16.msra.mxu0 %v1370
    %1380 = vmatmul.bf16.gmra.mxu0 %v1367
    %v1381 = vpop.f32.mrf.mxu0
    %v1382 = vadd.f32 0.0, %v1381
    %v1383 = vpop.f32.mrf.mxu0
    %1384 = vdwg.mxu0
    %1385 = vrot.lane.b32.xlu0 %v832, 48
    %v1386 = vpop.permute.xlu0 %1385
    %v1388 = vsel %vm313, %v1363, 0
    %v1391 = vsel %vm317, %v1386, 0
    %1393 = vmatpush.bf16.msra.mxu0 0
    %1394 = vmatpush.bf16.msra.mxu0 0
    %1395 = vmatpush.bf16.msra.mxu0 0
    %1396 = vmatpush.bf16.msra.mxu0 0
    %1397 = vmatpush.bf16.msra.mxu0 0
    %1398 = vmatpush.bf16.msra.mxu0 0
    %1399 = vmatpush.bf16.msra.mxu0 0
    %1400 = vmatpush.bf16.msra.mxu0 %v1391
    %1401 = vmatmul.bf16.gmra.mxu0 %v1388
    %v1402 = vpop.f32.mrf.mxu0
    %v1403 = vadd.f32 0.0, %v1402
    %v1404 = vpop.f32.mrf.mxu0
    %1405 = vdwg.mxu0
    %1406 = vrot.lane.b32.xlu0 %v700, 32
    %v1407 = vpop.permute.xlu0 %1406
    %1408 = vrot.lane.b32.xlu0 %v705, 32
    %v1409 = vpop.permute.xlu0 %1408
    %v1411 = vsel %vm571, %v1407, 0
    %v1414 = vsel %vm571, %v1409, 0
    %1416 = vmatpush.bf16.xpose.msra.mxu0 0
    %1417 = vmatpush.bf16.xpose.msra.mxu0 0
    %1418 = vmatpush.bf16.xpose.msra.mxu0 0
    %1419 = vmatpush.bf16.xpose.msra.mxu0 0
    %1420 = vmatpush.bf16.xpose.msra.mxu0 0
    %1421 = vmatpush.bf16.xpose.msra.mxu0 0
    %1422 = vmatpush.bf16.xpose.msra.mxu0 0
    %1423 = vmatpush.bf16.xpose.msra.mxu0 %v1414
    %1424 = vmatmul.bf16.gmra.mxu0 %v1411
    %v1425 = vpop.f32.mrf.mxu0
    %v1426 = vadd.f32 0.0, %v1425
    %v1427 = vpop.f32.mrf.mxu0
    %1428 = vdwg.mxu0
    %1429 = vrot.lane.b32.xlu0 %v729, 32
    %v1430 = vpop.permute.xlu0 %1429
    %1431 = vrot.lane.b32.xlu0 %v734, 32
    %v1432 = vpop.permute.xlu0 %1431
    %v1434 = vsel %vm571, %v1430, 0
    %v1437 = vsel %vm571, %v1432, 0
    %1439 = vmatpush.bf16.xpose.msra.mxu0 0
    %1440 = vmatpush.bf16.xpose.msra.mxu0 0
    %1441 = vmatpush.bf16.xpose.msra.mxu0 0
    %1442 = vmatpush.bf16.xpose.msra.mxu0 0
    %1443 = vmatpush.bf16.xpose.msra.mxu0 0
    %1444 = vmatpush.bf16.xpose.msra.mxu0 0
    %1445 = vmatpush.bf16.xpose.msra.mxu0 0
    %1446 = vmatpush.bf16.xpose.msra.mxu0 %v1437
    %1447 = vmatmul.bf16.gmra.mxu0 %v1434
    %v1448 = vpop.f32.mrf.mxu0
    %v1449 = vadd.f32 0.0, %v1448
    %v1450 = vpop.f32.mrf.mxu0
    %1451 = vdwg.mxu0
    %v1452 = vsel %vm313, %v1426, -inf
    %1453 = vmax.xlane.f32.xlu0 %v1452
    %v1454 = vpop.xlane.xlu0 %1453
    %v1455 = vsel %vm313, %v1449, -inf
    %1456 = vmax.xlane.f32.xlu0 %v1455
    %v1457 = vpop.xlane.xlu0 %1456
    %v1458 = vsub.f32 %v1426, %v1454
    %v1459 = vsub.f32 %v1449, %v1457
    %v1460 = vmul.f32 %v1458, 1.442695
    %v1461 = vpow.pop %v1460
    %v1462 = vmul.f32 %v1459, 1.442695
    %v1463 = vpow.pop %v1462
    %v1464 = vsel %vm313, %v1461, 0.0
    %1465 = vadd.xlane.f32.xlu0 %v1464
    %v1466 = vpop.xlane.xlu0 %1465
    %v1467 = vsel %vm313, %v1463, 0.0
    %1468 = vadd.xlane.f32.xlu0 %v1467
    %v1469 = vpop.xlane.xlu0 %1468
    %v1470 = vrcp.pop %v1466
    %v1471 = vmul.f32 %v1466, %v1470
    %v1472 = vsub.f32 1.0, %v1471
    %v1473 = vmul.f32 %v1470, %v1472
    %v1474 = vadd.f32 %v1470, %v1473
    %vm1475 = vweird.f32 %v1466
    %vm1476 = vweird.f32 %v1470
    %vm1477 = vmor %vm1475, %vm1476
    %v1478 = vsel %vm1477, %v1470, %v1474
    %v1479 = vand.u32 2147483647, %v1466
    %vm1480 = vcmp.eq.f32.partialorder %v1479, 8.507059e+37
    %v1481 = vand.u32 %v1466, 2147483648
    %v1482 = vor.u32 1.1754944e-38, %v1481
    %v1483 = vsel %vm1480, %v1482, %v1478
    %v1484 = vmul.f32 %v1461, %v1483
    %v1485 = vrcp.pop %v1469
    %v1486 = vmul.f32 %v1469, %v1485
    %v1487 = vsub.f32 1.0, %v1486
    %v1488 = vmul.f32 %v1485, %v1487
    %v1489 = vadd.f32 %v1485, %v1488
    %vm1490 = vweird.f32 %v1469
    %vm1491 = vweird.f32 %v1485
    %vm1492 = vmor %vm1490, %vm1491
    %v1493 = vsel %vm1492, %v1485, %v1489
    %v1494 = vand.u32 2147483647, %v1469
    %vm1495 = vcmp.eq.f32.partialorder %v1494, 8.507059e+37
    %v1496 = vand.u32 %v1469, 2147483648
    %v1497 = vor.u32 1.1754944e-38, %v1496
    %v1498 = vsel %vm1495, %v1497, %v1493
    %v1499 = vmul.f32 %v1463, %v1498
    %v1500 = vpack.c.bf16 %v1484, %v1484
    %v1501 = vpack.c.bf16 %v1499, %v1499
    %1502 = vrot.lane.b32.xlu0 %v808, 32
    %v1503 = vpop.permute.xlu0 %1502
    %v1505 = vsel %vm313, %v1500, 0
    %v1508 = vsel %vm317, %v1503, 0
    %1510 = vmatpush.bf16.msra.mxu0 0
    %1511 = vmatpush.bf16.msra.mxu0 0
    %1512 = vmatpush.bf16.msra.mxu0 0
    %1513 = vmatpush.bf16.msra.mxu0 0
    %1514 = vmatpush.bf16.msra.mxu0 0
    %1515 = vmatpush.bf16.msra.mxu0 0
    %1516 = vmatpush.bf16.msra.mxu0 0
    %1517 = vmatpush.bf16.msra.mxu0 %v1508
    %1518 = vmatmul.bf16.gmra.mxu0 %v1505
    %v1519 = vpop.f32.mrf.mxu0
    %v1520 = vadd.f32 0.0, %v1519
    %v1521 = vpop.f32.mrf.mxu0
    %1522 = vdwg.mxu0
    %1523 = vrot.lane.b32.xlu0 %v832, 32
    %v1524 = vpop.permute.xlu0 %1523
    %v1526 = vsel %vm313, %v1501, 0
    %v1529 = vsel %vm317, %v1524, 0
    %1531 = vmatpush.bf16.msra.mxu0 0
    %1532 = vmatpush.bf16.msra.mxu0 0
    %1533 = vmatpush.bf16.msra.mxu0 0
    %1534 = vmatpush.bf16.msra.mxu0 0
    %1535 = vmatpush.bf16.msra.mxu0 0
    %1536 = vmatpush.bf16.msra.mxu0 0
    %1537 = vmatpush.bf16.msra.mxu0 0
    %1538 = vmatpush.bf16.msra.mxu0 %v1529
    %1539 = vmatmul.bf16.gmra.mxu0 %v1526
    %v1540 = vpop.f32.mrf.mxu0
    %v1541 = vadd.f32 0.0, %v1540
    %v1542 = vpop.f32.mrf.mxu0
    %1543 = vdwg.mxu0
    %1544 = vrot.lane.b32.xlu0 %v700, 16
    %v1545 = vpop.permute.xlu0 %1544
    %1546 = vrot.lane.b32.xlu0 %v705, 16
    %v1547 = vpop.permute.xlu0 %1546
    %v1549 = vsel %vm571, %v1545, 0
    %v1552 = vsel %vm571, %v1547, 0
    %1554 = vmatpush.bf16.xpose.msra.mxu0 0
    %1555 = vmatpush.bf16.xpose.msra.mxu0 0
    %1556 = vmatpush.bf16.xpose.msra.mxu0 0
    %1557 = vmatpush.bf16.xpose.msra.mxu0 0
    %1558 = vmatpush.bf16.xpose.msra.mxu0 0
    %1559 = vmatpush.bf16.xpose.msra.mxu0 0
    %1560 = vmatpush.bf16.xpose.msra.mxu0 0
    %1561 = vmatpush.bf16.xpose.msra.mxu0 %v1552
    %1562 = vmatmul.bf16.gmra.mxu0 %v1549
    %v1563 = vpop.f32.mrf.mxu0
    %v1564 = vadd.f32 0.0, %v1563
    %v1565 = vpop.f32.mrf.mxu0
    %1566 = vdwg.mxu0
    %1567 = vrot.lane.b32.xlu0 %v729, 16
    %v1568 = vpop.permute.xlu0 %1567
    %1569 = vrot.lane.b32.xlu0 %v734, 16
    %v1570 = vpop.permute.xlu0 %1569
    %v1572 = vsel %vm571, %v1568, 0
    %v1575 = vsel %vm571, %v1570, 0
    %1577 = vmatpush.bf16.xpose.msra.mxu0 0
    %1578 = vmatpush.bf16.xpose.msra.mxu0 0
    %1579 = vmatpush.bf16.xpose.msra.mxu0 0
    %1580 = vmatpush.bf16.xpose.msra.mxu0 0
    %1581 = vmatpush.bf16.xpose.msra.mxu0 0
    %1582 = vmatpush.bf16.xpose.msra.mxu0 0
    %1583 = vmatpush.bf16.xpose.msra.mxu0 0
    %1584 = vmatpush.bf16.xpose.msra.mxu0 %v1575
    %1585 = vmatmul.bf16.gmra.mxu0 %v1572
    %v1586 = vpop.f32.mrf.mxu0
    %v1587 = vadd.f32 0.0, %v1586
    %v1588 = vpop.f32.mrf.mxu0
    %1589 = vdwg.mxu0
    %v1590 = vsel %vm313, %v1564, -inf
    %1591 = vmax.xlane.f32.xlu0 %v1590
    %v1592 = vpop.xlane.xlu0 %1591
    %v1593 = vsel %vm313, %v1587, -inf
    %1594 = vmax.xlane.f32.xlu0 %v1593
    %v1595 = vpop.xlane.xlu0 %1594
    %v1596 = vsub.f32 %v1564, %v1592
    %v1597 = vsub.f32 %v1587, %v1595
    %v1598 = vmul.f32 %v1596, 1.442695
    %v1599 = vpow.pop %v1598
    %v1600 = vmul.f32 %v1597, 1.442695
    %v1601 = vpow.pop %v1600
    %v1602 = vsel %vm313, %v1599, 0.0
    %1603 = vadd.xlane.f32.xlu0 %v1602
    %v1604 = vpop.xlane.xlu0 %1603
    %v1605 = vsel %vm313, %v1601, 0.0
    %1606 = vadd.xlane.f32.xlu0 %v1605
    %v1607 = vpop.xlane.xlu0 %1606
    %v1608 = vrcp.pop %v1604
    %v1609 = vmul.f32 %v1604, %v1608
    %v1610 = vsub.f32 1.0, %v1609
    %v1611 = vmul.f32 %v1608, %v1610
    %v1612 = vadd.f32 %v1608, %v1611
    %vm1613 = vweird.f32 %v1604
    %vm1614 = vweird.f32 %v1608
    %vm1615 = vmor %vm1613, %vm1614
    %v1616 = vsel %vm1615, %v1608, %v1612
    %v1617 = vand.u32 2147483647, %v1604
    %vm1618 = vcmp.eq.f32.partialorder %v1617, 8.507059e+37
    %v1619 = vand.u32 %v1604, 2147483648
    %v1620 = vor.u32 1.1754944e-38, %v1619
    %v1621 = vsel %vm1618, %v1620, %v1616
    %v1622 = vmul.f32 %v1599, %v1621
    %v1623 = vrcp.pop %v1607
    %v1624 = vmul.f32 %v1607, %v1623
    %v1625 = vsub.f32 1.0, %v1624
    %v1626 = vmul.f32 %v1623, %v1625
    %v1627 = vadd.f32 %v1623, %v1626
    %vm1628 = vweird.f32 %v1607
    %vm1629 = vweird.f32 %v1623
    %vm1630 = vmor %vm1628, %vm1629
    %v1631 = vsel %vm1630, %v1623, %v1627
    %v1632 = vand.u32 2147483647, %v1607
    %vm1633 = vcmp.eq.f32.partialorder %v1632, 8.507059e+37
    %v1634 = vand.u32 %v1607, 2147483648
    %v1635 = vor.u32 1.1754944e-38, %v1634
    %v1636 = vsel %vm1633, %v1635, %v1631
    %v1637 = vmul.f32 %v1601, %v1636
    %v1638 = vpack.c.bf16 %v1622, %v1622
    %v1639 = vpack.c.bf16 %v1637, %v1637
    %1640 = vrot.lane.b32.xlu0 %v808, 16
    %v1641 = vpop.permute.xlu0 %1640
    %v1643 = vsel %vm313, %v1638, 0
    %v1646 = vsel %vm317, %v1641, 0
    %1648 = vmatpush.bf16.msra.mxu0 0
    %1649 = vmatpush.bf16.msra.mxu0 0
    %1650 = vmatpush.bf16.msra.mxu0 0
    %1651 = vmatpush.bf16.msra.mxu0 0
    %1652 = vmatpush.bf16.msra.mxu0 0
    %1653 = vmatpush.bf16.msra.mxu0 0
    %1654 = vmatpush.bf16.msra.mxu0 0
    %1655 = vmatpush.bf16.msra.mxu0 %v1646
    %1656 = vmatmul.bf16.gmra.mxu0 %v1643
    %v1657 = vpop.f32.mrf.mxu0
    %v1658 = vadd.f32 0.0, %v1657
    %v1659 = vpop.f32.mrf.mxu0
    %1660 = vdwg.mxu0
    %1661 = vrot.lane.b32.xlu0 %v832, 16
    %v1662 = vpop.permute.xlu0 %1661
    %v1664 = vsel %vm313, %v1639, 0
    %v1667 = vsel %vm317, %v1662, 0
    %1669 = vmatpush.bf16.msra.mxu0 0
    %1670 = vmatpush.bf16.msra.mxu0 0
    %1671 = vmatpush.bf16.msra.mxu0 0
    %1672 = vmatpush.bf16.msra.mxu0 0
    %1673 = vmatpush.bf16.msra.mxu0 0
    %1674 = vmatpush.bf16.msra.mxu0 0
    %1675 = vmatpush.bf16.msra.mxu0 0
    %1676 = vmatpush.bf16.msra.mxu0 %v1667
    %1677 = vmatmul.bf16.gmra.mxu0 %v1664
    %v1678 = vpop.f32.mrf.mxu0
    %v1679 = vadd.f32 0.0, %v1678
    %v1680 = vpop.f32.mrf.mxu0
    %1681 = vdwg.mxu0
    %1684 = vrot.lane.b32.xlu0 %v827, 16
    %v1685 = vpop.permute.xlu0 %1684
    %1686 = vrot.lane.b32.xlu0 %v851, 16
    %v1687 = vpop.permute.xlu0 %1686
    %1692 = vrot.lane.b32.xlu0 %v968, 32
    %v1693 = vpop.permute.xlu0 %1692
    %1694 = vrot.lane.b32.xlu0 %v989, 32
    %v1695 = vpop.permute.xlu0 %1694
    %1700 = vrot.lane.b32.xlu0 %v1106, 48
    %v1701 = vpop.permute.xlu0 %1700
    %1702 = vrot.lane.b32.xlu0 %v1127, 48
    %v1703 = vpop.permute.xlu0 %1702
    %1708 = vrot.lane.b32.xlu0 %v1244, 64
    %v1709 = vpop.permute.xlu0 %1708
    %1710 = vrot.lane.b32.xlu0 %v1265, 64
    %v1711 = vpop.permute.xlu0 %1710
    %1716 = vrot.lane.b32.xlu0 %v1382, 80
    %v1717 = vpop.permute.xlu0 %1716
    %1718 = vrot.lane.b32.xlu0 %v1403, 80
    %v1719 = vpop.permute.xlu0 %1718
    %1724 = vrot.lane.b32.xlu0 %v1520, 96
    %v1725 = vpop.permute.xlu0 %1724
    %1726 = vrot.lane.b32.xlu0 %v1541, 96
    %v1727 = vpop.permute.xlu0 %1726
    %1732 = vrot.lane.b32.xlu0 %v1658, 112
    %v1733 = vpop.permute.xlu0 %1732
    %1734 = vrot.lane.b32.xlu0 %v1679, 112
    %v1735 = vpop.permute.xlu0 %1734
    %v1738 = vsel %vm571, %v676, %v1685
    %v1739 = vsel %vm571, %v695, %v1687
    %vm1740 = vcmask 261120
    %v1741 = vsel %vm1740, %v1738, %v1693
    %v1742 = vsel %vm1740, %v1739, %v1695
    %vm1743 = vcmask 392192
    %v1744 = vsel %vm1743, %v1741, %v1701
    %v1745 = vsel %vm1743, %v1742, %v1703
    %vm1746 = vcmask 523264
    %v1747 = vsel %vm1746, %v1744, %v1709
    %v1748 = vsel %vm1746, %v1745, %v1711
    %vm1749 = vcmask 654336
    %v1750 = vsel %vm1749, %v1747, %v1717
    %v1751 = vsel %vm1749, %v1748, %v1719
    %vm1752 = vcmask 785408
    %v1753 = vsel %vm1752, %v1750, %v1725
    %v1754 = vsel %vm1752, %v1751, %v1727
    %vm1755 = vcmask 916480
    %v1756 = vsel %vm1755, %v1753, %v1733
    %v1757 = vsel %vm1755, %v1754, %v1735
    %v1758 = vpack.c.bf16 %v1757, %v1756
    %v1759 = vld [vmem:[#allocation9] sm:$0xf]
    %v1760 = vld [vmem:[#allocation9 + $0x4] sm:$0xf]
    %v1761 = vld [vmem:[#allocation9 + $0x8] sm:$0xf]
    %v1762 = vld [vmem:[#allocation9 + $0xc] sm:$0xf]
    %v1763 = vld [vmem:[#allocation9 + $0x10] sm:$0xf]
    %v1764 = vld [vmem:[#allocation9 + $0x14] sm:$0xf]
    %v1765 = vld [vmem:[#allocation9 + $0x18] sm:$0xf]
    %v1766 = vld [vmem:[#allocation9 + $0x1c] sm:$0xf]
    %v1767 = vld [vmem:[#allocation9 + $0x20] sm:$0xf]
    %v1768 = vld [vmem:[#allocation9 + $0x24] sm:$0xf]
    %v1769 = vld [vmem:[#allocation9 + $0x28] sm:$0xf]
    %v1770 = vld [vmem:[#allocation9 + $0x2c] sm:$0xf]
    %v1771 = vld [vmem:[#allocation9 + $0x30] sm:$0xf]
    %v1772 = vld [vmem:[#allocation9 + $0x34] sm:$0xf]
    %v1773 = vld [vmem:[#allocation9 + $0x38] sm:$0xf]
    %v1774 = vld [vmem:[#allocation9 + $0x3c] sm:$0xf]
    %v1775 = vld [vmem:[#allocation11] sm:$0x1]
    %v1777 = vperm.slane %v1775, 0
    %v1795 = vunpack.c.l.b16 %v1759
    %v1796 = vunpack.c.l.b16 %v1760
    %v1797 = vunpack.c.l.b16 %v1761
    %v1798 = vunpack.c.l.b16 %v1762
    %v1799 = vunpack.c.l.b16 %v1763
    %v1800 = vunpack.c.l.b16 %v1764
    %v1801 = vunpack.c.l.b16 %v1765
    %v1802 = vunpack.c.l.b16 %v1766
    %v1803 = vunpack.c.l.b16 %v1767
    %v1804 = vunpack.c.l.b16 %v1768
    %v1805 = vunpack.c.l.b16 %v1769
    %v1806 = vunpack.c.l.b16 %v1770
    %v1807 = vunpack.c.l.b16 %v1771
    %v1808 = vunpack.c.l.b16 %v1772
    %v1809 = vunpack.c.l.b16 %v1773
    %v1810 = vunpack.c.l.b16 %v1774
    %v1811 = vpack.c.b16 %v1796, %v1795
    %v1812 = vpack.c.b16 %v1798, %v1797
    %v1813 = vpack.c.b16 %v1800, %v1799
    %v1814 = vpack.c.b16 %v1802, %v1801
    %v1815 = vpack.c.b16 %v1804, %v1803
    %v1816 = vpack.c.b16 %v1806, %v1805
    %v1817 = vpack.c.b16 %v1808, %v1807
    %v1818 = vpack.c.b16 %v1810, %v1809
    %1827 = vmatpush.bf16.msra.mxu0 %v1818
    %1828 = vmatpush.bf16.msra.mxu0 %v1817
    %1829 = vmatpush.bf16.msra.mxu0 %v1816
    %1830 = vmatpush.bf16.msra.mxu0 %v1815
    %1831 = vmatpush.bf16.msra.mxu0 %v1814
    %1832 = vmatpush.bf16.msra.mxu0 %v1813
    %1833 = vmatpush.bf16.msra.mxu0 %v1812
    %1834 = vmatpush.bf16.msra.mxu0 %v1811
    %1835 = vmatmul.bf16.gmra.mxu0 %v1758
    %v1836 = vpop.f32.mrf.mxu0
    %v1837 = vadd.f32 %v1777, %v1836
    %v1838 = vpop.f32.mrf.mxu0
    %v1839 = vadd.f32 %v1777, %v1838
    %1840 = vdwg.mxu0
    %v1841 = vadd.f32 %v350, %v1837
    %v1842 = vadd.f32 %v351, %v1839
    %v1843 = vld [vmem:[#allocation12] sm:$0x1]
    %v1844 = vld [vmem:[#allocation14] sm:$0x1]
    %1845 = vadd.xlane.f32.xlu0 %v1841
    %v1846 = vpop.xlane.xlu0 %1845
    %1847 = vadd.xlane.f32.xlu0 %v1842
    %v1848 = vpop.xlane.xlu0 %1847
    %v1849 = vrcp.pop 128.0
    %v1850 = vmul.f32 128.0, %v1849
    %v1851 = vsub.f32 1.0, %v1850
    %v1852 = vmul.f32 %v1849, %v1851
    %v1853 = vadd.f32 %v1849, %v1852
    %vm1854 = vweird.f32 %v1849
    %v1855 = vsel %vm1854, %v1849, %v1853
    %v1856 = vmul.f32 %v1846, %v1855
    %v1857 = vmul.f32 %v1848, %v1855
    %v1858 = vsub.f32 %v1841, %v1856
    %v1859 = vsub.f32 %v1842, %v1857
    %v1860 = vmul.f32 %v1858, %v1858
    %v1861 = vmul.f32 %v1859, %v1859
    %1862 = vadd.xlane.f32.xlu0 %v1860
    %v1863 = vpop.xlane.xlu0 %1862
    %1864 = vadd.xlane.f32.xlu0 %v1861
    %v1865 = vpop.xlane.xlu0 %1864
    %v1866 = vmul.f32 %v1863, %v1855
    %v1867 = vmul.f32 %v1865, %v1855
    %v1868 = vadd.f32 %v1866, 1e-12
    %v1869 = vadd.f32 %v1867, 1e-12
    %v1870 = vrsqrt.pop %v1868
    %v1871 = vmul.f32 %v1870, %v1868
    %v1872 = vmul.f32 %v1871, %v1870
    %v1873 = vmul.f32 0.5, %v1872
    %v1874 = vsub.f32 1.5, %v1873
    %v1875 = vmul.f32 %v1870, %v1874
    %vm1876 = vweird.f32 %v1868
    %vm1877 = vweird.f32 %v1870
    %vm1878 = vmor %vm1876, %vm1877
    %v1879 = vsel %vm1878, %v1870, %v1875
    %v1880 = vrsqrt.pop %v1869
    %v1881 = vmul.f32 %v1880, %v1869
    %v1882 = vmul.f32 %v1881, %v1880
    %v1883 = vmul.f32 0.5, %v1882
    %v1884 = vsub.f32 1.5, %v1883
    %v1885 = vmul.f32 %v1880, %v1884
    %vm1886 = vweird.f32 %v1869
    %vm1887 = vweird.f32 %v1880
    %vm1888 = vmor %vm1886, %vm1887
    %v1889 = vsel %vm1888, %v1880, %v1885
    %v1890 = vmul.f32 %v1858, %v1879
    %v1891 = vmul.f32 %v1859, %v1889
    %v1893 = vperm.slane %v1843, 0
    %v1895 = vmul.f32 %v1890, %v1893
    %v1896 = vmul.f32 %v1891, %v1893
    %v1898 = vperm.slane %v1844, 0
    %v1900 = vadd.f32 %v1895, %v1898
    %v1901 = vadd.f32 %v1896, %v1898
    %v1902 = vpack.c.bf16 %v1901, %v1900
    %v1903 = vld [vmem:[#allocation15] sm:$0xff]
    %v1904 = vld [vmem:[#allocation15 + $0x8] sm:$0xff]
    %v1905 = vld [vmem:[#allocation15 + $0x10] sm:$0xff]
    %v1906 = vld [vmem:[#allocation15 + $0x18] sm:$0xff]
    %v1907 = vld [vmem:[#allocation15 + $0x20] sm:$0xff]
    %v1908 = vld [vmem:[#allocation15 + $0x28] sm:$0xff]
    %v1909 = vld [vmem:[#allocation15 + $0x30] sm:$0xff]
    %v1910 = vld [vmem:[#allocation15 + $0x38] sm:$0xff]
    %v1911 = vld [vmem:[#allocation15 + $0x40] sm:$0xff]
    %v1912 = vld [vmem:[#allocation15 + $0x48] sm:$0xff]
    %v1913 = vld [vmem:[#allocation15 + $0x50] sm:$0xff]
    %v1914 = vld [vmem:[#allocation15 + $0x58] sm:$0xff]
    %v1915 = vld [vmem:[#allocation15 + $0x60] sm:$0xff]
    %v1916 = vld [vmem:[#allocation15 + $0x68] sm:$0xff]
    %v1917 = vld [vmem:[#allocation15 + $0x70] sm:$0xff]
    %v1918 = vld [vmem:[#allocation15 + $0x78] sm:$0xff]
    %v1919 = vld [vmem:[#allocation15 + $0x80] sm:$0xff]
    %v1920 = vld [vmem:[#allocation15 + $0x88] sm:$0xff]
    %v1921 = vld [vmem:[#allocation15 + $0x90] sm:$0xff]
    %v1922 = vld [vmem:[#allocation15 + $0x98] sm:$0xff]
    %v1923 = vld [vmem:[#allocation15 + $0xa0] sm:$0xff]
    %v1924 = vld [vmem:[#allocation15 + $0xa8] sm:$0xff]
    %v1925 = vld [vmem:[#allocation15 + $0xb0] sm:$0xff]
    %v1926 = vld [vmem:[#allocation15 + $0xb8] sm:$0xff]
    %v1927 = vld [vmem:[#allocation15 + $0xc0] sm:$0xff]
    %v1928 = vld [vmem:[#allocation15 + $0xc8] sm:$0xff]
    %v1929 = vld [vmem:[#allocation15 + $0xd0] sm:$0xff]
    %v1930 = vld [vmem:[#allocation15 + $0xd8] sm:$0xff]
    %v1931 = vld [vmem:[#allocation15 + $0xe0] sm:$0xff]
    %v1932 = vld [vmem:[#allocation15 + $0xe8] sm:$0xff]
    %v1933 = vld [vmem:[#allocation15 + $0xf0] sm:$0xff]
    %v1934 = vld [vmem:[#allocation15 + $0xf8] sm:$0xff]
    %v1935 = vld [vmem:[%s10] sm:$0xf]
    %v1937 = vperm.slane %v1935, 0
    %v1938 = vperm.slane %v1935, 1
    %v1939 = vperm.slane %v1935, 2
    %v1940 = vperm.slane %v1935, 3
    %v1977 = vunpack.c.l.b16 %v1903
    %v1978 = vunpack.c.h.b16 %v1903
    %v1979 = vunpack.c.l.b16 %v1904
    %v1980 = vunpack.c.h.b16 %v1904
    %v1981 = vunpack.c.l.b16 %v1905
    %v1982 = vunpack.c.h.b16 %v1905
    %v1983 = vunpack.c.l.b16 %v1906
    %v1984 = vunpack.c.h.b16 %v1906
    %v1985 = vunpack.c.l.b16 %v1907
    %v1986 = vunpack.c.h.b16 %v1907
    %v1987 = vunpack.c.l.b16 %v1908
    %v1988 = vunpack.c.h.b16 %v1908
    %v1989 = vunpack.c.l.b16 %v1909
    %v1990 = vunpack.c.h.b16 %v1909
    %v1991 = vunpack.c.l.b16 %v1910
    %v1992 = vunpack.c.h.b16 %v1910
    %v1993 = vunpack.c.l.b16 %v1911
    %v1994 = vunpack.c.h.b16 %v1911
    %v1995 = vunpack.c.l.b16 %v1912
    %v1996 = vunpack.c.h.b16 %v1912
    %v1997 = vunpack.c.l.b16 %v1913
    %v1998 = vunpack.c.h.b16 %v1913
    %v1999 = vunpack.c.l.b16 %v1914
    %v2000 = vunpack.c.h.b16 %v1914
    %v2001 = vunpack.c.l.b16 %v1915
    %v2002 = vunpack.c.h.b16 %v1915
    %v2003 = vunpack.c.l.b16 %v1916
    %v2004 = vunpack.c.h.b16 %v1916
    %v2005 = vunpack.c.l.b16 %v1917
    %v2006 = vunpack.c.h.b16 %v1917
    %v2007 = vunpack.c.l.b16 %v1918
    %v2008 = vunpack.c.h.b16 %v1918
    %v2009 = vunpack.c.l.b16 %v1919
    %v2010 = vunpack.c.h.b16 %v1919
    %v2011 = vunpack.c.l.b16 %v1920
    %v2012 = vunpack.c.h.b16 %v1920
    %v2013 = vunpack.c.l.b16 %v1921
    %v2014 = vunpack.c.h.b16 %v1921
    %v2015 = vunpack.c.l.b16 %v1922
    %v2016 = vunpack.c.h.b16 %v1922
    %v2017 = vunpack.c.l.b16 %v1923
    %v2018 = vunpack.c.h.b16 %v1923
    %v2019 = vunpack.c.l.b16 %v1924
    %v2020 = vunpack.c.h.b16 %v1924
    %v2021 = vunpack.c.l.b16 %v1925
    %v2022 = vunpack.c.h.b16 %v1925
    %v2023 = vunpack.c.l.b16 %v1926
    %v2024 = vunpack.c.h.b16 %v1926
    %v2025 = vunpack.c.l.b16 %v1927
    %v2026 = vunpack.c.h.b16 %v1927
    %v2027 = vunpack.c.l.b16 %v1928
    %v2028 = vunpack.c.h.b16 %v1928
    %v2029 = vunpack.c.l.b16 %v1929
    %v2030 = vunpack.c.h.b16 %v1929
    %v2031 = vunpack.c.l.b16 %v1930
    %v2032 = vunpack.c.h.b16 %v1930
    %v2033 = vunpack.c.l.b16 %v1931
    %v2034 = vunpack.c.h.b16 %v1931
    %v2035 = vunpack.c.l.b16 %v1932
    %v2036 = vunpack.c.h.b16 %v1932
    %v2037 = vunpack.c.l.b16 %v1933
    %v2038 = vunpack.c.h.b16 %v1933
    %v2039 = vunpack.c.l.b16 %v1934
    %v2040 = vunpack.c.h.b16 %v1934
    %v2041 = vpack.c.b16 %v1981, %v1977
    %v2042 = vpack.c.b16 %v1982, %v1978
    %v2043 = vpack.c.b16 %v1983, %v1979
    %v2044 = vpack.c.b16 %v1984, %v1980
    %v2045 = vpack.c.b16 %v1989, %v1985
    %v2046 = vpack.c.b16 %v1990, %v1986
    %v2047 = vpack.c.b16 %v1991, %v1987
    %v2048 = vpack.c.b16 %v1992, %v1988
    %v2049 = vpack.c.b16 %v1997, %v1993
    %v2050 = vpack.c.b16 %v1998, %v1994
    %v2051 = vpack.c.b16 %v1999, %v1995
    %v2052 = vpack.c.b16 %v2000, %v1996
    %v2053 = vpack.c.b16 %v2005, %v2001
    %v2054 = vpack.c.b16 %v2006, %v2002
    %v2055 = vpack.c.b16 %v2007, %v2003
    %v2056 = vpack.c.b16 %v2008, %v2004
    %v2057 = vpack.c.b16 %v2013, %v2009
    %v2058 = vpack.c.b16 %v2014, %v2010
    %v2059 = vpack.c.b16 %v2015, %v2011
    %v2060 = vpack.c.b16 %v2016, %v2012
    %v2061 = vpack.c.b16 %v2021, %v2017
    %v2062 = vpack.c.b16 %v2022, %v2018
    %v2063 = vpack.c.b16 %v2023, %v2019
    %v2064 = vpack.c.b16 %v2024, %v2020
    %v2065 = vpack.c.b16 %v2029, %v2025
    %v2066 = vpack.c.b16 %v2030, %v2026
    %v2067 = vpack.c.b16 %v2031, %v2027
    %v2068 = vpack.c.b16 %v2032, %v2028
    %v2069 = vpack.c.b16 %v2037, %v2033
    %v2070 = vpack.c.b16 %v2038, %v2034
    %v2071 = vpack.c.b16 %v2039, %v2035
    %v2072 = vpack.c.b16 %v2040, %v2036
    %2105 = vmatpush.bf16.msra.mxu0 %v2069
    %2106 = vmatpush.bf16.msra.mxu0 %v2065
    %2107 = vmatpush.bf16.msra.mxu0 %v2061
    %2108 = vmatpush.bf16.msra.mxu0 %v2057
    %2109 = vmatpush.bf16.msra.mxu0 %v2053
    %2110 = vmatpush.bf16.msra.mxu0 %v2049
    %2111 = vmatpush.bf16.msra.mxu0 %v2045
    %2112 = vmatpush.bf16.msra.mxu0 %v2041
    %2113 = vmatmul.bf16.gmra.mxu0 %v1902
    %v2114 = vpop.f32.mrf.mxu0
    %v2115 = vadd.f32 %v1937, %v2114
    %v2116 = vpop.f32.mrf.mxu0
    %v2117 = vadd.f32 %v1937, %v2116
    %2118 = vdwg.mxu0
    %2119 = vmatpush.bf16.msra.mxu0 %v2070
    %2120 = vmatpush.bf16.msra.mxu0 %v2066
    %2121 = vmatpush.bf16.msra.mxu0 %v2062
    %2122 = vmatpush.bf16.msra.mxu0 %v2058
    %2123 = vmatpush.bf16.msra.mxu0 %v2054
    %2124 = vmatpush.bf16.msra.mxu0 %v2050
    %2125 = vmatpush.bf16.msra.mxu0 %v2046
    %2126 = vmatpush.bf16.msra.mxu0 %v2042
    %2127 = vmatmul.bf16.gmra.mxu0 %v1902
    %v2128 = vpop.f32.mrf.mxu0
    %v2129 = vadd.f32 %v1938, %v2128
    %v2130 = vpop.f32.mrf.mxu0
    %v2131 = vadd.f32 %v1938, %v2130
    %2132 = vdwg.mxu0
    %2133 = vmatpush.bf16.msra.mxu0 %v2071
    %2134 = vmatpush.bf16.msra.mxu0 %v2067
    %2135 = vmatpush.bf16.msra.mxu0 %v2063
    %2136 = vmatpush.bf16.msra.mxu0 %v2059
    %2137 = vmatpush.bf16.msra.mxu0 %v2055
    %2138 = vmatpush.bf16.msra.mxu0 %v2051
    %2139 = vmatpush.bf16.msra.mxu0 %v2047
    %2140 = vmatpush.bf16.msra.mxu0 %v2043
    %2141 = vmatmul.bf16.gmra.mxu0 %v1902
    %v2142 = vpop.f32.mrf.mxu0
    %v2143 = vadd.f32 %v1939, %v2142
    %v2144 = vpop.f32.mrf.mxu0
    %v2145 = vadd.f32 %v1939, %v2144
    %2146 = vdwg.mxu0
    %2147 = vmatpush.bf16.msra.mxu0 %v2072
    %2148 = vmatpush.bf16.msra.mxu0 %v2068
    %2149 = vmatpush.bf16.msra.mxu0 %v2064
    %2150 = vmatpush.bf16.msra.mxu0 %v2060
    %2151 = vmatpush.bf16.msra.mxu0 %v2056
    %2152 = vmatpush.bf16.msra.mxu0 %v2052
    %2153 = vmatpush.bf16.msra.mxu0 %v2048
    %2154 = vmatpush.bf16.msra.mxu0 %v2044
    %2155 = vmatmul.bf16.gmra.mxu0 %v1902
    %v2156 = vpop.f32.mrf.mxu0
    %v2157 = vadd.f32 %v1940, %v2156
    %v2158 = vpop.f32.mrf.mxu0
    %v2159 = vadd.f32 %v1940, %v2158
    %2160 = vdwg.mxu0
    %v2161 = vmul.f32 %v2115, %v2115
    %v2162 = vmul.f32 %v2129, %v2129
    %v2163 = vmul.f32 %v2143, %v2143
    %v2164 = vmul.f32 %v2157, %v2157
    %v2165 = vmul.f32 %v2117, %v2117
    %v2166 = vmul.f32 %v2131, %v2131
    %v2167 = vmul.f32 %v2145, %v2145
    %v2168 = vmul.f32 %v2159, %v2159
    %v2169 = vmul.f32 %v2115, %v2161
    %v2170 = vmul.f32 %v2129, %v2162
    %v2171 = vmul.f32 %v2143, %v2163
    %v2172 = vmul.f32 %v2157, %v2164
    %v2173 = vmul.f32 %v2117, %v2165
    %v2174 = vmul.f32 %v2131, %v2166
    %v2175 = vmul.f32 %v2145, %v2167
    %v2176 = vmul.f32 %v2159, %v2168
    %v2177 = vmul.f32 %v2169, 0.044715
    %v2178 = vmul.f32 %v2170, 0.044715
    %v2179 = vmul.f32 %v2171, 0.044715
    %v2180 = vmul.f32 %v2172, 0.044715
    %v2181 = vmul.f32 %v2173, 0.044715
    %v2182 = vmul.f32 %v2174, 0.044715
    %v2183 = vmul.f32 %v2175, 0.044715
    %v2184 = vmul.f32 %v2176, 0.044715
    %v2185 = vadd.f32 %v2115, %v2177
    %v2186 = vadd.f32 %v2129, %v2178
    %v2187 = vadd.f32 %v2143, %v2179
    %v2188 = vadd.f32 %v2157, %v2180
    %v2189 = vadd.f32 %v2117, %v2181
    %v2190 = vadd.f32 %v2131, %v2182
    %v2191 = vadd.f32 %v2145, %v2183
    %v2192 = vadd.f32 %v2159, %v2184
    %v2193 = vmul.f32 %v2185, 0.7978846
    %v2194 = vmul.f32 %v2186, 0.7978846
    %v2195 = vmul.f32 %v2187, 0.7978846
    %v2196 = vmul.f32 %v2188, 0.7978846
    %v2197 = vmul.f32 %v2189, 0.7978846
    %v2198 = vmul.f32 %v2190, 0.7978846
    %v2199 = vmul.f32 %v2191, 0.7978846
    %v2200 = vmul.f32 %v2192, 0.7978846
    %v2201 = vtanh.pop %v2193
    %v2202 = vtanh.pop %v2194
    %v2203 = vtanh.pop %v2195
    %v2204 = vtanh.pop %v2196
    %v2205 = vtanh.pop %v2197
    %v2206 = vtanh.pop %v2198
    %v2207 = vtanh.pop %v2199
    %v2208 = vtanh.pop %v2200
    %v2209 = vadd.f32 %v2201, 1.0
    %v2210 = vadd.f32 %v2202, 1.0
    %v2211 = vadd.f32 %v2203, 1.0
    %v2212 = vadd.f32 %v2204, 1.0
    %v2213 = vadd.f32 %v2205, 1.0
    %v2214 = vadd.f32 %v2206, 1.0
    %v2215 = vadd.f32 %v2207, 1.0
    %v2216 = vadd.f32 %v2208, 1.0
    %v2217 = vmul.f32 %v2209, 0.5
    %v2218 = vmul.f32 %v2210, 0.5
    %v2219 = vmul.f32 %v2211, 0.5
    %v2220 = vmul.f32 %v2212, 0.5
    %v2221 = vmul.f32 %v2213, 0.5
    %v2222 = vmul.f32 %v2214, 0.5
    %v2223 = vmul.f32 %v2215, 0.5
    %v2224 = vmul.f32 %v2216, 0.5
    %v2225 = vmul.f32 %v2115, %v2217
    %v2226 = vmul.f32 %v2129, %v2218
    %v2227 = vmul.f32 %v2143, %v2219
    %v2228 = vmul.f32 %v2157, %v2220
    %v2229 = vmul.f32 %v2117, %v2221
    %v2230 = vmul.f32 %v2131, %v2222
    %v2231 = vmul.f32 %v2145, %v2223
    %v2232 = vmul.f32 %v2159, %v2224
    %v2233 = vpack.c.bf16 %v2229, %v2225
    %v2234 = vpack.c.bf16 %v2230, %v2226
    %v2235 = vpack.c.bf16 %v2231, %v2227
    %v2236 = vpack.c.bf16 %v2232, %v2228
    %v2237 = vld [vmem:[#allocation17] sm:$0xf]
    %v2238 = vld [vmem:[#allocation17 + $0x4] sm:$0xf]
    %v2239 = vld [vmem:[#allocation17 + $0x8] sm:$0xf]
    %v2240 = vld [vmem:[#allocation17 + $0xc] sm:$0xf]
    %v2241 = vld [vmem:[#allocation17 + $0x10] sm:$0xf]
    %v2242 = vld [vmem:[#allocation17 + $0x14] sm:$0xf]
    %v2243 = vld [vmem:[#allocation17 + $0x18] sm:$0xf]
    %v2244 = vld [vmem:[#allocation17 + $0x1c] sm:$0xf]
    %v2245 = vld [vmem:[#allocation17 + $0x20] sm:$0xf]
    %v2246 = vld [vmem:[#allocation17 + $0x24] sm:$0xf]
    %v2247 = vld [vmem:[#allocation17 + $0x28] sm:$0xf]
    %v2248 = vld [vmem:[#allocation17 + $0x2c] sm:$0xf]
    %v2249 = vld [vmem:[#allocation17 + $0x30] sm:$0xf]
    %v2250 = vld [vmem:[#allocation17 + $0x34] sm:$0xf]
    %v2251 = vld [vmem:[#allocation17 + $0x38] sm:$0xf]
    %v2252 = vld [vmem:[#allocation17 + $0x3c] sm:$0xf]
    %v2253 = vld [vmem:[#allocation17 + $0x40] sm:$0xf]
    %v2254 = vld [vmem:[#allocation17 + $0x44] sm:$0xf]
    %v2255 = vld [vmem:[#allocation17 + $0x48] sm:$0xf]
    %v2256 = vld [vmem:[#allocation17 + $0x4c] sm:$0xf]
    %v2257 = vld [vmem:[#allocation17 + $0x50] sm:$0xf]
    %v2258 = vld [vmem:[#allocation17 + $0x54] sm:$0xf]
    %v2259 = vld [vmem:[#allocation17 + $0x58] sm:$0xf]
    %v2260 = vld [vmem:[#allocation17 + $0x5c] sm:$0xf]
    %v2261 = vld [vmem:[#allocation17 + $0x60] sm:$0xf]
    %v2262 = vld [vmem:[#allocation17 + $0x64] sm:$0xf]
    %v2263 = vld [vmem:[#allocation17 + $0x68] sm:$0xf]
    %v2264 = vld [vmem:[#allocation17 + $0x6c] sm:$0xf]
    %v2265 = vld [vmem:[#allocation17 + $0x70] sm:$0xf]
    %v2266 = vld [vmem:[#allocation17 + $0x74] sm:$0xf]
    %v2267 = vld [vmem:[#allocation17 + $0x78] sm:$0xf]
    %v2268 = vld [vmem:[#allocation17 + $0x7c] sm:$0xf]
    %v2269 = vld [vmem:[#allocation17 + $0x80] sm:$0xf]
    %v2270 = vld [vmem:[#allocation17 + $0x84] sm:$0xf]
    %v2271 = vld [vmem:[#allocation17 + $0x88] sm:$0xf]
    %v2272 = vld [vmem:[#allocation17 + $0x8c] sm:$0xf]
    %v2273 = vld [vmem:[#allocation17 + $0x90] sm:$0xf]
    %v2274 = vld [vmem:[#allocation17 + $0x94] sm:$0xf]
    %v2275 = vld [vmem:[#allocation17 + $0x98] sm:$0xf]
    %v2276 = vld [vmem:[#allocation17 + $0x9c] sm:$0xf]
    %v2277 = vld [vmem:[#allocation17 + $0xa0] sm:$0xf]
    %v2278 = vld [vmem:[#allocation17 + $0xa4] sm:$0xf]
    %v2279 = vld [vmem:[#allocation17 + $0xa8] sm:$0xf]
    %v2280 = vld [vmem:[#allocation17 + $0xac] sm:$0xf]
    %v2281 = vld [vmem:[#allocation17 + $0xb0] sm:$0xf]
    %v2282 = vld [vmem:[#allocation17 + $0xb4] sm:$0xf]
    %v2283 = vld [vmem:[#allocation17 + $0xb8] sm:$0xf]
    %v2284 = vld [vmem:[#allocation17 + $0xbc] sm:$0xf]
    %v2285 = vld [vmem:[#allocation17 + $0xc0] sm:$0xf]
    %v2286 = vld [vmem:[#allocation17 + $0xc4] sm:$0xf]
    %v2287 = vld [vmem:[#allocation17 + $0xc8] sm:$0xf]
    %v2288 = vld [vmem:[#allocation17 + $0xcc] sm:$0xf]
    %v2289 = vld [vmem:[#allocation17 + $0xd0] sm:$0xf]
    %v2290 = vld [vmem:[#allocation17 + $0xd4] sm:$0xf]
    %v2291 = vld [vmem:[#allocation17 + $0xd8] sm:$0xf]
    %v2292 = vld [vmem:[#allocation17 + $0xdc] sm:$0xf]
    %v2293 = vld [vmem:[#allocation17 + $0xe0] sm:$0xf]
    %v2294 = vld [vmem:[#allocation17 + $0xe4] sm:$0xf]
    %v2295 = vld [vmem:[#allocation17 + $0xe8] sm:$0xf]
    %v2296 = vld [vmem:[#allocation17 + $0xec] sm:$0xf]
    %v2297 = vld [vmem:[#allocation17 + $0xf0] sm:$0xf]
    %v2298 = vld [vmem:[#allocation17 + $0xf4] sm:$0xf]
    %v2299 = vld [vmem:[#allocation17 + $0xf8] sm:$0xf]
    %v2300 = vld [vmem:[#allocation17 + $0xfc] sm:$0xf]
    %v2301 = vld [vmem:[%s12] sm:$0x1]
    %v2303 = vperm.slane %v2301, 0
    %v2369 = vunpack.c.l.b16 %v2237
    %v2370 = vunpack.c.l.b16 %v2238
    %v2371 = vunpack.c.l.b16 %v2239
    %v2372 = vunpack.c.l.b16 %v2240
    %v2373 = vunpack.c.l.b16 %v2241
    %v2374 = vunpack.c.l.b16 %v2242
    %v2375 = vunpack.c.l.b16 %v2243
    %v2376 = vunpack.c.l.b16 %v2244
    %v2377 = vunpack.c.l.b16 %v2245
    %v2378 = vunpack.c.l.b16 %v2246
    %v2379 = vunpack.c.l.b16 %v2247
    %v2380 = vunpack.c.l.b16 %v2248
    %v2381 = vunpack.c.l.b16 %v2249
    %v2382 = vunpack.c.l.b16 %v2250
    %v2383 = vunpack.c.l.b16 %v2251
    %v2384 = vunpack.c.l.b16 %v2252
    %v2385 = vunpack.c.l.b16 %v2253
    %v2386 = vunpack.c.l.b16 %v2254
    %v2387 = vunpack.c.l.b16 %v2255
    %v2388 = vunpack.c.l.b16 %v2256
    %v2389 = vunpack.c.l.b16 %v2257
    %v2390 = vunpack.c.l.b16 %v2258
    %v2391 = vunpack.c.l.b16 %v2259
    %v2392 = vunpack.c.l.b16 %v2260
    %v2393 = vunpack.c.l.b16 %v2261
    %v2394 = vunpack.c.l.b16 %v2262
    %v2395 = vunpack.c.l.b16 %v2263
    %v2396 = vunpack.c.l.b16 %v2264
    %v2397 = vunpack.c.l.b16 %v2265
    %v2398 = vunpack.c.l.b16 %v2266
    %v2399 = vunpack.c.l.b16 %v2267
    %v2400 = vunpack.c.l.b16 %v2268
    %v2401 = vunpack.c.l.b16 %v2269
    %v2402 = vunpack.c.l.b16 %v2270
    %v2403 = vunpack.c.l.b16 %v2271
    %v2404 = vunpack.c.l.b16 %v2272
    %v2405 = vunpack.c.l.b16 %v2273
    %v2406 = vunpack.c.l.b16 %v2274
    %v2407 = vunpack.c.l.b16 %v2275
    %v2408 = vunpack.c.l.b16 %v2276
    %v2409 = vunpack.c.l.b16 %v2277
    %v2410 = vunpack.c.l.b16 %v2278
    %v2411 = vunpack.c.l.b16 %v2279
    %v2412 = vunpack.c.l.b16 %v2280
    %v2413 = vunpack.c.l.b16 %v2281
    %v2414 = vunpack.c.l.b16 %v2282
    %v2415 = vunpack.c.l.b16 %v2283
    %v2416 = vunpack.c.l.b16 %v2284
    %v2417 = vunpack.c.l.b16 %v2285
    %v2418 = vunpack.c.l.b16 %v2286
    %v2419 = vunpack.c.l.b16 %v2287
    %v2420 = vunpack.c.l.b16 %v2288
    %v2421 = vunpack.c.l.b16 %v2289
    %v2422 = vunpack.c.l.b16 %v2290
    %v2423 = vunpack.c.l.b16 %v2291
    %v2424 = vunpack.c.l.b16 %v2292
    %v2425 = vunpack.c.l.b16 %v2293
    %v2426 = vunpack.c.l.b16 %v2294
    %v2427 = vunpack.c.l.b16 %v2295
    %v2428 = vunpack.c.l.b16 %v2296
    %v2429 = vunpack.c.l.b16 %v2297
    %v2430 = vunpack.c.l.b16 %v2298
    %v2431 = vunpack.c.l.b16 %v2299
    %v2432 = vunpack.c.l.b16 %v2300
    %v2433 = vpack.c.b16 %v2370, %v2369
    %v2434 = vpack.c.b16 %v2372, %v2371
    %v2435 = vpack.c.b16 %v2374, %v2373
    %v2436 = vpack.c.b16 %v2376, %v2375
    %v2437 = vpack.c.b16 %v2378, %v2377
    %v2438 = vpack.c.b16 %v2380, %v2379
    %v2439 = vpack.c.b16 %v2382, %v2381
    %v2440 = vpack.c.b16 %v2384, %v2383
    %v2441 = vpack.c.b16 %v2386, %v2385
    %v2442 = vpack.c.b16 %v2388, %v2387
    %v2443 = vpack.c.b16 %v2390, %v2389
    %v2444 = vpack.c.b16 %v2392, %v2391
    %v2445 = vpack.c.b16 %v2394, %v2393
    %v2446 = vpack.c.b16 %v2396, %v2395
    %v2447 = vpack.c.b16 %v2398, %v2397
    %v2448 = vpack.c.b16 %v2400, %v2399
    %v2449 = vpack.c.b16 %v2402, %v2401
    %v2450 = vpack.c.b16 %v2404, %v2403
    %v2451 = vpack.c.b16 %v2406, %v2405
    %v2452 = vpack.c.b16 %v2408, %v2407
    %v2453 = vpack.c.b16 %v2410, %v2409
    %v2454 = vpack.c.b16 %v2412, %v2411
    %v2455 = vpack.c.b16 %v2414, %v2413
    %v2456 = vpack.c.b16 %v2416, %v2415
    %v2457 = vpack.c.b16 %v2418, %v2417
    %v2458 = vpack.c.b16 %v2420, %v2419
    %v2459 = vpack.c.b16 %v2422, %v2421
    %v2460 = vpack.c.b16 %v2424, %v2423
    %v2461 = vpack.c.b16 %v2426, %v2425
    %v2462 = vpack.c.b16 %v2428, %v2427
    %v2463 = vpack.c.b16 %v2430, %v2429
    %v2464 = vpack.c.b16 %v2432, %v2431
    %2497 = vmatpush.bf16.msra.mxu0 %v2440
    %2498 = vmatpush.bf16.msra.mxu0 %v2439
    %2499 = vmatpush.bf16.msra.mxu0 %v2438
    %2500 = vmatpush.bf16.msra.mxu0 %v2437
    %2501 = vmatpush.bf16.msra.mxu0 %v2436
    %2502 = vmatpush.bf16.msra.mxu0 %v2435
    %2503 = vmatpush.bf16.msra.mxu0 %v2434
    %2504 = vmatpush.bf16.msra.mxu0 %v2433
    %2505 = vmatmul.bf16.gmra.mxu0 %v2233
    %v2506 = vpop.f32.mrf.mxu0
    %v2507 = vadd.f32 %v2303, %v2506
    %v2508 = vpop.f32.mrf.mxu0
    %v2509 = vadd.f32 %v2303, %v2508
    %2510 = vdwg.mxu0
    %2511 = vmatpush.bf16.msra.mxu0 %v2448
    %2512 = vmatpush.bf16.msra.mxu0 %v2447
    %2513 = vmatpush.bf16.msra.mxu0 %v2446
    %2514 = vmatpush.bf16.msra.mxu0 %v2445
    %2515 = vmatpush.bf16.msra.mxu0 %v2444
    %2516 = vmatpush.bf16.msra.mxu0 %v2443
    %2517 = vmatpush.bf16.msra.mxu0 %v2442
    %2518 = vmatpush.bf16.msra.mxu0 %v2441
    %2519 = vmatmul.bf16.gmra.mxu0 %v2234
    %v2520 = vpop.f32.mrf.mxu0
    %v2521 = vadd.f32 %v2507, %v2520
    %v2522 = vpop.f32.mrf.mxu0
    %v2523 = vadd.f32 %v2509, %v2522
    %2524 = vdwg.mxu0
    %2525 = vmatpush.bf16.msra.mxu0 %v2456
    %2526 = vmatpush.bf16.msra.mxu0 %v2455
    %2527 = vmatpush.bf16.msra.mxu0 %v2454
    %2528 = vmatpush.bf16.msra.mxu0 %v2453
    %2529 = vmatpush.bf16.msra.mxu0 %v2452
    %2530 = vmatpush.bf16.msra.mxu0 %v2451
    %2531 = vmatpush.bf16.msra.mxu0 %v2450
    %2532 = vmatpush.bf16.msra.mxu0 %v2449
    %2533 = vmatmul.bf16.gmra.mxu0 %v2235
    %v2534 = vpop.f32.mrf.mxu0
    %v2535 = vadd.f32 %v2521, %v2534
    %v2536 = vpop.f32.mrf.mxu0
    %v2537 = vadd.f32 %v2523, %v2536
    %2538 = vdwg.mxu0
    %2539 = vmatpush.bf16.msra.mxu0 %v2464
    %2540 = vmatpush.bf16.msra.mxu0 %v2463
    %2541 = vmatpush.bf16.msra.mxu0 %v2462
    %2542 = vmatpush.bf16.msra.mxu0 %v2461
    %2543 = vmatpush.bf16.msra.mxu0 %v2460
    %2544 = vmatpush.bf16.msra.mxu0 %v2459
    %2545 = vmatpush.bf16.msra.mxu0 %v2458
    %2546 = vmatpush.bf16.msra.mxu0 %v2457
    %2547 = vmatmul.bf16.gmra.mxu0 %v2236
    %v2548 = vpop.f32.mrf.mxu0
    %v2549 = vadd.f32 %v2535, %v2548
    %v2550 = vpop.f32.mrf.mxu0
    %v2551 = vadd.f32 %v2537, %v2550
    %2552 = vdwg.mxu0
    %v2553 = vadd.f32 %v1900, %v2549
    %v2554 = vadd.f32 %v1901, %v2551
    %v2555 = vld [vmem:[#allocation18] sm:$0x1]
    %v2556 = vld [vmem:[%s14] sm:$0x1]
    %2557 = vadd.xlane.f32.xlu0 %v2553
    %v2558 = vpop.xlane.xlu0 %2557
    %2559 = vadd.xlane.f32.xlu0 %v2554
    %v2560 = vpop.xlane.xlu0 %2559
    %v2561 = vmul.f32 %v2558, %v1855
    %v2562 = vmul.f32 %v2560, %v1855
    %v2563 = vsub.f32 %v2553, %v2561
    %v2564 = vsub.f32 %v2554, %v2562
    %v2565 = vmul.f32 %v2563, %v2563
    %v2566 = vmul.f32 %v2564, %v2564
    %2567 = vadd.xlane.f32.xlu0 %v2565
    %v2568 = vpop.xlane.xlu0 %2567
    %2569 = vadd.xlane.f32.xlu0 %v2566
    %v2570 = vpop.xlane.xlu0 %2569
    %v2571 = vmul.f32 %v2568, %v1855
    %v2572 = vmul.f32 %v2570, %v1855
    %v2573 = vadd.f32 %v2571, 1e-12
    %v2574 = vadd.f32 %v2572, 1e-12
    %v2575 = vrsqrt.pop %v2573
    %v2576 = vmul.f32 %v2575, %v2573
    %v2577 = vmul.f32 %v2576, %v2575
    %v2578 = vmul.f32 0.5, %v2577
    %v2579 = vsub.f32 1.5, %v2578
    %v2580 = vmul.f32 %v2575, %v2579
    %vm2581 = vweird.f32 %v2573
    %vm2582 = vweird.f32 %v2575
    %vm2583 = vmor %vm2581, %vm2582
    %v2584 = vsel %vm2583, %v2575, %v2580
    %v2585 = vrsqrt.pop %v2574
    %v2586 = vmul.f32 %v2585, %v2574
    %v2587 = vmul.f32 %v2586, %v2585
    %v2588 = vmul.f32 0.5, %v2587
    %v2589 = vsub.f32 1.5, %v2588
    %v2590 = vmul.f32 %v2585, %v2589
    %vm2591 = vweird.f32 %v2574
    %vm2592 = vweird.f32 %v2585
    %vm2593 = vmor %vm2591, %vm2592
    %v2594 = vsel %vm2593, %v2585, %v2590
    %v2595 = vmul.f32 %v2563, %v2584
    %v2596 = vmul.f32 %v2564, %v2594
    %v2598 = vperm.slane %v2555, 0
    %v2600 = vmul.f32 %v2595, %v2598
    %v2601 = vmul.f32 %v2596, %v2598
    %v2603 = vperm.slane %v2556, 0
    %v2605 = vadd.f32 %v2600, %v2603
    %v2606 = vadd.f32 %v2601, %v2603
    %v2607 = vpack.c.bf16 %v2606, %v2605
    %s2608 = scalar_lea.vmem [#allocation6], 192
    %v2609 = vld [vmem:[%s2608] sm:$0xff]
    %v2610 = vld [vmem:[%s2608 + $0x8] sm:$0xf]
    %v2611 = vld [vmem:[%s2608 + $0xc] sm:$0xff]
    %v2612 = vld [vmem:[%s2608 + $0x14] sm:$0xf]
    %v2613 = vld [vmem:[%s2608 + $0x18] sm:$0xff]
    %v2614 = vld [vmem:[%s2608 + $0x20] sm:$0xf]
    %v2615 = vld [vmem:[%s2608 + $0x24] sm:$0xff]
    %v2616 = vld [vmem:[%s2608 + $0x2c] sm:$0xf]
    %v2617 = vld [vmem:[%s2608 + $0x30] sm:$0xff]
    %v2618 = vld [vmem:[%s2608 + $0x38] sm:$0xf]
    %v2619 = vld [vmem:[%s2608 + $0x3c] sm:$0xff]
    %v2620 = vld [vmem:[%s2608 + $0x44] sm:$0xf]
    %v2621 = vld [vmem:[%s2608 + $0x48] sm:$0xff]
    %v2622 = vld [vmem:[%s2608 + $0x50] sm:$0xf]
    %v2623 = vld [vmem:[%s2608 + $0x54] sm:$0xff]
    %v2624 = vld [vmem:[%s2608 + $0x5c] sm:$0xf]
    %v2625 = vld [vmem:[%s2608 + $0x60] sm:$0xff]
    %v2626 = vld [vmem:[%s2608 + $0x68] sm:$0xf]
    %v2627 = vld [vmem:[%s2608 + $0x6c] sm:$0xff]
    %v2628 = vld [vmem:[%s2608 + $0x74] sm:$0xf]
    %v2629 = vld [vmem:[%s2608 + $0x78] sm:$0xff]
    %v2630 = vld [vmem:[%s2608 + $0x80] sm:$0xf]
    %v2631 = vld [vmem:[%s2608 + $0x84] sm:$0xff]
    %v2632 = vld [vmem:[%s2608 + $0x8c] sm:$0xf]
    %v2633 = vld [vmem:[%s2608 + $0x90] sm:$0xff]
    %v2634 = vld [vmem:[%s2608 + $0x98] sm:$0xf]
    %v2635 = vld [vmem:[%s2608 + $0x9c] sm:$0xff]
    %v2636 = vld [vmem:[%s2608 + $0xa4] sm:$0xf]
    %v2637 = vld [vmem:[%s2608 + $0xa8] sm:$0xff]
    %v2638 = vld [vmem:[%s2608 + $0xb0] sm:$0xf]
    %v2639 = vld [vmem:[%s2608 + $0xb4] sm:$0xff]
    %v2640 = vld [vmem:[%s2608 + $0xbc] sm:$0xf]
    %s2641 = scalar_lea.vmem [#allocation8], 3
    %v2642 = vld [vmem:[%s2641] sm:$0x7]
    %v2644 = vperm.slane %v2642, 0
    %v2645 = vperm.slane %v2642, 1
    %v2646 = vperm.slane %v2642, 2
    %v2682 = vunpack.c.l.b16 %v2609
    %v2683 = vunpack.c.h.b16 %v2609
    %v2684 = vunpack.c.l.b16 %v2610
    %v2685 = vunpack.c.l.b16 %v2611
    %v2686 = vunpack.c.h.b16 %v2611
    %v2687 = vunpack.c.l.b16 %v2612
    %v2688 = vunpack.c.l.b16 %v2613
    %v2689 = vunpack.c.h.b16 %v2613
    %v2690 = vunpack.c.l.b16 %v2614
    %v2691 = vunpack.c.l.b16 %v2615
    %v2692 = vunpack.c.h.b16 %v2615
    %v2693 = vunpack.c.l.b16 %v2616
    %v2694 = vunpack.c.l.b16 %v2617
    %v2695 = vunpack.c.h.b16 %v2617
    %v2696 = vunpack.c.l.b16 %v2618
    %v2697 = vunpack.c.l.b16 %v2619
    %v2698 = vunpack.c.h.b16 %v2619
    %v2699 = vunpack.c.l.b16 %v2620
    %v2700 = vunpack.c.l.b16 %v2621
    %v2701 = vunpack.c.h.b16 %v2621
    %v2702 = vunpack.c.l.b16 %v2622
    %v2703 = vunpack.c.l.b16 %v2623
    %v2704 = vunpack.c.h.b16 %v2623
    %v2705 = vunpack.c.l.b16 %v2624
    %v2706 = vunpack.c.l.b16 %v2625
    %v2707 = vunpack.c.h.b16 %v2625
    %v2708 = vunpack.c.l.b16 %v2626
    %v2709 = vunpack.c.l.b16 %v2627
    %v2710 = vunpack.c.h.b16 %v2627
    %v2711 = vunpack.c.l.b16 %v2628
    %v2712 = vunpack.c.l.b16 %v2629
    %v2713 = vunpack.c.h.b16 %v2629
    %v2714 = vunpack.c.l.b16 %v2630
    %v2715 = vunpack.c.l.b16 %v2631
    %v2716 = vunpack.c.h.b16 %v2631
    %v2717 = vunpack.c.l.b16 %v2632
    %v2718 = vunpack.c.l.b16 %v2633
    %v2719 = vunpack.c.h.b16 %v2633
    %v2720 = vunpack.c.l.b16 %v2634
    %v2721 = vunpack.c.l.b16 %v2635
    %v2722 = vunpack.c.h.b16 %v2635
    %v2723 = vunpack.c.l.b16 %v2636
    %v2724 = vunpack.c.l.b16 %v2637
    %v2725 = vunpack.c.h.b16 %v2637
    %v2726 = vunpack.c.l.b16 %v2638
    %v2727 = vunpack.c.l.b16 %v2639
    %v2728 = vunpack.c.h.b16 %v2639
    %v2729 = vunpack.c.l.b16 %v2640
    %v2730 = vpack.c.b16 %v2685, %v2682
    %v2731 = vpack.c.b16 %v2686, %v2683
    %v2732 = vpack.c.b16 %v2687, %v2684
    %v2733 = vpack.c.b16 %v2691, %v2688
    %v2734 = vpack.c.b16 %v2692, %v2689
    %v2735 = vpack.c.b16 %v2693, %v2690
    %v2736 = vpack.c.b16 %v2697, %v2694
    %v2737 = vpack.c.b16 %v2698, %v2695
    %v2738 = vpack.c.b16 %v2699, %v2696
    %v2739 = vpack.c.b16 %v2703, %v2700
    %v2740 = vpack.c.b16 %v2704, %v2701
    %v2741 = vpack.c.b16 %v2705, %v2702
    %v2742 = vpack.c.b16 %v2709, %v2706
    %v2743 = vpack.c.b16 %v2710, %v2707
    %v2744 = vpack.c.b16 %v2711, %v2708
    %v2745 = vpack.c.b16 %v2715, %v2712
    %v2746 = vpack.c.b16 %v2716, %v2713
    %v2747 = vpack.c.b16 %v2717, %v2714
    %v2748 = vpack.c.b16 %v2721, %v2718
    %v2749 = vpack.c.b16 %v2722, %v2719
    %v2750 = vpack.c.b16 %v2723, %v2720
    %v2751 = vpack.c.b16 %v2727, %v2724
    %v2752 = vpack.c.b16 %v2728, %v2725
    %v2753 = vpack.c.b16 %v2729, %v2726
    %2778 = vmatpush.bf16.msra.mxu0 %v2751
    %2779 = vmatpush.bf16.msra.mxu0 %v2748
    %2780 = vmatpush.bf16.msra.mxu0 %v2745
    %2781 = vmatpush.bf16.msra.mxu0 %v2742
    %2782 = vmatpush.bf16.msra.mxu0 %v2739
    %2783 = vmatpush.bf16.msra.mxu0 %v2736
    %2784 = vmatpush.bf16.msra.mxu0 %v2733
    %2785 = vmatpush.bf16.msra.mxu0 %v2730
    %2786 = vmatmul.bf16.gmra.mxu0 %v2607
    %v2787 = vpop.f32.mrf.mxu0
    %v2788 = vadd.f32 %v2644, %v2787
    %v2789 = vpop.f32.mrf.mxu0
    %v2790 = vadd.f32 %v2644, %v2789
    %2791 = vdwg.mxu0
    %2792 = vmatpush.bf16.msra.mxu0 %v2752
    %2793 = vmatpush.bf16.msra.mxu0 %v2749
    %2794 = vmatpush.bf16.msra.mxu0 %v2746
    %2795 = vmatpush.bf16.msra.mxu0 %v2743
    %2796 = vmatpush.bf16.msra.mxu0 %v2740
    %2797 = vmatpush.bf16.msra.mxu0 %v2737
    %2798 = vmatpush.bf16.msra.mxu0 %v2734
    %2799 = vmatpush.bf16.msra.mxu0 %v2731
    %2800 = vmatmul.bf16.gmra.mxu0 %v2607
    %v2801 = vpop.f32.mrf.mxu0
    %v2802 = vadd.f32 %v2645, %v2801
    %v2803 = vpop.f32.mrf.mxu0
    %v2804 = vadd.f32 %v2645, %v2803
    %2805 = vdwg.mxu0
    %2806 = vmatpush.bf16.msra.mxu0 %v2753
    %2807 = vmatpush.bf16.msra.mxu0 %v2750
    %2808 = vmatpush.bf16.msra.mxu0 %v2747
    %2809 = vmatpush.bf16.msra.mxu0 %v2744
    %2810 = vmatpush.bf16.msra.mxu0 %v2741
    %2811 = vmatpush.bf16.msra.mxu0 %v2738
    %2812 = vmatpush.bf16.msra.mxu0 %v2735
    %2813 = vmatpush.bf16.msra.mxu0 %v2732
    %2814 = vmatmul.bf16.gmra.mxu0 %v2607
    %v2815 = vpop.f32.mrf.mxu0
    %v2816 = vadd.f32 %v2646, %v2815
    %v2817 = vpop.f32.mrf.mxu0
    %v2818 = vadd.f32 %v2646, %v2817
    %2819 = vdwg.mxu0
    %v2820 = vmul.f32 %v2788, 0.25
    %v2821 = vmul.f32 %v2790, 0.25
    %v2822 = vpack.c.bf16 %v2820, %v2820
    %v2823 = vpack.c.bf16 %v2821, %v2821
    %v2824 = vpack.c.bf16 %v2802, %v2802
    %v2825 = vpack.c.bf16 %v2804, %v2804
    %v2826 = vpack.c.bf16 %v2816, %v2816
    %v2827 = vpack.c.bf16 %v2818, %v2818
    %v2829 = vsel %vm571, %v2822, 0
    %v2832 = vsel %vm571, %v2824, 0
    %2834 = vmatpush.bf16.xpose.msra.mxu0 0
    %2835 = vmatpush.bf16.xpose.msra.mxu0 0
    %2836 = vmatpush.bf16.xpose.msra.mxu0 0
    %2837 = vmatpush.bf16.xpose.msra.mxu0 0
    %2838 = vmatpush.bf16.xpose.msra.mxu0 0
    %2839 = vmatpush.bf16.xpose.msra.mxu0 0
    %2840 = vmatpush.bf16.xpose.msra.mxu0 0
    %2841 = vmatpush.bf16.xpose.msra.mxu0 %v2832
    %2842 = vmatmul.bf16.gmra.mxu0 %v2829
    %v2843 = vpop.f32.mrf.mxu0
    %v2844 = vadd.f32 0.0, %v2843
    %v2845 = vpop.f32.mrf.mxu0
    %2846 = vdwg.mxu0
    %v2848 = vsel %vm571, %v2823, 0
    %v2851 = vsel %vm571, %v2825, 0
    %2853 = vmatpush.bf16.xpose.msra.mxu0 0
    %2854 = vmatpush.bf16.xpose.msra.mxu0 0
    %2855 = vmatpush.bf16.xpose.msra.mxu0 0
    %2856 = vmatpush.bf16.xpose.msra.mxu0 0
    %2857 = vmatpush.bf16.xpose.msra.mxu0 0
    %2858 = vmatpush.bf16.xpose.msra.mxu0 0
    %2859 = vmatpush.bf16.xpose.msra.mxu0 0
    %2860 = vmatpush.bf16.xpose.msra.mxu0 %v2851
    %2861 = vmatmul.bf16.gmra.mxu0 %v2848
    %v2862 = vpop.f32.mrf.mxu0
    %v2863 = vadd.f32 0.0, %v2862
    %v2864 = vpop.f32.mrf.mxu0
    %2865 = vdwg.mxu0
    %v2866 = vsel %vm313, %v2844, -inf
    %2867 = vmax.xlane.f32.xlu0 %v2866
    %v2868 = vpop.xlane.xlu0 %2867
    %v2869 = vsel %vm313, %v2863, -inf
    %2870 = vmax.xlane.f32.xlu0 %v2869
    %v2871 = vpop.xlane.xlu0 %2870
    %v2872 = vsub.f32 %v2844, %v2868
    %v2873 = vsub.f32 %v2863, %v2871
    %v2874 = vmul.f32 %v2872, 1.442695
    %v2875 = vpow.pop %v2874
    %v2876 = vmul.f32 %v2873, 1.442695
    %v2877 = vpow.pop %v2876
    %v2878 = vsel %vm313, %v2875, 0.0
    %2879 = vadd.xlane.f32.xlu0 %v2878
    %v2880 = vpop.xlane.xlu0 %2879
    %v2881 = vsel %vm313, %v2877, 0.0
    %2882 = vadd.xlane.f32.xlu0 %v2881
    %v2883 = vpop.xlane.xlu0 %2882
    %v2884 = vrcp.pop %v2880
    %v2885 = vmul.f32 %v2880, %v2884
    %v2886 = vsub.f32 1.0, %v2885
    %v2887 = vmul.f32 %v2884, %v2886
    %v2888 = vadd.f32 %v2884, %v2887
    %vm2889 = vweird.f32 %v2880
    %vm2890 = vweird.f32 %v2884
    %vm2891 = vmor %vm2889, %vm2890
    %v2892 = vsel %vm2891, %v2884, %v2888
    %v2893 = vand.u32 2147483647, %v2880
    %vm2894 = vcmp.eq.f32.partialorder %v2893, 8.507059e+37
    %v2895 = vand.u32 %v2880, 2147483648
    %v2896 = vor.u32 1.1754944e-38, %v2895
    %v2897 = vsel %vm2894, %v2896, %v2892
    %v2898 = vmul.f32 %v2875, %v2897
    %v2899 = vrcp.pop %v2883
    %v2900 = vmul.f32 %v2883, %v2899
    %v2901 = vsub.f32 1.0, %v2900
    %v2902 = vmul.f32 %v2899, %v2901
    %v2903 = vadd.f32 %v2899, %v2902
    %vm2904 = vweird.f32 %v2883
    %vm2905 = vweird.f32 %v2899
    %vm2906 = vmor %vm2904, %vm2905
    %v2907 = vsel %vm2906, %v2899, %v2903
    %v2908 = vand.u32 2147483647, %v2883
    %vm2909 = vcmp.eq.f32.partialorder %v2908, 8.507059e+37
    %v2910 = vand.u32 %v2883, 2147483648
    %v2911 = vor.u32 1.1754944e-38, %v2910
    %v2912 = vsel %vm2909, %v2911, %v2907
    %v2913 = vmul.f32 %v2877, %v2912
    %v2914 = vpack.c.bf16 %v2898, %v2898
    %v2915 = vpack.c.bf16 %v2913, %v2913
    %v2917 = vsel %vm313, %v2914, 0
    %v2920 = vsel %vm317, %v2826, 0
    %2922 = vmatpush.bf16.msra.mxu0 0
    %2923 = vmatpush.bf16.msra.mxu0 0
    %2924 = vmatpush.bf16.msra.mxu0 0
    %2925 = vmatpush.bf16.msra.mxu0 0
    %2926 = vmatpush.bf16.msra.mxu0 0
    %2927 = vmatpush.bf16.msra.mxu0 0
    %2928 = vmatpush.bf16.msra.mxu0 0
    %2929 = vmatpush.bf16.msra.mxu0 %v2920
    %2930 = vmatmul.bf16.gmra.mxu0 %v2917
    %v2931 = vpop.f32.mrf.mxu0
    %v2932 = vadd.f32 0.0, %v2931
    %v2933 = vpop.f32.mrf.mxu0
    %2934 = vdwg.mxu0
    %v2936 = vsel %vm313, %v2915, 0
    %v2939 = vsel %vm317, %v2827, 0
    %2941 = vmatpush.bf16.msra.mxu0 0
    %2942 = vmatpush.bf16.msra.mxu0 0
    %2943 = vmatpush.bf16.msra.mxu0 0
    %2944 = vmatpush.bf16.msra.mxu0 0
    %2945 = vmatpush.bf16.msra.mxu0 0
    %2946 = vmatpush.bf16.msra.mxu0 0
    %2947 = vmatpush.bf16.msra.mxu0 0
    %2948 = vmatpush.bf16.msra.mxu0 %v2939
    %2949 = vmatmul.bf16.gmra.mxu0 %v2936
    %v2950 = vpop.f32.mrf.mxu0
    %v2951 = vadd.f32 0.0, %v2950
    %v2952 = vpop.f32.mrf.mxu0
    %2953 = vdwg.mxu0
    %v2955 = vunpack.c.l.b16 %v2822
    %v2956 = vpack.c.b16 %v2955, %v2955
    %2957 = vrot.lane.b32.xlu0 %v2956, 112
    %v2958 = vpop.permute.xlu0 %2957
    %v2960 = vunpack.c.l.b16 %v2824
    %v2961 = vpack.c.b16 %v2960, %v2960
    %2962 = vrot.lane.b32.xlu0 %v2961, 112
    %v2963 = vpop.permute.xlu0 %2962
    %v2965 = vsel %vm571, %v2958, 0
    %v2968 = vsel %vm571, %v2963, 0
    %2970 = vmatpush.bf16.xpose.msra.mxu0 0
    %2971 = vmatpush.bf16.xpose.msra.mxu0 0
    %2972 = vmatpush.bf16.xpose.msra.mxu0 0
    %2973 = vmatpush.bf16.xpose.msra.mxu0 0
    %2974 = vmatpush.bf16.xpose.msra.mxu0 0
    %2975 = vmatpush.bf16.xpose.msra.mxu0 0
    %2976 = vmatpush.bf16.xpose.msra.mxu0 0
    %2977 = vmatpush.bf16.xpose.msra.mxu0 %v2968
    %2978 = vmatmul.bf16.gmra.mxu0 %v2965
    %v2979 = vpop.f32.mrf.mxu0
    %v2980 = vadd.f32 0.0, %v2979
    %v2981 = vpop.f32.mrf.mxu0
    %2982 = vdwg.mxu0
    %v2984 = vunpack.c.l.b16 %v2823
    %v2985 = vpack.c.b16 %v2984, %v2984
    %2986 = vrot.lane.b32.xlu0 %v2985, 112
    %v2987 = vpop.permute.xlu0 %2986
    %v2989 = vunpack.c.l.b16 %v2825
    %v2990 = vpack.c.b16 %v2989, %v2989
    %2991 = vrot.lane.b32.xlu0 %v2990, 112
    %v2992 = vpop.permute.xlu0 %2991
    %v2994 = vsel %vm571, %v2987, 0
    %v2997 = vsel %vm571, %v2992, 0
    %2999 = vmatpush.bf16.xpose.msra.mxu0 0
    %3000 = vmatpush.bf16.xpose.msra.mxu0 0
    %3001 = vmatpush.bf16.xpose.msra.mxu0 0
    %3002 = vmatpush.bf16.xpose.msra.mxu0 0
    %3003 = vmatpush.bf16.xpose.msra.mxu0 0
    %3004 = vmatpush.bf16.xpose.msra.mxu0 0
    %3005 = vmatpush.bf16.xpose.msra.mxu0 0
    %3006 = vmatpush.bf16.xpose.msra.mxu0 %v2997
    %3007 = vmatmul.bf16.gmra.mxu0 %v2994
    %v3008 = vpop.f32.mrf.mxu0
    %v3009 = vadd.f32 0.0, %v3008
    %v3010 = vpop.f32.mrf.mxu0
    %3011 = vdwg.mxu0
    %v3012 = vsel %vm313, %v2980, -inf
    %3013 = vmax.xlane.f32.xlu0 %v3012
    %v3014 = vpop.xlane.xlu0 %3013
    %v3015 = vsel %vm313, %v3009, -inf
    %3016 = vmax.xlane.f32.xlu0 %v3015
    %v3017 = vpop.xlane.xlu0 %3016
    %v3018 = vsub.f32 %v2980, %v3014
    %v3019 = vsub.f32 %v3009, %v3017
    %v3020 = vmul.f32 %v3018, 1.442695
    %v3021 = vpow.pop %v3020
    %v3022 = vmul.f32 %v3019, 1.442695
    %v3023 = vpow.pop %v3022
    %v3024 = vsel %vm313, %v3021, 0.0
    %3025 = vadd.xlane.f32.xlu0 %v3024
    %v3026 = vpop.xlane.xlu0 %3025
    %v3027 = vsel %vm313, %v3023, 0.0
    %3028 = vadd.xlane.f32.xlu0 %v3027
    %v3029 = vpop.xlane.xlu0 %3028
    %v3030 = vrcp.pop %v3026
    %v3031 = vmul.f32 %v3026, %v3030
    %v3032 = vsub.f32 1.0, %v3031
    %v3033 = vmul.f32 %v3030, %v3032
    %v3034 = vadd.f32 %v3030, %v3033
    %vm3035 = vweird.f32 %v3026
    %vm3036 = vweird.f32 %v3030
    %vm3037 = vmor %vm3035, %vm3036
    %v3038 = vsel %vm3037, %v3030, %v3034
    %v3039 = vand.u32 2147483647, %v3026
    %vm3040 = vcmp.eq.f32.partialorder %v3039, 8.507059e+37
    %v3041 = vand.u32 %v3026, 2147483648
    %v3042 = vor.u32 1.1754944e-38, %v3041
    %v3043 = vsel %vm3040, %v3042, %v3038
    %v3044 = vmul.f32 %v3021, %v3043
    %v3045 = vrcp.pop %v3029
    %v3046 = vmul.f32 %v3029, %v3045
    %v3047 = vsub.f32 1.0, %v3046
    %v3048 = vmul.f32 %v3045, %v3047
    %v3049 = vadd.f32 %v3045, %v3048
    %vm3050 = vweird.f32 %v3029
    %vm3051 = vweird.f32 %v3045
    %vm3052 = vmor %vm3050, %vm3051
    %v3053 = vsel %vm3052, %v3045, %v3049
    %v3054 = vand.u32 2147483647, %v3029
    %vm3055 = vcmp.eq.f32.partialorder %v3054, 8.507059e+37
    %v3056 = vand.u32 %v3029, 2147483648
    %v3057 = vor.u32 1.1754944e-38, %v3056
    %v3058 = vsel %vm3055, %v3057, %v3053
    %v3059 = vmul.f32 %v3023, %v3058
    %v3060 = vpack.c.bf16 %v3044, %v3044
    %v3061 = vpack.c.bf16 %v3059, %v3059
    %v3063 = vunpack.c.l.b16 %v2826
    %v3064 = vpack.c.b16 %v3063, %v3063
    %3065 = vrot.lane.b32.xlu0 %v3064, 112
    %v3066 = vpop.permute.xlu0 %3065
    %v3068 = vsel %vm313, %v3060, 0
    %v3071 = vsel %vm317, %v3066, 0
    %3073 = vmatpush.bf16.msra.mxu0 0
    %3074 = vmatpush.bf16.msra.mxu0 0
    %3075 = vmatpush.bf16.msra.mxu0 0
    %3076 = vmatpush.bf16.msra.mxu0 0
    %3077 = vmatpush.bf16.msra.mxu0 0
    %3078 = vmatpush.bf16.msra.mxu0 0
    %3079 = vmatpush.bf16.msra.mxu0 0
    %3080 = vmatpush.bf16.msra.mxu0 %v3071
    %3081 = vmatmul.bf16.gmra.mxu0 %v3068
    %v3082 = vpop.f32.mrf.mxu0
    %v3083 = vadd.f32 0.0, %v3082
    %v3084 = vpop.f32.mrf.mxu0
    %3085 = vdwg.mxu0
    %v3087 = vunpack.c.l.b16 %v2827
    %v3088 = vpack.c.b16 %v3087, %v3087
    %3089 = vrot.lane.b32.xlu0 %v3088, 112
    %v3090 = vpop.permute.xlu0 %3089
    %v3092 = vsel %vm313, %v3061, 0
    %v3095 = vsel %vm317, %v3090, 0
    %3097 = vmatpush.bf16.msra.mxu0 0
    %3098 = vmatpush.bf16.msra.mxu0 0
    %3099 = vmatpush.bf16.msra.mxu0 0
    %3100 = vmatpush.bf16.msra.mxu0 0
    %3101 = vmatpush.bf16.msra.mxu0 0
    %3102 = vmatpush.bf16.msra.mxu0 0
    %3103 = vmatpush.bf16.msra.mxu0 0
    %3104 = vmatpush.bf16.msra.mxu0 %v3095
    %3105 = vmatmul.bf16.gmra.mxu0 %v3092
    %v3106 = vpop.f32.mrf.mxu0
    %v3107 = vadd.f32 0.0, %v3106
    %v3108 = vpop.f32.mrf.mxu0
    %3109 = vdwg.mxu0
    %3110 = vrot.lane.b32.xlu0 %v2956, 96
    %v3111 = vpop.permute.xlu0 %3110
    %3112 = vrot.lane.b32.xlu0 %v2961, 96
    %v3113 = vpop.permute.xlu0 %3112
    %v3115 = vsel %vm571, %v3111, 0
    %v3118 = vsel %vm571, %v3113, 0
    %3120 = vmatpush.bf16.xpose.msra.mxu0 0
    %3121 = vmatpush.bf16.xpose.msra.mxu0 0
    %3122 = vmatpush.bf16.xpose.msra.mxu0 0
    %3123 = vmatpush.bf16.xpose.msra.mxu0 0
    %3124 = vmatpush.bf16.xpose.msra.mxu0 0
    %3125 = vmatpush.bf16.xpose.msra.mxu0 0
    %3126 = vmatpush.bf16.xpose.msra.mxu0 0
    %3127 = vmatpush.bf16.xpose.msra.mxu0 %v3118
    %3128 = vmatmul.bf16.gmra.mxu0 %v3115
    %v3129 = vpop.f32.mrf.mxu0
    %v3130 = vadd.f32 0.0, %v3129
    %v3131 = vpop.f32.mrf.mxu0
    %3132 = vdwg.mxu0
    %3133 = vrot.lane.b32.xlu0 %v2985, 96
    %v3134 = vpop.permute.xlu0 %3133
    %3135 = vrot.lane.b32.xlu0 %v2990, 96
    %v3136 = vpop.permute.xlu0 %3135
    %v3138 = vsel %vm571, %v3134, 0
    %v3141 = vsel %vm571, %v3136, 0
    %3143 = vmatpush.bf16.xpose.msra.mxu0 0
    %3144 = vmatpush.bf16.xpose.msra.mxu0 0
    %3145 = vmatpush.bf16.xpose.msra.mxu0 0
    %3146 = vmatpush.bf16.xpose.msra.mxu0 0
    %3147 = vmatpush.bf16.xpose.msra.mxu0 0
    %3148 = vmatpush.bf16.xpose.msra.mxu0 0
    %3149 = vmatpush.bf16.xpose.msra.mxu0 0
    %3150 = vmatpush.bf16.xpose.msra.mxu0 %v3141
    %3151 = vmatmul.bf16.gmra.mxu0 %v3138
    %v3152 = vpop.f32.mrf.mxu0
    %v3153 = vadd.f32 0.0, %v3152
    %v3154 = vpop.f32.mrf.mxu0
    %3155 = vdwg.mxu0
    %v3156 = vsel %vm313, %v3130, -inf
    %3157 = vmax.xlane.f32.xlu0 %v3156
    %v3158 = vpop.xlane.xlu0 %3157
    %v3159 = vsel %vm313, %v3153, -inf
    %3160 = vmax.xlane.f32.xlu0 %v3159
    %v3161 = vpop.xlane.xlu0 %3160
    %v3162 = vsub.f32 %v3130, %v3158
    %v3163 = vsub.f32 %v3153, %v3161
    %v3164 = vmul.f32 %v3162, 1.442695
    %v3165 = vpow.pop %v3164
    %v3166 = vmul.f32 %v3163, 1.442695
    %v3167 = vpow.pop %v3166
    %v3168 = vsel %vm313, %v3165, 0.0
    %3169 = vadd.xlane.f32.xlu0 %v3168
    %v3170 = vpop.xlane.xlu0 %3169
    %v3171 = vsel %vm313, %v3167, 0.0
    %3172 = vadd.xlane.f32.xlu0 %v3171
    %v3173 = vpop.xlane.xlu0 %3172
    %v3174 = vrcp.pop %v3170
    %v3175 = vmul.f32 %v3170, %v3174
    %v3176 = vsub.f32 1.0, %v3175
    %v3177 = vmul.f32 %v3174, %v3176
    %v3178 = vadd.f32 %v3174, %v3177
    %vm3179 = vweird.f32 %v3170
    %vm3180 = vweird.f32 %v3174
    %vm3181 = vmor %vm3179, %vm3180
    %v3182 = vsel %vm3181, %v3174, %v3178
    %v3183 = vand.u32 2147483647, %v3170
    %vm3184 = vcmp.eq.f32.partialorder %v3183, 8.507059e+37
    %v3185 = vand.u32 %v3170, 2147483648
    %v3186 = vor.u32 1.1754944e-38, %v3185
    %v3187 = vsel %vm3184, %v3186, %v3182
    %v3188 = vmul.f32 %v3165, %v3187
    %v3189 = vrcp.pop %v3173
    %v3190 = vmul.f32 %v3173, %v3189
    %v3191 = vsub.f32 1.0, %v3190
    %v3192 = vmul.f32 %v3189, %v3191
    %v3193 = vadd.f32 %v3189, %v3192
    %vm3194 = vweird.f32 %v3173
    %vm3195 = vweird.f32 %v3189
    %vm3196 = vmor %vm3194, %vm3195
    %v3197 = vsel %vm3196, %v3189, %v3193
    %v3198 = vand.u32 2147483647, %v3173
    %vm3199 = vcmp.eq.f32.partialorder %v3198, 8.507059e+37
    %v3200 = vand.u32 %v3173, 2147483648
    %v3201 = vor.u32 1.1754944e-38, %v3200
    %v3202 = vsel %vm3199, %v3201, %v3197
    %v3203 = vmul.f32 %v3167, %v3202
    %v3204 = vpack.c.bf16 %v3188, %v3188
    %v3205 = vpack.c.bf16 %v3203, %v3203
    %3206 = vrot.lane.b32.xlu0 %v3064, 96
    %v3207 = vpop.permute.xlu0 %3206
    %v3209 = vsel %vm313, %v3204, 0
    %v3212 = vsel %vm317, %v3207, 0
    %3214 = vmatpush.bf16.msra.mxu0 0
    %3215 = vmatpush.bf16.msra.mxu0 0
    %3216 = vmatpush.bf16.msra.mxu0 0
    %3217 = vmatpush.bf16.msra.mxu0 0
    %3218 = vmatpush.bf16.msra.mxu0 0
    %3219 = vmatpush.bf16.msra.mxu0 0
    %3220 = vmatpush.bf16.msra.mxu0 0
    %3221 = vmatpush.bf16.msra.mxu0 %v3212
    %3222 = vmatmul.bf16.gmra.mxu0 %v3209
    %v3223 = vpop.f32.mrf.mxu0
    %v3224 = vadd.f32 0.0, %v3223
    %v3225 = vpop.f32.mrf.mxu0
    %3226 = vdwg.mxu0
    %3227 = vrot.lane.b32.xlu0 %v3088, 96
    %v3228 = vpop.permute.xlu0 %3227
    %v3230 = vsel %vm313, %v3205, 0
    %v3233 = vsel %vm317, %v3228, 0
    %3235 = vmatpush.bf16.msra.mxu0 0
    %3236 = vmatpush.bf16.msra.mxu0 0
    %3237 = vmatpush.bf16.msra.mxu0 0
    %3238 = vmatpush.bf16.msra.mxu0 0
    %3239 = vmatpush.bf16.msra.mxu0 0
    %3240 = vmatpush.bf16.msra.mxu0 0
    %3241 = vmatpush.bf16.msra.mxu0 0
    %3242 = vmatpush.bf16.msra.mxu0 %v3233
    %3243 = vmatmul.bf16.gmra.mxu0 %v3230
    %v3244 = vpop.f32.mrf.mxu0
    %v3245 = vadd.f32 0.0, %v3244
    %v3246 = vpop.f32.mrf.mxu0
    %3247 = vdwg.mxu0
    %3248 = vrot.lane.b32.xlu0 %v2956, 80
    %v3249 = vpop.permute.xlu0 %3248
    %3250 = vrot.lane.b32.xlu0 %v2961, 80
    %v3251 = vpop.permute.xlu0 %3250
    %v3253 = vsel %vm571, %v3249, 0
    %v3256 = vsel %vm571, %v3251, 0
    %3258 = vmatpush.bf16.xpose.msra.mxu0 0
    %3259 = vmatpush.bf16.xpose.msra.mxu0 0
    %3260 = vmatpush.bf16.xpose.msra.mxu0 0
    %3261 = vmatpush.bf16.xpose.msra.mxu0 0
    %3262 = vmatpush.bf16.xpose.msra.mxu0 0
    %3263 = vmatpush.bf16.xpose.msra.mxu0 0
    %3264 = vmatpush.bf16.xpose.msra.mxu0 0
    %3265 = vmatpush.bf16.xpose.msra.mxu0 %v3256
    %3266 = vmatmul.bf16.gmra.mxu0 %v3253
    %v3267 = vpop.f32.mrf.mxu0
    %v3268 = vadd.f32 0.0, %v3267
    %v3269 = vpop.f32.mrf.mxu0
    %3270 = vdwg.mxu0
    %3271 = vrot.lane.b32.xlu0 %v2985, 80
    %v3272 = vpop.permute.xlu0 %3271
    %3273 = vrot.lane.b32.xlu0 %v2990, 80
    %v3274 = vpop.permute.xlu0 %3273
    %v3276 = vsel %vm571, %v3272, 0
    %v3279 = vsel %vm571, %v3274, 0
    %3281 = vmatpush.bf16.xpose.msra.mxu0 0
    %3282 = vmatpush.bf16.xpose.msra.mxu0 0
    %3283 = vmatpush.bf16.xpose.msra.mxu0 0
    %3284 = vmatpush.bf16.xpose.msra.mxu0 0
    %3285 = vmatpush.bf16.xpose.msra.mxu0 0
    %3286 = vmatpush.bf16.xpose.msra.mxu0 0
    %3287 = vmatpush.bf16.xpose.msra.mxu0 0
    %3288 = vmatpush.bf16.xpose.msra.mxu0 %v3279
    %3289 = vmatmul.bf16.gmra.mxu0 %v3276
    %v3290 = vpop.f32.mrf.mxu0
    %v3291 = vadd.f32 0.0, %v3290
    %v3292 = vpop.f32.mrf.mxu0
    %3293 = vdwg.mxu0
    %v3294 = vsel %vm313, %v3268, -inf
    %3295 = vmax.xlane.f32.xlu0 %v3294
    %v3296 = vpop.xlane.xlu0 %3295
    %v3297 = vsel %vm313, %v3291, -inf
    %3298 = vmax.xlane.f32.xlu0 %v3297
    %v3299 = vpop.xlane.xlu0 %3298
    %v3300 = vsub.f32 %v3268, %v3296
    %v3301 = vsub.f32 %v3291, %v3299
    %v3302 = vmul.f32 %v3300, 1.442695
    %v3303 = vpow.pop %v3302
    %v3304 = vmul.f32 %v3301, 1.442695
    %v3305 = vpow.pop %v3304
    %v3306 = vsel %vm313, %v3303, 0.0
    %3307 = vadd.xlane.f32.xlu0 %v3306
    %v3308 = vpop.xlane.xlu0 %3307
    %v3309 = vsel %vm313, %v3305, 0.0
    %3310 = vadd.xlane.f32.xlu0 %v3309
    %v3311 = vpop.xlane.xlu0 %3310
    %v3312 = vrcp.pop %v3308
    %v3313 = vmul.f32 %v3308, %v3312
    %v3314 = vsub.f32 1.0, %v3313
    %v3315 = vmul.f32 %v3312, %v3314
    %v3316 = vadd.f32 %v3312, %v3315
    %vm3317 = vweird.f32 %v3308
    %vm3318 = vweird.f32 %v3312
    %vm3319 = vmor %vm3317, %vm3318
    %v3320 = vsel %vm3319, %v3312, %v3316
    %v3321 = vand.u32 2147483647, %v3308
    %vm3322 = vcmp.eq.f32.partialorder %v3321, 8.507059e+37
    %v3323 = vand.u32 %v3308, 2147483648
    %v3324 = vor.u32 1.1754944e-38, %v3323
    %v3325 = vsel %vm3322, %v3324, %v3320
    %v3326 = vmul.f32 %v3303, %v3325
    %v3327 = vrcp.pop %v3311
    %v3328 = vmul.f32 %v3311, %v3327
    %v3329 = vsub.f32 1.0, %v3328
    %v3330 = vmul.f32 %v3327, %v3329
    %v3331 = vadd.f32 %v3327, %v3330
    %vm3332 = vweird.f32 %v3311
    %vm3333 = vweird.f32 %v3327
    %vm3334 = vmor %vm3332, %vm3333
    %v3335 = vsel %vm3334, %v3327, %v3331
    %v3336 = vand.u32 2147483647, %v3311
    %vm3337 = vcmp.eq.f32.partialorder %v3336, 8.507059e+37
    %v3338 = vand.u32 %v3311, 2147483648
    %v3339 = vor.u32 1.1754944e-38, %v3338
    %v3340 = vsel %vm3337, %v3339, %v3335
    %v3341 = vmul.f32 %v3305, %v3340
    %v3342 = vpack.c.bf16 %v3326, %v3326
    %v3343 = vpack.c.bf16 %v3341, %v3341
    %3344 = vrot.lane.b32.xlu0 %v3064, 80
    %v3345 = vpop.permute.xlu0 %3344
    %v3347 = vsel %vm313, %v3342, 0
    %v3350 = vsel %vm317, %v3345, 0
    %3352 = vmatpush.bf16.msra.mxu0 0
    %3353 = vmatpush.bf16.msra.mxu0 0
    %3354 = vmatpush.bf16.msra.mxu0 0
    %3355 = vmatpush.bf16.msra.mxu0 0
    %3356 = vmatpush.bf16.msra.mxu0 0
    %3357 = vmatpush.bf16.msra.mxu0 0
    %3358 = vmatpush.bf16.msra.mxu0 0
    %3359 = vmatpush.bf16.msra.mxu0 %v3350
    %3360 = vmatmul.bf16.gmra.mxu0 %v3347
    %v3361 = vpop.f32.mrf.mxu0
    %v3362 = vadd.f32 0.0, %v3361
    %v3363 = vpop.f32.mrf.mxu0
    %3364 = vdwg.mxu0
    %3365 = vrot.lane.b32.xlu0 %v3088, 80
    %v3366 = vpop.permute.xlu0 %3365
    %v3368 = vsel %vm313, %v3343, 0
    %v3371 = vsel %vm317, %v3366, 0
    %3373 = vmatpush.bf16.msra.mxu0 0
    %3374 = vmatpush.bf16.msra.mxu0 0
    %3375 = vmatpush.bf16.msra.mxu0 0
    %3376 = vmatpush.bf16.msra.mxu0 0
    %3377 = vmatpush.bf16.msra.mxu0 0
    %3378 = vmatpush.bf16.msra.mxu0 0
    %3379 = vmatpush.bf16.msra.mxu0 0
    %3380 = vmatpush.bf16.msra.mxu0 %v3371
    %3381 = vmatmul.bf16.gmra.mxu0 %v3368
    %v3382 = vpop.f32.mrf.mxu0
    %v3383 = vadd.f32 0.0, %v3382
    %v3384 = vpop.f32.mrf.mxu0
    %3385 = vdwg.mxu0
    %3386 = vrot.lane.b32.xlu0 %v2956, 64
    %v3387 = vpop.permute.xlu0 %3386
    %3388 = vrot.lane.b32.xlu0 %v2961, 64
    %v3389 = vpop.permute.xlu0 %3388
    %v3391 = vsel %vm571, %v3387, 0
    %v3394 = vsel %vm571, %v3389, 0
    %3396 = vmatpush.bf16.xpose.msra.mxu0 0
    %3397 = vmatpush.bf16.xpose.msra.mxu0 0
    %3398 = vmatpush.bf16.xpose.msra.mxu0 0
    %3399 = vmatpush.bf16.xpose.msra.mxu0 0
    %3400 = vmatpush.bf16.xpose.msra.mxu0 0
    %3401 = vmatpush.bf16.xpose.msra.mxu0 0
    %3402 = vmatpush.bf16.xpose.msra.mxu0 0
    %3403 = vmatpush.bf16.xpose.msra.mxu0 %v3394
    %3404 = vmatmul.bf16.gmra.mxu0 %v3391
    %v3405 = vpop.f32.mrf.mxu0
    %v3406 = vadd.f32 0.0, %v3405
    %v3407 = vpop.f32.mrf.mxu0
    %3408 = vdwg.mxu0
    %3409 = vrot.lane.b32.xlu0 %v2985, 64
    %v3410 = vpop.permute.xlu0 %3409
    %3411 = vrot.lane.b32.xlu0 %v2990, 64
    %v3412 = vpop.permute.xlu0 %3411
    %v3414 = vsel %vm571, %v3410, 0
    %v3417 = vsel %vm571, %v3412, 0
    %3419 = vmatpush.bf16.xpose.msra.mxu0 0
    %3420 = vmatpush.bf16.xpose.msra.mxu0 0
    %3421 = vmatpush.bf16.xpose.msra.mxu0 0
    %3422 = vmatpush.bf16.xpose.msra.mxu0 0
    %3423 = vmatpush.bf16.xpose.msra.mxu0 0
    %3424 = vmatpush.bf16.xpose.msra.mxu0 0
    %3425 = vmatpush.bf16.xpose.msra.mxu0 0
    %3426 = vmatpush.bf16.xpose.msra.mxu0 %v3417
    %3427 = vmatmul.bf16.gmra.mxu0 %v3414
    %v3428 = vpop.f32.mrf.mxu0
    %v3429 = vadd.f32 0.0, %v3428
    %v3430 = vpop.f32.mrf.mxu0
    %3431 = vdwg.mxu0
    %v3432 = vsel %vm313, %v3406, -inf
    %3433 = vmax.xlane.f32.xlu0 %v3432
    %v3434 = vpop.xlane.xlu0 %3433
    %v3435 = vsel %vm313, %v3429, -inf
    %3436 = vmax.xlane.f32.xlu0 %v3435
    %v3437 = vpop.xlane.xlu0 %3436
    %v3438 = vsub.f32 %v3406, %v3434
    %v3439 = vsub.f32 %v3429, %v3437
    %v3440 = vmul.f32 %v3438, 1.442695
    %v3441 = vpow.pop %v3440
    %v3442 = vmul.f32 %v3439, 1.442695
    %v3443 = vpow.pop %v3442
    %v3444 = vsel %vm313, %v3441, 0.0
    %3445 = vadd.xlane.f32.xlu0 %v3444
    %v3446 = vpop.xlane.xlu0 %3445
    %v3447 = vsel %vm313, %v3443, 0.0
    %3448 = vadd.xlane.f32.xlu0 %v3447
    %v3449 = vpop.xlane.xlu0 %3448
    %v3450 = vrcp.pop %v3446
    %v3451 = vmul.f32 %v3446, %v3450
    %v3452 = vsub.f32 1.0, %v3451
    %v3453 = vmul.f32 %v3450, %v3452
    %v3454 = vadd.f32 %v3450, %v3453
    %vm3455 = vweird.f32 %v3446
    %vm3456 = vweird.f32 %v3450
    %vm3457 = vmor %vm3455, %vm3456
    %v3458 = vsel %vm3457, %v3450, %v3454
    %v3459 = vand.u32 2147483647, %v3446
    %vm3460 = vcmp.eq.f32.partialorder %v3459, 8.507059e+37
    %v3461 = vand.u32 %v3446, 2147483648
    %v3462 = vor.u32 1.1754944e-38, %v3461
    %v3463 = vsel %vm3460, %v3462, %v3458
    %v3464 = vmul.f32 %v3441, %v3463
    %v3465 = vrcp.pop %v3449
    %v3466 = vmul.f32 %v3449, %v3465
    %v3467 = vsub.f32 1.0, %v3466
    %v3468 = vmul.f32 %v3465, %v3467
    %v3469 = vadd.f32 %v3465, %v3468
    %vm3470 = vweird.f32 %v3449
    %vm3471 = vweird.f32 %v3465
    %vm3472 = vmor %vm3470, %vm3471
    %v3473 = vsel %vm3472, %v3465, %v3469
    %v3474 = vand.u32 2147483647, %v3449
    %vm3475 = vcmp.eq.f32.partialorder %v3474, 8.507059e+37
    %v3476 = vand.u32 %v3449, 2147483648
    %v3477 = vor.u32 1.1754944e-38, %v3476
    %v3478 = vsel %vm3475, %v3477, %v3473
    %v3479 = vmul.f32 %v3443, %v3478
    %v3480 = vpack.c.bf16 %v3464, %v3464
    %v3481 = vpack.c.bf16 %v3479, %v3479
    %3482 = vrot.lane.b32.xlu0 %v3064, 64
    %v3483 = vpop.permute.xlu0 %3482
    %v3485 = vsel %vm313, %v3480, 0
    %v3488 = vsel %vm317, %v3483, 0
    %3490 = vmatpush.bf16.msra.mxu0 0
    %3491 = vmatpush.bf16.msra.mxu0 0
    %3492 = vmatpush.bf16.msra.mxu0 0
    %3493 = vmatpush.bf16.msra.mxu0 0
    %3494 = vmatpush.bf16.msra.mxu0 0
    %3495 = vmatpush.bf16.msra.mxu0 0
    %3496 = vmatpush.bf16.msra.mxu0 0
    %3497 = vmatpush.bf16.msra.mxu0 %v3488
    %3498 = vmatmul.bf16.gmra.mxu0 %v3485
    %v3499 = vpop.f32.mrf.mxu0
    %v3500 = vadd.f32 0.0, %v3499
    %v3501 = vpop.f32.mrf.mxu0
    %3502 = vdwg.mxu0
    %3503 = vrot.lane.b32.xlu0 %v3088, 64
    %v3504 = vpop.permute.xlu0 %3503
    %v3506 = vsel %vm313, %v3481, 0
    %v3509 = vsel %vm317, %v3504, 0
    %3511 = vmatpush.bf16.msra.mxu0 0
    %3512 = vmatpush.bf16.msra.mxu0 0
    %3513 = vmatpush.bf16.msra.mxu0 0
    %3514 = vmatpush.bf16.msra.mxu0 0
    %3515 = vmatpush.bf16.msra.mxu0 0
    %3516 = vmatpush.bf16.msra.mxu0 0
    %3517 = vmatpush.bf16.msra.mxu0 0
    %3518 = vmatpush.bf16.msra.mxu0 %v3509
    %3519 = vmatmul.bf16.gmra.mxu0 %v3506
    %v3520 = vpop.f32.mrf.mxu0
    %v3521 = vadd.f32 0.0, %v3520
    %v3522 = vpop.f32.mrf.mxu0
    %3523 = vdwg.mxu0
    %3524 = vrot.lane.b32.xlu0 %v2956, 48
    %v3525 = vpop.permute.xlu0 %3524
    %3526 = vrot.lane.b32.xlu0 %v2961, 48
    %v3527 = vpop.permute.xlu0 %3526
    %v3529 = vsel %vm571, %v3525, 0
    %v3532 = vsel %vm571, %v3527, 0
    %3534 = vmatpush.bf16.xpose.msra.mxu0 0
    %3535 = vmatpush.bf16.xpose.msra.mxu0 0
    %3536 = vmatpush.bf16.xpose.msra.mxu0 0
    %3537 = vmatpush.bf16.xpose.msra.mxu0 0
    %3538 = vmatpush.bf16.xpose.msra.mxu0 0
    %3539 = vmatpush.bf16.xpose.msra.mxu0 0
    %3540 = vmatpush.bf16.xpose.msra.mxu0 0
    %3541 = vmatpush.bf16.xpose.msra.mxu0 %v3532
    %3542 = vmatmul.bf16.gmra.mxu0 %v3529
    %v3543 = vpop.f32.mrf.mxu0
    %v3544 = vadd.f32 0.0, %v3543
    %v3545 = vpop.f32.mrf.mxu0
    %3546 = vdwg.mxu0
    %3547 = vrot.lane.b32.xlu0 %v2985, 48
    %v3548 = vpop.permute.xlu0 %3547
    %3549 = vrot.lane.b32.xlu0 %v2990, 48
    %v3550 = vpop.permute.xlu0 %3549
    %v3552 = vsel %vm571, %v3548, 0
    %v3555 = vsel %vm571, %v3550, 0
    %3557 = vmatpush.bf16.xpose.msra.mxu0 0
    %3558 = vmatpush.bf16.xpose.msra.mxu0 0
    %3559 = vmatpush.bf16.xpose.msra.mxu0 0
    %3560 = vmatpush.bf16.xpose.msra.mxu0 0
    %3561 = vmatpush.bf16.xpose.msra.mxu0 0
    %3562 = vmatpush.bf16.xpose.msra.mxu0 0
    %3563 = vmatpush.bf16.xpose.msra.mxu0 0
    %3564 = vmatpush.bf16.xpose.msra.mxu0 %v3555
    %3565 = vmatmul.bf16.gmra.mxu0 %v3552
    %v3566 = vpop.f32.mrf.mxu0
    %v3567 = vadd.f32 0.0, %v3566
    %v3568 = vpop.f32.mrf.mxu0
    %3569 = vdwg.mxu0
    %v3570 = vsel %vm313, %v3544, -inf
    %3571 = vmax.xlane.f32.xlu0 %v3570
    %v3572 = vpop.xlane.xlu0 %3571
    %v3573 = vsel %vm313, %v3567, -inf
    %3574 = vmax.xlane.f32.xlu0 %v3573
    %v3575 = vpop.xlane.xlu0 %3574
    %v3576 = vsub.f32 %v3544, %v3572
    %v3577 = vsub.f32 %v3567, %v3575
    %v3578 = vmul.f32 %v3576, 1.442695
    %v3579 = vpow.pop %v3578
    %v3580 = vmul.f32 %v3577, 1.442695
    %v3581 = vpow.pop %v3580
    %v3582 = vsel %vm313, %v3579, 0.0
    %3583 = vadd.xlane.f32.xlu0 %v3582
    %v3584 = vpop.xlane.xlu0 %3583
    %v3585 = vsel %vm313, %v3581, 0.0
    %3586 = vadd.xlane.f32.xlu0 %v3585
    %v3587 = vpop.xlane.xlu0 %3586
    %v3588 = vrcp.pop %v3584
    %v3589 = vmul.f32 %v3584, %v3588
    %v3590 = vsub.f32 1.0, %v3589
    %v3591 = vmul.f32 %v3588, %v3590
    %v3592 = vadd.f32 %v3588, %v3591
    %vm3593 = vweird.f32 %v3584
    %vm3594 = vweird.f32 %v3588
    %vm3595 = vmor %vm3593, %vm3594
    %v3596 = vsel %vm3595, %v3588, %v3592
    %v3597 = vand.u32 2147483647, %v3584
    %vm3598 = vcmp.eq.f32.partialorder %v3597, 8.507059e+37
    %v3599 = vand.u32 %v3584, 2147483648
    %v3600 = vor.u32 1.1754944e-38, %v3599
    %v3601 = vsel %vm3598, %v3600, %v3596
    %v3602 = vmul.f32 %v3579, %v3601
    %v3603 = vrcp.pop %v3587
    %v3604 = vmul.f32 %v3587, %v3603
    %v3605 = vsub.f32 1.0, %v3604
    %v3606 = vmul.f32 %v3603, %v3605
    %v3607 = vadd.f32 %v3603, %v3606
    %vm3608 = vweird.f32 %v3587
    %vm3609 = vweird.f32 %v3603
    %vm3610 = vmor %vm3608, %vm3609
    %v3611 = vsel %vm3610, %v3603, %v3607
    %v3612 = vand.u32 2147483647, %v3587
    %vm3613 = vcmp.eq.f32.partialorder %v3612, 8.507059e+37
    %v3614 = vand.u32 %v3587, 2147483648
    %v3615 = vor.u32 1.1754944e-38, %v3614
    %v3616 = vsel %vm3613, %v3615, %v3611
    %v3617 = vmul.f32 %v3581, %v3616
    %v3618 = vpack.c.bf16 %v3602, %v3602
    %v3619 = vpack.c.bf16 %v3617, %v3617
    %3620 = vrot.lane.b32.xlu0 %v3064, 48
    %v3621 = vpop.permute.xlu0 %3620
    %v3623 = vsel %vm313, %v3618, 0
    %v3626 = vsel %vm317, %v3621, 0
    %3628 = vmatpush.bf16.msra.mxu0 0
    %3629 = vmatpush.bf16.msra.mxu0 0
    %3630 = vmatpush.bf16.msra.mxu0 0
    %3631 = vmatpush.bf16.msra.mxu0 0
    %3632 = vmatpush.bf16.msra.mxu0 0
    %3633 = vmatpush.bf16.msra.mxu0 0
    %3634 = vmatpush.bf16.msra.mxu0 0
    %3635 = vmatpush.bf16.msra.mxu0 %v3626
    %3636 = vmatmul.bf16.gmra.mxu0 %v3623
    %v3637 = vpop.f32.mrf.mxu0
    %v3638 = vadd.f32 0.0, %v3637
    %v3639 = vpop.f32.mrf.mxu0
    %3640 = vdwg.mxu0
    %3641 = vrot.lane.b32.xlu0 %v3088, 48
    %v3642 = vpop.permute.xlu0 %3641
    %v3644 = vsel %vm313, %v3619, 0
    %v3647 = vsel %vm317, %v3642, 0
    %3649 = vmatpush.bf16.msra.mxu0 0
    %3650 = vmatpush.bf16.msra.mxu0 0
    %3651 = vmatpush.bf16.msra.mxu0 0
    %3652 = vmatpush.bf16.msra.mxu0 0
    %3653 = vmatpush.bf16.msra.mxu0 0
    %3654 = vmatpush.bf16.msra.mxu0 0
    %3655 = vmatpush.bf16.msra.mxu0 0
    %3656 = vmatpush.bf16.msra.mxu0 %v3647
    %3657 = vmatmul.bf16.gmra.mxu0 %v3644
    %v3658 = vpop.f32.mrf.mxu0
    %v3659 = vadd.f32 0.0, %v3658
    %v3660 = vpop.f32.mrf.mxu0
    %3661 = vdwg.mxu0
    %3662 = vrot.lane.b32.xlu0 %v2956, 32
    %v3663 = vpop.permute.xlu0 %3662
    %3664 = vrot.lane.b32.xlu0 %v2961, 32
    %v3665 = vpop.permute.xlu0 %3664
    %v3667 = vsel %vm571, %v3663, 0
    %v3670 = vsel %vm571, %v3665, 0
    %3672 = vmatpush.bf16.xpose.msra.mxu0 0
    %3673 = vmatpush.bf16.xpose.msra.mxu0 0
    %3674 = vmatpush.bf16.xpose.msra.mxu0 0
    %3675 = vmatpush.bf16.xpose.msra.mxu0 0
    %3676 = vmatpush.bf16.xpose.msra.mxu0 0
    %3677 = vmatpush.bf16.xpose.msra.mxu0 0
    %3678 = vmatpush.bf16.xpose.msra.mxu0 0
    %3679 = vmatpush.bf16.xpose.msra.mxu0 %v3670
    %3680 = vmatmul.bf16.gmra.mxu0 %v3667
    %v3681 = vpop.f32.mrf.mxu0
    %v3682 = vadd.f32 0.0, %v3681
    %v3683 = vpop.f32.mrf.mxu0
    %3684 = vdwg.mxu0
    %3685 = vrot.lane.b32.xlu0 %v2985, 32
    %v3686 = vpop.permute.xlu0 %3685
    %3687 = vrot.lane.b32.xlu0 %v2990, 32
    %v3688 = vpop.permute.xlu0 %3687
    %v3690 = vsel %vm571, %v3686, 0
    %v3693 = vsel %vm571, %v3688, 0
    %3695 = vmatpush.bf16.xpose.msra.mxu0 0
    %3696 = vmatpush.bf16.xpose.msra.mxu0 0
    %3697 = vmatpush.bf16.xpose.msra.mxu0 0
    %3698 = vmatpush.bf16.xpose.msra.mxu0 0
    %3699 = vmatpush.bf16.xpose.msra.mxu0 0
    %3700 = vmatpush.bf16.xpose.msra.mxu0 0
    %3701 = vmatpush.bf16.xpose.msra.mxu0 0
    %3702 = vmatpush.bf16.xpose.msra.mxu0 %v3693
    %3703 = vmatmul.bf16.gmra.mxu0 %v3690
    %v3704 = vpop.f32.mrf.mxu0
    %v3705 = vadd.f32 0.0, %v3704
    %v3706 = vpop.f32.mrf.mxu0
    %3707 = vdwg.mxu0
    %v3708 = vsel %vm313, %v3682, -inf
    %3709 = vmax.xlane.f32.xlu0 %v3708
    %v3710 = vpop.xlane.xlu0 %3709
    %v3711 = vsel %vm313, %v3705, -inf
    %3712 = vmax.xlane.f32.xlu0 %v3711
    %v3713 = vpop.xlane.xlu0 %3712
    %v3714 = vsub.f32 %v3682, %v3710
    %v3715 = vsub.f32 %v3705, %v3713
    %v3716 = vmul.f32 %v3714, 1.442695
    %v3717 = vpow.pop %v3716
    %v3718 = vmul.f32 %v3715, 1.442695
    %v3719 = vpow.pop %v3718
    %v3720 = vsel %vm313, %v3717, 0.0
    %3721 = vadd.xlane.f32.xlu0 %v3720
    %v3722 = vpop.xlane.xlu0 %3721
    %v3723 = vsel %vm313, %v3719, 0.0
    %3724 = vadd.xlane.f32.xlu0 %v3723
    %v3725 = vpop.xlane.xlu0 %3724
    %v3726 = vrcp.pop %v3722
    %v3727 = vmul.f32 %v3722, %v3726
    %v3728 = vsub.f32 1.0, %v3727
    %v3729 = vmul.f32 %v3726, %v3728
    %v3730 = vadd.f32 %v3726, %v3729
    %vm3731 = vweird.f32 %v3722
    %vm3732 = vweird.f32 %v3726
    %vm3733 = vmor %vm3731, %vm3732
    %v3734 = vsel %vm3733, %v3726, %v3730
    %v3735 = vand.u32 2147483647, %v3722
    %vm3736 = vcmp.eq.f32.partialorder %v3735, 8.507059e+37
    %v3737 = vand.u32 %v3722, 2147483648
    %v3738 = vor.u32 1.1754944e-38, %v3737
    %v3739 = vsel %vm3736, %v3738, %v3734
    %v3740 = vmul.f32 %v3717, %v3739
    %v3741 = vrcp.pop %v3725
    %v3742 = vmul.f32 %v3725, %v3741
    %v3743 = vsub.f32 1.0, %v3742
    %v3744 = vmul.f32 %v3741, %v3743
    %v3745 = vadd.f32 %v3741, %v3744
    %vm3746 = vweird.f32 %v3725
    %vm3747 = vweird.f32 %v3741
    %vm3748 = vmor %vm3746, %vm3747
    %v3749 = vsel %vm3748, %v3741, %v3745
    %v3750 = vand.u32 2147483647, %v3725
    %vm3751 = vcmp.eq.f32.partialorder %v3750, 8.507059e+37
    %v3752 = vand.u32 %v3725, 2147483648
    %v3753 = vor.u32 1.1754944e-38, %v3752
    %v3754 = vsel %vm3751, %v3753, %v3749
    %v3755 = vmul.f32 %v3719, %v3754
    %v3756 = vpack.c.bf16 %v3740, %v3740
    %v3757 = vpack.c.bf16 %v3755, %v3755
    %3758 = vrot.lane.b32.xlu0 %v3064, 32
    %v3759 = vpop.permute.xlu0 %3758
    %v3761 = vsel %vm313, %v3756, 0
    %v3764 = vsel %vm317, %v3759, 0
    %3766 = vmatpush.bf16.msra.mxu0 0
    %3767 = vmatpush.bf16.msra.mxu0 0
    %3768 = vmatpush.bf16.msra.mxu0 0
    %3769 = vmatpush.bf16.msra.mxu0 0
    %3770 = vmatpush.bf16.msra.mxu0 0
    %3771 = vmatpush.bf16.msra.mxu0 0
    %3772 = vmatpush.bf16.msra.mxu0 0
    %3773 = vmatpush.bf16.msra.mxu0 %v3764
    %3774 = vmatmul.bf16.gmra.mxu0 %v3761
    %v3775 = vpop.f32.mrf.mxu0
    %v3776 = vadd.f32 0.0, %v3775
    %v3777 = vpop.f32.mrf.mxu0
    %3778 = vdwg.mxu0
    %3779 = vrot.lane.b32.xlu0 %v3088, 32
    %v3780 = vpop.permute.xlu0 %3779
    %v3782 = vsel %vm313, %v3757, 0
    %v3785 = vsel %vm317, %v3780, 0
    %3787 = vmatpush.bf16.msra.mxu0 0
    %3788 = vmatpush.bf16.msra.mxu0 0
    %3789 = vmatpush.bf16.msra.mxu0 0
    %3790 = vmatpush.bf16.msra.mxu0 0
    %3791 = vmatpush.bf16.msra.mxu0 0
    %3792 = vmatpush.bf16.msra.mxu0 0
    %3793 = vmatpush.bf16.msra.mxu0 0
    %3794 = vmatpush.bf16.msra.mxu0 %v3785
    %3795 = vmatmul.bf16.gmra.mxu0 %v3782
    %v3796 = vpop.f32.mrf.mxu0
    %v3797 = vadd.f32 0.0, %v3796
    %v3798 = vpop.f32.mrf.mxu0
    %3799 = vdwg.mxu0
    %3800 = vrot.lane.b32.xlu0 %v2956, 16
    %v3801 = vpop.permute.xlu0 %3800
    %3802 = vrot.lane.b32.xlu0 %v2961, 16
    %v3803 = vpop.permute.xlu0 %3802
    %v3805 = vsel %vm571, %v3801, 0
    %v3808 = vsel %vm571, %v3803, 0
    %3810 = vmatpush.bf16.xpose.msra.mxu0 0
    %3811 = vmatpush.bf16.xpose.msra.mxu0 0
    %3812 = vmatpush.bf16.xpose.msra.mxu0 0
    %3813 = vmatpush.bf16.xpose.msra.mxu0 0
    %3814 = vmatpush.bf16.xpose.msra.mxu0 0
    %3815 = vmatpush.bf16.xpose.msra.mxu0 0
    %3816 = vmatpush.bf16.xpose.msra.mxu0 0
    %3817 = vmatpush.bf16.xpose.msra.mxu0 %v3808
    %3818 = vmatmul.bf16.gmra.mxu0 %v3805
    %v3819 = vpop.f32.mrf.mxu0
    %v3820 = vadd.f32 0.0, %v3819
    %v3821 = vpop.f32.mrf.mxu0
    %3822 = vdwg.mxu0
    %3823 = vrot.lane.b32.xlu0 %v2985, 16
    %v3824 = vpop.permute.xlu0 %3823
    %3825 = vrot.lane.b32.xlu0 %v2990, 16
    %v3826 = vpop.permute.xlu0 %3825
    %v3828 = vsel %vm571, %v3824, 0
    %v3831 = vsel %vm571, %v3826, 0
    %3833 = vmatpush.bf16.xpose.msra.mxu0 0
    %3834 = vmatpush.bf16.xpose.msra.mxu0 0
    %3835 = vmatpush.bf16.xpose.msra.mxu0 0
    %3836 = vmatpush.bf16.xpose.msra.mxu0 0
    %3837 = vmatpush.bf16.xpose.msra.mxu0 0
    %3838 = vmatpush.bf16.xpose.msra.mxu0 0
    %3839 = vmatpush.bf16.xpose.msra.mxu0 0
    %3840 = vmatpush.bf16.xpose.msra.mxu0 %v3831
    %3841 = vmatmul.bf16.gmra.mxu0 %v3828
    %v3842 = vpop.f32.mrf.mxu0
    %v3843 = vadd.f32 0.0, %v3842
    %v3844 = vpop.f32.mrf.mxu0
    %3845 = vdwg.mxu0
    %v3846 = vsel %vm313, %v3820, -inf
    %3847 = vmax.xlane.f32.xlu0 %v3846
    %v3848 = vpop.xlane.xlu0 %3847
    %v3849 = vsel %vm313, %v3843, -inf
    %3850 = vmax.xlane.f32.xlu0 %v3849
    %v3851 = vpop.xlane.xlu0 %3850
    %v3852 = vsub.f32 %v3820, %v3848
    %v3853 = vsub.f32 %v3843, %v3851
    %v3854 = vmul.f32 %v3852, 1.442695
    %v3855 = vpow.pop %v3854
    %v3856 = vmul.f32 %v3853, 1.442695
    %v3857 = vpow.pop %v3856
    %v3858 = vsel %vm313, %v3855, 0.0
    %3859 = vadd.xlane.f32.xlu0 %v3858
    %v3860 = vpop.xlane.xlu0 %3859
    %v3861 = vsel %vm313, %v3857, 0.0
    %3862 = vadd.xlane.f32.xlu0 %v3861
    %v3863 = vpop.xlane.xlu0 %3862
    %v3864 = vrcp.pop %v3860
    %v3865 = vmul.f32 %v3860, %v3864
    %v3866 = vsub.f32 1.0, %v3865
    %v3867 = vmul.f32 %v3864, %v3866
    %v3868 = vadd.f32 %v3864, %v3867
    %vm3869 = vweird.f32 %v3860
    %vm3870 = vweird.f32 %v3864
    %vm3871 = vmor %vm3869, %vm3870
    %v3872 = vsel %vm3871, %v3864, %v3868
    %v3873 = vand.u32 2147483647, %v3860
    %vm3874 = vcmp.eq.f32.partialorder %v3873, 8.507059e+37
    %v3875 = vand.u32 %v3860, 2147483648
    %v3876 = vor.u32 1.1754944e-38, %v3875
    %v3877 = vsel %vm3874, %v3876, %v3872
    %v3878 = vmul.f32 %v3855, %v3877
    %v3879 = vrcp.pop %v3863
    %v3880 = vmul.f32 %v3863, %v3879
    %v3881 = vsub.f32 1.0, %v3880
    %v3882 = vmul.f32 %v3879, %v3881
    %v3883 = vadd.f32 %v3879, %v3882
    %vm3884 = vweird.f32 %v3863
    %vm3885 = vweird.f32 %v3879
    %vm3886 = vmor %vm3884, %vm3885
    %v3887 = vsel %vm3886, %v3879, %v3883
    %v3888 = vand.u32 2147483647, %v3863
    %vm3889 = vcmp.eq.f32.partialorder %v3888, 8.507059e+37
    %v3890 = vand.u32 %v3863, 2147483648
    %v3891 = vor.u32 1.1754944e-38, %v3890
    %v3892 = vsel %vm3889, %v3891, %v3887
    %v3893 = vmul.f32 %v3857, %v3892
    %v3894 = vpack.c.bf16 %v3878, %v3878
    %v3895 = vpack.c.bf16 %v3893, %v3893
    %3896 = vrot.lane.b32.xlu0 %v3064, 16
    %v3897 = vpop.permute.xlu0 %3896
    %v3899 = vsel %vm313, %v3894, 0
    %v3902 = vsel %vm317, %v3897, 0
    %3904 = vmatpush.bf16.msra.mxu0 0
    %3905 = vmatpush.bf16.msra.mxu0 0
    %3906 = vmatpush.bf16.msra.mxu0 0
    %3907 = vmatpush.bf16.msra.mxu0 0
    %3908 = vmatpush.bf16.msra.mxu0 0
    %3909 = vmatpush.bf16.msra.mxu0 0
    %3910 = vmatpush.bf16.msra.mxu0 0
    %3911 = vmatpush.bf16.msra.mxu0 %v3902
    %3912 = vmatmul.bf16.gmra.mxu0 %v3899
    %v3913 = vpop.f32.mrf.mxu0
    %v3914 = vadd.f32 0.0, %v3913
    %v3915 = vpop.f32.mrf.mxu0
    %3916 = vdwg.mxu0
    %3917 = vrot.lane.b32.xlu0 %v3088, 16
    %v3918 = vpop.permute.xlu0 %3917
    %v3920 = vsel %vm313, %v3895, 0
    %v3923 = vsel %vm317, %v3918, 0
    %3925 = vmatpush.bf16.msra.mxu0 0
    %3926 = vmatpush.bf16.msra.mxu0 0
    %3927 = vmatpush.bf16.msra.mxu0 0
    %3928 = vmatpush.bf16.msra.mxu0 0
    %3929 = vmatpush.bf16.msra.mxu0 0
    %3930 = vmatpush.bf16.msra.mxu0 0
    %3931 = vmatpush.bf16.msra.mxu0 0
    %3932 = vmatpush.bf16.msra.mxu0 %v3923
    %3933 = vmatmul.bf16.gmra.mxu0 %v3920
    %v3934 = vpop.f32.mrf.mxu0
    %v3935 = vadd.f32 0.0, %v3934
    %v3936 = vpop.f32.mrf.mxu0
    %3937 = vdwg.mxu0
    %3940 = vrot.lane.b32.xlu0 %v3083, 16
    %v3941 = vpop.permute.xlu0 %3940
    %3942 = vrot.lane.b32.xlu0 %v3107, 16
    %v3943 = vpop.permute.xlu0 %3942
    %3948 = vrot.lane.b32.xlu0 %v3224, 32
    %v3949 = vpop.permute.xlu0 %3948
    %3950 = vrot.lane.b32.xlu0 %v3245, 32
    %v3951 = vpop.permute.xlu0 %3950
    %3956 = vrot.lane.b32.xlu0 %v3362, 48
    %v3957 = vpop.permute.xlu0 %3956
    %3958 = vrot.lane.b32.xlu0 %v3383, 48
    %v3959 = vpop.permute.xlu0 %3958
    %3964 = vrot.lane.b32.xlu0 %v3500, 64
    %v3965 = vpop.permute.xlu0 %3964
    %3966 = vrot.lane.b32.xlu0 %v3521, 64
    %v3967 = vpop.permute.xlu0 %3966
    %3972 = vrot.lane.b32.xlu0 %v3638, 80
    %v3973 = vpop.permute.xlu0 %3972
    %3974 = vrot.lane.b32.xlu0 %v3659, 80
    %v3975 = vpop.permute.xlu0 %3974
    %3980 = vrot.lane.b32.xlu0 %v3776, 96
    %v3981 = vpop.permute.xlu0 %3980
    %3982 = vrot.lane.b32.xlu0 %v3797, 96
    %v3983 = vpop.permute.xlu0 %3982
    %3988 = vrot.lane.b32.xlu0 %v3914, 112
    %v3989 = vpop.permute.xlu0 %3988
    %3990 = vrot.lane.b32.xlu0 %v3935, 112
    %v3991 = vpop.permute.xlu0 %3990
    %v3994 = vsel %vm571, %v2932, %v3941
    %v3995 = vsel %vm571, %v2951, %v3943
    %v3996 = vsel %vm1740, %v3994, %v3949
    %v3997 = vsel %vm1740, %v3995, %v3951
    %v3998 = vsel %vm1743, %v3996, %v3957
    %v3999 = vsel %vm1743, %v3997, %v3959
    %v4000 = vsel %vm1746, %v3998, %v3965
    %v4001 = vsel %vm1746, %v3999, %v3967
    %v4002 = vsel %vm1749, %v4000, %v3973
    %v4003 = vsel %vm1749, %v4001, %v3975
    %v4004 = vsel %vm1752, %v4002, %v3981
    %v4005 = vsel %vm1752, %v4003, %v3983
    %v4006 = vsel %vm1755, %v4004, %v3989
    %v4007 = vsel %vm1755, %v4005, %v3991
    %v4008 = vpack.c.bf16 %v4007, %v4006
    %s4009 = scalar_lea.vmem [#allocation9], 64
    %v4010 = vld [vmem:[%s4009] sm:$0xf]
    %v4011 = vld [vmem:[%s4009 + $0x4] sm:$0xf]
    %v4012 = vld [vmem:[%s4009 + $0x8] sm:$0xf]
    %v4013 = vld [vmem:[%s4009 + $0xc] sm:$0xf]
    %v4014 = vld [vmem:[%s4009 + $0x10] sm:$0xf]
    %v4015 = vld [vmem:[%s4009 + $0x14] sm:$0xf]
    %v4016 = vld [vmem:[%s4009 + $0x18] sm:$0xf]
    %v4017 = vld [vmem:[%s4009 + $0x1c] sm:$0xf]
    %v4018 = vld [vmem:[%s4009 + $0x20] sm:$0xf]
    %v4019 = vld [vmem:[%s4009 + $0x24] sm:$0xf]
    %v4020 = vld [vmem:[%s4009 + $0x28] sm:$0xf]
    %v4021 = vld [vmem:[%s4009 + $0x2c] sm:$0xf]
    %v4022 = vld [vmem:[%s4009 + $0x30] sm:$0xf]
    %v4023 = vld [vmem:[%s4009 + $0x34] sm:$0xf]
    %v4024 = vld [vmem:[%s4009 + $0x38] sm:$0xf]
    %v4025 = vld [vmem:[%s4009 + $0x3c] sm:$0xf]
    %s4026 = scalar_lea.vmem [#allocation11], 1
    %v4027 = vld [vmem:[%s4026] sm:$0x1]
    %v4029 = vperm.slane %v4027, 0
    %v4047 = vunpack.c.l.b16 %v4010
    %v4048 = vunpack.c.l.b16 %v4011
    %v4049 = vunpack.c.l.b16 %v4012
    %v4050 = vunpack.c.l.b16 %v4013
    %v4051 = vunpack.c.l.b16 %v4014
    %v4052 = vunpack.c.l.b16 %v4015
    %v4053 = vunpack.c.l.b16 %v4016
    %v4054 = vunpack.c.l.b16 %v4017
    %v4055 = vunpack.c.l.b16 %v4018
    %v4056 = vunpack.c.l.b16 %v4019
    %v4057 = vunpack.c.l.b16 %v4020
    %v4058 = vunpack.c.l.b16 %v4021
    %v4059 = vunpack.c.l.b16 %v4022
    %v4060 = vunpack.c.l.b16 %v4023
    %v4061 = vunpack.c.l.b16 %v4024
    %v4062 = vunpack.c.l.b16 %v4025
    %v4063 = vpack.c.b16 %v4048, %v4047
    %v4064 = vpack.c.b16 %v4050, %v4049
    %v4065 = vpack.c.b16 %v4052, %v4051
    %v4066 = vpack.c.b16 %v4054, %v4053
    %v4067 = vpack.c.b16 %v4056, %v4055
    %v4068 = vpack.c.b16 %v4058, %v4057
    %v4069 = vpack.c.b16 %v4060, %v4059
    %v4070 = vpack.c.b16 %v4062, %v4061
    %4079 = vmatpush.bf16.msra.mxu0 %v4070
    %4080 = vmatpush.bf16.msra.mxu0 %v4069
    %4081 = vmatpush.bf16.msra.mxu0 %v4068
    %4082 = vmatpush.bf16.msra.mxu0 %v4067
    %4083 = vmatpush.bf16.msra.mxu0 %v4066
    %4084 = vmatpush.bf16.msra.mxu0 %v4065
    %4085 = vmatpush.bf16.msra.mxu0 %v4064
    %4086 = vmatpush.bf16.msra.mxu0 %v4063
    %4087 = vmatmul.bf16.gmra.mxu0 %v4008
    %v4088 = vpop.f32.mrf.mxu0
    %v4089 = vadd.f32 %v4029, %v4088
    %v4090 = vpop.f32.mrf.mxu0
    %v4091 = vadd.f32 %v4029, %v4090
    %4092 = vdwg.mxu0
    %v4093 = vadd.f32 %v2605, %v4089
    %v4094 = vadd.f32 %v2606, %v4091
    %s4095 = scalar_lea.vmem [#allocation12], 1
    %v4096 = vld [vmem:[%s4095] sm:$0x1]
    %s4097 = scalar_lea.vmem [#allocation14], 1
    %v4098 = vld [vmem:[%s4097] sm:$0x1]
    %4099 = vadd.xlane.f32.xlu0 %v4093
    %v4100 = vpop.xlane.xlu0 %4099
    %4101 = vadd.xlane.f32.xlu0 %v4094
    %v4102 = vpop.xlane.xlu0 %4101
    %v4103 = vmul.f32 %v4100, %v1855
    %v4104 = vmul.f32 %v4102, %v1855
    %v4105 = vsub.f32 %v4093, %v4103
    %v4106 = vsub.f32 %v4094, %v4104
    %v4107 = vmul.f32 %v4105, %v4105
    %v4108 = vmul.f32 %v4106, %v4106
    %4109 = vadd.xlane.f32.xlu0 %v4107
    %v4110 = vpop.xlane.xlu0 %4109
    %4111 = vadd.xlane.f32.xlu0 %v4108
    %v4112 = vpop.xlane.xlu0 %4111
    %v4113 = vmul.f32 %v4110, %v1855
    %v4114 = vmul.f32 %v4112, %v1855
    %v4115 = vadd.f32 %v4113, 1e-12
    %v4116 = vadd.f32 %v4114, 1e-12
    %v4117 = vrsqrt.pop %v4115
    %v4118 = vmul.f32 %v4117, %v4115
    %v4119 = vmul.f32 %v4118, %v4117
    %v4120 = vmul.f32 0.5, %v4119
    %v4121 = vsub.f32 1.5, %v4120
    %v4122 = vmul.f32 %v4117, %v4121
    %vm4123 = vweird.f32 %v4115
    %vm4124 = vweird.f32 %v4117
    %vm4125 = vmor %vm4123, %vm4124
    %v4126 = vsel %vm4125, %v4117, %v4122
    %v4127 = vrsqrt.pop %v4116
    %v4128 = vmul.f32 %v4127, %v4116
    %v4129 = vmul.f32 %v4128, %v4127
    %v4130 = vmul.f32 0.5, %v4129
    %v4131 = vsub.f32 1.5, %v4130
    %v4132 = vmul.f32 %v4127, %v4131
    %vm4133 = vweird.f32 %v4116
    %vm4134 = vweird.f32 %v4127
    %vm4135 = vmor %vm4133, %vm4134
    %v4136 = vsel %vm4135, %v4127, %v4132
    %v4137 = vmul.f32 %v4105, %v4126
    %v4138 = vmul.f32 %v4106, %v4136
    %v4140 = vperm.slane %v4096, 0
    %v4142 = vmul.f32 %v4137, %v4140
    %v4143 = vmul.f32 %v4138, %v4140
    %v4145 = vperm.slane %v4098, 0
    %v4147 = vadd.f32 %v4142, %v4145
    %v4148 = vadd.f32 %v4143, %v4145
    %v4149 = vpack.c.bf16 %v4148, %v4147
    %s4150 = scalar_lea.vmem [#allocation15], 256
    %v4151 = vld [vmem:[%s4150] sm:$0xff]
    %v4152 = vld [vmem:[%s4150 + $0x8] sm:$0xff]
    %v4153 = vld [vmem:[%s4150 + $0x10] sm:$0xff]
    %v4154 = vld [vmem:[%s4150 + $0x18] sm:$0xff]
    %v4155 = vld [vmem:[%s4150 + $0x20] sm:$0xff]
    %v4156 = vld [vmem:[%s4150 + $0x28] sm:$0xff]
    %v4157 = vld [vmem:[%s4150 + $0x30] sm:$0xff]
    %v4158 = vld [vmem:[%s4150 + $0x38] sm:$0xff]
    %v4159 = vld [vmem:[%s4150 + $0x40] sm:$0xff]
    %v4160 = vld [vmem:[%s4150 + $0x48] sm:$0xff]
    %v4161 = vld [vmem:[%s4150 + $0x50] sm:$0xff]
    %v4162 = vld [vmem:[%s4150 + $0x58] sm:$0xff]
    %v4163 = vld [vmem:[%s4150 + $0x60] sm:$0xff]
    %v4164 = vld [vmem:[%s4150 + $0x68] sm:$0xff]
    %v4165 = vld [vmem:[%s4150 + $0x70] sm:$0xff]
    %v4166 = vld [vmem:[%s4150 + $0x78] sm:$0xff]
    %v4167 = vld [vmem:[%s4150 + $0x80] sm:$0xff]
    %v4168 = vld [vmem:[%s4150 + $0x88] sm:$0xff]
    %v4169 = vld [vmem:[%s4150 + $0x90] sm:$0xff]
    %v4170 = vld [vmem:[%s4150 + $0x98] sm:$0xff]
    %v4171 = vld [vmem:[%s4150 + $0xa0] sm:$0xff]
    %v4172 = vld [vmem:[%s4150 + $0xa8] sm:$0xff]
    %v4173 = vld [vmem:[%s4150 + $0xb0] sm:$0xff]
    %v4174 = vld [vmem:[%s4150 + $0xb8] sm:$0xff]
    %v4175 = vld [vmem:[%s4150 + $0xc0] sm:$0xff]
    %v4176 = vld [vmem:[%s4150 + $0xc8] sm:$0xff]
    %v4177 = vld [vmem:[%s4150 + $0xd0] sm:$0xff]
    %v4178 = vld [vmem:[%s4150 + $0xd8] sm:$0xff]
    %v4179 = vld [vmem:[%s4150 + $0xe0] sm:$0xff]
    %v4180 = vld [vmem:[%s4150 + $0xe8] sm:$0xff]
    %v4181 = vld [vmem:[%s4150 + $0xf0] sm:$0xff]
    %v4182 = vld [vmem:[%s4150 + $0xf8] sm:$0xff]
    %s4183 = scalar_lea.vmem %s10, 4
    %v4184 = vld [vmem:[%s4183] sm:$0xf]
    %v4186 = vperm.slane %v4184, 0
    %v4187 = vperm.slane %v4184, 1
    %v4188 = vperm.slane %v4184, 2
    %v4189 = vperm.slane %v4184, 3
    %v4226 = vunpack.c.l.b16 %v4151
    %v4227 = vunpack.c.h.b16 %v4151
    %v4228 = vunpack.c.l.b16 %v4152
    %v4229 = vunpack.c.h.b16 %v4152
    %v4230 = vunpack.c.l.b16 %v4153
    %v4231 = vunpack.c.h.b16 %v4153
    %v4232 = vunpack.c.l.b16 %v4154
    %v4233 = vunpack.c.h.b16 %v4154
    %v4234 = vunpack.c.l.b16 %v4155
    %v4235 = vunpack.c.h.b16 %v4155
    %v4236 = vunpack.c.l.b16 %v4156
    %v4237 = vunpack.c.h.b16 %v4156
    %v4238 = vunpack.c.l.b16 %v4157
    %v4239 = vunpack.c.h.b16 %v4157
    %v4240 = vunpack.c.l.b16 %v4158
    %v4241 = vunpack.c.h.b16 %v4158
    %v4242 = vunpack.c.l.b16 %v4159
    %v4243 = vunpack.c.h.b16 %v4159
    %v4244 = vunpack.c.l.b16 %v4160
    %v4245 = vunpack.c.h.b16 %v4160
    %v4246 = vunpack.c.l.b16 %v4161
    %v4247 = vunpack.c.h.b16 %v4161
    %v4248 = vunpack.c.l.b16 %v4162
    %v4249 = vunpack.c.h.b16 %v4162
    %v4250 = vunpack.c.l.b16 %v4163
    %v4251 = vunpack.c.h.b16 %v4163
    %v4252 = vunpack.c.l.b16 %v4164
    %v4253 = vunpack.c.h.b16 %v4164
    %v4254 = vunpack.c.l.b16 %v4165
    %v4255 = vunpack.c.h.b16 %v4165
    %v4256 = vunpack.c.l.b16 %v4166
    %v4257 = vunpack.c.h.b16 %v4166
    %v4258 = vunpack.c.l.b16 %v4167
    %v4259 = vunpack.c.h.b16 %v4167
    %v4260 = vunpack.c.l.b16 %v4168
    %v4261 = vunpack.c.h.b16 %v4168
    %v4262 = vunpack.c.l.b16 %v4169
    %v4263 = vunpack.c.h.b16 %v4169
    %v4264 = vunpack.c.l.b16 %v4170
    %v4265 = vunpack.c.h.b16 %v4170
    %v4266 = vunpack.c.l.b16 %v4171
    %v4267 = vunpack.c.h.b16 %v4171
    %v4268 = vunpack.c.l.b16 %v4172
    %v4269 = vunpack.c.h.b16 %v4172
    %v4270 = vunpack.c.l.b16 %v4173
    %v4271 = vunpack.c.h.b16 %v4173
    %v4272 = vunpack.c.l.b16 %v4174
    %v4273 = vunpack.c.h.b16 %v4174
    %v4274 = vunpack.c.l.b16 %v4175
    %v4275 = vunpack.c.h.b16 %v4175
    %v4276 = vunpack.c.l.b16 %v4176
    %v4277 = vunpack.c.h.b16 %v4176
    %v4278 = vunpack.c.l.b16 %v4177
    %v4279 = vunpack.c.h.b16 %v4177
    %v4280 = vunpack.c.l.b16 %v4178
    %v4281 = vunpack.c.h.b16 %v4178
    %v4282 = vunpack.c.l.b16 %v4179
    %v4283 = vunpack.c.h.b16 %v4179
    %v4284 = vunpack.c.l.b16 %v4180
    %v4285 = vunpack.c.h.b16 %v4180
    %v4286 = vunpack.c.l.b16 %v4181
    %v4287 = vunpack.c.h.b16 %v4181
    %v4288 = vunpack.c.l.b16 %v4182
    %v4289 = vunpack.c.h.b16 %v4182
    %v4290 = vpack.c.b16 %v4230, %v4226
    %v4291 = vpack.c.b16 %v4231, %v4227
    %v4292 = vpack.c.b16 %v4232, %v4228
    %v4293 = vpack.c.b16 %v4233, %v4229
    %v4294 = vpack.c.b16 %v4238, %v4234
    %v4295 = vpack.c.b16 %v4239, %v4235
    %v4296 = vpack.c.b16 %v4240, %v4236
    %v4297 = vpack.c.b16 %v4241, %v4237
    %v4298 = vpack.c.b16 %v4246, %v4242
    %v4299 = vpack.c.b16 %v4247, %v4243
    %v4300 = vpack.c.b16 %v4248, %v4244
    %v4301 = vpack.c.b16 %v4249, %v4245
    %v4302 = vpack.c.b16 %v4254, %v4250
    %v4303 = vpack.c.b16 %v4255, %v4251
    %v4304 = vpack.c.b16 %v4256, %v4252
    %v4305 = vpack.c.b16 %v4257, %v4253
    %v4306 = vpack.c.b16 %v4262, %v4258
    %v4307 = vpack.c.b16 %v4263, %v4259
    %v4308 = vpack.c.b16 %v4264, %v4260
    %v4309 = vpack.c.b16 %v4265, %v4261
    %v4310 = vpack.c.b16 %v4270, %v4266
    %v4311 = vpack.c.b16 %v4271, %v4267
    %v4312 = vpack.c.b16 %v4272, %v4268
    %v4313 = vpack.c.b16 %v4273, %v4269
    %v4314 = vpack.c.b16 %v4278, %v4274
    %v4315 = vpack.c.b16 %v4279, %v4275
    %v4316 = vpack.c.b16 %v4280, %v4276
    %v4317 = vpack.c.b16 %v4281, %v4277
    %v4318 = vpack.c.b16 %v4286, %v4282
    %v4319 = vpack.c.b16 %v4287, %v4283
    %v4320 = vpack.c.b16 %v4288, %v4284
    %v4321 = vpack.c.b16 %v4289, %v4285
    %4354 = vmatpush.bf16.msra.mxu0 %v4318
    %4355 = vmatpush.bf16.msra.mxu0 %v4314
    %4356 = vmatpush.bf16.msra.mxu0 %v4310
    %4357 = vmatpush.bf16.msra.mxu0 %v4306
    %4358 = vmatpush.bf16.msra.mxu0 %v4302
    %4359 = vmatpush.bf16.msra.mxu0 %v4298
    %4360 = vmatpush.bf16.msra.mxu0 %v4294
    %4361 = vmatpush.bf16.msra.mxu0 %v4290
    %4362 = vmatmul.bf16.gmra.mxu0 %v4149
    %v4363 = vpop.f32.mrf.mxu0
    %v4364 = vadd.f32 %v4186, %v4363
    %v4365 = vpop.f32.mrf.mxu0
    %v4366 = vadd.f32 %v4186, %v4365
    %4367 = vdwg.mxu0
    %4368 = vmatpush.bf16.msra.mxu0 %v4319
    %4369 = vmatpush.bf16.msra.mxu0 %v4315
    %4370 = vmatpush.bf16.msra.mxu0 %v4311
    %4371 = vmatpush.bf16.msra.mxu0 %v4307
    %4372 = vmatpush.bf16.msra.mxu0 %v4303
    %4373 = vmatpush.bf16.msra.mxu0 %v4299
    %4374 = vmatpush.bf16.msra.mxu0 %v4295
    %4375 = vmatpush.bf16.msra.mxu0 %v4291
    %4376 = vmatmul.bf16.gmra.mxu0 %v4149
    %v4377 = vpop.f32.mrf.mxu0
    %v4378 = vadd.f32 %v4187, %v4377
    %v4379 = vpop.f32.mrf.mxu0
    %v4380 = vadd.f32 %v4187, %v4379
    %4381 = vdwg.mxu0
    %4382 = vmatpush.bf16.msra.mxu0 %v4320
    %4383 = vmatpush.bf16.msra.mxu0 %v4316
    %4384 = vmatpush.bf16.msra.mxu0 %v4312
    %4385 = vmatpush.bf16.msra.mxu0 %v4308
    %4386 = vmatpush.bf16.msra.mxu0 %v4304
    %4387 = vmatpush.bf16.msra.mxu0 %v4300
    %4388 = vmatpush.bf16.msra.mxu0 %v4296
    %4389 = vmatpush.bf16.msra.mxu0 %v4292
    %4390 = vmatmul.bf16.gmra.mxu0 %v4149
    %v4391 = vpop.f32.mrf.mxu0
    %v4392 = vadd.f32 %v4188, %v4391
    %v4393 = vpop.f32.mrf.mxu0
    %v4394 = vadd.f32 %v4188, %v4393
    %4395 = vdwg.mxu0
    %4396 = vmatpush.bf16.msra.mxu0 %v4321
    %4397 = vmatpush.bf16.msra.mxu0 %v4317
    %4398 = vmatpush.bf16.msra.mxu0 %v4313
    %4399 = vmatpush.bf16.msra.mxu0 %v4309
    %4400 = vmatpush.bf16.msra.mxu0 %v4305
    %4401 = vmatpush.bf16.msra.mxu0 %v4301
    %4402 = vmatpush.bf16.msra.mxu0 %v4297
    %4403 = vmatpush.bf16.msra.mxu0 %v4293
    %4404 = vmatmul.bf16.gmra.mxu0 %v4149
    %v4405 = vpop.f32.mrf.mxu0
    %v4406 = vadd.f32 %v4189, %v4405
    %v4407 = vpop.f32.mrf.mxu0
    %v4408 = vadd.f32 %v4189, %v4407
    %4409 = vdwg.mxu0
    %v4410 = vmul.f32 %v4364, %v4364
    %v4411 = vmul.f32 %v4378, %v4378
    %v4412 = vmul.f32 %v4392, %v4392
    %v4413 = vmul.f32 %v4406, %v4406
    %v4414 = vmul.f32 %v4366, %v4366
    %v4415 = vmul.f32 %v4380, %v4380
    %v4416 = vmul.f32 %v4394, %v4394
    %v4417 = vmul.f32 %v4408, %v4408
    %v4418 = vmul.f32 %v4364, %v4410
    %v4419 = vmul.f32 %v4378, %v4411
    %v4420 = vmul.f32 %v4392, %v4412
    %v4421 = vmul.f32 %v4406, %v4413
    %v4422 = vmul.f32 %v4366, %v4414
    %v4423 = vmul.f32 %v4380, %v4415
    %v4424 = vmul.f32 %v4394, %v4416
    %v4425 = vmul.f32 %v4408, %v4417
    %v4426 = vmul.f32 %v4418, 0.044715
    %v4427 = vmul.f32 %v4419, 0.044715
    %v4428 = vmul.f32 %v4420, 0.044715
    %v4429 = vmul.f32 %v4421, 0.044715
    %v4430 = vmul.f32 %v4422, 0.044715
    %v4431 = vmul.f32 %v4423, 0.044715
    %v4432 = vmul.f32 %v4424, 0.044715
    %v4433 = vmul.f32 %v4425, 0.044715
    %v4434 = vadd.f32 %v4364, %v4426
    %v4435 = vadd.f32 %v4378, %v4427
    %v4436 = vadd.f32 %v4392, %v4428
    %v4437 = vadd.f32 %v4406, %v4429
    %v4438 = vadd.f32 %v4366, %v4430
    %v4439 = vadd.f32 %v4380, %v4431
    %v4440 = vadd.f32 %v4394, %v4432
    %v4441 = vadd.f32 %v4408, %v4433
    %v4442 = vmul.f32 %v4434, 0.7978846
    %v4443 = vmul.f32 %v4435, 0.7978846
    %v4444 = vmul.f32 %v4436, 0.7978846
    %v4445 = vmul.f32 %v4437, 0.7978846
    %v4446 = vmul.f32 %v4438, 0.7978846
    %v4447 = vmul.f32 %v4439, 0.7978846
    %v4448 = vmul.f32 %v4440, 0.7978846
    %v4449 = vmul.f32 %v4441, 0.7978846
    %v4450 = vtanh.pop %v4442
    %v4451 = vtanh.pop %v4443
    %v4452 = vtanh.pop %v4444
    %v4453 = vtanh.pop %v4445
    %v4454 = vtanh.pop %v4446
    %v4455 = vtanh.pop %v4447
    %v4456 = vtanh.pop %v4448
    %v4457 = vtanh.pop %v4449
    %v4458 = vadd.f32 %v4450, 1.0
    %v4459 = vadd.f32 %v4451, 1.0
    %v4460 = vadd.f32 %v4452, 1.0
    %v4461 = vadd.f32 %v4453, 1.0
    %v4462 = vadd.f32 %v4454, 1.0
    %v4463 = vadd.f32 %v4455, 1.0
    %v4464 = vadd.f32 %v4456, 1.0
    %v4465 = vadd.f32 %v4457, 1.0
    %v4466 = vmul.f32 %v4458, 0.5
    %v4467 = vmul.f32 %v4459, 0.5
    %v4468 = vmul.f32 %v4460, 0.5
    %v4469 = vmul.f32 %v4461, 0.5
    %v4470 = vmul.f32 %v4462, 0.5
    %v4471 = vmul.f32 %v4463, 0.5
    %v4472 = vmul.f32 %v4464, 0.5
    %v4473 = vmul.f32 %v4465, 0.5
    %v4474 = vmul.f32 %v4364, %v4466
    %v4475 = vmul.f32 %v4378, %v4467
    %v4476 = vmul.f32 %v4392, %v4468
    %v4477 = vmul.f32 %v4406, %v4469
    %v4478 = vmul.f32 %v4366, %v4470
    %v4479 = vmul.f32 %v4380, %v4471
    %v4480 = vmul.f32 %v4394, %v4472
    %v4481 = vmul.f32 %v4408, %v4473
    %v4482 = vpack.c.bf16 %v4478, %v4474
    %v4483 = vpack.c.bf16 %v4479, %v4475
    %v4484 = vpack.c.bf16 %v4480, %v4476
    %v4485 = vpack.c.bf16 %v4481, %v4477
    %s4486 = scalar_lea.vmem [#allocation17], 256
    %v4487 = vld [vmem:[%s4486] sm:$0xf]
    %v4488 = vld [vmem:[%s4486 + $0x4] sm:$0xf]
    %v4489 = vld [vmem:[%s4486 + $0x8] sm:$0xf]
    %v4490 = vld [vmem:[%s4486 + $0xc] sm:$0xf]
    %v4491 = vld [vmem:[%s4486 + $0x10] sm:$0xf]
    %v4492 = vld [vmem:[%s4486 + $0x14] sm:$0xf]
    %v4493 = vld [vmem:[%s4486 + $0x18] sm:$0xf]
    %v4494 = vld [vmem:[%s4486 + $0x1c] sm:$0xf]
    %v4495 = vld [vmem:[%s4486 + $0x20] sm:$0xf]
    %v4496 = vld [vmem:[%s4486 + $0x24] sm:$0xf]
    %v4497 = vld [vmem:[%s4486 + $0x28] sm:$0xf]
    %v4498 = vld [vmem:[%s4486 + $0x2c] sm:$0xf]
    %v4499 = vld [vmem:[%s4486 + $0x30] sm:$0xf]
    %v4500 = vld [vmem:[%s4486 + $0x34] sm:$0xf]
    %v4501 = vld [vmem:[%s4486 + $0x38] sm:$0xf]
    %v4502 = vld [vmem:[%s4486 + $0x3c] sm:$0xf]
    %v4503 = vld [vmem:[%s4486 + $0x40] sm:$0xf]
    %v4504 = vld [vmem:[%s4486 + $0x44] sm:$0xf]
    %v4505 = vld [vmem:[%s4486 + $0x48] sm:$0xf]
    %v4506 = vld [vmem:[%s4486 + $0x4c] sm:$0xf]
    %v4507 = vld [vmem:[%s4486 + $0x50] sm:$0xf]
    %v4508 = vld [vmem:[%s4486 + $0x54] sm:$0xf]
    %v4509 = vld [vmem:[%s4486 + $0x58] sm:$0xf]
    %v4510 = vld [vmem:[%s4486 + $0x5c] sm:$0xf]
    %v4511 = vld [vmem:[%s4486 + $0x60] sm:$0xf]
    %v4512 = vld [vmem:[%s4486 + $0x64] sm:$0xf]
    %v4513 = vld [vmem:[%s4486 + $0x68] sm:$0xf]
    %v4514 = vld [vmem:[%s4486 + $0x6c] sm:$0xf]
    %v4515 = vld [vmem:[%s4486 + $0x70] sm:$0xf]
    %v4516 = vld [vmem:[%s4486 + $0x74] sm:$0xf]
    %v4517 = vld [vmem:[%s4486 + $0x78] sm:$0xf]
    %v4518 = vld [vmem:[%s4486 + $0x7c] sm:$0xf]
    %v4519 = vld [vmem:[%s4486 + $0x80] sm:$0xf]
    %v4520 = vld [vmem:[%s4486 + $0x84] sm:$0xf]
    %v4521 = vld [vmem:[%s4486 + $0x88] sm:$0xf]
    %v4522 = vld [vmem:[%s4486 + $0x8c] sm:$0xf]
    %v4523 = vld [vmem:[%s4486 + $0x90] sm:$0xf]
    %v4524 = vld [vmem:[%s4486 + $0x94] sm:$0xf]
    %v4525 = vld [vmem:[%s4486 + $0x98] sm:$0xf]
    %v4526 = vld [vmem:[%s4486 + $0x9c] sm:$0xf]
    %v4527 = vld [vmem:[%s4486 + $0xa0] sm:$0xf]
    %v4528 = vld [vmem:[%s4486 + $0xa4] sm:$0xf]
    %v4529 = vld [vmem:[%s4486 + $0xa8] sm:$0xf]
    %v4530 = vld [vmem:[%s4486 + $0xac] sm:$0xf]
    %v4531 = vld [vmem:[%s4486 + $0xb0] sm:$0xf]
    %v4532 = vld [vmem:[%s4486 + $0xb4] sm:$0xf]
    %v4533 = vld [vmem:[%s4486 + $0xb8] sm:$0xf]
    %v4534 = vld [vmem:[%s4486 + $0xbc] sm:$0xf]
    %v4535 = vld [vmem:[%s4486 + $0xc0] sm:$0xf]
    %v4536 = vld [vmem:[%s4486 + $0xc4] sm:$0xf]
    %v4537 = vld [vmem:[%s4486 + $0xc8] sm:$0xf]
    %v4538 = vld [vmem:[%s4486 + $0xcc] sm:$0xf]
    %v4539 = vld [vmem:[%s4486 + $0xd0] sm:$0xf]
    %v4540 = vld [vmem:[%s4486 + $0xd4] sm:$0xf]
    %v4541 = vld [vmem:[%s4486 + $0xd8] sm:$0xf]
    %v4542 = vld [vmem:[%s4486 + $0xdc] sm:$0xf]
    %v4543 = vld [vmem:[%s4486 + $0xe0] sm:$0xf]
    %v4544 = vld [vmem:[%s4486 + $0xe4] sm:$0xf]
    %v4545 = vld [vmem:[%s4486 + $0xe8] sm:$0xf]
    %v4546 = vld [vmem:[%s4486 + $0xec] sm:$0xf]
    %v4547 = vld [vmem:[%s4486 + $0xf0] sm:$0xf]
    %v4548 = vld [vmem:[%s4486 + $0xf4] sm:$0xf]
    %v4549 = vld [vmem:[%s4486 + $0xf8] sm:$0xf]
    %v4550 = vld [vmem:[%s4486 + $0xfc] sm:$0xf]
    %s4551 = scalar_lea.vmem %s12, 1
    %v4552 = vld [vmem:[%s4551] sm:$0x1]
    %v4554 = vperm.slane %v4552, 0
    %v4620 = vunpack.c.l.b16 %v4487
    %v4621 = vunpack.c.l.b16 %v4488
    %v4622 = vunpack.c.l.b16 %v4489
    %v4623 = vunpack.c.l.b16 %v4490
    %v4624 = vunpack.c.l.b16 %v4491
    %v4625 = vunpack.c.l.b16 %v4492
    %v4626 = vunpack.c.l.b16 %v4493
    %v4627 = vunpack.c.l.b16 %v4494
    %v4628 = vunpack.c.l.b16 %v4495
    %v4629 = vunpack.c.l.b16 %v4496
    %v4630 = vunpack.c.l.b16 %v4497
    %v4631 = vunpack.c.l.b16 %v4498
    %v4632 = vunpack.c.l.b16 %v4499
    %v4633 = vunpack.c.l.b16 %v4500
    %v4634 = vunpack.c.l.b16 %v4501
    %v4635 = vunpack.c.l.b16 %v4502
    %v4636 = vunpack.c.l.b16 %v4503
    %v4637 = vunpack.c.l.b16 %v4504
    %v4638 = vunpack.c.l.b16 %v4505
    %v4639 = vunpack.c.l.b16 %v4506
    %v4640 = vunpack.c.l.b16 %v4507
    %v4641 = vunpack.c.l.b16 %v4508
    %v4642 = vunpack.c.l.b16 %v4509
    %v4643 = vunpack.c.l.b16 %v4510
    %v4644 = vunpack.c.l.b16 %v4511
    %v4645 = vunpack.c.l.b16 %v4512
    %v4646 = vunpack.c.l.b16 %v4513
    %v4647 = vunpack.c.l.b16 %v4514
    %v4648 = vunpack.c.l.b16 %v4515
    %v4649 = vunpack.c.l.b16 %v4516
    %v4650 = vunpack.c.l.b16 %v4517
    %v4651 = vunpack.c.l.b16 %v4518
    %v4652 = vunpack.c.l.b16 %v4519
    %v4653 = vunpack.c.l.b16 %v4520
    %v4654 = vunpack.c.l.b16 %v4521
    %v4655 = vunpack.c.l.b16 %v4522
    %v4656 = vunpack.c.l.b16 %v4523
    %v4657 = vunpack.c.l.b16 %v4524
    %v4658 = vunpack.c.l.b16 %v4525
    %v4659 = vunpack.c.l.b16 %v4526
    %v4660 = vunpack.c.l.b16 %v4527
    %v4661 = vunpack.c.l.b16 %v4528
    %v4662 = vunpack.c.l.b16 %v4529
    %v4663 = vunpack.c.l.b16 %v4530
    %v4664 = vunpack.c.l.b16 %v4531
    %v4665 = vunpack.c.l.b16 %v4532
    %v4666 = vunpack.c.l.b16 %v4533
    %v4667 = vunpack.c.l.b16 %v4534
    %v4668 = vunpack.c.l.b16 %v4535
    %v4669 = vunpack.c.l.b16 %v4536
    %v4670 = vunpack.c.l.b16 %v4537
    %v4671 = vunpack.c.l.b16 %v4538
    %v4672 = vunpack.c.l.b16 %v4539
    %v4673 = vunpack.c.l.b16 %v4540
    %v4674 = vunpack.c.l.b16 %v4541
    %v4675 = vunpack.c.l.b16 %v4542
    %v4676 = vunpack.c.l.b16 %v4543
    %v4677 = vunpack.c.l.b16 %v4544
    %v4678 = vunpack.c.l.b16 %v4545
    %v4679 = vunpack.c.l.b16 %v4546
    %v4680 = vunpack.c.l.b16 %v4547
    %v4681 = vunpack.c.l.b16 %v4548
    %v4682 = vunpack.c.l.b16 %v4549
    %v4683 = vunpack.c.l.b16 %v4550
    %v4684 = vpack.c.b16 %v4621, %v4620
    %v4685 = vpack.c.b16 %v4623, %v4622
    %v4686 = vpack.c.b16 %v4625, %v4624
    %v4687 = vpack.c.b16 %v4627, %v4626
    %v4688 = vpack.c.b16 %v4629, %v4628
    %v4689 = vpack.c.b16 %v4631, %v4630
    %v4690 = vpack.c.b16 %v4633, %v4632
    %v4691 = vpack.c.b16 %v4635, %v4634
    %v4692 = vpack.c.b16 %v4637, %v4636
    %v4693 = vpack.c.b16 %v4639, %v4638
    %v4694 = vpack.c.b16 %v4641, %v4640
    %v4695 = vpack.c.b16 %v4643, %v4642
    %v4696 = vpack.c.b16 %v4645, %v4644
    %v4697 = vpack.c.b16 %v4647, %v4646
    %v4698 = vpack.c.b16 %v4649, %v4648
    %v4699 = vpack.c.b16 %v4651, %v4650
    %v4700 = vpack.c.b16 %v4653, %v4652
    %v4701 = vpack.c.b16 %v4655, %v4654
    %v4702 = vpack.c.b16 %v4657, %v4656
    %v4703 = vpack.c.b16 %v4659, %v4658
    %v4704 = vpack.c.b16 %v4661, %v4660
    %v4705 = vpack.c.b16 %v4663, %v4662
    %v4706 = vpack.c.b16 %v4665, %v4664
    %v4707 = vpack.c.b16 %v4667, %v4666
    %v4708 = vpack.c.b16 %v4669, %v4668
    %v4709 = vpack.c.b16 %v4671, %v4670
    %v4710 = vpack.c.b16 %v4673, %v4672
    %v4711 = vpack.c.b16 %v4675, %v4674
    %v4712 = vpack.c.b16 %v4677, %v4676
    %v4713 = vpack.c.b16 %v4679, %v4678
    %v4714 = vpack.c.b16 %v4681, %v4680
    %v4715 = vpack.c.b16 %v4683, %v4682
    %4748 = vmatpush.bf16.msra.mxu0 %v4691
    %4749 = vmatpush.bf16.msra.mxu0 %v4690
    %4750 = vmatpush.bf16.msra.mxu0 %v4689
    %4751 = vmatpush.bf16.msra.mxu0 %v4688
    %4752 = vmatpush.bf16.msra.mxu0 %v4687
    %4753 = vmatpush.bf16.msra.mxu0 %v4686
    %4754 = vmatpush.bf16.msra.mxu0 %v4685
    %4755 = vmatpush.bf16.msra.mxu0 %v4684
    %4756 = vmatmul.bf16.gmra.mxu0 %v4482
    %v4757 = vpop.f32.mrf.mxu0
    %v4758 = vadd.f32 %v4554, %v4757
    %v4759 = vpop.f32.mrf.mxu0
    %v4760 = vadd.f32 %v4554, %v4759
    %4761 = vdwg.mxu0
    %4762 = vmatpush.bf16.msra.mxu0 %v4699
    %4763 = vmatpush.bf16.msra.mxu0 %v4698
    %4764 = vmatpush.bf16.msra.mxu0 %v4697
    %4765 = vmatpush.bf16.msra.mxu0 %v4696
    %4766 = vmatpush.bf16.msra.mxu0 %v4695
    %4767 = vmatpush.bf16.msra.mxu0 %v4694
    %4768 = vmatpush.bf16.msra.mxu0 %v4693
    %4769 = vmatpush.bf16.msra.mxu0 %v4692
    %4770 = vmatmul.bf16.gmra.mxu0 %v4483
    %v4771 = vpop.f32.mrf.mxu0
    %v4772 = vadd.f32 %v4758, %v4771
    %v4773 = vpop.f32.mrf.mxu0
    %v4774 = vadd.f32 %v4760, %v4773
    %4775 = vdwg.mxu0
    %4776 = vmatpush.bf16.msra.mxu0 %v4707
    %4777 = vmatpush.bf16.msra.mxu0 %v4706
    %4778 = vmatpush.bf16.msra.mxu0 %v4705
    %4779 = vmatpush.bf16.msra.mxu0 %v4704
    %4780 = vmatpush.bf16.msra.mxu0 %v4703
    %4781 = vmatpush.bf16.msra.mxu0 %v4702
    %4782 = vmatpush.bf16.msra.mxu0 %v4701
    %4783 = vmatpush.bf16.msra.mxu0 %v4700
    %4784 = vmatmul.bf16.gmra.mxu0 %v4484
    %v4785 = vpop.f32.mrf.mxu0
    %v4786 = vadd.f32 %v4772, %v4785
    %v4787 = vpop.f32.mrf.mxu0
    %v4788 = vadd.f32 %v4774, %v4787
    %4789 = vdwg.mxu0
    %4790 = vmatpush.bf16.msra.mxu0 %v4715
    %4791 = vmatpush.bf16.msra.mxu0 %v4714
    %4792 = vmatpush.bf16.msra.mxu0 %v4713
    %4793 = vmatpush.bf16.msra.mxu0 %v4712
    %4794 = vmatpush.bf16.msra.mxu0 %v4711
    %4795 = vmatpush.bf16.msra.mxu0 %v4710
    %4796 = vmatpush.bf16.msra.mxu0 %v4709
    %4797 = vmatpush.bf16.msra.mxu0 %v4708
    %4798 = vmatmul.bf16.gmra.mxu0 %v4485
    %v4799 = vpop.f32.mrf.mxu0
    %v4800 = vadd.f32 %v4786, %v4799
    %v4801 = vpop.f32.mrf.mxu0
    %v4802 = vadd.f32 %v4788, %v4801
    %4803 = vdwg.mxu0
    %v4804 = vadd.f32 %v4147, %v4800
    %v4805 = vadd.f32 %v4148, %v4802
    %s4806 = scalar_lea.vmem [#allocation18], 1
    %v4807 = vld [vmem:[%s4806] sm:$0x1]
    %s4808 = scalar_lea.vmem %s14, 1
    %v4809 = vld [vmem:[%s4808] sm:$0x1]
    %4810 = vadd.xlane.f32.xlu0 %v4804
    %v4811 = vpop.xlane.xlu0 %4810
    %4812 = vadd.xlane.f32.xlu0 %v4805
    %v4813 = vpop.xlane.xlu0 %4812
    %v4814 = vmul.f32 %v4811, %v1855
    %v4815 = vmul.f32 %v4813, %v1855
    %v4816 = vsub.f32 %v4804, %v4814
    %v4817 = vsub.f32 %v4805, %v4815
    %v4818 = vmul.f32 %v4816, %v4816
    %v4819 = vmul.f32 %v4817, %v4817
    %4820 = vadd.xlane.f32.xlu0 %v4818
    %v4821 = vpop.xlane.xlu0 %4820
    %4822 = vadd.xlane.f32.xlu0 %v4819
    %v4823 = vpop.xlane.xlu0 %4822
    %v4824 = vmul.f32 %v4821, %v1855
    %v4825 = vmul.f32 %v4823, %v1855
    %v4826 = vadd.f32 %v4824, 1e-12
    %v4827 = vadd.f32 %v4825, 1e-12
    %v4828 = vrsqrt.pop %v4826
    %v4829 = vmul.f32 %v4828, %v4826
    %v4830 = vmul.f32 %v4829, %v4828
    %v4831 = vmul.f32 0.5, %v4830
    %v4832 = vsub.f32 1.5, %v4831
    %v4833 = vmul.f32 %v4828, %v4832
    %vm4834 = vweird.f32 %v4826
    %vm4835 = vweird.f32 %v4828
    %vm4836 = vmor %vm4834, %vm4835
    %v4837 = vsel %vm4836, %v4828, %v4833
    %v4838 = vrsqrt.pop %v4827
    %v4839 = vmul.f32 %v4838, %v4827
    %v4840 = vmul.f32 %v4839, %v4838
    %v4841 = vmul.f32 0.5, %v4840
    %v4842 = vsub.f32 1.5, %v4841
    %v4843 = vmul.f32 %v4838, %v4842
    %vm4844 = vweird.f32 %v4827
    %vm4845 = vweird.f32 %v4838
    %vm4846 = vmor %vm4844, %vm4845
    %v4847 = vsel %vm4846, %v4838, %v4843
    %v4848 = vmul.f32 %v4816, %v4837
    %v4849 = vmul.f32 %v4817, %v4847
    %v4851 = vperm.slane %v4807, 0
    %v4853 = vmul.f32 %v4848, %v4851
    %v4854 = vmul.f32 %v4849, %v4851
    %v4856 = vperm.slane %v4809, 0
    %v4858 = vadd.f32 %v4853, %v4856
    %v4859 = vadd.f32 %v4854, %v4856
    %v4860 = vpack.c.bf16 %v4859, %v4858
    %s4861 = scalar_lea.vmem [#allocation6], 384
    %v4862 = vld [vmem:[%s4861] sm:$0xff]
    %v4863 = vld [vmem:[%s4861 + $0x8] sm:$0xf]
    %v4864 = vld [vmem:[%s4861 + $0xc] sm:$0xff]
    %v4865 = vld [vmem:[%s4861 + $0x14] sm:$0xf]
    %v4866 = vld [vmem:[%s4861 + $0x18] sm:$0xff]
    %v4867 = vld [vmem:[%s4861 + $0x20] sm:$0xf]
    %v4868 = vld [vmem:[%s4861 + $0x24] sm:$0xff]
    %v4869 = vld [vmem:[%s4861 + $0x2c] sm:$0xf]
    %v4870 = vld [vmem:[%s4861 + $0x30] sm:$0xff]
    %v4871 = vld [vmem:[%s4861 + $0x38] sm:$0xf]
    %v4872 = vld [vmem:[%s4861 + $0x3c] sm:$0xff]
    %v4873 = vld [vmem:[%s4861 + $0x44] sm:$0xf]
    %v4874 = vld [vmem:[%s4861 + $0x48] sm:$0xff]
    %v4875 = vld [vmem:[%s4861 + $0x50] sm:$0xf]
    %v4876 = vld [vmem:[%s4861 + $0x54] sm:$0xff]
    %v4877 = vld [vmem:[%s4861 + $0x5c] sm:$0xf]
    %v4878 = vld [vmem:[%s4861 + $0x60] sm:$0xff]
    %v4879 = vld [vmem:[%s4861 + $0x68] sm:$0xf]
    %v4880 = vld [vmem:[%s4861 + $0x6c] sm:$0xff]
    %v4881 = vld [vmem:[%s4861 + $0x74] sm:$0xf]
    %v4882 = vld [vmem:[%s4861 + $0x78] sm:$0xff]
    %v4883 = vld [vmem:[%s4861 + $0x80] sm:$0xf]
    %v4884 = vld [vmem:[%s4861 + $0x84] sm:$0xff]
    %v4885 = vld [vmem:[%s4861 + $0x8c] sm:$0xf]
    %v4886 = vld [vmem:[%s4861 + $0x90] sm:$0xff]
    %v4887 = vld [vmem:[%s4861 + $0x98] sm:$0xf]
    %v4888 = vld [vmem:[%s4861 + $0x9c] sm:$0xff]
    %v4889 = vld [vmem:[%s4861 + $0xa4] sm:$0xf]
    %v4890 = vld [vmem:[%s4861 + $0xa8] sm:$0xff]
    %v4891 = vld [vmem:[%s4861 + $0xb0] sm:$0xf]
    %v4892 = vld [vmem:[%s4861 + $0xb4] sm:$0xff]
    %v4893 = vld [vmem:[%s4861 + $0xbc] sm:$0xf]
    %s4894 = scalar_lea.vmem [#allocation8], 6
    %v4895 = vld [vmem:[%s4894] sm:$0x7]
    %v4897 = vperm.slane %v4895, 0
    %v4898 = vperm.slane %v4895, 1
    %v4899 = vperm.slane %v4895, 2
    %v4935 = vunpack.c.l.b16 %v4862
    %v4936 = vunpack.c.h.b16 %v4862
    %v4937 = vunpack.c.l.b16 %v4863
    %v4938 = vunpack.c.l.b16 %v4864
    %v4939 = vunpack.c.h.b16 %v4864
    %v4940 = vunpack.c.l.b16 %v4865
    %v4941 = vunpack.c.l.b16 %v4866
    %v4942 = vunpack.c.h.b16 %v4866
    %v4943 = vunpack.c.l.b16 %v4867
    %v4944 = vunpack.c.l.b16 %v4868
    %v4945 = vunpack.c.h.b16 %v4868
    %v4946 = vunpack.c.l.b16 %v4869
    %v4947 = vunpack.c.l.b16 %v4870
    %v4948 = vunpack.c.h.b16 %v4870
    %v4949 = vunpack.c.l.b16 %v4871
    %v4950 = vunpack.c.l.b16 %v4872
    %v4951 = vunpack.c.h.b16 %v4872
    %v4952 = vunpack.c.l.b16 %v4873
    %v4953 = vunpack.c.l.b16 %v4874
    %v4954 = vunpack.c.h.b16 %v4874
    %v4955 = vunpack.c.l.b16 %v4875
    %v4956 = vunpack.c.l.b16 %v4876
    %v4957 = vunpack.c.h.b16 %v4876
    %v4958 = vunpack.c.l.b16 %v4877
    %v4959 = vunpack.c.l.b16 %v4878
    %v4960 = vunpack.c.h.b16 %v4878
    %v4961 = vunpack.c.l.b16 %v4879
    %v4962 = vunpack.c.l.b16 %v4880
    %v4963 = vunpack.c.h.b16 %v4880
    %v4964 = vunpack.c.l.b16 %v4881
    %v4965 = vunpack.c.l.b16 %v4882
    %v4966 = vunpack.c.h.b16 %v4882
    %v4967 = vunpack.c.l.b16 %v4883
    %v4968 = vunpack.c.l.b16 %v4884
    %v4969 = vunpack.c.h.b16 %v4884
    %v4970 = vunpack.c.l.b16 %v4885
    %v4971 = vunpack.c.l.b16 %v4886
    %v4972 = vunpack.c.h.b16 %v4886
    %v4973 = vunpack.c.l.b16 %v4887
    %v4974 = vunpack.c.l.b16 %v4888
    %v4975 = vunpack.c.h.b16 %v4888
    %v4976 = vunpack.c.l.b16 %v4889
    %v4977 = vunpack.c.l.b16 %v4890
    %v4978 = vunpack.c.h.b16 %v4890
    %v4979 = vunpack.c.l.b16 %v4891
    %v4980 = vunpack.c.l.b16 %v4892
    %v4981 = vunpack.c.h.b16 %v4892
    %v4982 = vunpack.c.l.b16 %v4893
    %v4983 = vpack.c.b16 %v4938, %v4935
    %v4984 = vpack.c.b16 %v4939, %v4936
    %v4985 = vpack.c.b16 %v4940, %v4937
    %v4986 = vpack.c.b16 %v4944, %v4941
    %v4987 = vpack.c.b16 %v4945, %v4942
    %v4988 = vpack.c.b16 %v4946, %v4943
    %v4989 = vpack.c.b16 %v4950, %v4947
    %v4990 = vpack.c.b16 %v4951, %v4948
    %v4991 = vpack.c.b16 %v4952, %v4949
    %v4992 = vpack.c.b16 %v4956, %v4953
    %v4993 = vpack.c.b16 %v4957, %v4954
    %v4994 = vpack.c.b16 %v4958, %v4955
    %v4995 = vpack.c.b16 %v4962, %v4959
    %v4996 = vpack.c.b16 %v4963, %v4960
    %v4997 = vpack.c.b16 %v4964, %v4961
    %v4998 = vpack.c.b16 %v4968, %v4965
    %v4999 = vpack.c.b16 %v4969, %v4966
    %v5000 = vpack.c.b16 %v4970, %v4967
    %v5001 = vpack.c.b16 %v4974, %v4971
    %v5002 = vpack.c.b16 %v4975, %v4972
    %v5003 = vpack.c.b16 %v4976, %v4973
    %v5004 = vpack.c.b16 %v4980, %v4977
    %v5005 = vpack.c.b16 %v4981, %v4978
    %v5006 = vpack.c.b16 %v4982, %v4979
    %5031 = vmatpush.bf16.msra.mxu0 %v5004
    %5032 = vmatpush.bf16.msra.mxu0 %v5001
    %5033 = vmatpush.bf16.msra.mxu0 %v4998
    %5034 = vmatpush.bf16.msra.mxu0 %v4995
    %5035 = vmatpush.bf16.msra.mxu0 %v4992
    %5036 = vmatpush.bf16.msra.mxu0 %v4989
    %5037 = vmatpush.bf16.msra.mxu0 %v4986
    %5038 = vmatpush.bf16.msra.mxu0 %v4983
    %5039 = vmatmul.bf16.gmra.mxu0 %v4860
    %v5040 = vpop.f32.mrf.mxu0
    %v5041 = vadd.f32 %v4897, %v5040
    %v5042 = vpop.f32.mrf.mxu0
    %v5043 = vadd.f32 %v4897, %v5042
    %5044 = vdwg.mxu0
    %5045 = vmatpush.bf16.msra.mxu0 %v5005
    %5046 = vmatpush.bf16.msra.mxu0 %v5002
    %5047 = vmatpush.bf16.msra.mxu0 %v4999
    %5048 = vmatpush.bf16.msra.mxu0 %v4996
    %5049 = vmatpush.bf16.msra.mxu0 %v4993
    %5050 = vmatpush.bf16.msra.mxu0 %v4990
    %5051 = vmatpush.bf16.msra.mxu0 %v4987
    %5052 = vmatpush.bf16.msra.mxu0 %v4984
    %5053 = vmatmul.bf16.gmra.mxu0 %v4860
    %v5054 = vpop.f32.mrf.mxu0
    %v5055 = vadd.f32 %v4898, %v5054
    %v5056 = vpop.f32.mrf.mxu0
    %v5057 = vadd.f32 %v4898, %v5056
    %5058 = vdwg.mxu0
    %5059 = vmatpush.bf16.msra.mxu0 %v5006
    %5060 = vmatpush.bf16.msra.mxu0 %v5003
    %5061 = vmatpush.bf16.msra.mxu0 %v5000
    %5062 = vmatpush.bf16.msra.mxu0 %v4997
    %5063 = vmatpush.bf16.msra.mxu0 %v4994
    %5064 = vmatpush.bf16.msra.mxu0 %v4991
    %5065 = vmatpush.bf16.msra.mxu0 %v4988
    %5066 = vmatpush.bf16.msra.mxu0 %v4985
    %5067 = vmatmul.bf16.gmra.mxu0 %v4860
    %v5068 = vpop.f32.mrf.mxu0
    %v5069 = vadd.f32 %v4899, %v5068
    %v5070 = vpop.f32.mrf.mxu0
    %v5071 = vadd.f32 %v4899, %v5070
    %5072 = vdwg.mxu0
    %v5073 = vmul.f32 %v5041, 0.25
    %v5074 = vmul.f32 %v5043, 0.25
    %v5075 = vpack.c.bf16 %v5073, %v5073
    %v5076 = vpack.c.bf16 %v5074, %v5074
    %v5077 = vpack.c.bf16 %v5055, %v5055
    %v5078 = vpack.c.bf16 %v5057, %v5057
    %v5079 = vpack.c.bf16 %v5069, %v5069
    %v5080 = vpack.c.bf16 %v5071, %v5071
    %v5082 = vsel %vm571, %v5075, 0
    %v5085 = vsel %vm571, %v5077, 0
    %5087 = vmatpush.bf16.xpose.msra.mxu0 0
    %5088 = vmatpush.bf16.xpose.msra.mxu0 0
    %5089 = vmatpush.bf16.xpose.msra.mxu0 0
    %5090 = vmatpush.bf16.xpose.msra.mxu0 0
    %5091 = vmatpush.bf16.xpose.msra.mxu0 0
    %5092 = vmatpush.bf16.xpose.msra.mxu0 0
    %5093 = vmatpush.bf16.xpose.msra.mxu0 0
    %5094 = vmatpush.bf16.xpose.msra.mxu0 %v5085
    %5095 = vmatmul.bf16.gmra.mxu0 %v5082
    %v5096 = vpop.f32.mrf.mxu0
    %v5097 = vadd.f32 0.0, %v5096
    %v5098 = vpop.f32.mrf.mxu0
    %5099 = vdwg.mxu0
    %v5101 = vsel %vm571, %v5076, 0
    %v5104 = vsel %vm571, %v5078, 0
    %5106 = vmatpush.bf16.xpose.msra.mxu0 0
    %5107 = vmatpush.bf16.xpose.msra.mxu0 0
    %5108 = vmatpush.bf16.xpose.msra.mxu0 0
    %5109 = vmatpush.bf16.xpose.msra.mxu0 0
    %5110 = vmatpush.bf16.xpose.msra.mxu0 0
    %5111 = vmatpush.bf16.xpose.msra.mxu0 0
    %5112 = vmatpush.bf16.xpose.msra.mxu0 0
    %5113 = vmatpush.bf16.xpose.msra.mxu0 %v5104
    %5114 = vmatmul.bf16.gmra.mxu0 %v5101
    %v5115 = vpop.f32.mrf.mxu0
    %v5116 = vadd.f32 0.0, %v5115
    %v5117 = vpop.f32.mrf.mxu0
    %5118 = vdwg.mxu0
    %v5119 = vsel %vm313, %v5097, -inf
    %5120 = vmax.xlane.f32.xlu0 %v5119
    %v5121 = vpop.xlane.xlu0 %5120
    %v5122 = vsel %vm313, %v5116, -inf
    %5123 = vmax.xlane.f32.xlu0 %v5122
    %v5124 = vpop.xlane.xlu0 %5123
    %v5125 = vsub.f32 %v5097, %v5121
    %v5126 = vsub.f32 %v5116, %v5124
    %v5127 = vmul.f32 %v5125, 1.442695
    %v5128 = vpow.pop %v5127
    %v5129 = vmul.f32 %v5126, 1.442695
    %v5130 = vpow.pop %v5129
    %v5131 = vsel %vm313, %v5128, 0.0
    %5132 = vadd.xlane.f32.xlu0 %v5131
    %v5133 = vpop.xlane.xlu0 %5132
    %v5134 = vsel %vm313, %v5130, 0.0
    %5135 = vadd.xlane.f32.xlu0 %v5134
    %v5136 = vpop.xlane.xlu0 %5135
    %v5137 = vrcp.pop %v5133
    %v5138 = vmul.f32 %v5133, %v5137
    %v5139 = vsub.f32 1.0, %v5138
    %v5140 = vmul.f32 %v5137, %v5139
    %v5141 = vadd.f32 %v5137, %v5140
    %vm5142 = vweird.f32 %v5133
    %vm5143 = vweird.f32 %v5137
    %vm5144 = vmor %vm5142, %vm5143
    %v5145 = vsel %vm5144, %v5137, %v5141
    %v5146 = vand.u32 2147483647, %v5133
    %vm5147 = vcmp.eq.f32.partialorder %v5146, 8.507059e+37
    %v5148 = vand.u32 %v5133, 2147483648
    %v5149 = vor.u32 1.1754944e-38, %v5148
    %v5150 = vsel %vm5147, %v5149, %v5145
    %v5151 = vmul.f32 %v5128, %v5150
    %v5152 = vrcp.pop %v5136
    %v5153 = vmul.f32 %v5136, %v5152
    %v5154 = vsub.f32 1.0, %v5153
    %v5155 = vmul.f32 %v5152, %v5154
    %v5156 = vadd.f32 %v5152, %v5155
    %vm5157 = vweird.f32 %v5136
    %vm5158 = vweird.f32 %v5152
    %vm5159 = vmor %vm5157, %vm5158
    %v5160 = vsel %vm5159, %v5152, %v5156
    %v5161 = vand.u32 2147483647, %v5136
    %vm5162 = vcmp.eq.f32.partialorder %v5161, 8.507059e+37
    %v5163 = vand.u32 %v5136, 2147483648
    %v5164 = vor.u32 1.1754944e-38, %v5163
    %v5165 = vsel %vm5162, %v5164, %v5160
    %v5166 = vmul.f32 %v5130, %v5165
    %v5167 = vpack.c.bf16 %v5151, %v5151
    %v5168 = vpack.c.bf16 %v5166, %v5166
    %v5170 = vsel %vm313, %v5167, 0
    %v5173 = vsel %vm317, %v5079, 0
    %5175 = vmatpush.bf16.msra.mxu0 0
    %5176 = vmatpush.bf16.msra.mxu0 0
    %5177 = vmatpush.bf16.msra.mxu0 0
    %5178 = vmatpush.bf16.msra.mxu0 0
    %5179 = vmatpush.bf16.msra.mxu0 0
    %5180 = vmatpush.bf16.msra.mxu0 0
    %5181 = vmatpush.bf16.msra.mxu0 0
    %5182 = vmatpush.bf16.msra.mxu0 %v5173
    %5183 = vmatmul.bf16.gmra.mxu0 %v5170
    %v5184 = vpop.f32.mrf.mxu0
    %v5185 = vadd.f32 0.0, %v5184
    %v5186 = vpop.f32.mrf.mxu0
    %5187 = vdwg.mxu0
    %v5189 = vsel %vm313, %v5168, 0
    %v5192 = vsel %vm317, %v5080, 0
    %5194 = vmatpush.bf16.msra.mxu0 0
    %5195 = vmatpush.bf16.msra.mxu0 0
    %5196 = vmatpush.bf16.msra.mxu0 0
    %5197 = vmatpush.bf16.msra.mxu0 0
    %5198 = vmatpush.bf16.msra.mxu0 0
    %5199 = vmatpush.bf16.msra.mxu0 0
    %5200 = vmatpush.bf16.msra.mxu0 0
    %5201 = vmatpush.bf16.msra.mxu0 %v5192
    %5202 = vmatmul.bf16.gmra.mxu0 %v5189
    %v5203 = vpop.f32.mrf.mxu0
    %v5204 = vadd.f32 0.0, %v5203
    %v5205 = vpop.f32.mrf.mxu0
    %5206 = vdwg.mxu0
    %v5208 = vunpack.c.l.b16 %v5075
    %v5209 = vpack.c.b16 %v5208, %v5208
    %5210 = vrot.lane.b32.xlu0 %v5209, 112
    %v5211 = vpop.permute.xlu0 %5210
    %v5213 = vunpack.c.l.b16 %v5077
    %v5214 = vpack.c.b16 %v5213, %v5213
    %5215 = vrot.lane.b32.xlu0 %v5214, 112
    %v5216 = vpop.permute.xlu0 %5215
    %v5218 = vsel %vm571, %v5211, 0
    %v5221 = vsel %vm571, %v5216, 0
    %5223 = vmatpush.bf16.xpose.msra.mxu0 0
    %5224 = vmatpush.bf16.xpose.msra.mxu0 0
    %5225 = vmatpush.bf16.xpose.msra.mxu0 0
    %5226 = vmatpush.bf16.xpose.msra.mxu0 0
    %5227 = vmatpush.bf16.xpose.msra.mxu0 0
    %5228 = vmatpush.bf16.xpose.msra.mxu0 0
    %5229 = vmatpush.bf16.xpose.msra.mxu0 0
    %5230 = vmatpush.bf16.xpose.msra.mxu0 %v5221
    %5231 = vmatmul.bf16.gmra.mxu0 %v5218
    %v5232 = vpop.f32.mrf.mxu0
    %v5233 = vadd.f32 0.0, %v5232
    %v5234 = vpop.f32.mrf.mxu0
    %5235 = vdwg.mxu0
    %v5237 = vunpack.c.l.b16 %v5076
    %v5238 = vpack.c.b16 %v5237, %v5237
    %5239 = vrot.lane.b32.xlu0 %v5238, 112
    %v5240 = vpop.permute.xlu0 %5239
    %v5242 = vunpack.c.l.b16 %v5078
    %v5243 = vpack.c.b16 %v5242, %v5242
    %5244 = vrot.lane.b32.xlu0 %v5243, 112
    %v5245 = vpop.permute.xlu0 %5244
    %v5247 = vsel %vm571, %v5240, 0
    %v5250 = vsel %vm571, %v5245, 0
    %5252 = vmatpush.bf16.xpose.msra.mxu0 0
    %5253 = vmatpush.bf16.xpose.msra.mxu0 0
    %5254 = vmatpush.bf16.xpose.msra.mxu0 0
    %5255 = vmatpush.bf16.xpose.msra.mxu0 0
    %5256 = vmatpush.bf16.xpose.msra.mxu0 0
    %5257 = vmatpush.bf16.xpose.msra.mxu0 0
    %5258 = vmatpush.bf16.xpose.msra.mxu0 0
    %5259 = vmatpush.bf16.xpose.msra.mxu0 %v5250
    %5260 = vmatmul.bf16.gmra.mxu0 %v5247
    %v5261 = vpop.f32.mrf.mxu0
    %v5262 = vadd.f32 0.0, %v5261
    %v5263 = vpop.f32.mrf.mxu0
    %5264 = vdwg.mxu0
    %v5265 = vsel %vm313, %v5233, -inf
    %5266 = vmax.xlane.f32.xlu0 %v5265
    %v5267 = vpop.xlane.xlu0 %5266
    %v5268 = vsel %vm313, %v5262, -inf
    %5269 = vmax.xlane.f32.xlu0 %v5268
    %v5270 = vpop.xlane.xlu0 %5269
    %v5271 = vsub.f32 %v5233, %v5267
    %v5272 = vsub.f32 %v5262, %v5270
    %v5273 = vmul.f32 %v5271, 1.442695
    %v5274 = vpow.pop %v5273
    %v5275 = vmul.f32 %v5272, 1.442695
    %v5276 = vpow.pop %v5275
    %v5277 = vsel %vm313, %v5274, 0.0
    %5278 = vadd.xlane.f32.xlu0 %v5277
    %v5279 = vpop.xlane.xlu0 %5278
    %v5280 = vsel %vm313, %v5276, 0.0
    %5281 = vadd.xlane.f32.xlu0 %v5280
    %v5282 = vpop.xlane.xlu0 %5281
    %v5283 = vrcp.pop %v5279
    %v5284 = vmul.f32 %v5279, %v5283
    %v5285 = vsub.f32 1.0, %v5284
    %v5286 = vmul.f32 %v5283, %v5285
    %v5287 = vadd.f32 %v5283, %v5286
    %vm5288 = vweird.f32 %v5279
    %vm5289 = vweird.f32 %v5283
    %vm5290 = vmor %vm5288, %vm5289
    %v5291 = vsel %vm5290, %v5283, %v5287
    %v5292 = vand.u32 2147483647, %v5279
    %vm5293 = vcmp.eq.f32.partialorder %v5292, 8.507059e+37
    %v5294 = vand.u32 %v5279, 2147483648
    %v5295 = vor.u32 1.1754944e-38, %v5294
    %v5296 = vsel %vm5293, %v5295, %v5291
    %v5297 = vmul.f32 %v5274, %v5296
    %v5298 = vrcp.pop %v5282
    %v5299 = vmul.f32 %v5282, %v5298
    %v5300 = vsub.f32 1.0, %v5299
    %v5301 = vmul.f32 %v5298, %v5300
    %v5302 = vadd.f32 %v5298, %v5301
    %vm5303 = vweird.f32 %v5282
    %vm5304 = vweird.f32 %v5298
    %vm5305 = vmor %vm5303, %vm5304
    %v5306 = vsel %vm5305, %v5298, %v5302
    %v5307 = vand.u32 2147483647, %v5282
    %vm5308 = vcmp.eq.f32.partialorder %v5307, 8.507059e+37
    %v5309 = vand.u32 %v5282, 2147483648
    %v5310 = vor.u32 1.1754944e-38, %v5309
    %v5311 = vsel %vm5308, %v5310, %v5306
    %v5312 = vmul.f32 %v5276, %v5311
    %v5313 = vpack.c.bf16 %v5297, %v5297
    %v5314 = vpack.c.bf16 %v5312, %v5312
    %v5316 = vunpack.c.l.b16 %v5079
    %v5317 = vpack.c.b16 %v5316, %v5316
    %5318 = vrot.lane.b32.xlu0 %v5317, 112
    %v5319 = vpop.permute.xlu0 %5318
    %v5321 = vsel %vm313, %v5313, 0
    %v5324 = vsel %vm317, %v5319, 0
    %5326 = vmatpush.bf16.msra.mxu0 0
    %5327 = vmatpush.bf16.msra.mxu0 0
    %5328 = vmatpush.bf16.msra.mxu0 0
    %5329 = vmatpush.bf16.msra.mxu0 0
    %5330 = vmatpush.bf16.msra.mxu0 0
    %5331 = vmatpush.bf16.msra.mxu0 0
    %5332 = vmatpush.bf16.msra.mxu0 0
    %5333 = vmatpush.bf16.msra.mxu0 %v5324
    %5334 = vmatmul.bf16.gmra.mxu0 %v5321
    %v5335 = vpop.f32.mrf.mxu0
    %v5336 = vadd.f32 0.0, %v5335
    %v5337 = vpop.f32.mrf.mxu0
    %5338 = vdwg.mxu0
    %v5340 = vunpack.c.l.b16 %v5080
    %v5341 = vpack.c.b16 %v5340, %v5340
    %5342 = vrot.lane.b32.xlu0 %v5341, 112
    %v5343 = vpop.permute.xlu0 %5342
    %v5345 = vsel %vm313, %v5314, 0
    %v5348 = vsel %vm317, %v5343, 0
    %5350 = vmatpush.bf16.msra.mxu0 0
    %5351 = vmatpush.bf16.msra.mxu0 0
    %5352 = vmatpush.bf16.msra.mxu0 0
    %5353 = vmatpush.bf16.msra.mxu0 0
    %5354 = vmatpush.bf16.msra.mxu0 0
    %5355 = vmatpush.bf16.msra.mxu0 0
    %5356 = vmatpush.bf16.msra.mxu0 0
    %5357 = vmatpush.bf16.msra.mxu0 %v5348
    %5358 = vmatmul.bf16.gmra.mxu0 %v5345
    %v5359 = vpop.f32.mrf.mxu0
    %v5360 = vadd.f32 0.0, %v5359
    %v5361 = vpop.f32.mrf.mxu0
    %5362 = vdwg.mxu0
    %5363 = vrot.lane.b32.xlu0 %v5209, 96
    %v5364 = vpop.permute.xlu0 %5363
    %5365 = vrot.lane.b32.xlu0 %v5214, 96
    %v5366 = vpop.permute.xlu0 %5365
    %v5368 = vsel %vm571, %v5364, 0
    %v5371 = vsel %vm571, %v5366, 0
    %5373 = vmatpush.bf16.xpose.msra.mxu0 0
    %5374 = vmatpush.bf16.xpose.msra.mxu0 0
    %5375 = vmatpush.bf16.xpose.msra.mxu0 0
    %5376 = vmatpush.bf16.xpose.msra.mxu0 0
    %5377 = vmatpush.bf16.xpose.msra.mxu0 0
    %5378 = vmatpush.bf16.xpose.msra.mxu0 0
    %5379 = vmatpush.bf16.xpose.msra.mxu0 0
    %5380 = vmatpush.bf16.xpose.msra.mxu0 %v5371
    %5381 = vmatmul.bf16.gmra.mxu0 %v5368
    %v5382 = vpop.f32.mrf.mxu0
    %v5383 = vadd.f32 0.0, %v5382
    %v5384 = vpop.f32.mrf.mxu0
    %5385 = vdwg.mxu0
    %5386 = vrot.lane.b32.xlu0 %v5238, 96
    %v5387 = vpop.permute.xlu0 %5386
    %5388 = vrot.lane.b32.xlu0 %v5243, 96
    %v5389 = vpop.permute.xlu0 %5388
    %v5391 = vsel %vm571, %v5387, 0
    %v5394 = vsel %vm571, %v5389, 0
    %5396 = vmatpush.bf16.xpose.msra.mxu0 0
    %5397 = vmatpush.bf16.xpose.msra.mxu0 0
    %5398 = vmatpush.bf16.xpose.msra.mxu0 0
    %5399 = vmatpush.bf16.xpose.msra.mxu0 0
    %5400 = vmatpush.bf16.xpose.msra.mxu0 0
    %5401 = vmatpush.bf16.xpose.msra.mxu0 0
    %5402 = vmatpush.bf16.xpose.msra.mxu0 0
    %5403 = vmatpush.bf16.xpose.msra.mxu0 %v5394
    %5404 = vmatmul.bf16.gmra.mxu0 %v5391
    %v5405 = vpop.f32.mrf.mxu0
    %v5406 = vadd.f32 0.0, %v5405
    %v5407 = vpop.f32.mrf.mxu0
    %5408 = vdwg.mxu0
    %v5409 = vsel %vm313, %v5383, -inf
    %5410 = vmax.xlane.f32.xlu0 %v5409
    %v5411 = vpop.xlane.xlu0 %5410
    %v5412 = vsel %vm313, %v5406, -inf
    %5413 = vmax.xlane.f32.xlu0 %v5412
    %v5414 = vpop.xlane.xlu0 %5413
    %v5415 = vsub.f32 %v5383, %v5411
    %v5416 = vsub.f32 %v5406, %v5414
    %v5417 = vmul.f32 %v5415, 1.442695
    %v5418 = vpow.pop %v5417
    %v5419 = vmul.f32 %v5416, 1.442695
    %v5420 = vpow.pop %v5419
    %v5421 = vsel %vm313, %v5418, 0.0
    %5422 = vadd.xlane.f32.xlu0 %v5421
    %v5423 = vpop.xlane.xlu0 %5422
    %v5424 = vsel %vm313, %v5420, 0.0
    %5425 = vadd.xlane.f32.xlu0 %v5424
    %v5426 = vpop.xlane.xlu0 %5425
    %v5427 = vrcp.pop %v5423
    %v5428 = vmul.f32 %v5423, %v5427
    %v5429 = vsub.f32 1.0, %v5428
    %v5430 = vmul.f32 %v5427, %v5429
    %v5431 = vadd.f32 %v5427, %v5430
    %vm5432 = vweird.f32 %v5423
    %vm5433 = vweird.f32 %v5427
    %vm5434 = vmor %vm5432, %vm5433
    %v5435 = vsel %vm5434, %v5427, %v5431
    %v5436 = vand.u32 2147483647, %v5423
    %vm5437 = vcmp.eq.f32.partialorder %v5436, 8.507059e+37
    %v5438 = vand.u32 %v5423, 2147483648
    %v5439 = vor.u32 1.1754944e-38, %v5438
    %v5440 = vsel %vm5437, %v5439, %v5435
    %v5441 = vmul.f32 %v5418, %v5440
    %v5442 = vrcp.pop %v5426
    %v5443 = vmul.f32 %v5426, %v5442
    %v5444 = vsub.f32 1.0, %v5443
    %v5445 = vmul.f32 %v5442, %v5444
    %v5446 = vadd.f32 %v5442, %v5445
    %vm5447 = vweird.f32 %v5426
    %vm5448 = vweird.f32 %v5442
    %vm5449 = vmor %vm5447, %vm5448
    %v5450 = vsel %vm5449, %v5442, %v5446
    %v5451 = vand.u32 2147483647, %v5426
    %vm5452 = vcmp.eq.f32.partialorder %v5451, 8.507059e+37
    %v5453 = vand.u32 %v5426, 2147483648
    %v5454 = vor.u32 1.1754944e-38, %v5453
    %v5455 = vsel %vm5452, %v5454, %v5450
    %v5456 = vmul.f32 %v5420, %v5455
    %v5457 = vpack.c.bf16 %v5441, %v5441
    %v5458 = vpack.c.bf16 %v5456, %v5456
    %5459 = vrot.lane.b32.xlu0 %v5317, 96
    %v5460 = vpop.permute.xlu0 %5459
    %v5462 = vsel %vm313, %v5457, 0
    %v5465 = vsel %vm317, %v5460, 0
    %5467 = vmatpush.bf16.msra.mxu0 0
    %5468 = vmatpush.bf16.msra.mxu0 0
    %5469 = vmatpush.bf16.msra.mxu0 0
    %5470 = vmatpush.bf16.msra.mxu0 0
    %5471 = vmatpush.bf16.msra.mxu0 0
    %5472 = vmatpush.bf16.msra.mxu0 0
    %5473 = vmatpush.bf16.msra.mxu0 0
    %5474 = vmatpush.bf16.msra.mxu0 %v5465
    %5475 = vmatmul.bf16.gmra.mxu0 %v5462
    %v5476 = vpop.f32.mrf.mxu0
    %v5477 = vadd.f32 0.0, %v5476
    %v5478 = vpop.f32.mrf.mxu0
    %5479 = vdwg.mxu0
    %5480 = vrot.lane.b32.xlu0 %v5341, 96
    %v5481 = vpop.permute.xlu0 %5480
    %v5483 = vsel %vm313, %v5458, 0
    %v5486 = vsel %vm317, %v5481, 0
    %5488 = vmatpush.bf16.msra.mxu0 0
    %5489 = vmatpush.bf16.msra.mxu0 0
    %5490 = vmatpush.bf16.msra.mxu0 0
    %5491 = vmatpush.bf16.msra.mxu0 0
    %5492 = vmatpush.bf16.msra.mxu0 0
    %5493 = vmatpush.bf16.msra.mxu0 0
    %5494 = vmatpush.bf16.msra.mxu0 0
    %5495 = vmatpush.bf16.msra.mxu0 %v5486
    %5496 = vmatmul.bf16.gmra.mxu0 %v5483
    %v5497 = vpop.f32.mrf.mxu0
    %v5498 = vadd.f32 0.0, %v5497
    %v5499 = vpop.f32.mrf.mxu0
    %5500 = vdwg.mxu0
    %5501 = vrot.lane.b32.xlu0 %v5209, 80
    %v5502 = vpop.permute.xlu0 %5501
    %5503 = vrot.lane.b32.xlu0 %v5214, 80
    %v5504 = vpop.permute.xlu0 %5503
    %v5506 = vsel %vm571, %v5502, 0
    %v5509 = vsel %vm571, %v5504, 0
    %5511 = vmatpush.bf16.xpose.msra.mxu0 0
    %5512 = vmatpush.bf16.xpose.msra.mxu0 0
    %5513 = vmatpush.bf16.xpose.msra.mxu0 0
    %5514 = vmatpush.bf16.xpose.msra.mxu0 0
    %5515 = vmatpush.bf16.xpose.msra.mxu0 0
    %5516 = vmatpush.bf16.xpose.msra.mxu0 0
    %5517 = vmatpush.bf16.xpose.msra.mxu0 0
    %5518 = vmatpush.bf16.xpose.msra.mxu0 %v5509
    %5519 = vmatmul.bf16.gmra.mxu0 %v5506
    %v5520 = vpop.f32.mrf.mxu0
    %v5521 = vadd.f32 0.0, %v5520
    %v5522 = vpop.f32.mrf.mxu0
    %5523 = vdwg.mxu0
    %5524 = vrot.lane.b32.xlu0 %v5238, 80
    %v5525 = vpop.permute.xlu0 %5524
    %5526 = vrot.lane.b32.xlu0 %v5243, 80
    %v5527 = vpop.permute.xlu0 %5526
    %v5529 = vsel %vm571, %v5525, 0
    %v5532 = vsel %vm571, %v5527, 0
    %5534 = vmatpush.bf16.xpose.msra.mxu0 0
    %5535 = vmatpush.bf16.xpose.msra.mxu0 0
    %5536 = vmatpush.bf16.xpose.msra.mxu0 0
    %5537 = vmatpush.bf16.xpose.msra.mxu0 0
    %5538 = vmatpush.bf16.xpose.msra.mxu0 0
    %5539 = vmatpush.bf16.xpose.msra.mxu0 0
    %5540 = vmatpush.bf16.xpose.msra.mxu0 0
    %5541 = vmatpush.bf16.xpose.msra.mxu0 %v5532
    %5542 = vmatmul.bf16.gmra.mxu0 %v5529
    %v5543 = vpop.f32.mrf.mxu0
    %v5544 = vadd.f32 0.0, %v5543
    %v5545 = vpop.f32.mrf.mxu0
    %5546 = vdwg.mxu0
    %v5547 = vsel %vm313, %v5521, -inf
    %5548 = vmax.xlane.f32.xlu0 %v5547
    %v5549 = vpop.xlane.xlu0 %5548
    %v5550 = vsel %vm313, %v5544, -inf
    %5551 = vmax.xlane.f32.xlu0 %v5550
    %v5552 = vpop.xlane.xlu0 %5551
    %v5553 = vsub.f32 %v5521, %v5549
    %v5554 = vsub.f32 %v5544, %v5552
    %v5555 = vmul.f32 %v5553, 1.442695
    %v5556 = vpow.pop %v5555
    %v5557 = vmul.f32 %v5554, 1.442695
    %v5558 = vpow.pop %v5557
    %v5559 = vsel %vm313, %v5556, 0.0
    %5560 = vadd.xlane.f32.xlu0 %v5559
    %v5561 = vpop.xlane.xlu0 %5560
    %v5562 = vsel %vm313, %v5558, 0.0
    %5563 = vadd.xlane.f32.xlu0 %v5562
    %v5564 = vpop.xlane.xlu0 %5563
    %v5565 = vrcp.pop %v5561
    %v5566 = vmul.f32 %v5561, %v5565
    %v5567 = vsub.f32 1.0, %v5566
    %v5568 = vmul.f32 %v5565, %v5567
    %v5569 = vadd.f32 %v5565, %v5568
    %vm5570 = vweird.f32 %v5561
    %vm5571 = vweird.f32 %v5565
    %vm5572 = vmor %vm5570, %vm5571
    %v5573 = vsel %vm5572, %v5565, %v5569
    %v5574 = vand.u32 2147483647, %v5561
    %vm5575 = vcmp.eq.f32.partialorder %v5574, 8.507059e+37
    %v5576 = vand.u32 %v5561, 2147483648
    %v5577 = vor.u32 1.1754944e-38, %v5576
    %v5578 = vsel %vm5575, %v5577, %v5573
    %v5579 = vmul.f32 %v5556, %v5578
    %v5580 = vrcp.pop %v5564
    %v5581 = vmul.f32 %v5564, %v5580
    %v5582 = vsub.f32 1.0, %v5581
    %v5583 = vmul.f32 %v5580, %v5582
    %v5584 = vadd.f32 %v5580, %v5583
    %vm5585 = vweird.f32 %v5564
    %vm5586 = vweird.f32 %v5580
    %vm5587 = vmor %vm5585, %vm5586
    %v5588 = vsel %vm5587, %v5580, %v5584
    %v5589 = vand.u32 2147483647, %v5564
    %vm5590 = vcmp.eq.f32.partialorder %v5589, 8.507059e+37
    %v5591 = vand.u32 %v5564, 2147483648
    %v5592 = vor.u32 1.1754944e-38, %v5591
    %v5593 = vsel %vm5590, %v5592, %v5588
    %v5594 = vmul.f32 %v5558, %v5593
    %v5595 = vpack.c.bf16 %v5579, %v5579
    %v5596 = vpack.c.bf16 %v5594, %v5594
    %5597 = vrot.lane.b32.xlu0 %v5317, 80
    %v5598 = vpop.permute.xlu0 %5597
    %v5600 = vsel %vm313, %v5595, 0
    %v5603 = vsel %vm317, %v5598, 0
    %5605 = vmatpush.bf16.msra.mxu0 0
    %5606 = vmatpush.bf16.msra.mxu0 0
    %5607 = vmatpush.bf16.msra.mxu0 0
    %5608 = vmatpush.bf16.msra.mxu0 0
    %5609 = vmatpush.bf16.msra.mxu0 0
    %5610 = vmatpush.bf16.msra.mxu0 0
    %5611 = vmatpush.bf16.msra.mxu0 0
    %5612 = vmatpush.bf16.msra.mxu0 %v5603
    %5613 = vmatmul.bf16.gmra.mxu0 %v5600
    %v5614 = vpop.f32.mrf.mxu0
    %v5615 = vadd.f32 0.0, %v5614
    %v5616 = vpop.f32.mrf.mxu0
    %5617 = vdwg.mxu0
    %5618 = vrot.lane.b32.xlu0 %v5341, 80
    %v5619 = vpop.permute.xlu0 %5618
    %v5621 = vsel %vm313, %v5596, 0
    %v5624 = vsel %vm317, %v5619, 0
    %5626 = vmatpush.bf16.msra.mxu0 0
    %5627 = vmatpush.bf16.msra.mxu0 0
    %5628 = vmatpush.bf16.msra.mxu0 0
    %5629 = vmatpush.bf16.msra.mxu0 0
    %5630 = vmatpush.bf16.msra.mxu0 0
    %5631 = vmatpush.bf16.msra.mxu0 0
    %5632 = vmatpush.bf16.msra.mxu0 0
    %5633 = vmatpush.bf16.msra.mxu0 %v5624
    %5634 = vmatmul.bf16.gmra.mxu0 %v5621
    %v5635 = vpop.f32.mrf.mxu0
    %v5636 = vadd.f32 0.0, %v5635
    %v5637 = vpop.f32.mrf.mxu0
    %5638 = vdwg.mxu0
    %5639 = vrot.lane.b32.xlu0 %v5209, 64
    %v5640 = vpop.permute.xlu0 %5639
    %5641 = vrot.lane.b32.xlu0 %v5214, 64
    %v5642 = vpop.permute.xlu0 %5641
    %v5644 = vsel %vm571, %v5640, 0
    %v5647 = vsel %vm571, %v5642, 0
    %5649 = vmatpush.bf16.xpose.msra.mxu0 0
    %5650 = vmatpush.bf16.xpose.msra.mxu0 0
    %5651 = vmatpush.bf16.xpose.msra.mxu0 0
    %5652 = vmatpush.bf16.xpose.msra.mxu0 0
    %5653 = vmatpush.bf16.xpose.msra.mxu0 0
    %5654 = vmatpush.bf16.xpose.msra.mxu0 0
    %5655 = vmatpush.bf16.xpose.msra.mxu0 0
    %5656 = vmatpush.bf16.xpose.msra.mxu0 %v5647
    %5657 = vmatmul.bf16.gmra.mxu0 %v5644
    %v5658 = vpop.f32.mrf.mxu0
    %v5659 = vadd.f32 0.0, %v5658
    %v5660 = vpop.f32.mrf.mxu0
    %5661 = vdwg.mxu0
    %5662 = vrot.lane.b32.xlu0 %v5238, 64
    %v5663 = vpop.permute.xlu0 %5662
    %5664 = vrot.lane.b32.xlu0 %v5243, 64
    %v5665 = vpop.permute.xlu0 %5664
    %v5667 = vsel %vm571, %v5663, 0
    %v5670 = vsel %vm571, %v5665, 0
    %5672 = vmatpush.bf16.xpose.msra.mxu0 0
    %5673 = vmatpush.bf16.xpose.msra.mxu0 0
    %5674 = vmatpush.bf16.xpose.msra.mxu0 0
    %5675 = vmatpush.bf16.xpose.msra.mxu0 0
    %5676 = vmatpush.bf16.xpose.msra.mxu0 0
    %5677 = vmatpush.bf16.xpose.msra.mxu0 0
    %5678 = vmatpush.bf16.xpose.msra.mxu0 0
    %5679 = vmatpush.bf16.xpose.msra.mxu0 %v5670
    %5680 = vmatmul.bf16.gmra.mxu0 %v5667
    %v5681 = vpop.f32.mrf.mxu0
    %v5682 = vadd.f32 0.0, %v5681
    %v5683 = vpop.f32.mrf.mxu0
    %5684 = vdwg.mxu0
    %v5685 = vsel %vm313, %v5659, -inf
    %5686 = vmax.xlane.f32.xlu0 %v5685
    %v5687 = vpop.xlane.xlu0 %5686
    %v5688 = vsel %vm313, %v5682, -inf
    %5689 = vmax.xlane.f32.xlu0 %v5688
    %v5690 = vpop.xlane.xlu0 %5689
    %v5691 = vsub.f32 %v5659, %v5687
    %v5692 = vsub.f32 %v5682, %v5690
    %v5693 = vmul.f32 %v5691, 1.442695
    %v5694 = vpow.pop %v5693
    %v5695 = vmul.f32 %v5692, 1.442695
    %v5696 = vpow.pop %v5695
    %v5697 = vsel %vm313, %v5694, 0.0
    %5698 = vadd.xlane.f32.xlu0 %v5697
    %v5699 = vpop.xlane.xlu0 %5698
    %v5700 = vsel %vm313, %v5696, 0.0
    %5701 = vadd.xlane.f32.xlu0 %v5700
    %v5702 = vpop.xlane.xlu0 %5701
    %v5703 = vrcp.pop %v5699
    %v5704 = vmul.f32 %v5699, %v5703
    %v5705 = vsub.f32 1.0, %v5704
    %v5706 = vmul.f32 %v5703, %v5705
    %v5707 = vadd.f32 %v5703, %v5706
    %vm5708 = vweird.f32 %v5699
    %vm5709 = vweird.f32 %v5703
    %vm5710 = vmor %vm5708, %vm5709
    %v5711 = vsel %vm5710, %v5703, %v5707
    %v5712 = vand.u32 2147483647, %v5699
    %vm5713 = vcmp.eq.f32.partialorder %v5712, 8.507059e+37
    %v5714 = vand.u32 %v5699, 2147483648
    %v5715 = vor.u32 1.1754944e-38, %v5714
    %v5716 = vsel %vm5713, %v5715, %v5711
    %v5717 = vmul.f32 %v5694, %v5716
    %v5718 = vrcp.pop %v5702
    %v5719 = vmul.f32 %v5702, %v5718
    %v5720 = vsub.f32 1.0, %v5719
    %v5721 = vmul.f32 %v5718, %v5720
    %v5722 = vadd.f32 %v5718, %v5721
    %vm5723 = vweird.f32 %v5702
    %vm5724 = vweird.f32 %v5718
    %vm5725 = vmor %vm5723, %vm5724
    %v5726 = vsel %vm5725, %v5718, %v5722
    %v5727 = vand.u32 2147483647, %v5702
    %vm5728 = vcmp.eq.f32.partialorder %v5727, 8.507059e+37
    %v5729 = vand.u32 %v5702, 2147483648
    %v5730 = vor.u32 1.1754944e-38, %v5729
    %v5731 = vsel %vm5728, %v5730, %v5726
    %v5732 = vmul.f32 %v5696, %v5731
    %v5733 = vpack.c.bf16 %v5717, %v5717
    %v5734 = vpack.c.bf16 %v5732, %v5732
    %5735 = vrot.lane.b32.xlu0 %v5317, 64
    %v5736 = vpop.permute.xlu0 %5735
    %v5738 = vsel %vm313, %v5733, 0
    %v5741 = vsel %vm317, %v5736, 0
    %5743 = vmatpush.bf16.msra.mxu0 0
    %5744 = vmatpush.bf16.msra.mxu0 0
    %5745 = vmatpush.bf16.msra.mxu0 0
    %5746 = vmatpush.bf16.msra.mxu0 0
    %5747 = vmatpush.bf16.msra.mxu0 0
    %5748 = vmatpush.bf16.msra.mxu0 0
    %5749 = vmatpush.bf16.msra.mxu0 0
    %5750 = vmatpush.bf16.msra.mxu0 %v5741
    %5751 = vmatmul.bf16.gmra.mxu0 %v5738
    %v5752 = vpop.f32.mrf.mxu0
    %v5753 = vadd.f32 0.0, %v5752
    %v5754 = vpop.f32.mrf.mxu0
    %5755 = vdwg.mxu0
    %5756 = vrot.lane.b32.xlu0 %v5341, 64
    %v5757 = vpop.permute.xlu0 %5756
    %v5759 = vsel %vm313, %v5734, 0
    %v5762 = vsel %vm317, %v5757, 0
    %5764 = vmatpush.bf16.msra.mxu0 0
    %5765 = vmatpush.bf16.msra.mxu0 0
    %5766 = vmatpush.bf16.msra.mxu0 0
    %5767 = vmatpush.bf16.msra.mxu0 0
    %5768 = vmatpush.bf16.msra.mxu0 0
    %5769 = vmatpush.bf16.msra.mxu0 0
    %5770 = vmatpush.bf16.msra.mxu0 0
    %5771 = vmatpush.bf16.msra.mxu0 %v5762
    %5772 = vmatmul.bf16.gmra.mxu0 %v5759
    %v5773 = vpop.f32.mrf.mxu0
    %v5774 = vadd.f32 0.0, %v5773
    %v5775 = vpop.f32.mrf.mxu0
    %5776 = vdwg.mxu0
    %5777 = vrot.lane.b32.xlu0 %v5209, 48
    %v5778 = vpop.permute.xlu0 %5777
    %5779 = vrot.lane.b32.xlu0 %v5214, 48
    %v5780 = vpop.permute.xlu0 %5779
    %v5782 = vsel %vm571, %v5778, 0
    %v5785 = vsel %vm571, %v5780, 0
    %5787 = vmatpush.bf16.xpose.msra.mxu0 0
    %5788 = vmatpush.bf16.xpose.msra.mxu0 0
    %5789 = vmatpush.bf16.xpose.msra.mxu0 0
    %5790 = vmatpush.bf16.xpose.msra.mxu0 0
    %5791 = vmatpush.bf16.xpose.msra.mxu0 0
    %5792 = vmatpush.bf16.xpose.msra.mxu0 0
    %5793 = vmatpush.bf16.xpose.msra.mxu0 0
    %5794 = vmatpush.bf16.xpose.msra.mxu0 %v5785
    %5795 = vmatmul.bf16.gmra.mxu0 %v5782
    %v5796 = vpop.f32.mrf.mxu0
    %v5797 = vadd.f32 0.0, %v5796
    %v5798 = vpop.f32.mrf.mxu0
    %5799 = vdwg.mxu0
    %5800 = vrot.lane.b32.xlu0 %v5238, 48
    %v5801 = vpop.permute.xlu0 %5800
    %5802 = vrot.lane.b32.xlu0 %v5243, 48
    %v5803 = vpop.permute.xlu0 %5802
    %v5805 = vsel %vm571, %v5801, 0
    %v5808 = vsel %vm571, %v5803, 0
    %5810 = vmatpush.bf16.xpose.msra.mxu0 0
    %5811 = vmatpush.bf16.xpose.msra.mxu0 0
    %5812 = vmatpush.bf16.xpose.msra.mxu0 0
    %5813 = vmatpush.bf16.xpose.msra.mxu0 0
    %5814 = vmatpush.bf16.xpose.msra.mxu0 0
    %5815 = vmatpush.bf16.xpose.msra.mxu0 0
    %5816 = vmatpush.bf16.xpose.msra.mxu0 0
    %5817 = vmatpush.bf16.xpose.msra.mxu0 %v5808
    %5818 = vmatmul.bf16.gmra.mxu0 %v5805
    %v5819 = vpop.f32.mrf.mxu0
    %v5820 = vadd.f32 0.0, %v5819
    %v5821 = vpop.f32.mrf.mxu0
    %5822 = vdwg.mxu0
    %v5823 = vsel %vm313, %v5797, -inf
    %5824 = vmax.xlane.f32.xlu0 %v5823
    %v5825 = vpop.xlane.xlu0 %5824
    %v5826 = vsel %vm313, %v5820, -inf
    %5827 = vmax.xlane.f32.xlu0 %v5826
    %v5828 = vpop.xlane.xlu0 %5827
    %v5829 = vsub.f32 %v5797, %v5825
    %v5830 = vsub.f32 %v5820, %v5828
    %v5831 = vmul.f32 %v5829, 1.442695
    %v5832 = vpow.pop %v5831
    %v5833 = vmul.f32 %v5830, 1.442695
    %v5834 = vpow.pop %v5833
    %v5835 = vsel %vm313, %v5832, 0.0
    %5836 = vadd.xlane.f32.xlu0 %v5835
    %v5837 = vpop.xlane.xlu0 %5836
    %v5838 = vsel %vm313, %v5834, 0.0
    %5839 = vadd.xlane.f32.xlu0 %v5838
    %v5840 = vpop.xlane.xlu0 %5839
    %v5841 = vrcp.pop %v5837
    %v5842 = vmul.f32 %v5837, %v5841
    %v5843 = vsub.f32 1.0, %v5842
    %v5844 = vmul.f32 %v5841, %v5843
    %v5845 = vadd.f32 %v5841, %v5844
    %vm5846 = vweird.f32 %v5837
    %vm5847 = vweird.f32 %v5841
    %vm5848 = vmor %vm5846, %vm5847
    %v5849 = vsel %vm5848, %v5841, %v5845
    %v5850 = vand.u32 2147483647, %v5837
    %vm5851 = vcmp.eq.f32.partialorder %v5850, 8.507059e+37
    %v5852 = vand.u32 %v5837, 2147483648
    %v5853 = vor.u32 1.1754944e-38, %v5852
    %v5854 = vsel %vm5851, %v5853, %v5849
    %v5855 = vmul.f32 %v5832, %v5854
    %v5856 = vrcp.pop %v5840
    %v5857 = vmul.f32 %v5840, %v5856
    %v5858 = vsub.f32 1.0, %v5857
    %v5859 = vmul.f32 %v5856, %v5858
    %v5860 = vadd.f32 %v5856, %v5859
    %vm5861 = vweird.f32 %v5840
    %vm5862 = vweird.f32 %v5856
    %vm5863 = vmor %vm5861, %vm5862
    %v5864 = vsel %vm5863, %v5856, %v5860
    %v5865 = vand.u32 2147483647, %v5840
    %vm5866 = vcmp.eq.f32.partialorder %v5865, 8.507059e+37
    %v5867 = vand.u32 %v5840, 2147483648
    %v5868 = vor.u32 1.1754944e-38, %v5867
    %v5869 = vsel %vm5866, %v5868, %v5864
    %v5870 = vmul.f32 %v5834, %v5869
    %v5871 = vpack.c.bf16 %v5855, %v5855
    %v5872 = vpack.c.bf16 %v5870, %v5870
    %5873 = vrot.lane.b32.xlu0 %v5317, 48
    %v5874 = vpop.permute.xlu0 %5873
    %v5876 = vsel %vm313, %v5871, 0
    %v5879 = vsel %vm317, %v5874, 0
    %5881 = vmatpush.bf16.msra.mxu0 0
    %5882 = vmatpush.bf16.msra.mxu0 0
    %5883 = vmatpush.bf16.msra.mxu0 0
    %5884 = vmatpush.bf16.msra.mxu0 0
    %5885 = vmatpush.bf16.msra.mxu0 0
    %5886 = vmatpush.bf16.msra.mxu0 0
    %5887 = vmatpush.bf16.msra.mxu0 0
    %5888 = vmatpush.bf16.msra.mxu0 %v5879
    %5889 = vmatmul.bf16.gmra.mxu0 %v5876
    %v5890 = vpop.f32.mrf.mxu0
    %v5891 = vadd.f32 0.0, %v5890
    %v5892 = vpop.f32.mrf.mxu0
    %5893 = vdwg.mxu0
    %5894 = vrot.lane.b32.xlu0 %v5341, 48
    %v5895 = vpop.permute.xlu0 %5894
    %v5897 = vsel %vm313, %v5872, 0
    %v5900 = vsel %vm317, %v5895, 0
    %5902 = vmatpush.bf16.msra.mxu0 0
    %5903 = vmatpush.bf16.msra.mxu0 0
    %5904 = vmatpush.bf16.msra.mxu0 0
    %5905 = vmatpush.bf16.msra.mxu0 0
    %5906 = vmatpush.bf16.msra.mxu0 0
    %5907 = vmatpush.bf16.msra.mxu0 0
    %5908 = vmatpush.bf16.msra.mxu0 0
    %5909 = vmatpush.bf16.msra.mxu0 %v5900
    %5910 = vmatmul.bf16.gmra.mxu0 %v5897
    %v5911 = vpop.f32.mrf.mxu0
    %v5912 = vadd.f32 0.0, %v5911
    %v5913 = vpop.f32.mrf.mxu0
    %5914 = vdwg.mxu0
    %5915 = vrot.lane.b32.xlu0 %v5209, 32
    %v5916 = vpop.permute.xlu0 %5915
    %5917 = vrot.lane.b32.xlu0 %v5214, 32
    %v5918 = vpop.permute.xlu0 %5917
    %v5920 = vsel %vm571, %v5916, 0
    %v5923 = vsel %vm571, %v5918, 0
    %5925 = vmatpush.bf16.xpose.msra.mxu0 0
    %5926 = vmatpush.bf16.xpose.msra.mxu0 0
    %5927 = vmatpush.bf16.xpose.msra.mxu0 0
    %5928 = vmatpush.bf16.xpose.msra.mxu0 0
    %5929 = vmatpush.bf16.xpose.msra.mxu0 0
    %5930 = vmatpush.bf16.xpose.msra.mxu0 0
    %5931 = vmatpush.bf16.xpose.msra.mxu0 0
    %5932 = vmatpush.bf16.xpose.msra.mxu0 %v5923
    %5933 = vmatmul.bf16.gmra.mxu0 %v5920
    %v5934 = vpop.f32.mrf.mxu0
    %v5935 = vadd.f32 0.0, %v5934
    %v5936 = vpop.f32.mrf.mxu0
    %5937 = vdwg.mxu0
    %5938 = vrot.lane.b32.xlu0 %v5238, 32
    %v5939 = vpop.permute.xlu0 %5938
    %5940 = vrot.lane.b32.xlu0 %v5243, 32
    %v5941 = vpop.permute.xlu0 %5940
    %v5943 = vsel %vm571, %v5939, 0
    %v5946 = vsel %vm571, %v5941, 0
    %5948 = vmatpush.bf16.xpose.msra.mxu0 0
    %5949 = vmatpush.bf16.xpose.msra.mxu0 0
    %5950 = vmatpush.bf16.xpose.msra.mxu0 0
    %5951 = vmatpush.bf16.xpose.msra.mxu0 0
    %5952 = vmatpush.bf16.xpose.msra.mxu0 0
    %5953 = vmatpush.bf16.xpose.msra.mxu0 0
    %5954 = vmatpush.bf16.xpose.msra.mxu0 0
    %5955 = vmatpush.bf16.xpose.msra.mxu0 %v5946
    %5956 = vmatmul.bf16.gmra.mxu0 %v5943
    %v5957 = vpop.f32.mrf.mxu0
    %v5958 = vadd.f32 0.0, %v5957
    %v5959 = vpop.f32.mrf.mxu0
    %5960 = vdwg.mxu0
    %v5961 = vsel %vm313, %v5935, -inf
    %5962 = vmax.xlane.f32.xlu0 %v5961
    %v5963 = vpop.xlane.xlu0 %5962
    %v5964 = vsel %vm313, %v5958, -inf
    %5965 = vmax.xlane.f32.xlu0 %v5964
    %v5966 = vpop.xlane.xlu0 %5965
    %v5967 = vsub.f32 %v5935, %v5963
    %v5968 = vsub.f32 %v5958, %v5966
    %v5969 = vmul.f32 %v5967, 1.442695
    %v5970 = vpow.pop %v5969
    %v5971 = vmul.f32 %v5968, 1.442695
    %v5972 = vpow.pop %v5971
    %v5973 = vsel %vm313, %v5970, 0.0
    %5974 = vadd.xlane.f32.xlu0 %v5973
    %v5975 = vpop.xlane.xlu0 %5974
    %v5976 = vsel %vm313, %v5972, 0.0
    %5977 = vadd.xlane.f32.xlu0 %v5976
    %v5978 = vpop.xlane.xlu0 %5977
    %v5979 = vrcp.pop %v5975
    %v5980 = vmul.f32 %v5975, %v5979
    %v5981 = vsub.f32 1.0, %v5980
    %v5982 = vmul.f32 %v5979, %v5981
    %v5983 = vadd.f32 %v5979, %v5982
    %vm5984 = vweird.f32 %v5975
    %vm5985 = vweird.f32 %v5979
    %vm5986 = vmor %vm5984, %vm5985
    %v5987 = vsel %vm5986, %v5979, %v5983
    %v5988 = vand.u32 2147483647, %v5975
    %vm5989 = vcmp.eq.f32.partialorder %v5988, 8.507059e+37
    %v5990 = vand.u32 %v5975, 2147483648
    %v5991 = vor.u32 1.1754944e-38, %v5990
    %v5992 = vsel %vm5989, %v5991, %v5987
    %v5993 = vmul.f32 %v5970, %v5992
    %v5994 = vrcp.pop %v5978
    %v5995 = vmul.f32 %v5978, %v5994
    %v5996 = vsub.f32 1.0, %v5995
    %v5997 = vmul.f32 %v5994, %v5996
    %v5998 = vadd.f32 %v5994, %v5997
    %vm5999 = vweird.f32 %v5978
    %vm6000 = vweird.f32 %v5994
    %vm6001 = vmor %vm5999, %vm6000
    %v6002 = vsel %vm6001, %v5994, %v5998
    %v6003 = vand.u32 2147483647, %v5978
    %vm6004 = vcmp.eq.f32.partialorder %v6003, 8.507059e+37
    %v6005 = vand.u32 %v5978, 2147483648
    %v6006 = vor.u32 1.1754944e-38, %v6005
    %v6007 = vsel %vm6004, %v6006, %v6002
    %v6008 = vmul.f32 %v5972, %v6007
    %v6009 = vpack.c.bf16 %v5993, %v5993
    %v6010 = vpack.c.bf16 %v6008, %v6008
    %6011 = vrot.lane.b32.xlu0 %v5317, 32
    %v6012 = vpop.permute.xlu0 %6011
    %v6014 = vsel %vm313, %v6009, 0
    %v6017 = vsel %vm317, %v6012, 0
    %6019 = vmatpush.bf16.msra.mxu0 0
    %6020 = vmatpush.bf16.msra.mxu0 0
    %6021 = vmatpush.bf16.msra.mxu0 0
    %6022 = vmatpush.bf16.msra.mxu0 0
    %6023 = vmatpush.bf16.msra.mxu0 0
    %6024 = vmatpush.bf16.msra.mxu0 0
    %6025 = vmatpush.bf16.msra.mxu0 0
    %6026 = vmatpush.bf16.msra.mxu0 %v6017
    %6027 = vmatmul.bf16.gmra.mxu0 %v6014
    %v6028 = vpop.f32.mrf.mxu0
    %v6029 = vadd.f32 0.0, %v6028
    %v6030 = vpop.f32.mrf.mxu0
    %6031 = vdwg.mxu0
    %6032 = vrot.lane.b32.xlu0 %v5341, 32
    %v6033 = vpop.permute.xlu0 %6032
    %v6035 = vsel %vm313, %v6010, 0
    %v6038 = vsel %vm317, %v6033, 0
    %6040 = vmatpush.bf16.msra.mxu0 0
    %6041 = vmatpush.bf16.msra.mxu0 0
    %6042 = vmatpush.bf16.msra.mxu0 0
    %6043 = vmatpush.bf16.msra.mxu0 0
    %6044 = vmatpush.bf16.msra.mxu0 0
    %6045 = vmatpush.bf16.msra.mxu0 0
    %6046 = vmatpush.bf16.msra.mxu0 0
    %6047 = vmatpush.bf16.msra.mxu0 %v6038
    %6048 = vmatmul.bf16.gmra.mxu0 %v6035
    %v6049 = vpop.f32.mrf.mxu0
    %v6050 = vadd.f32 0.0, %v6049
    %v6051 = vpop.f32.mrf.mxu0
    %6052 = vdwg.mxu0
    %6053 = vrot.lane.b32.xlu0 %v5209, 16
    %v6054 = vpop.permute.xlu0 %6053
    %6055 = vrot.lane.b32.xlu0 %v5214, 16
    %v6056 = vpop.permute.xlu0 %6055
    %v6058 = vsel %vm571, %v6054, 0
    %v6061 = vsel %vm571, %v6056, 0
    %6063 = vmatpush.bf16.xpose.msra.mxu0 0
    %6064 = vmatpush.bf16.xpose.msra.mxu0 0
    %6065 = vmatpush.bf16.xpose.msra.mxu0 0
    %6066 = vmatpush.bf16.xpose.msra.mxu0 0
    %6067 = vmatpush.bf16.xpose.msra.mxu0 0
    %6068 = vmatpush.bf16.xpose.msra.mxu0 0
    %6069 = vmatpush.bf16.xpose.msra.mxu0 0
    %6070 = vmatpush.bf16.xpose.msra.mxu0 %v6061
    %6071 = vmatmul.bf16.gmra.mxu0 %v6058
    %v6072 = vpop.f32.mrf.mxu0
    %v6073 = vadd.f32 0.0, %v6072
    %v6074 = vpop.f32.mrf.mxu0
    %6075 = vdwg.mxu0
    %6076 = vrot.lane.b32.xlu0 %v5238, 16
    %v6077 = vpop.permute.xlu0 %6076
    %6078 = vrot.lane.b32.xlu0 %v5243, 16
    %v6079 = vpop.permute.xlu0 %6078
    %v6081 = vsel %vm571, %v6077, 0
    %v6084 = vsel %vm571, %v6079, 0
    %6086 = vmatpush.bf16.xpose.msra.mxu0 0
    %6087 = vmatpush.bf16.xpose.msra.mxu0 0
    %6088 = vmatpush.bf16.xpose.msra.mxu0 0
    %6089 = vmatpush.bf16.xpose.msra.mxu0 0
    %6090 = vmatpush.bf16.xpose.msra.mxu0 0
    %6091 = vmatpush.bf16.xpose.msra.mxu0 0
    %6092 = vmatpush.bf16.xpose.msra.mxu0 0
    %6093 = vmatpush.bf16.xpose.msra.mxu0 %v6084
    %6094 = vmatmul.bf16.gmra.mxu0 %v6081
    %v6095 = vpop.f32.mrf.mxu0
    %v6096 = vadd.f32 0.0, %v6095
    %v6097 = vpop.f32.mrf.mxu0
    %6098 = vdwg.mxu0
    %v6099 = vsel %vm313, %v6073, -inf
    %6100 = vmax.xlane.f32.xlu0 %v6099
    %v6101 = vpop.xlane.xlu0 %6100
    %v6102 = vsel %vm313, %v6096, -inf
    %6103 = vmax.xlane.f32.xlu0 %v6102
    %v6104 = vpop.xlane.xlu0 %6103
    %v6105 = vsub.f32 %v6073, %v6101
    %v6106 = vsub.f32 %v6096, %v6104
    %v6107 = vmul.f32 %v6105, 1.442695
    %v6108 = vpow.pop %v6107
    %v6109 = vmul.f32 %v6106, 1.442695
    %v6110 = vpow.pop %v6109
    %v6111 = vsel %vm313, %v6108, 0.0
    %6112 = vadd.xlane.f32.xlu0 %v6111
    %v6113 = vpop.xlane.xlu0 %6112
    %v6114 = vsel %vm313, %v6110, 0.0
    %6115 = vadd.xlane.f32.xlu0 %v6114
    %v6116 = vpop.xlane.xlu0 %6115
    %v6117 = vrcp.pop %v6113
    %v6118 = vmul.f32 %v6113, %v6117
    %v6119 = vsub.f32 1.0, %v6118
    %v6120 = vmul.f32 %v6117, %v6119
    %v6121 = vadd.f32 %v6117, %v6120
    %vm6122 = vweird.f32 %v6113
    %vm6123 = vweird.f32 %v6117
    %vm6124 = vmor %vm6122, %vm6123
    %v6125 = vsel %vm6124, %v6117, %v6121
    %v6126 = vand.u32 2147483647, %v6113
    %vm6127 = vcmp.eq.f32.partialorder %v6126, 8.507059e+37
    %v6128 = vand.u32 %v6113, 2147483648
    %v6129 = vor.u32 1.1754944e-38, %v6128
    %v6130 = vsel %vm6127, %v6129, %v6125
    %v6131 = vmul.f32 %v6108, %v6130
    %v6132 = vrcp.pop %v6116
    %v6133 = vmul.f32 %v6116, %v6132
    %v6134 = vsub.f32 1.0, %v6133
    %v6135 = vmul.f32 %v6132, %v6134
    %v6136 = vadd.f32 %v6132, %v6135
    %vm6137 = vweird.f32 %v6116
    %vm6138 = vweird.f32 %v6132
    %vm6139 = vmor %vm6137, %vm6138
    %v6140 = vsel %vm6139, %v6132, %v6136
    %v6141 = vand.u32 2147483647, %v6116
    %vm6142 = vcmp.eq.f32.partialorder %v6141, 8.507059e+37
    %v6143 = vand.u32 %v6116, 2147483648
    %v6144 = vor.u32 1.1754944e-38, %v6143
    %v6145 = vsel %vm6142, %v6144, %v6140
    %v6146 = vmul.f32 %v6110, %v6145
    %v6147 = vpack.c.bf16 %v6131, %v6131
    %v6148 = vpack.c.bf16 %v6146, %v6146
    %6149 = vrot.lane.b32.xlu0 %v5317, 16
    %v6150 = vpop.permute.xlu0 %6149
    %v6152 = vsel %vm313, %v6147, 0
    %v6155 = vsel %vm317, %v6150, 0
    %6157 = vmatpush.bf16.msra.mxu0 0
    %6158 = vmatpush.bf16.msra.mxu0 0
    %6159 = vmatpush.bf16.msra.mxu0 0
    %6160 = vmatpush.bf16.msra.mxu0 0
    %6161 = vmatpush.bf16.msra.mxu0 0
    %6162 = vmatpush.bf16.msra.mxu0 0
    %6163 = vmatpush.bf16.msra.mxu0 0
    %6164 = vmatpush.bf16.msra.mxu0 %v6155
    %6165 = vmatmul.bf16.gmra.mxu0 %v6152
    %v6166 = vpop.f32.mrf.mxu0
    %v6167 = vadd.f32 0.0, %v6166
    %v6168 = vpop.f32.mrf.mxu0
    %6169 = vdwg.mxu0
    %6170 = vrot.lane.b32.xlu0 %v5341, 16
    %v6171 = vpop.permute.xlu0 %6170
    %v6173 = vsel %vm313, %v6148, 0
    %v6176 = vsel %vm317, %v6171, 0
    %6178 = vmatpush.bf16.msra.mxu0 0
    %6179 = vmatpush.bf16.msra.mxu0 0
    %6180 = vmatpush.bf16.msra.mxu0 0
    %6181 = vmatpush.bf16.msra.mxu0 0
    %6182 = vmatpush.bf16.msra.mxu0 0
    %6183 = vmatpush.bf16.msra.mxu0 0
    %6184 = vmatpush.bf16.msra.mxu0 0
    %6185 = vmatpush.bf16.msra.mxu0 %v6176
    %6186 = vmatmul.bf16.gmra.mxu0 %v6173
    %v6187 = vpop.f32.mrf.mxu0
    %v6188 = vadd.f32 0.0, %v6187
    %v6189 = vpop.f32.mrf.mxu0
    %6190 = vdwg.mxu0
    %6193 = vrot.lane.b32.xlu0 %v5336, 16
    %v6194 = vpop.permute.xlu0 %6193
    %6195 = vrot.lane.b32.xlu0 %v5360, 16
    %v6196 = vpop.permute.xlu0 %6195
    %6201 = vrot.lane.b32.xlu0 %v5477, 32
    %v6202 = vpop.permute.xlu0 %6201
    %6203 = vrot.lane.b32.xlu0 %v5498, 32
    %v6204 = vpop.permute.xlu0 %6203
    %6209 = vrot.lane.b32.xlu0 %v5615, 48
    %v6210 = vpop.permute.xlu0 %6209
    %6211 = vrot.lane.b32.xlu0 %v5636, 48
    %v6212 = vpop.permute.xlu0 %6211
    %6217 = vrot.lane.b32.xlu0 %v5753, 64
    %v6218 = vpop.permute.xlu0 %6217
    %6219 = vrot.lane.b32.xlu0 %v5774, 64
    %v6220 = vpop.permute.xlu0 %6219
    %6225 = vrot.lane.b32.xlu0 %v5891, 80
    %v6226 = vpop.permute.xlu0 %6225
    %6227 = vrot.lane.b32.xlu0 %v5912, 80
    %v6228 = vpop.permute.xlu0 %6227
    %6233 = vrot.lane.b32.xlu0 %v6029, 96
    %v6234 = vpop.permute.xlu0 %6233
    %6235 = vrot.lane.b32.xlu0 %v6050, 96
    %v6236 = vpop.permute.xlu0 %6235
    %6241 = vrot.lane.b32.xlu0 %v6167, 112
    %v6242 = vpop.permute.xlu0 %6241
    %6243 = vrot.lane.b32.xlu0 %v6188, 112
    %v6244 = vpop.permute.xlu0 %6243
    %v6247 = vsel %vm571, %v5185, %v6194
    %v6248 = vsel %vm571, %v5204, %v6196
    %v6249 = vsel %vm1740, %v6247, %v6202
    %v6250 = vsel %vm1740, %v6248, %v6204
    %v6251 = vsel %vm1743, %v6249, %v6210
    %v6252 = vsel %vm1743, %v6250, %v6212
    %v6253 = vsel %vm1746, %v6251, %v6218
    %v6254 = vsel %vm1746, %v6252, %v6220
    %v6255 = vsel %vm1749, %v6253, %v6226
    %v6256 = vsel %vm1749, %v6254, %v6228
    %v6257 = vsel %vm1752, %v6255, %v6234
    %v6258 = vsel %vm1752, %v6256, %v6236
    %v6259 = vsel %vm1755, %v6257, %v6242
    %v6260 = vsel %vm1755, %v6258, %v6244
    %v6261 = vpack.c.bf16 %v6260, %v6259
    %s6262 = scalar_lea.vmem [#allocation9], 128
    %v6263 = vld [vmem:[%s6262] sm:$0xf]
    %v6264 = vld [vmem:[%s6262 + $0x4] sm:$0xf]
    %v6265 = vld [vmem:[%s6262 + $0x8] sm:$0xf]
    %v6266 = vld [vmem:[%s6262 + $0xc] sm:$0xf]
    %v6267 = vld [vmem:[%s6262 + $0x10] sm:$0xf]
    %v6268 = vld [vmem:[%s6262 + $0x14] sm:$0xf]
    %v6269 = vld [vmem:[%s6262 + $0x18] sm:$0xf]
    %v6270 = vld [vmem:[%s6262 + $0x1c] sm:$0xf]
    %v6271 = vld [vmem:[%s6262 + $0x20] sm:$0xf]
    %v6272 = vld [vmem:[%s6262 + $0x24] sm:$0xf]
    %v6273 = vld [vmem:[%s6262 + $0x28] sm:$0xf]
    %v6274 = vld [vmem:[%s6262 + $0x2c] sm:$0xf]
    %v6275 = vld [vmem:[%s6262 + $0x30] sm:$0xf]
    %v6276 = vld [vmem:[%s6262 + $0x34] sm:$0xf]
    %v6277 = vld [vmem:[%s6262 + $0x38] sm:$0xf]
    %v6278 = vld [vmem:[%s6262 + $0x3c] sm:$0xf]
    %s6279 = scalar_lea.vmem [#allocation11], 2
    %v6280 = vld [vmem:[%s6279] sm:$0x1]
    %v6282 = vperm.slane %v6280, 0
    %v6300 = vunpack.c.l.b16 %v6263
    %v6301 = vunpack.c.l.b16 %v6264
    %v6302 = vunpack.c.l.b16 %v6265
    %v6303 = vunpack.c.l.b16 %v6266
    %v6304 = vunpack.c.l.b16 %v6267
    %v6305 = vunpack.c.l.b16 %v6268
    %v6306 = vunpack.c.l.b16 %v6269
    %v6307 = vunpack.c.l.b16 %v6270
    %v6308 = vunpack.c.l.b16 %v6271
    %v6309 = vunpack.c.l.b16 %v6272
    %v6310 = vunpack.c.l.b16 %v6273
    %v6311 = vunpack.c.l.b16 %v6274
    %v6312 = vunpack.c.l.b16 %v6275
    %v6313 = vunpack.c.l.b16 %v6276
    %v6314 = vunpack.c.l.b16 %v6277
    %v6315 = vunpack.c.l.b16 %v6278
    %v6316 = vpack.c.b16 %v6301, %v6300
    %v6317 = vpack.c.b16 %v6303, %v6302
    %v6318 = vpack.c.b16 %v6305, %v6304
    %v6319 = vpack.c.b16 %v6307, %v6306
    %v6320 = vpack.c.b16 %v6309, %v6308
    %v6321 = vpack.c.b16 %v6311, %v6310
    %v6322 = vpack.c.b16 %v6313, %v6312
    %v6323 = vpack.c.b16 %v6315, %v6314
    %6332 = vmatpush.bf16.msra.mxu0 %v6323
    %6333 = vmatpush.bf16.msra.mxu0 %v6322
    %6334 = vmatpush.bf16.msra.mxu0 %v6321
    %6335 = vmatpush.bf16.msra.mxu0 %v6320
    %6336 = vmatpush.bf16.msra.mxu0 %v6319
    %6337 = vmatpush.bf16.msra.mxu0 %v6318
    %6338 = vmatpush.bf16.msra.mxu0 %v6317
    %6339 = vmatpush.bf16.msra.mxu0 %v6316
    %6340 = vmatmul.bf16.gmra.mxu0 %v6261
    %v6341 = vpop.f32.mrf.mxu0
    %v6342 = vadd.f32 %v6282, %v6341
    %v6343 = vpop.f32.mrf.mxu0
    %v6344 = vadd.f32 %v6282, %v6343
    %6345 = vdwg.mxu0
    %v6346 = vadd.f32 %v4858, %v6342
    %v6347 = vadd.f32 %v4859, %v6344
    %s6348 = scalar_lea.vmem [#allocation12], 2
    %v6349 = vld [vmem:[%s6348] sm:$0x1]
    %s6350 = scalar_lea.vmem [#allocation14], 2
    %v6351 = vld [vmem:[%s6350] sm:$0x1]
    %6352 = vadd.xlane.f32.xlu0 %v6346
    %v6353 = vpop.xlane.xlu0 %6352
    %6354 = vadd.xlane.f32.xlu0 %v6347
    %v6355 = vpop.xlane.xlu0 %6354
    %v6356 = vmul.f32 %v6353, %v1855
    %v6357 = vmul.f32 %v6355, %v1855
    %v6358 = vsub.f32 %v6346, %v6356
    %v6359 = vsub.f32 %v6347, %v6357
    %v6360 = vmul.f32 %v6358, %v6358
    %v6361 = vmul.f32 %v6359, %v6359
    %6362 = vadd.xlane.f32.xlu0 %v6360
    %v6363 = vpop.xlane.xlu0 %6362
    %6364 = vadd.xlane.f32.xlu0 %v6361
    %v6365 = vpop.xlane.xlu0 %6364
    %v6366 = vmul.f32 %v6363, %v1855
    %v6367 = vmul.f32 %v6365, %v1855
    %v6368 = vadd.f32 %v6366, 1e-12
    %v6369 = vadd.f32 %v6367, 1e-12
    %v6370 = vrsqrt.pop %v6368
    %v6371 = vmul.f32 %v6370, %v6368
    %v6372 = vmul.f32 %v6371, %v6370
    %v6373 = vmul.f32 0.5, %v6372
    %v6374 = vsub.f32 1.5, %v6373
    %v6375 = vmul.f32 %v6370, %v6374
    %vm6376 = vweird.f32 %v6368
    %vm6377 = vweird.f32 %v6370
    %vm6378 = vmor %vm6376, %vm6377
    %v6379 = vsel %vm6378, %v6370, %v6375
    %v6380 = vrsqrt.pop %v6369
    %v6381 = vmul.f32 %v6380, %v6369
    %v6382 = vmul.f32 %v6381, %v6380
    %v6383 = vmul.f32 0.5, %v6382
    %v6384 = vsub.f32 1.5, %v6383
    %v6385 = vmul.f32 %v6380, %v6384
    %vm6386 = vweird.f32 %v6369
    %vm6387 = vweird.f32 %v6380
    %vm6388 = vmor %vm6386, %vm6387
    %v6389 = vsel %vm6388, %v6380, %v6385
    %v6390 = vmul.f32 %v6358, %v6379
    %v6391 = vmul.f32 %v6359, %v6389
    %v6393 = vperm.slane %v6349, 0
    %v6395 = vmul.f32 %v6390, %v6393
    %v6396 = vmul.f32 %v6391, %v6393
    %v6398 = vperm.slane %v6351, 0
    %v6400 = vadd.f32 %v6395, %v6398
    %v6401 = vadd.f32 %v6396, %v6398
    %v6402 = vpack.c.bf16 %v6401, %v6400
    %s6403 = scalar_lea.vmem [#allocation15], 512
    %v6404 = vld [vmem:[%s6403] sm:$0xff]
    %v6405 = vld [vmem:[%s6403 + $0x8] sm:$0xff]
    %v6406 = vld [vmem:[%s6403 + $0x10] sm:$0xff]
    %v6407 = vld [vmem:[%s6403 + $0x18] sm:$0xff]
    %v6408 = vld [vmem:[%s6403 + $0x20] sm:$0xff]
    %v6409 = vld [vmem:[%s6403 + $0x28] sm:$0xff]
    %v6410 = vld [vmem:[%s6403 + $0x30] sm:$0xff]
    %v6411 = vld [vmem:[%s6403 + $0x38] sm:$0xff]
    %v6412 = vld [vmem:[%s6403 + $0x40] sm:$0xff]
    %v6413 = vld [vmem:[%s6403 + $0x48] sm:$0xff]
    %v6414 = vld [vmem:[%s6403 + $0x50] sm:$0xff]
    %v6415 = vld [vmem:[%s6403 + $0x58] sm:$0xff]
    %v6416 = vld [vmem:[%s6403 + $0x60] sm:$0xff]
    %v6417 = vld [vmem:[%s6403 + $0x68] sm:$0xff]
    %v6418 = vld [vmem:[%s6403 + $0x70] sm:$0xff]
    %v6419 = vld [vmem:[%s6403 + $0x78] sm:$0xff]
    %v6420 = vld [vmem:[%s6403 + $0x80] sm:$0xff]
    %v6421 = vld [vmem:[%s6403 + $0x88] sm:$0xff]
    %v6422 = vld [vmem:[%s6403 + $0x90] sm:$0xff]
    %v6423 = vld [vmem:[%s6403 + $0x98] sm:$0xff]
    %v6424 = vld [vmem:[%s6403 + $0xa0] sm:$0xff]
    %v6425 = vld [vmem:[%s6403 + $0xa8] sm:$0xff]
    %v6426 = vld [vmem:[%s6403 + $0xb0] sm:$0xff]
    %v6427 = vld [vmem:[%s6403 + $0xb8] sm:$0xff]
    %v6428 = vld [vmem:[%s6403 + $0xc0] sm:$0xff]
    %v6429 = vld [vmem:[%s6403 + $0xc8] sm:$0xff]
    %v6430 = vld [vmem:[%s6403 + $0xd0] sm:$0xff]
    %v6431 = vld [vmem:[%s6403 + $0xd8] sm:$0xff]
    %v6432 = vld [vmem:[%s6403 + $0xe0] sm:$0xff]
    %v6433 = vld [vmem:[%s6403 + $0xe8] sm:$0xff]
    %v6434 = vld [vmem:[%s6403 + $0xf0] sm:$0xff]
    %v6435 = vld [vmem:[%s6403 + $0xf8] sm:$0xff]
    %s6436 = scalar_lea.vmem %s10, 8
    %v6437 = vld [vmem:[%s6436] sm:$0xf]
    %v6439 = vperm.slane %v6437, 0
    %v6440 = vperm.slane %v6437, 1
    %v6441 = vperm.slane %v6437, 2
    %v6442 = vperm.slane %v6437, 3
    %v6479 = vunpack.c.l.b16 %v6404
    %v6480 = vunpack.c.h.b16 %v6404
    %v6481 = vunpack.c.l.b16 %v6405
    %v6482 = vunpack.c.h.b16 %v6405
    %v6483 = vunpack.c.l.b16 %v6406
    %v6484 = vunpack.c.h.b16 %v6406
    %v6485 = vunpack.c.l.b16 %v6407
    %v6486 = vunpack.c.h.b16 %v6407
    %v6487 = vunpack.c.l.b16 %v6408
    %v6488 = vunpack.c.h.b16 %v6408
    %v6489 = vunpack.c.l.b16 %v6409
    %v6490 = vunpack.c.h.b16 %v6409
    %v6491 = vunpack.c.l.b16 %v6410
    %v6492 = vunpack.c.h.b16 %v6410
    %v6493 = vunpack.c.l.b16 %v6411
    %v6494 = vunpack.c.h.b16 %v6411
    %v6495 = vunpack.c.l.b16 %v6412
    %v6496 = vunpack.c.h.b16 %v6412
    %v6497 = vunpack.c.l.b16 %v6413
    %v6498 = vunpack.c.h.b16 %v6413
    %v6499 = vunpack.c.l.b16 %v6414
    %v6500 = vunpack.c.h.b16 %v6414
    %v6501 = vunpack.c.l.b16 %v6415
    %v6502 = vunpack.c.h.b16 %v6415
    %v6503 = vunpack.c.l.b16 %v6416
    %v6504 = vunpack.c.h.b16 %v6416
    %v6505 = vunpack.c.l.b16 %v6417
    %v6506 = vunpack.c.h.b16 %v6417
    %v6507 = vunpack.c.l.b16 %v6418
    %v6508 = vunpack.c.h.b16 %v6418
    %v6509 = vunpack.c.l.b16 %v6419
    %v6510 = vunpack.c.h.b16 %v6419
    %v6511 = vunpack.c.l.b16 %v6420
    %v6512 = vunpack.c.h.b16 %v6420
    %v6513 = vunpack.c.l.b16 %v6421
    %v6514 = vunpack.c.h.b16 %v6421
    %v6515 = vunpack.c.l.b16 %v6422
    %v6516 = vunpack.c.h.b16 %v6422
    %v6517 = vunpack.c.l.b16 %v6423
    %v6518 = vunpack.c.h.b16 %v6423
    %v6519 = vunpack.c.l.b16 %v6424
    %v6520 = vunpack.c.h.b16 %v6424
    %v6521 = vunpack.c.l.b16 %v6425
    %v6522 = vunpack.c.h.b16 %v6425
    %v6523 = vunpack.c.l.b16 %v6426
    %v6524 = vunpack.c.h.b16 %v6426
    %v6525 = vunpack.c.l.b16 %v6427
    %v6526 = vunpack.c.h.b16 %v6427
    %v6527 = vunpack.c.l.b16 %v6428
    %v6528 = vunpack.c.h.b16 %v6428
    %v6529 = vunpack.c.l.b16 %v6429
    %v6530 = vunpack.c.h.b16 %v6429
    %v6531 = vunpack.c.l.b16 %v6430
    %v6532 = vunpack.c.h.b16 %v6430
    %v6533 = vunpack.c.l.b16 %v6431
    %v6534 = vunpack.c.h.b16 %v6431
    %v6535 = vunpack.c.l.b16 %v6432
    %v6536 = vunpack.c.h.b16 %v6432
    %v6537 = vunpack.c.l.b16 %v6433
    %v6538 = vunpack.c.h.b16 %v6433
    %v6539 = vunpack.c.l.b16 %v6434
    %v6540 = vunpack.c.h.b16 %v6434
    %v6541 = vunpack.c.l.b16 %v6435
    %v6542 = vunpack.c.h.b16 %v6435
    %v6543 = vpack.c.b16 %v6483, %v6479
    %v6544 = vpack.c.b16 %v6484, %v6480
    %v6545 = vpack.c.b16 %v6485, %v6481
    %v6546 = vpack.c.b16 %v6486, %v6482
    %v6547 = vpack.c.b16 %v6491, %v6487
    %v6548 = vpack.c.b16 %v6492, %v6488
    %v6549 = vpack.c.b16 %v6493, %v6489
    %v6550 = vpack.c.b16 %v6494, %v6490
    %v6551 = vpack.c.b16 %v6499, %v6495
    %v6552 = vpack.c.b16 %v6500, %v6496
    %v6553 = vpack.c.b16 %v6501, %v6497
    %v6554 = vpack.c.b16 %v6502, %v6498
    %v6555 = vpack.c.b16 %v6507, %v6503
    %v6556 = vpack.c.b16 %v6508, %v6504
    %v6557 = vpack.c.b16 %v6509, %v6505
    %v6558 = vpack.c.b16 %v6510, %v6506
    %v6559 = vpack.c.b16 %v6515, %v6511
    %v6560 = vpack.c.b16 %v6516, %v6512
    %v6561 = vpack.c.b16 %v6517, %v6513
    %v6562 = vpack.c.b16 %v6518, %v6514
    %v6563 = vpack.c.b16 %v6523, %v6519
    %v6564 = vpack.c.b16 %v6524, %v6520
    %v6565 = vpack.c.b16 %v6525, %v6521
    %v6566 = vpack.c.b16 %v6526, %v6522
    %v6567 = vpack.c.b16 %v6531, %v6527
    %v6568 = vpack.c.b16 %v6532, %v6528
    %v6569 = vpack.c.b16 %v6533, %v6529
    %v6570 = vpack.c.b16 %v6534, %v6530
    %v6571 = vpack.c.b16 %v6539, %v6535
    %v6572 = vpack.c.b16 %v6540, %v6536
    %v6573 = vpack.c.b16 %v6541, %v6537
    %v6574 = vpack.c.b16 %v6542, %v6538
    %6607 = vmatpush.bf16.msra.mxu0 %v6571
    %6608 = vmatpush.bf16.msra.mxu0 %v6567
    %6609 = vmatpush.bf16.msra.mxu0 %v6563
    %6610 = vmatpush.bf16.msra.mxu0 %v6559
    %6611 = vmatpush.bf16.msra.mxu0 %v6555
    %6612 = vmatpush.bf16.msra.mxu0 %v6551
    %6613 = vmatpush.bf16.msra.mxu0 %v6547
    %6614 = vmatpush.bf16.msra.mxu0 %v6543
    %6615 = vmatmul.bf16.gmra.mxu0 %v6402
    %v6616 = vpop.f32.mrf.mxu0
    %v6617 = vadd.f32 %v6439, %v6616
    %v6618 = vpop.f32.mrf.mxu0
    %v6619 = vadd.f32 %v6439, %v6618
    %6620 = vdwg.mxu0
    %6621 = vmatpush.bf16.msra.mxu0 %v6572
    %6622 = vmatpush.bf16.msra.mxu0 %v6568
    %6623 = vmatpush.bf16.msra.mxu0 %v6564
    %6624 = vmatpush.bf16.msra.mxu0 %v6560
    %6625 = vmatpush.bf16.msra.mxu0 %v6556
    %6626 = vmatpush.bf16.msra.mxu0 %v6552
    %6627 = vmatpush.bf16.msra.mxu0 %v6548
    %6628 = vmatpush.bf16.msra.mxu0 %v6544
    %6629 = vmatmul.bf16.gmra.mxu0 %v6402
    %v6630 = vpop.f32.mrf.mxu0
    %v6631 = vadd.f32 %v6440, %v6630
    %v6632 = vpop.f32.mrf.mxu0
    %v6633 = vadd.f32 %v6440, %v6632
    %6634 = vdwg.mxu0
    %6635 = vmatpush.bf16.msra.mxu0 %v6573
    %6636 = vmatpush.bf16.msra.mxu0 %v6569
    %6637 = vmatpush.bf16.msra.mxu0 %v6565
    %6638 = vmatpush.bf16.msra.mxu0 %v6561
    %6639 = vmatpush.bf16.msra.mxu0 %v6557
    %6640 = vmatpush.bf16.msra.mxu0 %v6553
    %6641 = vmatpush.bf16.msra.mxu0 %v6549
    %6642 = vmatpush.bf16.msra.mxu0 %v6545
    %6643 = vmatmul.bf16.gmra.mxu0 %v6402
    %v6644 = vpop.f32.mrf.mxu0
    %v6645 = vadd.f32 %v6441, %v6644
    %v6646 = vpop.f32.mrf.mxu0
    %v6647 = vadd.f32 %v6441, %v6646
    %6648 = vdwg.mxu0
    %6649 = vmatpush.bf16.msra.mxu0 %v6574
    %6650 = vmatpush.bf16.msra.mxu0 %v6570
    %6651 = vmatpush.bf16.msra.mxu0 %v6566
    %6652 = vmatpush.bf16.msra.mxu0 %v6562
    %6653 = vmatpush.bf16.msra.mxu0 %v6558
    %6654 = vmatpush.bf16.msra.mxu0 %v6554
    %6655 = vmatpush.bf16.msra.mxu0 %v6550
    %6656 = vmatpush.bf16.msra.mxu0 %v6546
    %6657 = vmatmul.bf16.gmra.mxu0 %v6402
    %v6658 = vpop.f32.mrf.mxu0
    %v6659 = vadd.f32 %v6442, %v6658
    %v6660 = vpop.f32.mrf.mxu0
    %v6661 = vadd.f32 %v6442, %v6660
    %6662 = vdwg.mxu0
    %v6663 = vmul.f32 %v6617, %v6617
    %v6664 = vmul.f32 %v6631, %v6631
    %v6665 = vmul.f32 %v6645, %v6645
    %v6666 = vmul.f32 %v6659, %v6659
    %v6667 = vmul.f32 %v6619, %v6619
    %v6668 = vmul.f32 %v6633, %v6633
    %v6669 = vmul.f32 %v6647, %v6647
    %v6670 = vmul.f32 %v6661, %v6661
    %v6671 = vmul.f32 %v6617, %v6663
    %v6672 = vmul.f32 %v6631, %v6664
    %v6673 = vmul.f32 %v6645, %v6665
    %v6674 = vmul.f32 %v6659, %v6666
    %v6675 = vmul.f32 %v6619, %v6667
    %v6676 = vmul.f32 %v6633, %v6668
    %v6677 = vmul.f32 %v6647, %v6669
    %v6678 = vmul.f32 %v6661, %v6670
    %v6679 = vmul.f32 %v6671, 0.044715
    %v6680 = vmul.f32 %v6672, 0.044715
    %v6681 = vmul.f32 %v6673, 0.044715
    %v6682 = vmul.f32 %v6674, 0.044715
    %v6683 = vmul.f32 %v6675, 0.044715
    %v6684 = vmul.f32 %v6676, 0.044715
    %v6685 = vmul.f32 %v6677, 0.044715
    %v6686 = vmul.f32 %v6678, 0.044715
    %v6687 = vadd.f32 %v6617, %v6679
    %v6688 = vadd.f32 %v6631, %v6680
    %v6689 = vadd.f32 %v6645, %v6681
    %v6690 = vadd.f32 %v6659, %v6682
    %v6691 = vadd.f32 %v6619, %v6683
    %v6692 = vadd.f32 %v6633, %v6684
    %v6693 = vadd.f32 %v6647, %v6685
    %v6694 = vadd.f32 %v6661, %v6686
    %v6695 = vmul.f32 %v6687, 0.7978846
    %v6696 = vmul.f32 %v6688, 0.7978846
    %v6697 = vmul.f32 %v6689, 0.7978846
    %v6698 = vmul.f32 %v6690, 0.7978846
    %v6699 = vmul.f32 %v6691, 0.7978846
    %v6700 = vmul.f32 %v6692, 0.7978846
    %v6701 = vmul.f32 %v6693, 0.7978846
    %v6702 = vmul.f32 %v6694, 0.7978846
    %v6703 = vtanh.pop %v6695
    %v6704 = vtanh.pop %v6696
    %v6705 = vtanh.pop %v6697
    %v6706 = vtanh.pop %v6698
    %v6707 = vtanh.pop %v6699
    %v6708 = vtanh.pop %v6700
    %v6709 = vtanh.pop %v6701
    %v6710 = vtanh.pop %v6702
    %v6711 = vadd.f32 %v6703, 1.0
    %v6712 = vadd.f32 %v6704, 1.0
    %v6713 = vadd.f32 %v6705, 1.0
    %v6714 = vadd.f32 %v6706, 1.0
    %v6715 = vadd.f32 %v6707, 1.0
    %v6716 = vadd.f32 %v6708, 1.0
    %v6717 = vadd.f32 %v6709, 1.0
    %v6718 = vadd.f32 %v6710, 1.0
    %v6719 = vmul.f32 %v6711, 0.5
    %v6720 = vmul.f32 %v6712, 0.5
    %v6721 = vmul.f32 %v6713, 0.5
    %v6722 = vmul.f32 %v6714, 0.5
    %v6723 = vmul.f32 %v6715, 0.5
    %v6724 = vmul.f32 %v6716, 0.5
    %v6725 = vmul.f32 %v6717, 0.5
    %v6726 = vmul.f32 %v6718, 0.5
    %v6727 = vmul.f32 %v6617, %v6719
    %v6728 = vmul.f32 %v6631, %v6720
    %v6729 = vmul.f32 %v6645, %v6721
    %v6730 = vmul.f32 %v6659, %v6722
    %v6731 = vmul.f32 %v6619, %v6723
    %v6732 = vmul.f32 %v6633, %v6724
    %v6733 = vmul.f32 %v6647, %v6725
    %v6734 = vmul.f32 %v6661, %v6726
    %v6735 = vpack.c.bf16 %v6731, %v6727
    %v6736 = vpack.c.bf16 %v6732, %v6728
    %v6737 = vpack.c.bf16 %v6733, %v6729
    %v6738 = vpack.c.bf16 %v6734, %v6730
    %s6739 = scalar_lea.vmem [#allocation17], 512
    %v6740 = vld [vmem:[%s6739] sm:$0xf]
    %v6741 = vld [vmem:[%s6739 + $0x4] sm:$0xf]
    %v6742 = vld [vmem:[%s6739 + $0x8] sm:$0xf]
    %v6743 = vld [vmem:[%s6739 + $0xc] sm:$0xf]
    %v6744 = vld [vmem:[%s6739 + $0x10] sm:$0xf]
    %v6745 = vld [vmem:[%s6739 + $0x14] sm:$0xf]
    %v6746 = vld [vmem:[%s6739 + $0x18] sm:$0xf]
    %v6747 = vld [vmem:[%s6739 + $0x1c] sm:$0xf]
    %v6748 = vld [vmem:[%s6739 + $0x20] sm:$0xf]
    %v6749 = vld [vmem:[%s6739 + $0x24] sm:$0xf]
    %v6750 = vld [vmem:[%s6739 + $0x28] sm:$0xf]
    %v6751 = vld [vmem:[%s6739 + $0x2c] sm:$0xf]
    %v6752 = vld [vmem:[%s6739 + $0x30] sm:$0xf]
    %v6753 = vld [vmem:[%s6739 + $0x34] sm:$0xf]
    %v6754 = vld [vmem:[%s6739 + $0x38] sm:$0xf]
    %v6755 = vld [vmem:[%s6739 + $0x3c] sm:$0xf]
    %v6756 = vld [vmem:[%s6739 + $0x40] sm:$0xf]
    %v6757 = vld [vmem:[%s6739 + $0x44] sm:$0xf]
    %v6758 = vld [vmem:[%s6739 + $0x48] sm:$0xf]
    %v6759 = vld [vmem:[%s6739 + $0x4c] sm:$0xf]
    %v6760 = vld [vmem:[%s6739 + $0x50] sm:$0xf]
    %v6761 = vld [vmem:[%s6739 + $0x54] sm:$0xf]
    %v6762 = vld [vmem:[%s6739 + $0x58] sm:$0xf]
    %v6763 = vld [vmem:[%s6739 + $0x5c] sm:$0xf]
    %v6764 = vld [vmem:[%s6739 + $0x60] sm:$0xf]
    %v6765 = vld [vmem:[%s6739 + $0x64] sm:$0xf]
    %v6766 = vld [vmem:[%s6739 + $0x68] sm:$0xf]
    %v6767 = vld [vmem:[%s6739 + $0x6c] sm:$0xf]
    %v6768 = vld [vmem:[%s6739 + $0x70] sm:$0xf]
    %v6769 = vld [vmem:[%s6739 + $0x74] sm:$0xf]
    %v6770 = vld [vmem:[%s6739 + $0x78] sm:$0xf]
    %v6771 = vld [vmem:[%s6739 + $0x7c] sm:$0xf]
    %v6772 = vld [vmem:[%s6739 + $0x80] sm:$0xf]
    %v6773 = vld [vmem:[%s6739 + $0x84] sm:$0xf]
    %v6774 = vld [vmem:[%s6739 + $0x88] sm:$0xf]
    %v6775 = vld [vmem:[%s6739 + $0x8c] sm:$0xf]
    %v6776 = vld [vmem:[%s6739 + $0x90] sm:$0xf]
    %v6777 = vld [vmem:[%s6739 + $0x94] sm:$0xf]
    %v6778 = vld [vmem:[%s6739 + $0x98] sm:$0xf]
    %v6779 = vld [vmem:[%s6739 + $0x9c] sm:$0xf]
    %v6780 = vld [vmem:[%s6739 + $0xa0] sm:$0xf]
    %v6781 = vld [vmem:[%s6739 + $0xa4] sm:$0xf]
    %v6782 = vld [vmem:[%s6739 + $0xa8] sm:$0xf]
    %v6783 = vld [vmem:[%s6739 + $0xac] sm:$0xf]
    %v6784 = vld [vmem:[%s6739 + $0xb0] sm:$0xf]
    %v6785 = vld [vmem:[%s6739 + $0xb4] sm:$0xf]
    %v6786 = vld [vmem:[%s6739 + $0xb8] sm:$0xf]
    %v6787 = vld [vmem:[%s6739 + $0xbc] sm:$0xf]
    %v6788 = vld [vmem:[%s6739 + $0xc0] sm:$0xf]
    %v6789 = vld [vmem:[%s6739 + $0xc4] sm:$0xf]
    %v6790 = vld [vmem:[%s6739 + $0xc8] sm:$0xf]
    %v6791 = vld [vmem:[%s6739 + $0xcc] sm:$0xf]
    %v6792 = vld [vmem:[%s6739 + $0xd0] sm:$0xf]
    %v6793 = vld [vmem:[%s6739 + $0xd4] sm:$0xf]
    %v6794 = vld [vmem:[%s6739 + $0xd8] sm:$0xf]
    %v6795 = vld [vmem:[%s6739 + $0xdc] sm:$0xf]
    %v6796 = vld [vmem:[%s6739 + $0xe0] sm:$0xf]
    %v6797 = vld [vmem:[%s6739 + $0xe4] sm:$0xf]
    %v6798 = vld [vmem:[%s6739 + $0xe8] sm:$0xf]
    %v6799 = vld [vmem:[%s6739 + $0xec] sm:$0xf]
    %v6800 = vld [vmem:[%s6739 + $0xf0] sm:$0xf]
    %v6801 = vld [vmem:[%s6739 + $0xf4] sm:$0xf]
    %v6802 = vld [vmem:[%s6739 + $0xf8] sm:$0xf]
    %v6803 = vld [vmem:[%s6739 + $0xfc] sm:$0xf]
    %s6804 = scalar_lea.vmem %s12, 2
    %v6805 = vld [vmem:[%s6804] sm:$0x1]
    %v6807 = vperm.slane %v6805, 0
    %v6873 = vunpack.c.l.b16 %v6740
    %v6874 = vunpack.c.l.b16 %v6741
    %v6875 = vunpack.c.l.b16 %v6742
    %v6876 = vunpack.c.l.b16 %v6743
    %v6877 = vunpack.c.l.b16 %v6744
    %v6878 = vunpack.c.l.b16 %v6745
    %v6879 = vunpack.c.l.b16 %v6746
    %v6880 = vunpack.c.l.b16 %v6747
    %v6881 = vunpack.c.l.b16 %v6748
    %v6882 = vunpack.c.l.b16 %v6749
    %v6883 = vunpack.c.l.b16 %v6750
    %v6884 = vunpack.c.l.b16 %v6751
    %v6885 = vunpack.c.l.b16 %v6752
    %v6886 = vunpack.c.l.b16 %v6753
    %v6887 = vunpack.c.l.b16 %v6754
    %v6888 = vunpack.c.l.b16 %v6755
    %v6889 = vunpack.c.l.b16 %v6756
    %v6890 = vunpack.c.l.b16 %v6757
    %v6891 = vunpack.c.l.b16 %v6758
    %v6892 = vunpack.c.l.b16 %v6759
    %v6893 = vunpack.c.l.b16 %v6760
    %v6894 = vunpack.c.l.b16 %v6761
    %v6895 = vunpack.c.l.b16 %v6762
    %v6896 = vunpack.c.l.b16 %v6763
    %v6897 = vunpack.c.l.b16 %v6764
    %v6898 = vunpack.c.l.b16 %v6765
    %v6899 = vunpack.c.l.b16 %v6766
    %v6900 = vunpack.c.l.b16 %v6767
    %v6901 = vunpack.c.l.b16 %v6768
    %v6902 = vunpack.c.l.b16 %v6769
    %v6903 = vunpack.c.l.b16 %v6770
    %v6904 = vunpack.c.l.b16 %v6771
    %v6905 = vunpack.c.l.b16 %v6772
    %v6906 = vunpack.c.l.b16 %v6773
    %v6907 = vunpack.c.l.b16 %v6774
    %v6908 = vunpack.c.l.b16 %v6775
    %v6909 = vunpack.c.l.b16 %v6776
    %v6910 = vunpack.c.l.b16 %v6777
    %v6911 = vunpack.c.l.b16 %v6778
    %v6912 = vunpack.c.l.b16 %v6779
    %v6913 = vunpack.c.l.b16 %v6780
    %v6914 = vunpack.c.l.b16 %v6781
    %v6915 = vunpack.c.l.b16 %v6782
    %v6916 = vunpack.c.l.b16 %v6783
    %v6917 = vunpack.c.l.b16 %v6784
    %v6918 = vunpack.c.l.b16 %v6785
    %v6919 = vunpack.c.l.b16 %v6786
    %v6920 = vunpack.c.l.b16 %v6787
    %v6921 = vunpack.c.l.b16 %v6788
    %v6922 = vunpack.c.l.b16 %v6789
    %v6923 = vunpack.c.l.b16 %v6790
    %v6924 = vunpack.c.l.b16 %v6791
    %v6925 = vunpack.c.l.b16 %v6792
    %v6926 = vunpack.c.l.b16 %v6793
    %v6927 = vunpack.c.l.b16 %v6794
    %v6928 = vunpack.c.l.b16 %v6795
    %v6929 = vunpack.c.l.b16 %v6796
    %v6930 = vunpack.c.l.b16 %v6797
    %v6931 = vunpack.c.l.b16 %v6798
    %v6932 = vunpack.c.l.b16 %v6799
    %v6933 = vunpack.c.l.b16 %v6800
    %v6934 = vunpack.c.l.b16 %v6801
    %v6935 = vunpack.c.l.b16 %v6802
    %v6936 = vunpack.c.l.b16 %v6803
    %v6937 = vpack.c.b16 %v6874, %v6873
    %v6938 = vpack.c.b16 %v6876, %v6875
    %v6939 = vpack.c.b16 %v6878, %v6877
    %v6940 = vpack.c.b16 %v6880, %v6879
    %v6941 = vpack.c.b16 %v6882, %v6881
    %v6942 = vpack.c.b16 %v6884, %v6883
    %v6943 = vpack.c.b16 %v6886, %v6885
    %v6944 = vpack.c.b16 %v6888, %v6887
    %v6945 = vpack.c.b16 %v6890, %v6889
    %v6946 = vpack.c.b16 %v6892, %v6891
    %v6947 = vpack.c.b16 %v6894, %v6893
    %v6948 = vpack.c.b16 %v6896, %v6895
    %v6949 = vpack.c.b16 %v6898, %v6897
    %v6950 = vpack.c.b16 %v6900, %v6899
    %v6951 = vpack.c.b16 %v6902, %v6901
    %v6952 = vpack.c.b16 %v6904, %v6903
    %v6953 = vpack.c.b16 %v6906, %v6905
    %v6954 = vpack.c.b16 %v6908, %v6907
    %v6955 = vpack.c.b16 %v6910, %v6909
    %v6956 = vpack.c.b16 %v6912, %v6911
    %v6957 = vpack.c.b16 %v6914, %v6913
    %v6958 = vpack.c.b16 %v6916, %v6915
    %v6959 = vpack.c.b16 %v6918, %v6917
    %v6960 = vpack.c.b16 %v6920, %v6919
    %v6961 = vpack.c.b16 %v6922, %v6921
    %v6962 = vpack.c.b16 %v6924, %v6923
    %v6963 = vpack.c.b16 %v6926, %v6925
    %v6964 = vpack.c.b16 %v6928, %v6927
    %v6965 = vpack.c.b16 %v6930, %v6929
    %v6966 = vpack.c.b16 %v6932, %v6931
    %v6967 = vpack.c.b16 %v6934, %v6933
    %v6968 = vpack.c.b16 %v6936, %v6935
    %7001 = vmatpush.bf16.msra.mxu0 %v6944
    %7002 = vmatpush.bf16.msra.mxu0 %v6943
    %7003 = vmatpush.bf16.msra.mxu0 %v6942
    %7004 = vmatpush.bf16.msra.mxu0 %v6941
    %7005 = vmatpush.bf16.msra.mxu0 %v6940
    %7006 = vmatpush.bf16.msra.mxu0 %v6939
    %7007 = vmatpush.bf16.msra.mxu0 %v6938
    %7008 = vmatpush.bf16.msra.mxu0 %v6937
    %7009 = vmatmul.bf16.gmra.mxu0 %v6735
    %v7010 = vpop.f32.mrf.mxu0
    %v7011 = vadd.f32 %v6807, %v7010
    %v7012 = vpop.f32.mrf.mxu0
    %v7013 = vadd.f32 %v6807, %v7012
    %7014 = vdwg.mxu0
    %7015 = vmatpush.bf16.msra.mxu0 %v6952
    %7016 = vmatpush.bf16.msra.mxu0 %v6951
    %7017 = vmatpush.bf16.msra.mxu0 %v6950
    %7018 = vmatpush.bf16.msra.mxu0 %v6949
    %7019 = vmatpush.bf16.msra.mxu0 %v6948
    %7020 = vmatpush.bf16.msra.mxu0 %v6947
    %7021 = vmatpush.bf16.msra.mxu0 %v6946
    %7022 = vmatpush.bf16.msra.mxu0 %v6945
    %7023 = vmatmul.bf16.gmra.mxu0 %v6736
    %v7024 = vpop.f32.mrf.mxu0
    %v7025 = vadd.f32 %v7011, %v7024
    %v7026 = vpop.f32.mrf.mxu0
    %v7027 = vadd.f32 %v7013, %v7026
    %7028 = vdwg.mxu0
    %7029 = vmatpush.bf16.msra.mxu0 %v6960
    %7030 = vmatpush.bf16.msra.mxu0 %v6959
    %7031 = vmatpush.bf16.msra.mxu0 %v6958
    %7032 = vmatpush.bf16.msra.mxu0 %v6957
    %7033 = vmatpush.bf16.msra.mxu0 %v6956
    %7034 = vmatpush.bf16.msra.mxu0 %v6955
    %7035 = vmatpush.bf16.msra.mxu0 %v6954
    %7036 = vmatpush.bf16.msra.mxu0 %v6953
    %7037 = vmatmul.bf16.gmra.mxu0 %v6737
    %v7038 = vpop.f32.mrf.mxu0
    %v7039 = vadd.f32 %v7025, %v7038
    %v7040 = vpop.f32.mrf.mxu0
    %v7041 = vadd.f32 %v7027, %v7040
    %7042 = vdwg.mxu0
    %7043 = vmatpush.bf16.msra.mxu0 %v6968
    %7044 = vmatpush.bf16.msra.mxu0 %v6967
    %7045 = vmatpush.bf16.msra.mxu0 %v6966
    %7046 = vmatpush.bf16.msra.mxu0 %v6965
    %7047 = vmatpush.bf16.msra.mxu0 %v6964
    %7048 = vmatpush.bf16.msra.mxu0 %v6963
    %7049 = vmatpush.bf16.msra.mxu0 %v6962
    %7050 = vmatpush.bf16.msra.mxu0 %v6961
    %7051 = vmatmul.bf16.gmra.mxu0 %v6738
    %v7052 = vpop.f32.mrf.mxu0
    %v7053 = vadd.f32 %v7039, %v7052
    %v7054 = vpop.f32.mrf.mxu0
    %v7055 = vadd.f32 %v7041, %v7054
    %7056 = vdwg.mxu0
    %v7057 = vadd.f32 %v6400, %v7053
    %v7058 = vadd.f32 %v6401, %v7055
    %s7059 = scalar_lea.vmem [#allocation18], 2
    %v7060 = vld [vmem:[%s7059] sm:$0x1]
    %s7061 = scalar_lea.vmem %s14, 2
    %v7062 = vld [vmem:[%s7061] sm:$0x1]
    %7063 = vadd.xlane.f32.xlu0 %v7057
    %v7064 = vpop.xlane.xlu0 %7063
    %7065 = vadd.xlane.f32.xlu0 %v7058
    %v7066 = vpop.xlane.xlu0 %7065
    %v7067 = vmul.f32 %v7064, %v1855
    %v7068 = vmul.f32 %v7066, %v1855
    %v7069 = vsub.f32 %v7057, %v7067
    %v7070 = vsub.f32 %v7058, %v7068
    %v7071 = vmul.f32 %v7069, %v7069
    %v7072 = vmul.f32 %v7070, %v7070
    %7073 = vadd.xlane.f32.xlu0 %v7071
    %v7074 = vpop.xlane.xlu0 %7073
    %7075 = vadd.xlane.f32.xlu0 %v7072
    %v7076 = vpop.xlane.xlu0 %7075
    %v7077 = vmul.f32 %v7074, %v1855
    %v7078 = vmul.f32 %v7076, %v1855
    %v7079 = vadd.f32 %v7077, 1e-12
    %v7080 = vadd.f32 %v7078, 1e-12
    %v7081 = vrsqrt.pop %v7079
    %v7082 = vmul.f32 %v7081, %v7079
    %v7083 = vmul.f32 %v7082, %v7081
    %v7084 = vmul.f32 0.5, %v7083
    %v7085 = vsub.f32 1.5, %v7084
    %v7086 = vmul.f32 %v7081, %v7085
    %vm7087 = vweird.f32 %v7079
    %vm7088 = vweird.f32 %v7081
    %vm7089 = vmor %vm7087, %vm7088
    %v7090 = vsel %vm7089, %v7081, %v7086
    %v7091 = vrsqrt.pop %v7080
    %v7092 = vmul.f32 %v7091, %v7080
    %v7093 = vmul.f32 %v7092, %v7091
    %v7094 = vmul.f32 0.5, %v7093
    %v7095 = vsub.f32 1.5, %v7094
    %v7096 = vmul.f32 %v7091, %v7095
    %vm7097 = vweird.f32 %v7080
    %vm7098 = vweird.f32 %v7091
    %vm7099 = vmor %vm7097, %vm7098
    %v7100 = vsel %vm7099, %v7091, %v7096
    %v7101 = vmul.f32 %v7069, %v7090
    %v7102 = vmul.f32 %v7070, %v7100
    %v7104 = vperm.slane %v7060, 0
    %v7106 = vmul.f32 %v7101, %v7104
    %v7107 = vmul.f32 %v7102, %v7104
    %v7109 = vperm.slane %v7062, 0
    %v7111 = vadd.f32 %v7106, %v7109
    %v7112 = vadd.f32 %v7107, %v7109
    %v7113 = vpack.c.bf16 %v7112, %v7111
    %s7114 = scalar_lea.vmem [#allocation6], 576
    %v7115 = vld [vmem:[%s7114] sm:$0xff]
    %v7116 = vld [vmem:[%s7114 + $0x8] sm:$0xf]
    %v7117 = vld [vmem:[%s7114 + $0xc] sm:$0xff]
    %v7118 = vld [vmem:[%s7114 + $0x14] sm:$0xf]
    %v7119 = vld [vmem:[%s7114 + $0x18] sm:$0xff]
    %v7120 = vld [vmem:[%s7114 + $0x20] sm:$0xf]
    %v7121 = vld [vmem:[%s7114 + $0x24] sm:$0xff]
    %v7122 = vld [vmem:[%s7114 + $0x2c] sm:$0xf]
    %v7123 = vld [vmem:[%s7114 + $0x30] sm:$0xff]
    %v7124 = vld [vmem:[%s7114 + $0x38] sm:$0xf]
    %v7125 = vld [vmem:[%s7114 + $0x3c] sm:$0xff]
    %v7126 = vld [vmem:[%s7114 + $0x44] sm:$0xf]
    %v7127 = vld [vmem:[%s7114 + $0x48] sm:$0xff]
    %v7128 = vld [vmem:[%s7114 + $0x50] sm:$0xf]
    %v7129 = vld [vmem:[%s7114 + $0x54] sm:$0xff]
    %v7130 = vld [vmem:[%s7114 + $0x5c] sm:$0xf]
    %v7131 = vld [vmem:[%s7114 + $0x60] sm:$0xff]
    %v7132 = vld [vmem:[%s7114 + $0x68] sm:$0xf]
    %v7133 = vld [vmem:[%s7114 + $0x6c] sm:$0xff]
    %v7134 = vld [vmem:[%s7114 + $0x74] sm:$0xf]
    %v7135 = vld [vmem:[%s7114 + $0x78] sm:$0xff]
    %v7136 = vld [vmem:[%s7114 + $0x80] sm:$0xf]
    %v7137 = vld [vmem:[%s7114 + $0x84] sm:$0xff]
    %v7138 = vld [vmem:[%s7114 + $0x8c] sm:$0xf]
    %v7139 = vld [vmem:[%s7114 + $0x90] sm:$0xff]
    %v7140 = vld [vmem:[%s7114 + $0x98] sm:$0xf]
    %v7141 = vld [vmem:[%s7114 + $0x9c] sm:$0xff]
    %v7142 = vld [vmem:[%s7114 + $0xa4] sm:$0xf]
    %v7143 = vld [vmem:[%s7114 + $0xa8] sm:$0xff]
    %v7144 = vld [vmem:[%s7114 + $0xb0] sm:$0xf]
    %v7145 = vld [vmem:[%s7114 + $0xb4] sm:$0xff]
    %v7146 = vld [vmem:[%s7114 + $0xbc] sm:$0xf]
    %s7147 = scalar_lea.vmem [#allocation8], 9
    %v7148 = vld [vmem:[%s7147] sm:$0x7]
    %v7150 = vperm.slane %v7148, 0
    %v7151 = vperm.slane %v7148, 1
    %v7152 = vperm.slane %v7148, 2
    %v7188 = vunpack.c.l.b16 %v7115
    %v7189 = vunpack.c.h.b16 %v7115
    %v7190 = vunpack.c.l.b16 %v7116
    %v7191 = vunpack.c.l.b16 %v7117
    %v7192 = vunpack.c.h.b16 %v7117
    %v7193 = vunpack.c.l.b16 %v7118
    %v7194 = vunpack.c.l.b16 %v7119
    %v7195 = vunpack.c.h.b16 %v7119
    %v7196 = vunpack.c.l.b16 %v7120
    %v7197 = vunpack.c.l.b16 %v7121
    %v7198 = vunpack.c.h.b16 %v7121
    %v7199 = vunpack.c.l.b16 %v7122
    %v7200 = vunpack.c.l.b16 %v7123
    %v7201 = vunpack.c.h.b16 %v7123
    %v7202 = vunpack.c.l.b16 %v7124
    %v7203 = vunpack.c.l.b16 %v7125
    %v7204 = vunpack.c.h.b16 %v7125
    %v7205 = vunpack.c.l.b16 %v7126
    %v7206 = vunpack.c.l.b16 %v7127
    %v7207 = vunpack.c.h.b16 %v7127
    %v7208 = vunpack.c.l.b16 %v7128
    %v7209 = vunpack.c.l.b16 %v7129
    %v7210 = vunpack.c.h.b16 %v7129
    %v7211 = vunpack.c.l.b16 %v7130
    %v7212 = vunpack.c.l.b16 %v7131
    %v7213 = vunpack.c.h.b16 %v7131
    %v7214 = vunpack.c.l.b16 %v7132
    %v7215 = vunpack.c.l.b16 %v7133
    %v7216 = vunpack.c.h.b16 %v7133
    %v7217 = vunpack.c.l.b16 %v7134
    %v7218 = vunpack.c.l.b16 %v7135
    %v7219 = vunpack.c.h.b16 %v7135
    %v7220 = vunpack.c.l.b16 %v7136
    %v7221 = vunpack.c.l.b16 %v7137
    %v7222 = vunpack.c.h.b16 %v7137
    %v7223 = vunpack.c.l.b16 %v7138
    %v7224 = vunpack.c.l.b16 %v7139
    %v7225 = vunpack.c.h.b16 %v7139
    %v7226 = vunpack.c.l.b16 %v7140
    %v7227 = vunpack.c.l.b16 %v7141
    %v7228 = vunpack.c.h.b16 %v7141
    %v7229 = vunpack.c.l.b16 %v7142
    %v7230 = vunpack.c.l.b16 %v7143
    %v7231 = vunpack.c.h.b16 %v7143
    %v7232 = vunpack.c.l.b16 %v7144
    %v7233 = vunpack.c.l.b16 %v7145
    %v7234 = vunpack.c.h.b16 %v7145
    %v7235 = vunpack.c.l.b16 %v7146
    %v7236 = vpack.c.b16 %v7191, %v7188
    %v7237 = vpack.c.b16 %v7192, %v7189
    %v7238 = vpack.c.b16 %v7193, %v7190
    %v7239 = vpack.c.b16 %v7197, %v7194
    %v7240 = vpack.c.b16 %v7198, %v7195
    %v7241 = vpack.c.b16 %v7199, %v7196
    %v7242 = vpack.c.b16 %v7203, %v7200
    %v7243 = vpack.c.b16 %v7204, %v7201
    %v7244 = vpack.c.b16 %v7205, %v7202
    %v7245 = vpack.c.b16 %v7209, %v7206
    %v7246 = vpack.c.b16 %v7210, %v7207
    %v7247 = vpack.c.b16 %v7211, %v7208
    %v7248 = vpack.c.b16 %v7215, %v7212
    %v7249 = vpack.c.b16 %v7216, %v7213
    %v7250 = vpack.c.b16 %v7217, %v7214
    %v7251 = vpack.c.b16 %v7221, %v7218
    %v7252 = vpack.c.b16 %v7222, %v7219
    %v7253 = vpack.c.b16 %v7223, %v7220
    %v7254 = vpack.c.b16 %v7227, %v7224
    %v7255 = vpack.c.b16 %v7228, %v7225
    %v7256 = vpack.c.b16 %v7229, %v7226
    %v7257 = vpack.c.b16 %v7233, %v7230
    %v7258 = vpack.c.b16 %v7234, %v7231
    %v7259 = vpack.c.b16 %v7235, %v7232
    %7284 = vmatpush.bf16.msra.mxu0 %v7257
    %7285 = vmatpush.bf16.msra.mxu0 %v7254
    %7286 = vmatpush.bf16.msra.mxu0 %v7251
    %7287 = vmatpush.bf16.msra.mxu0 %v7248
    %7288 = vmatpush.bf16.msra.mxu0 %v7245
    %7289 = vmatpush.bf16.msra.mxu0 %v7242
    %7290 = vmatpush.bf16.msra.mxu0 %v7239
    %7291 = vmatpush.bf16.msra.mxu0 %v7236
    %7292 = vmatmul.bf16.gmra.mxu0 %v7113
    %v7293 = vpop.f32.mrf.mxu0
    %v7294 = vadd.f32 %v7150, %v7293
    %v7295 = vpop.f32.mrf.mxu0
    %v7296 = vadd.f32 %v7150, %v7295
    %7297 = vdwg.mxu0
    %7298 = vmatpush.bf16.msra.mxu0 %v7258
    %7299 = vmatpush.bf16.msra.mxu0 %v7255
    %7300 = vmatpush.bf16.msra.mxu0 %v7252
    %7301 = vmatpush.bf16.msra.mxu0 %v7249
    %7302 = vmatpush.bf16.msra.mxu0 %v7246
    %7303 = vmatpush.bf16.msra.mxu0 %v7243
    %7304 = vmatpush.bf16.msra.mxu0 %v7240
    %7305 = vmatpush.bf16.msra.mxu0 %v7237
    %7306 = vmatmul.bf16.gmra.mxu0 %v7113
    %v7307 = vpop.f32.mrf.mxu0
    %v7308 = vadd.f32 %v7151, %v7307
    %v7309 = vpop.f32.mrf.mxu0
    %v7310 = vadd.f32 %v7151, %v7309
    %7311 = vdwg.mxu0
    %7312 = vmatpush.bf16.msra.mxu0 %v7259
    %7313 = vmatpush.bf16.msra.mxu0 %v7256
    %7314 = vmatpush.bf16.msra.mxu0 %v7253
    %7315 = vmatpush.bf16.msra.mxu0 %v7250
    %7316 = vmatpush.bf16.msra.mxu0 %v7247
    %7317 = vmatpush.bf16.msra.mxu0 %v7244
    %7318 = vmatpush.bf16.msra.mxu0 %v7241
    %7319 = vmatpush.bf16.msra.mxu0 %v7238
    %7320 = vmatmul.bf16.gmra.mxu0 %v7113
    %v7321 = vpop.f32.mrf.mxu0
    %v7322 = vadd.f32 %v7152, %v7321
    %v7323 = vpop.f32.mrf.mxu0
    %v7324 = vadd.f32 %v7152, %v7323
    %7325 = vdwg.mxu0
    %v7326 = vmul.f32 %v7294, 0.25
    %v7327 = vmul.f32 %v7296, 0.25
    %v7328 = vpack.c.bf16 %v7326, %v7326
    %v7329 = vpack.c.bf16 %v7327, %v7327
    %v7330 = vpack.c.bf16 %v7308, %v7308
    %v7331 = vpack.c.bf16 %v7310, %v7310
    %v7332 = vpack.c.bf16 %v7322, %v7322
    %v7333 = vpack.c.bf16 %v7324, %v7324
    %v7335 = vsel %vm571, %v7328, 0
    %v7338 = vsel %vm571, %v7330, 0
    %7340 = vmatpush.bf16.xpose.msra.mxu0 0
    %7341 = vmatpush.bf16.xpose.msra.mxu0 0
    %7342 = vmatpush.bf16.xpose.msra.mxu0 0
    %7343 = vmatpush.bf16.xpose.msra.mxu0 0
    %7344 = vmatpush.bf16.xpose.msra.mxu0 0
    %7345 = vmatpush.bf16.xpose.msra.mxu0 0
    %7346 = vmatpush.bf16.xpose.msra.mxu0 0
    %7347 = vmatpush.bf16.xpose.msra.mxu0 %v7338
    %7348 = vmatmul.bf16.gmra.mxu0 %v7335
    %v7349 = vpop.f32.mrf.mxu0
    %v7350 = vadd.f32 0.0, %v7349
    %v7351 = vpop.f32.mrf.mxu0
    %7352 = vdwg.mxu0
    %v7354 = vsel %vm571, %v7329, 0
    %v7357 = vsel %vm571, %v7331, 0
    %7359 = vmatpush.bf16.xpose.msra.mxu0 0
    %7360 = vmatpush.bf16.xpose.msra.mxu0 0
    %7361 = vmatpush.bf16.xpose.msra.mxu0 0
    %7362 = vmatpush.bf16.xpose.msra.mxu0 0
    %7363 = vmatpush.bf16.xpose.msra.mxu0 0
    %7364 = vmatpush.bf16.xpose.msra.mxu0 0
    %7365 = vmatpush.bf16.xpose.msra.mxu0 0
    %7366 = vmatpush.bf16.xpose.msra.mxu0 %v7357
    %7367 = vmatmul.bf16.gmra.mxu0 %v7354
    %v7368 = vpop.f32.mrf.mxu0
    %v7369 = vadd.f32 0.0, %v7368
    %v7370 = vpop.f32.mrf.mxu0
    %7371 = vdwg.mxu0
    %v7372 = vsel %vm313, %v7350, -inf
    %7373 = vmax.xlane.f32.xlu0 %v7372
    %v7374 = vpop.xlane.xlu0 %7373
    %v7375 = vsel %vm313, %v7369, -inf
    %7376 = vmax.xlane.f32.xlu0 %v7375
    %v7377 = vpop.xlane.xlu0 %7376
    %v7378 = vsub.f32 %v7350, %v7374
    %v7379 = vsub.f32 %v7369, %v7377
    %v7380 = vmul.f32 %v7378, 1.442695
    %v7381 = vpow.pop %v7380
    %v7382 = vmul.f32 %v7379, 1.442695
    %v7383 = vpow.pop %v7382
    %v7384 = vsel %vm313, %v7381, 0.0
    %7385 = vadd.xlane.f32.xlu0 %v7384
    %v7386 = vpop.xlane.xlu0 %7385
    %v7387 = vsel %vm313, %v7383, 0.0
    %7388 = vadd.xlane.f32.xlu0 %v7387
    %v7389 = vpop.xlane.xlu0 %7388
    %v7390 = vrcp.pop %v7386
    %v7391 = vmul.f32 %v7386, %v7390
    %v7392 = vsub.f32 1.0, %v7391
    %v7393 = vmul.f32 %v7390, %v7392
    %v7394 = vadd.f32 %v7390, %v7393
    %vm7395 = vweird.f32 %v7386
    %vm7396 = vweird.f32 %v7390
    %vm7397 = vmor %vm7395, %vm7396
    %v7398 = vsel %vm7397, %v7390, %v7394
    %v7399 = vand.u32 2147483647, %v7386
    %vm7400 = vcmp.eq.f32.partialorder %v7399, 8.507059e+37
    %v7401 = vand.u32 %v7386, 2147483648
    %v7402 = vor.u32 1.1754944e-38, %v7401
    %v7403 = vsel %vm7400, %v7402, %v7398
    %v7404 = vmul.f32 %v7381, %v7403
    %v7405 = vrcp.pop %v7389
    %v7406 = vmul.f32 %v7389, %v7405
    %v7407 = vsub.f32 1.0, %v7406
    %v7408 = vmul.f32 %v7405, %v7407
    %v7409 = vadd.f32 %v7405, %v7408
    %vm7410 = vweird.f32 %v7389
    %vm7411 = vweird.f32 %v7405
    %vm7412 = vmor %vm7410, %vm7411
    %v7413 = vsel %vm7412, %v7405, %v7409
    %v7414 = vand.u32 2147483647, %v7389
    %vm7415 = vcmp.eq.f32.partialorder %v7414, 8.507059e+37
    %v7416 = vand.u32 %v7389, 2147483648
    %v7417 = vor.u32 1.1754944e-38, %v7416
    %v7418 = vsel %vm7415, %v7417, %v7413
    %v7419 = vmul.f32 %v7383, %v7418
    %v7420 = vpack.c.bf16 %v7404, %v7404
    %v7421 = vpack.c.bf16 %v7419, %v7419
    %v7423 = vsel %vm313, %v7420, 0
    %v7426 = vsel %vm317, %v7332, 0
    %7428 = vmatpush.bf16.msra.mxu0 0
    %7429 = vmatpush.bf16.msra.mxu0 0
    %7430 = vmatpush.bf16.msra.mxu0 0
    %7431 = vmatpush.bf16.msra.mxu0 0
    %7432 = vmatpush.bf16.msra.mxu0 0
    %7433 = vmatpush.bf16.msra.mxu0 0
    %7434 = vmatpush.bf16.msra.mxu0 0
    %7435 = vmatpush.bf16.msra.mxu0 %v7426
    %7436 = vmatmul.bf16.gmra.mxu0 %v7423
    %v7437 = vpop.f32.mrf.mxu0
    %v7438 = vadd.f32 0.0, %v7437
    %v7439 = vpop.f32.mrf.mxu0
    %7440 = vdwg.mxu0
    %v7442 = vsel %vm313, %v7421, 0
    %v7445 = vsel %vm317, %v7333, 0
    %7447 = vmatpush.bf16.msra.mxu0 0
    %7448 = vmatpush.bf16.msra.mxu0 0
    %7449 = vmatpush.bf16.msra.mxu0 0
    %7450 = vmatpush.bf16.msra.mxu0 0
    %7451 = vmatpush.bf16.msra.mxu0 0
    %7452 = vmatpush.bf16.msra.mxu0 0
    %7453 = vmatpush.bf16.msra.mxu0 0
    %7454 = vmatpush.bf16.msra.mxu0 %v7445
    %7455 = vmatmul.bf16.gmra.mxu0 %v7442
    %v7456 = vpop.f32.mrf.mxu0
    %v7457 = vadd.f32 0.0, %v7456
    %v7458 = vpop.f32.mrf.mxu0
    %7459 = vdwg.mxu0
    %v7461 = vunpack.c.l.b16 %v7328
    %v7462 = vpack.c.b16 %v7461, %v7461
    %7463 = vrot.lane.b32.xlu0 %v7462, 112
    %v7464 = vpop.permute.xlu0 %7463
    %v7466 = vunpack.c.l.b16 %v7330
    %v7467 = vpack.c.b16 %v7466, %v7466
    %7468 = vrot.lane.b32.xlu0 %v7467, 112
    %v7469 = vpop.permute.xlu0 %7468
    %v7471 = vsel %vm571, %v7464, 0
    %v7474 = vsel %vm571, %v7469, 0
    %7476 = vmatpush.bf16.xpose.msra.mxu0 0
    %7477 = vmatpush.bf16.xpose.msra.mxu0 0
    %7478 = vmatpush.bf16.xpose.msra.mxu0 0
    %7479 = vmatpush.bf16.xpose.msra.mxu0 0
    %7480 = vmatpush.bf16.xpose.msra.mxu0 0
    %7481 = vmatpush.bf16.xpose.msra.mxu0 0
    %7482 = vmatpush.bf16.xpose.msra.mxu0 0
    %7483 = vmatpush.bf16.xpose.msra.mxu0 %v7474
    %7484 = vmatmul.bf16.gmra.mxu0 %v7471
    %v7485 = vpop.f32.mrf.mxu0
    %v7486 = vadd.f32 0.0, %v7485
    %v7487 = vpop.f32.mrf.mxu0
    %7488 = vdwg.mxu0
    %v7490 = vunpack.c.l.b16 %v7329
    %v7491 = vpack.c.b16 %v7490, %v7490
    %7492 = vrot.lane.b32.xlu0 %v7491, 112
    %v7493 = vpop.permute.xlu0 %7492
    %v7495 = vunpack.c.l.b16 %v7331
    %v7496 = vpack.c.b16 %v7495, %v7495
    %7497 = vrot.lane.b32.xlu0 %v7496, 112
    %v7498 = vpop.permute.xlu0 %7497
    %v7500 = vsel %vm571, %v7493, 0
    %v7503 = vsel %vm571, %v7498, 0
    %7505 = vmatpush.bf16.xpose.msra.mxu0 0
    %7506 = vmatpush.bf16.xpose.msra.mxu0 0
    %7507 = vmatpush.bf16.xpose.msra.mxu0 0
    %7508 = vmatpush.bf16.xpose.msra.mxu0 0
    %7509 = vmatpush.bf16.xpose.msra.mxu0 0
    %7510 = vmatpush.bf16.xpose.msra.mxu0 0
    %7511 = vmatpush.bf16.xpose.msra.mxu0 0
    %7512 = vmatpush.bf16.xpose.msra.mxu0 %v7503
    %7513 = vmatmul.bf16.gmra.mxu0 %v7500
    %v7514 = vpop.f32.mrf.mxu0
    %v7515 = vadd.f32 0.0, %v7514
    %v7516 = vpop.f32.mrf.mxu0
    %7517 = vdwg.mxu0
    %v7518 = vsel %vm313, %v7486, -inf
    %7519 = vmax.xlane.f32.xlu0 %v7518
    %v7520 = vpop.xlane.xlu0 %7519
    %v7521 = vsel %vm313, %v7515, -inf
    %7522 = vmax.xlane.f32.xlu0 %v7521
    %v7523 = vpop.xlane.xlu0 %7522
    %v7524 = vsub.f32 %v7486, %v7520
    %v7525 = vsub.f32 %v7515, %v7523
    %v7526 = vmul.f32 %v7524, 1.442695
    %v7527 = vpow.pop %v7526
    %v7528 = vmul.f32 %v7525, 1.442695
    %v7529 = vpow.pop %v7528
    %v7530 = vsel %vm313, %v7527, 0.0
    %7531 = vadd.xlane.f32.xlu0 %v7530
    %v7532 = vpop.xlane.xlu0 %7531
    %v7533 = vsel %vm313, %v7529, 0.0
    %7534 = vadd.xlane.f32.xlu0 %v7533
    %v7535 = vpop.xlane.xlu0 %7534
    %v7536 = vrcp.pop %v7532
    %v7537 = vmul.f32 %v7532, %v7536
    %v7538 = vsub.f32 1.0, %v7537
    %v7539 = vmul.f32 %v7536, %v7538
    %v7540 = vadd.f32 %v7536, %v7539
    %vm7541 = vweird.f32 %v7532
    %vm7542 = vweird.f32 %v7536
    %vm7543 = vmor %vm7541, %vm7542
    %v7544 = vsel %vm7543, %v7536, %v7540
    %v7545 = vand.u32 2147483647, %v7532
    %vm7546 = vcmp.eq.f32.partialorder %v7545, 8.507059e+37
    %v7547 = vand.u32 %v7532, 2147483648
    %v7548 = vor.u32 1.1754944e-38, %v7547
    %v7549 = vsel %vm7546, %v7548, %v7544
    %v7550 = vmul.f32 %v7527, %v7549
    %v7551 = vrcp.pop %v7535
    %v7552 = vmul.f32 %v7535, %v7551
    %v7553 = vsub.f32 1.0, %v7552
    %v7554 = vmul.f32 %v7551, %v7553
    %v7555 = vadd.f32 %v7551, %v7554
    %vm7556 = vweird.f32 %v7535
    %vm7557 = vweird.f32 %v7551
    %vm7558 = vmor %vm7556, %vm7557
    %v7559 = vsel %vm7558, %v7551, %v7555
    %v7560 = vand.u32 2147483647, %v7535
    %vm7561 = vcmp.eq.f32.partialorder %v7560, 8.507059e+37
    %v7562 = vand.u32 %v7535, 2147483648
    %v7563 = vor.u32 1.1754944e-38, %v7562
    %v7564 = vsel %vm7561, %v7563, %v7559
    %v7565 = vmul.f32 %v7529, %v7564
    %v7566 = vpack.c.bf16 %v7550, %v7550
    %v7567 = vpack.c.bf16 %v7565, %v7565
    %v7569 = vunpack.c.l.b16 %v7332
    %v7570 = vpack.c.b16 %v7569, %v7569
    %7571 = vrot.lane.b32.xlu0 %v7570, 112
    %v7572 = vpop.permute.xlu0 %7571
    %v7574 = vsel %vm313, %v7566, 0
    %v7577 = vsel %vm317, %v7572, 0
    %7579 = vmatpush.bf16.msra.mxu0 0
    %7580 = vmatpush.bf16.msra.mxu0 0
    %7581 = vmatpush.bf16.msra.mxu0 0
    %7582 = vmatpush.bf16.msra.mxu0 0
    %7583 = vmatpush.bf16.msra.mxu0 0
    %7584 = vmatpush.bf16.msra.mxu0 0
    %7585 = vmatpush.bf16.msra.mxu0 0
    %7586 = vmatpush.bf16.msra.mxu0 %v7577
    %7587 = vmatmul.bf16.gmra.mxu0 %v7574
    %v7588 = vpop.f32.mrf.mxu0
    %v7589 = vadd.f32 0.0, %v7588
    %v7590 = vpop.f32.mrf.mxu0
    %7591 = vdwg.mxu0
    %v7593 = vunpack.c.l.b16 %v7333
    %v7594 = vpack.c.b16 %v7593, %v7593
    %7595 = vrot.lane.b32.xlu0 %v7594, 112
    %v7596 = vpop.permute.xlu0 %7595
    %v7598 = vsel %vm313, %v7567, 0
    %v7601 = vsel %vm317, %v7596, 0
    %7603 = vmatpush.bf16.msra.mxu0 0
    %7604 = vmatpush.bf16.msra.mxu0 0
    %7605 = vmatpush.bf16.msra.mxu0 0
    %7606 = vmatpush.bf16.msra.mxu0 0
    %7607 = vmatpush.bf16.msra.mxu0 0
    %7608 = vmatpush.bf16.msra.mxu0 0
    %7609 = vmatpush.bf16.msra.mxu0 0
    %7610 = vmatpush.bf16.msra.mxu0 %v7601
    %7611 = vmatmul.bf16.gmra.mxu0 %v7598
    %v7612 = vpop.f32.mrf.mxu0
    %v7613 = vadd.f32 0.0, %v7612
    %v7614 = vpop.f32.mrf.mxu0
    %7615 = vdwg.mxu0
    %7616 = vrot.lane.b32.xlu0 %v7462, 96
    %v7617 = vpop.permute.xlu0 %7616
    %7618 = vrot.lane.b32.xlu0 %v7467, 96
    %v7619 = vpop.permute.xlu0 %7618
    %v7621 = vsel %vm571, %v7617, 0
    %v7624 = vsel %vm571, %v7619, 0
    %7626 = vmatpush.bf16.xpose.msra.mxu0 0
    %7627 = vmatpush.bf16.xpose.msra.mxu0 0
    %7628 = vmatpush.bf16.xpose.msra.mxu0 0
    %7629 = vmatpush.bf16.xpose.msra.mxu0 0
    %7630 = vmatpush.bf16.xpose.msra.mxu0 0
    %7631 = vmatpush.bf16.xpose.msra.mxu0 0
    %7632 = vmatpush.bf16.xpose.msra.mxu0 0
    %7633 = vmatpush.bf16.xpose.msra.mxu0 %v7624
    %7634 = vmatmul.bf16.gmra.mxu0 %v7621
    %v7635 = vpop.f32.mrf.mxu0
    %v7636 = vadd.f32 0.0, %v7635
    %v7637 = vpop.f32.mrf.mxu0
    %7638 = vdwg.mxu0
    %7639 = vrot.lane.b32.xlu0 %v7491, 96
    %v7640 = vpop.permute.xlu0 %7639
    %7641 = vrot.lane.b32.xlu0 %v7496, 96
    %v7642 = vpop.permute.xlu0 %7641
    %v7644 = vsel %vm571, %v7640, 0
    %v7647 = vsel %vm571, %v7642, 0
    %7649 = vmatpush.bf16.xpose.msra.mxu0 0
    %7650 = vmatpush.bf16.xpose.msra.mxu0 0
    %7651 = vmatpush.bf16.xpose.msra.mxu0 0
    %7652 = vmatpush.bf16.xpose.msra.mxu0 0
    %7653 = vmatpush.bf16.xpose.msra.mxu0 0
    %7654 = vmatpush.bf16.xpose.msra.mxu0 0
    %7655 = vmatpush.bf16.xpose.msra.mxu0 0
    %7656 = vmatpush.bf16.xpose.msra.mxu0 %v7647
    %7657 = vmatmul.bf16.gmra.mxu0 %v7644
    %v7658 = vpop.f32.mrf.mxu0
    %v7659 = vadd.f32 0.0, %v7658
    %v7660 = vpop.f32.mrf.mxu0
    %7661 = vdwg.mxu0
    %v7662 = vsel %vm313, %v7636, -inf
    %7663 = vmax.xlane.f32.xlu0 %v7662
    %v7664 = vpop.xlane.xlu0 %7663
    %v7665 = vsel %vm313, %v7659, -inf
    %7666 = vmax.xlane.f32.xlu0 %v7665
    %v7667 = vpop.xlane.xlu0 %7666
    %v7668 = vsub.f32 %v7636, %v7664
    %v7669 = vsub.f32 %v7659, %v7667
    %v7670 = vmul.f32 %v7668, 1.442695
    %v7671 = vpow.pop %v7670
    %v7672 = vmul.f32 %v7669, 1.442695
    %v7673 = vpow.pop %v7672
    %v7674 = vsel %vm313, %v7671, 0.0
    %7675 = vadd.xlane.f32.xlu0 %v7674
    %v7676 = vpop.xlane.xlu0 %7675
    %v7677 = vsel %vm313, %v7673, 0.0
    %7678 = vadd.xlane.f32.xlu0 %v7677
    %v7679 = vpop.xlane.xlu0 %7678
    %v7680 = vrcp.pop %v7676
    %v7681 = vmul.f32 %v7676, %v7680
    %v7682 = vsub.f32 1.0, %v7681
    %v7683 = vmul.f32 %v7680, %v7682
    %v7684 = vadd.f32 %v7680, %v7683
    %vm7685 = vweird.f32 %v7676
    %vm7686 = vweird.f32 %v7680
    %vm7687 = vmor %vm7685, %vm7686
    %v7688 = vsel %vm7687, %v7680, %v7684
    %v7689 = vand.u32 2147483647, %v7676
    %vm7690 = vcmp.eq.f32.partialorder %v7689, 8.507059e+37
    %v7691 = vand.u32 %v7676, 2147483648
    %v7692 = vor.u32 1.1754944e-38, %v7691
    %v7693 = vsel %vm7690, %v7692, %v7688
    %v7694 = vmul.f32 %v7671, %v7693
    %v7695 = vrcp.pop %v7679
    %v7696 = vmul.f32 %v7679, %v7695
    %v7697 = vsub.f32 1.0, %v7696
    %v7698 = vmul.f32 %v7695, %v7697
    %v7699 = vadd.f32 %v7695, %v7698
    %vm7700 = vweird.f32 %v7679
    %vm7701 = vweird.f32 %v7695
    %vm7702 = vmor %vm7700, %vm7701
    %v7703 = vsel %vm7702, %v7695, %v7699
    %v7704 = vand.u32 2147483647, %v7679
    %vm7705 = vcmp.eq.f32.partialorder %v7704, 8.507059e+37
    %v7706 = vand.u32 %v7679, 2147483648
    %v7707 = vor.u32 1.1754944e-38, %v7706
    %v7708 = vsel %vm7705, %v7707, %v7703
    %v7709 = vmul.f32 %v7673, %v7708
    %v7710 = vpack.c.bf16 %v7694, %v7694
    %v7711 = vpack.c.bf16 %v7709, %v7709
    %7712 = vrot.lane.b32.xlu0 %v7570, 96
    %v7713 = vpop.permute.xlu0 %7712
    %v7715 = vsel %vm313, %v7710, 0
    %v7718 = vsel %vm317, %v7713, 0
    %7720 = vmatpush.bf16.msra.mxu0 0
    %7721 = vmatpush.bf16.msra.mxu0 0
    %7722 = vmatpush.bf16.msra.mxu0 0
    %7723 = vmatpush.bf16.msra.mxu0 0
    %7724 = vmatpush.bf16.msra.mxu0 0
    %7725 = vmatpush.bf16.msra.mxu0 0
    %7726 = vmatpush.bf16.msra.mxu0 0
    %7727 = vmatpush.bf16.msra.mxu0 %v7718
    %7728 = vmatmul.bf16.gmra.mxu0 %v7715
    %v7729 = vpop.f32.mrf.mxu0
    %v7730 = vadd.f32 0.0, %v7729
    %v7731 = vpop.f32.mrf.mxu0
    %7732 = vdwg.mxu0
    %7733 = vrot.lane.b32.xlu0 %v7594, 96
    %v7734 = vpop.permute.xlu0 %7733
    %v7736 = vsel %vm313, %v7711, 0
    %v7739 = vsel %vm317, %v7734, 0
    %7741 = vmatpush.bf16.msra.mxu0 0
    %7742 = vmatpush.bf16.msra.mxu0 0
    %7743 = vmatpush.bf16.msra.mxu0 0
    %7744 = vmatpush.bf16.msra.mxu0 0
    %7745 = vmatpush.bf16.msra.mxu0 0
    %7746 = vmatpush.bf16.msra.mxu0 0
    %7747 = vmatpush.bf16.msra.mxu0 0
    %7748 = vmatpush.bf16.msra.mxu0 %v7739
    %7749 = vmatmul.bf16.gmra.mxu0 %v7736
    %v7750 = vpop.f32.mrf.mxu0
    %v7751 = vadd.f32 0.0, %v7750
    %v7752 = vpop.f32.mrf.mxu0
    %7753 = vdwg.mxu0
    %7754 = vrot.lane.b32.xlu0 %v7462, 80
    %v7755 = vpop.permute.xlu0 %7754
    %7756 = vrot.lane.b32.xlu0 %v7467, 80
    %v7757 = vpop.permute.xlu0 %7756
    %v7759 = vsel %vm571, %v7755, 0
    %v7762 = vsel %vm571, %v7757, 0
    %7764 = vmatpush.bf16.xpose.msra.mxu0 0
    %7765 = vmatpush.bf16.xpose.msra.mxu0 0
    %7766 = vmatpush.bf16.xpose.msra.mxu0 0
    %7767 = vmatpush.bf16.xpose.msra.mxu0 0
    %7768 = vmatpush.bf16.xpose.msra.mxu0 0
    %7769 = vmatpush.bf16.xpose.msra.mxu0 0
    %7770 = vmatpush.bf16.xpose.msra.mxu0 0
    %7771 = vmatpush.bf16.xpose.msra.mxu0 %v7762
    %7772 = vmatmul.bf16.gmra.mxu0 %v7759
    %v7773 = vpop.f32.mrf.mxu0
    %v7774 = vadd.f32 0.0, %v7773
    %v7775 = vpop.f32.mrf.mxu0
    %7776 = vdwg.mxu0
    %7777 = vrot.lane.b32.xlu0 %v7491, 80
    %v7778 = vpop.permute.xlu0 %7777
    %7779 = vrot.lane.b32.xlu0 %v7496, 80
    %v7780 = vpop.permute.xlu0 %7779
    %v7782 = vsel %vm571, %v7778, 0
    %v7785 = vsel %vm571, %v7780, 0
    %7787 = vmatpush.bf16.xpose.msra.mxu0 0
    %7788 = vmatpush.bf16.xpose.msra.mxu0 0
    %7789 = vmatpush.bf16.xpose.msra.mxu0 0
    %7790 = vmatpush.bf16.xpose.msra.mxu0 0
    %7791 = vmatpush.bf16.xpose.msra.mxu0 0
    %7792 = vmatpush.bf16.xpose.msra.mxu0 0
    %7793 = vmatpush.bf16.xpose.msra.mxu0 0
    %7794 = vmatpush.bf16.xpose.msra.mxu0 %v7785
    %7795 = vmatmul.bf16.gmra.mxu0 %v7782
    %v7796 = vpop.f32.mrf.mxu0
    %v7797 = vadd.f32 0.0, %v7796
    %v7798 = vpop.f32.mrf.mxu0
    %7799 = vdwg.mxu0
    %v7800 = vsel %vm313, %v7774, -inf
    %7801 = vmax.xlane.f32.xlu0 %v7800
    %v7802 = vpop.xlane.xlu0 %7801
    %v7803 = vsel %vm313, %v7797, -inf
    %7804 = vmax.xlane.f32.xlu0 %v7803
    %v7805 = vpop.xlane.xlu0 %7804
    %v7806 = vsub.f32 %v7774, %v7802
    %v7807 = vsub.f32 %v7797, %v7805
    %v7808 = vmul.f32 %v7806, 1.442695
    %v7809 = vpow.pop %v7808
    %v7810 = vmul.f32 %v7807, 1.442695
    %v7811 = vpow.pop %v7810
    %v7812 = vsel %vm313, %v7809, 0.0
    %7813 = vadd.xlane.f32.xlu0 %v7812
    %v7814 = vpop.xlane.xlu0 %7813
    %v7815 = vsel %vm313, %v7811, 0.0
    %7816 = vadd.xlane.f32.xlu0 %v7815
    %v7817 = vpop.xlane.xlu0 %7816
    %v7818 = vrcp.pop %v7814
    %v7819 = vmul.f32 %v7814, %v7818
    %v7820 = vsub.f32 1.0, %v7819
    %v7821 = vmul.f32 %v7818, %v7820
    %v7822 = vadd.f32 %v7818, %v7821
    %vm7823 = vweird.f32 %v7814
    %vm7824 = vweird.f32 %v7818
    %vm7825 = vmor %vm7823, %vm7824
    %v7826 = vsel %vm7825, %v7818, %v7822
    %v7827 = vand.u32 2147483647, %v7814
    %vm7828 = vcmp.eq.f32.partialorder %v7827, 8.507059e+37
    %v7829 = vand.u32 %v7814, 2147483648
    %v7830 = vor.u32 1.1754944e-38, %v7829
    %v7831 = vsel %vm7828, %v7830, %v7826
    %v7832 = vmul.f32 %v7809, %v7831
    %v7833 = vrcp.pop %v7817
    %v7834 = vmul.f32 %v7817, %v7833
    %v7835 = vsub.f32 1.0, %v7834
    %v7836 = vmul.f32 %v7833, %v7835
    %v7837 = vadd.f32 %v7833, %v7836
    %vm7838 = vweird.f32 %v7817
    %vm7839 = vweird.f32 %v7833
    %vm7840 = vmor %vm7838, %vm7839
    %v7841 = vsel %vm7840, %v7833, %v7837
    %v7842 = vand.u32 2147483647, %v7817
    %vm7843 = vcmp.eq.f32.partialorder %v7842, 8.507059e+37
    %v7844 = vand.u32 %v7817, 2147483648
    %v7845 = vor.u32 1.1754944e-38, %v7844
    %v7846 = vsel %vm7843, %v7845, %v7841
    %v7847 = vmul.f32 %v7811, %v7846
    %v7848 = vpack.c.bf16 %v7832, %v7832
    %v7849 = vpack.c.bf16 %v7847, %v7847
    %7850 = vrot.lane.b32.xlu0 %v7570, 80
    %v7851 = vpop.permute.xlu0 %7850
    %v7853 = vsel %vm313, %v7848, 0
    %v7856 = vsel %vm317, %v7851, 0
    %7858 = vmatpush.bf16.msra.mxu0 0
    %7859 = vmatpush.bf16.msra.mxu0 0
    %7860 = vmatpush.bf16.msra.mxu0 0
    %7861 = vmatpush.bf16.msra.mxu0 0
    %7862 = vmatpush.bf16.msra.mxu0 0
    %7863 = vmatpush.bf16.msra.mxu0 0
    %7864 = vmatpush.bf16.msra.mxu0 0
    %7865 = vmatpush.bf16.msra.mxu0 %v7856
    %7866 = vmatmul.bf16.gmra.mxu0 %v7853
    %v7867 = vpop.f32.mrf.mxu0
    %v7868 = vadd.f32 0.0, %v7867
    %v7869 = vpop.f32.mrf.mxu0
    %7870 = vdwg.mxu0
    %7871 = vrot.lane.b32.xlu0 %v7594, 80
    %v7872 = vpop.permute.xlu0 %7871
    %v7874 = vsel %vm313, %v7849, 0
    %v7877 = vsel %vm317, %v7872, 0
    %7879 = vmatpush.bf16.msra.mxu0 0
    %7880 = vmatpush.bf16.msra.mxu0 0
    %7881 = vmatpush.bf16.msra.mxu0 0
    %7882 = vmatpush.bf16.msra.mxu0 0
    %7883 = vmatpush.bf16.msra.mxu0 0
    %7884 = vmatpush.bf16.msra.mxu0 0
    %7885 = vmatpush.bf16.msra.mxu0 0
    %7886 = vmatpush.bf16.msra.mxu0 %v7877
    %7887 = vmatmul.bf16.gmra.mxu0 %v7874
    %v7888 = vpop.f32.mrf.mxu0
    %v7889 = vadd.f32 0.0, %v7888
    %v7890 = vpop.f32.mrf.mxu0
    %7891 = vdwg.mxu0
    %7892 = vrot.lane.b32.xlu0 %v7462, 64
    %v7893 = vpop.permute.xlu0 %7892
    %7894 = vrot.lane.b32.xlu0 %v7467, 64
    %v7895 = vpop.permute.xlu0 %7894
    %v7897 = vsel %vm571, %v7893, 0
    %v7900 = vsel %vm571, %v7895, 0
    %7902 = vmatpush.bf16.xpose.msra.mxu0 0
    %7903 = vmatpush.bf16.xpose.msra.mxu0 0
    %7904 = vmatpush.bf16.xpose.msra.mxu0 0
    %7905 = vmatpush.bf16.xpose.msra.mxu0 0
    %7906 = vmatpush.bf16.xpose.msra.mxu0 0
    %7907 = vmatpush.bf16.xpose.msra.mxu0 0
    %7908 = vmatpush.bf16.xpose.msra.mxu0 0
    %7909 = vmatpush.bf16.xpose.msra.mxu0 %v7900
    %7910 = vmatmul.bf16.gmra.mxu0 %v7897
    %v7911 = vpop.f32.mrf.mxu0
    %v7912 = vadd.f32 0.0, %v7911
    %v7913 = vpop.f32.mrf.mxu0
    %7914 = vdwg.mxu0
    %7915 = vrot.lane.b32.xlu0 %v7491, 64
    %v7916 = vpop.permute.xlu0 %7915
    %7917 = vrot.lane.b32.xlu0 %v7496, 64
    %v7918 = vpop.permute.xlu0 %7917
    %v7920 = vsel %vm571, %v7916, 0
    %v7923 = vsel %vm571, %v7918, 0
    %7925 = vmatpush.bf16.xpose.msra.mxu0 0
    %7926 = vmatpush.bf16.xpose.msra.mxu0 0
    %7927 = vmatpush.bf16.xpose.msra.mxu0 0
    %7928 = vmatpush.bf16.xpose.msra.mxu0 0
    %7929 = vmatpush.bf16.xpose.msra.mxu0 0
    %7930 = vmatpush.bf16.xpose.msra.mxu0 0
    %7931 = vmatpush.bf16.xpose.msra.mxu0 0
    %7932 = vmatpush.bf16.xpose.msra.mxu0 %v7923
    %7933 = vmatmul.bf16.gmra.mxu0 %v7920
    %v7934 = vpop.f32.mrf.mxu0
    %v7935 = vadd.f32 0.0, %v7934
    %v7936 = vpop.f32.mrf.mxu0
    %7937 = vdwg.mxu0
    %v7938 = vsel %vm313, %v7912, -inf
    %7939 = vmax.xlane.f32.xlu0 %v7938
    %v7940 = vpop.xlane.xlu0 %7939
    %v7941 = vsel %vm313, %v7935, -inf
    %7942 = vmax.xlane.f32.xlu0 %v7941
    %v7943 = vpop.xlane.xlu0 %7942
    %v7944 = vsub.f32 %v7912, %v7940
    %v7945 = vsub.f32 %v7935, %v7943
    %v7946 = vmul.f32 %v7944, 1.442695
    %v7947 = vpow.pop %v7946
    %v7948 = vmul.f32 %v7945, 1.442695
    %v7949 = vpow.pop %v7948
    %v7950 = vsel %vm313, %v7947, 0.0
    %7951 = vadd.xlane.f32.xlu0 %v7950
    %v7952 = vpop.xlane.xlu0 %7951
    %v7953 = vsel %vm313, %v7949, 0.0
    %7954 = vadd.xlane.f32.xlu0 %v7953
    %v7955 = vpop.xlane.xlu0 %7954
    %v7956 = vrcp.pop %v7952
    %v7957 = vmul.f32 %v7952, %v7956
    %v7958 = vsub.f32 1.0, %v7957
    %v7959 = vmul.f32 %v7956, %v7958
    %v7960 = vadd.f32 %v7956, %v7959
    %vm7961 = vweird.f32 %v7952
    %vm7962 = vweird.f32 %v7956
    %vm7963 = vmor %vm7961, %vm7962
    %v7964 = vsel %vm7963, %v7956, %v7960
    %v7965 = vand.u32 2147483647, %v7952
    %vm7966 = vcmp.eq.f32.partialorder %v7965, 8.507059e+37
    %v7967 = vand.u32 %v7952, 2147483648
    %v7968 = vor.u32 1.1754944e-38, %v7967
    %v7969 = vsel %vm7966, %v7968, %v7964
    %v7970 = vmul.f32 %v7947, %v7969
    %v7971 = vrcp.pop %v7955
    %v7972 = vmul.f32 %v7955, %v7971
    %v7973 = vsub.f32 1.0, %v7972
    %v7974 = vmul.f32 %v7971, %v7973
    %v7975 = vadd.f32 %v7971, %v7974
    %vm7976 = vweird.f32 %v7955
    %vm7977 = vweird.f32 %v7971
    %vm7978 = vmor %vm7976, %vm7977
    %v7979 = vsel %vm7978, %v7971, %v7975
    %v7980 = vand.u32 2147483647, %v7955
    %vm7981 = vcmp.eq.f32.partialorder %v7980, 8.507059e+37
    %v7982 = vand.u32 %v7955, 2147483648
    %v7983 = vor.u32 1.1754944e-38, %v7982
    %v7984 = vsel %vm7981, %v7983, %v7979
    %v7985 = vmul.f32 %v7949, %v7984
    %v7986 = vpack.c.bf16 %v7970, %v7970
    %v7987 = vpack.c.bf16 %v7985, %v7985
    %7988 = vrot.lane.b32.xlu0 %v7570, 64
    %v7989 = vpop.permute.xlu0 %7988
    %v7991 = vsel %vm313, %v7986, 0
    %v7994 = vsel %vm317, %v7989, 0
    %7996 = vmatpush.bf16.msra.mxu0 0
    %7997 = vmatpush.bf16.msra.mxu0 0
    %7998 = vmatpush.bf16.msra.mxu0 0
    %7999 = vmatpush.bf16.msra.mxu0 0
    %8000 = vmatpush.bf16.msra.mxu0 0
    %8001 = vmatpush.bf16.msra.mxu0 0
    %8002 = vmatpush.bf16.msra.mxu0 0
    %8003 = vmatpush.bf16.msra.mxu0 %v7994
    %8004 = vmatmul.bf16.gmra.mxu0 %v7991
    %v8005 = vpop.f32.mrf.mxu0
    %v8006 = vadd.f32 0.0, %v8005
    %v8007 = vpop.f32.mrf.mxu0
    %8008 = vdwg.mxu0
    %8009 = vrot.lane.b32.xlu0 %v7594, 64
    %v8010 = vpop.permute.xlu0 %8009
    %v8012 = vsel %vm313, %v7987, 0
    %v8015 = vsel %vm317, %v8010, 0
    %8017 = vmatpush.bf16.msra.mxu0 0
    %8018 = vmatpush.bf16.msra.mxu0 0
    %8019 = vmatpush.bf16.msra.mxu0 0
    %8020 = vmatpush.bf16.msra.mxu0 0
    %8021 = vmatpush.bf16.msra.mxu0 0
    %8022 = vmatpush.bf16.msra.mxu0 0
    %8023 = vmatpush.bf16.msra.mxu0 0
    %8024 = vmatpush.bf16.msra.mxu0 %v8015
    %8025 = vmatmul.bf16.gmra.mxu0 %v8012
    %v8026 = vpop.f32.mrf.mxu0
    %v8027 = vadd.f32 0.0, %v8026
    %v8028 = vpop.f32.mrf.mxu0
    %8029 = vdwg.mxu0
    %8030 = vrot.lane.b32.xlu0 %v7462, 48
    %v8031 = vpop.permute.xlu0 %8030
    %8032 = vrot.lane.b32.xlu0 %v7467, 48
    %v8033 = vpop.permute.xlu0 %8032
    %v8035 = vsel %vm571, %v8031, 0
    %v8038 = vsel %vm571, %v8033, 0
    %8040 = vmatpush.bf16.xpose.msra.mxu0 0
    %8041 = vmatpush.bf16.xpose.msra.mxu0 0
    %8042 = vmatpush.bf16.xpose.msra.mxu0 0
    %8043 = vmatpush.bf16.xpose.msra.mxu0 0
    %8044 = vmatpush.bf16.xpose.msra.mxu0 0
    %8045 = vmatpush.bf16.xpose.msra.mxu0 0
    %8046 = vmatpush.bf16.xpose.msra.mxu0 0
    %8047 = vmatpush.bf16.xpose.msra.mxu0 %v8038
    %8048 = vmatmul.bf16.gmra.mxu0 %v8035
    %v8049 = vpop.f32.mrf.mxu0
    %v8050 = vadd.f32 0.0, %v8049
    %v8051 = vpop.f32.mrf.mxu0
    %8052 = vdwg.mxu0
    %8053 = vrot.lane.b32.xlu0 %v7491, 48
    %v8054 = vpop.permute.xlu0 %8053
    %8055 = vrot.lane.b32.xlu0 %v7496, 48
    %v8056 = vpop.permute.xlu0 %8055
    %v8058 = vsel %vm571, %v8054, 0
    %v8061 = vsel %vm571, %v8056, 0
    %8063 = vmatpush.bf16.xpose.msra.mxu0 0
    %8064 = vmatpush.bf16.xpose.msra.mxu0 0
    %8065 = vmatpush.bf16.xpose.msra.mxu0 0
    %8066 = vmatpush.bf16.xpose.msra.mxu0 0
    %8067 = vmatpush.bf16.xpose.msra.mxu0 0
    %8068 = vmatpush.bf16.xpose.msra.mxu0 0
    %8069 = vmatpush.bf16.xpose.msra.mxu0 0
    %8070 = vmatpush.bf16.xpose.msra.mxu0 %v8061
    %8071 = vmatmul.bf16.gmra.mxu0 %v8058
    %v8072 = vpop.f32.mrf.mxu0
    %v8073 = vadd.f32 0.0, %v8072
    %v8074 = vpop.f32.mrf.mxu0
    %8075 = vdwg.mxu0
    %v8076 = vsel %vm313, %v8050, -inf
    %8077 = vmax.xlane.f32.xlu0 %v8076
    %v8078 = vpop.xlane.xlu0 %8077
    %v8079 = vsel %vm313, %v8073, -inf
    %8080 = vmax.xlane.f32.xlu0 %v8079
    %v8081 = vpop.xlane.xlu0 %8080
    %v8082 = vsub.f32 %v8050, %v8078
    %v8083 = vsub.f32 %v8073, %v8081
    %v8084 = vmul.f32 %v8082, 1.442695
    %v8085 = vpow.pop %v8084
    %v8086 = vmul.f32 %v8083, 1.442695
    %v8087 = vpow.pop %v8086
    %v8088 = vsel %vm313, %v8085, 0.0
    %8089 = vadd.xlane.f32.xlu0 %v8088
    %v8090 = vpop.xlane.xlu0 %8089
    %v8091 = vsel %vm313, %v8087, 0.0
    %8092 = vadd.xlane.f32.xlu0 %v8091
    %v8093 = vpop.xlane.xlu0 %8092
    %v8094 = vrcp.pop %v8090
    %v8095 = vmul.f32 %v8090, %v8094
    %v8096 = vsub.f32 1.0, %v8095
    %v8097 = vmul.f32 %v8094, %v8096
    %v8098 = vadd.f32 %v8094, %v8097
    %vm8099 = vweird.f32 %v8090
    %vm8100 = vweird.f32 %v8094
    %vm8101 = vmor %vm8099, %vm8100
    %v8102 = vsel %vm8101, %v8094, %v8098
    %v8103 = vand.u32 2147483647, %v8090
    %vm8104 = vcmp.eq.f32.partialorder %v8103, 8.507059e+37
    %v8105 = vand.u32 %v8090, 2147483648
    %v8106 = vor.u32 1.1754944e-38, %v8105
    %v8107 = vsel %vm8104, %v8106, %v8102
    %v8108 = vmul.f32 %v8085, %v8107
    %v8109 = vrcp.pop %v8093
    %v8110 = vmul.f32 %v8093, %v8109
    %v8111 = vsub.f32 1.0, %v8110
    %v8112 = vmul.f32 %v8109, %v8111
    %v8113 = vadd.f32 %v8109, %v8112
    %vm8114 = vweird.f32 %v8093
    %vm8115 = vweird.f32 %v8109
    %vm8116 = vmor %vm8114, %vm8115
    %v8117 = vsel %vm8116, %v8109, %v8113
    %v8118 = vand.u32 2147483647, %v8093
    %vm8119 = vcmp.eq.f32.partialorder %v8118, 8.507059e+37
    %v8120 = vand.u32 %v8093, 2147483648
    %v8121 = vor.u32 1.1754944e-38, %v8120
    %v8122 = vsel %vm8119, %v8121, %v8117
    %v8123 = vmul.f32 %v8087, %v8122
    %v8124 = vpack.c.bf16 %v8108, %v8108
    %v8125 = vpack.c.bf16 %v8123, %v8123
    %8126 = vrot.lane.b32.xlu0 %v7570, 48
    %v8127 = vpop.permute.xlu0 %8126
    %v8129 = vsel %vm313, %v8124, 0
    %v8132 = vsel %vm317, %v8127, 0
    %8134 = vmatpush.bf16.msra.mxu0 0
    %8135 = vmatpush.bf16.msra.mxu0 0
    %8136 = vmatpush.bf16.msra.mxu0 0
    %8137 = vmatpush.bf16.msra.mxu0 0
    %8138 = vmatpush.bf16.msra.mxu0 0
    %8139 = vmatpush.bf16.msra.mxu0 0
    %8140 = vmatpush.bf16.msra.mxu0 0
    %8141 = vmatpush.bf16.msra.mxu0 %v8132
    %8142 = vmatmul.bf16.gmra.mxu0 %v8129
    %v8143 = vpop.f32.mrf.mxu0
    %v8144 = vadd.f32 0.0, %v8143
    %v8145 = vpop.f32.mrf.mxu0
    %8146 = vdwg.mxu0
    %8147 = vrot.lane.b32.xlu0 %v7594, 48
    %v8148 = vpop.permute.xlu0 %8147
    %v8150 = vsel %vm313, %v8125, 0
    %v8153 = vsel %vm317, %v8148, 0
    %8155 = vmatpush.bf16.msra.mxu0 0
    %8156 = vmatpush.bf16.msra.mxu0 0
    %8157 = vmatpush.bf16.msra.mxu0 0
    %8158 = vmatpush.bf16.msra.mxu0 0
    %8159 = vmatpush.bf16.msra.mxu0 0
    %8160 = vmatpush.bf16.msra.mxu0 0
    %8161 = vmatpush.bf16.msra.mxu0 0
    %8162 = vmatpush.bf16.msra.mxu0 %v8153
    %8163 = vmatmul.bf16.gmra.mxu0 %v8150
    %v8164 = vpop.f32.mrf.mxu0
    %v8165 = vadd.f32 0.0, %v8164
    %v8166 = vpop.f32.mrf.mxu0
    %8167 = vdwg.mxu0
    %8168 = vrot.lane.b32.xlu0 %v7462, 32
    %v8169 = vpop.permute.xlu0 %8168
    %8170 = vrot.lane.b32.xlu0 %v7467, 32
    %v8171 = vpop.permute.xlu0 %8170
    %v8173 = vsel %vm571, %v8169, 0
    %v8176 = vsel %vm571, %v8171, 0
    %8178 = vmatpush.bf16.xpose.msra.mxu0 0
    %8179 = vmatpush.bf16.xpose.msra.mxu0 0
    %8180 = vmatpush.bf16.xpose.msra.mxu0 0
    %8181 = vmatpush.bf16.xpose.msra.mxu0 0
    %8182 = vmatpush.bf16.xpose.msra.mxu0 0
    %8183 = vmatpush.bf16.xpose.msra.mxu0 0
    %8184 = vmatpush.bf16.xpose.msra.mxu0 0
    %8185 = vmatpush.bf16.xpose.msra.mxu0 %v8176
    %8186 = vmatmul.bf16.gmra.mxu0 %v8173
    %v8187 = vpop.f32.mrf.mxu0
    %v8188 = vadd.f32 0.0, %v8187
    %v8189 = vpop.f32.mrf.mxu0
    %8190 = vdwg.mxu0
    %8191 = vrot.lane.b32.xlu0 %v7491, 32
    %v8192 = vpop.permute.xlu0 %8191
    %8193 = vrot.lane.b32.xlu0 %v7496, 32
    %v8194 = vpop.permute.xlu0 %8193
    %v8196 = vsel %vm571, %v8192, 0
    %v8199 = vsel %vm571, %v8194, 0
    %8201 = vmatpush.bf16.xpose.msra.mxu0 0
    %8202 = vmatpush.bf16.xpose.msra.mxu0 0
    %8203 = vmatpush.bf16.xpose.msra.mxu0 0
    %8204 = vmatpush.bf16.xpose.msra.mxu0 0
    %8205 = vmatpush.bf16.xpose.msra.mxu0 0
    %8206 = vmatpush.bf16.xpose.msra.mxu0 0
    %8207 = vmatpush.bf16.xpose.msra.mxu0 0
    %8208 = vmatpush.bf16.xpose.msra.mxu0 %v8199
    %8209 = vmatmul.bf16.gmra.mxu0 %v8196
    %v8210 = vpop.f32.mrf.mxu0
    %v8211 = vadd.f32 0.0, %v8210
    %v8212 = vpop.f32.mrf.mxu0
    %8213 = vdwg.mxu0
    %v8214 = vsel %vm313, %v8188, -inf
    %8215 = vmax.xlane.f32.xlu0 %v8214
    %v8216 = vpop.xlane.xlu0 %8215
    %v8217 = vsel %vm313, %v8211, -inf
    %8218 = vmax.xlane.f32.xlu0 %v8217
    %v8219 = vpop.xlane.xlu0 %8218
    %v8220 = vsub.f32 %v8188, %v8216
    %v8221 = vsub.f32 %v8211, %v8219
    %v8222 = vmul.f32 %v8220, 1.442695
    %v8223 = vpow.pop %v8222
    %v8224 = vmul.f32 %v8221, 1.442695
    %v8225 = vpow.pop %v8224
    %v8226 = vsel %vm313, %v8223, 0.0
    %8227 = vadd.xlane.f32.xlu0 %v8226
    %v8228 = vpop.xlane.xlu0 %8227
    %v8229 = vsel %vm313, %v8225, 0.0
    %8230 = vadd.xlane.f32.xlu0 %v8229
    %v8231 = vpop.xlane.xlu0 %8230
    %v8232 = vrcp.pop %v8228
    %v8233 = vmul.f32 %v8228, %v8232
    %v8234 = vsub.f32 1.0, %v8233
    %v8235 = vmul.f32 %v8232, %v8234
    %v8236 = vadd.f32 %v8232, %v8235
    %vm8237 = vweird.f32 %v8228
    %vm8238 = vweird.f32 %v8232
    %vm8239 = vmor %vm8237, %vm8238
    %v8240 = vsel %vm8239, %v8232, %v8236
    %v8241 = vand.u32 2147483647, %v8228
    %vm8242 = vcmp.eq.f32.partialorder %v8241, 8.507059e+37
    %v8243 = vand.u32 %v8228, 2147483648
    %v8244 = vor.u32 1.1754944e-38, %v8243
    %v8245 = vsel %vm8242, %v8244, %v8240
    %v8246 = vmul.f32 %v8223, %v8245
    %v8247 = vrcp.pop %v8231
    %v8248 = vmul.f32 %v8231, %v8247
    %v8249 = vsub.f32 1.0, %v8248
    %v8250 = vmul.f32 %v8247, %v8249
    %v8251 = vadd.f32 %v8247, %v8250
    %vm8252 = vweird.f32 %v8231
    %vm8253 = vweird.f32 %v8247
    %vm8254 = vmor %vm8252, %vm8253
    %v8255 = vsel %vm8254, %v8247, %v8251
    %v8256 = vand.u32 2147483647, %v8231
    %vm8257 = vcmp.eq.f32.partialorder %v8256, 8.507059e+37
    %v8258 = vand.u32 %v8231, 2147483648
    %v8259 = vor.u32 1.1754944e-38, %v8258
    %v8260 = vsel %vm8257, %v8259, %v8255
    %v8261 = vmul.f32 %v8225, %v8260
    %v8262 = vpack.c.bf16 %v8246, %v8246
    %v8263 = vpack.c.bf16 %v8261, %v8261
    %8264 = vrot.lane.b32.xlu0 %v7570, 32
    %v8265 = vpop.permute.xlu0 %8264
    %v8267 = vsel %vm313, %v8262, 0
    %v8270 = vsel %vm317, %v8265, 0
    %8272 = vmatpush.bf16.msra.mxu0 0
    %8273 = vmatpush.bf16.msra.mxu0 0
    %8274 = vmatpush.bf16.msra.mxu0 0
    %8275 = vmatpush.bf16.msra.mxu0 0
    %8276 = vmatpush.bf16.msra.mxu0 0
    %8277 = vmatpush.bf16.msra.mxu0 0
    %8278 = vmatpush.bf16.msra.mxu0 0
    %8279 = vmatpush.bf16.msra.mxu0 %v8270
    %8280 = vmatmul.bf16.gmra.mxu0 %v8267
    %v8281 = vpop.f32.mrf.mxu0
    %v8282 = vadd.f32 0.0, %v8281
    %v8283 = vpop.f32.mrf.mxu0
    %8284 = vdwg.mxu0
    %8285 = vrot.lane.b32.xlu0 %v7594, 32
    %v8286 = vpop.permute.xlu0 %8285
    %v8288 = vsel %vm313, %v8263, 0
    %v8291 = vsel %vm317, %v8286, 0
    %8293 = vmatpush.bf16.msra.mxu0 0
    %8294 = vmatpush.bf16.msra.mxu0 0
    %8295 = vmatpush.bf16.msra.mxu0 0
    %8296 = vmatpush.bf16.msra.mxu0 0
    %8297 = vmatpush.bf16.msra.mxu0 0
    %8298 = vmatpush.bf16.msra.mxu0 0
    %8299 = vmatpush.bf16.msra.mxu0 0
    %8300 = vmatpush.bf16.msra.mxu0 %v8291
    %8301 = vmatmul.bf16.gmra.mxu0 %v8288
    %v8302 = vpop.f32.mrf.mxu0
    %v8303 = vadd.f32 0.0, %v8302
    %v8304 = vpop.f32.mrf.mxu0
    %8305 = vdwg.mxu0
    %8306 = vrot.lane.b32.xlu0 %v7462, 16
    %v8307 = vpop.permute.xlu0 %8306
    %8308 = vrot.lane.b32.xlu0 %v7467, 16
    %v8309 = vpop.permute.xlu0 %8308
    %v8311 = vsel %vm571, %v8307, 0
    %v8314 = vsel %vm571, %v8309, 0
    %8316 = vmatpush.bf16.xpose.msra.mxu0 0
    %8317 = vmatpush.bf16.xpose.msra.mxu0 0
    %8318 = vmatpush.bf16.xpose.msra.mxu0 0
    %8319 = vmatpush.bf16.xpose.msra.mxu0 0
    %8320 = vmatpush.bf16.xpose.msra.mxu0 0
    %8321 = vmatpush.bf16.xpose.msra.mxu0 0
    %8322 = vmatpush.bf16.xpose.msra.mxu0 0
    %8323 = vmatpush.bf16.xpose.msra.mxu0 %v8314
    %8324 = vmatmul.bf16.gmra.mxu0 %v8311
    %v8325 = vpop.f32.mrf.mxu0
    %v8326 = vadd.f32 0.0, %v8325
    %v8327 = vpop.f32.mrf.mxu0
    %8328 = vdwg.mxu0
    %8329 = vrot.lane.b32.xlu0 %v7491, 16
    %v8330 = vpop.permute.xlu0 %8329
    %8331 = vrot.lane.b32.xlu0 %v7496, 16
    %v8332 = vpop.permute.xlu0 %8331
    %v8334 = vsel %vm571, %v8330, 0
    %v8337 = vsel %vm571, %v8332, 0
    %8339 = vmatpush.bf16.xpose.msra.mxu0 0
    %8340 = vmatpush.bf16.xpose.msra.mxu0 0
    %8341 = vmatpush.bf16.xpose.msra.mxu0 0
    %8342 = vmatpush.bf16.xpose.msra.mxu0 0
    %8343 = vmatpush.bf16.xpose.msra.mxu0 0
    %8344 = vmatpush.bf16.xpose.msra.mxu0 0
    %8345 = vmatpush.bf16.xpose.msra.mxu0 0
    %8346 = vmatpush.bf16.xpose.msra.mxu0 %v8337
    %8347 = vmatmul.bf16.gmra.mxu0 %v8334
    %v8348 = vpop.f32.mrf.mxu0
    %v8349 = vadd.f32 0.0, %v8348
    %v8350 = vpop.f32.mrf.mxu0
    %8351 = vdwg.mxu0
    %v8352 = vsel %vm313, %v8326, -inf
    %8353 = vmax.xlane.f32.xlu0 %v8352
    %v8354 = vpop.xlane.xlu0 %8353
    %v8355 = vsel %vm313, %v8349, -inf
    %8356 = vmax.xlane.f32.xlu0 %v8355
    %v8357 = vpop.xlane.xlu0 %8356
    %v8358 = vsub.f32 %v8326, %v8354
    %v8359 = vsub.f32 %v8349, %v8357
    %v8360 = vmul.f32 %v8358, 1.442695
    %v8361 = vpow.pop %v8360
    %v8362 = vmul.f32 %v8359, 1.442695
    %v8363 = vpow.pop %v8362
    %v8364 = vsel %vm313, %v8361, 0.0
    %8365 = vadd.xlane.f32.xlu0 %v8364
    %v8366 = vpop.xlane.xlu0 %8365
    %v8367 = vsel %vm313, %v8363, 0.0
    %8368 = vadd.xlane.f32.xlu0 %v8367
    %v8369 = vpop.xlane.xlu0 %8368
    %v8370 = vrcp.pop %v8366
    %v8371 = vmul.f32 %v8366, %v8370
    %v8372 = vsub.f32 1.0, %v8371
    %v8373 = vmul.f32 %v8370, %v8372
    %v8374 = vadd.f32 %v8370, %v8373
    %vm8375 = vweird.f32 %v8366
    %vm8376 = vweird.f32 %v8370
    %vm8377 = vmor %vm8375, %vm8376
    %v8378 = vsel %vm8377, %v8370, %v8374
    %v8379 = vand.u32 2147483647, %v8366
    %vm8380 = vcmp.eq.f32.partialorder %v8379, 8.507059e+37
    %v8381 = vand.u32 %v8366, 2147483648
    %v8382 = vor.u32 1.1754944e-38, %v8381
    %v8383 = vsel %vm8380, %v8382, %v8378
    %v8384 = vmul.f32 %v8361, %v8383
    %v8385 = vrcp.pop %v8369
    %v8386 = vmul.f32 %v8369, %v8385
    %v8387 = vsub.f32 1.0, %v8386
    %v8388 = vmul.f32 %v8385, %v8387
    %v8389 = vadd.f32 %v8385, %v8388
    %vm8390 = vweird.f32 %v8369
    %vm8391 = vweird.f32 %v8385
    %vm8392 = vmor %vm8390, %vm8391
    %v8393 = vsel %vm8392, %v8385, %v8389
    %v8394 = vand.u32 2147483647, %v8369
    %vm8395 = vcmp.eq.f32.partialorder %v8394, 8.507059e+37
    %v8396 = vand.u32 %v8369, 2147483648
    %v8397 = vor.u32 1.1754944e-38, %v8396
    %v8398 = vsel %vm8395, %v8397, %v8393
    %v8399 = vmul.f32 %v8363, %v8398
    %v8400 = vpack.c.bf16 %v8384, %v8384
    %v8401 = vpack.c.bf16 %v8399, %v8399
    %8402 = vrot.lane.b32.xlu0 %v7570, 16
    %v8403 = vpop.permute.xlu0 %8402
    %v8405 = vsel %vm313, %v8400, 0
    %v8408 = vsel %vm317, %v8403, 0
    %8410 = vmatpush.bf16.msra.mxu0 0
    %8411 = vmatpush.bf16.msra.mxu0 0
    %8412 = vmatpush.bf16.msra.mxu0 0
    %8413 = vmatpush.bf16.msra.mxu0 0
    %8414 = vmatpush.bf16.msra.mxu0 0
    %8415 = vmatpush.bf16.msra.mxu0 0
    %8416 = vmatpush.bf16.msra.mxu0 0
    %8417 = vmatpush.bf16.msra.mxu0 %v8408
    %8418 = vmatmul.bf16.gmra.mxu0 %v8405
    %v8419 = vpop.f32.mrf.mxu0
    %v8420 = vadd.f32 0.0, %v8419
    %v8421 = vpop.f32.mrf.mxu0
    %8422 = vdwg.mxu0
    %8423 = vrot.lane.b32.xlu0 %v7594, 16
    %v8424 = vpop.permute.xlu0 %8423
    %v8426 = vsel %vm313, %v8401, 0
    %v8429 = vsel %vm317, %v8424, 0
    %8431 = vmatpush.bf16.msra.mxu0 0
    %8432 = vmatpush.bf16.msra.mxu0 0
    %8433 = vmatpush.bf16.msra.mxu0 0
    %8434 = vmatpush.bf16.msra.mxu0 0
    %8435 = vmatpush.bf16.msra.mxu0 0
    %8436 = vmatpush.bf16.msra.mxu0 0
    %8437 = vmatpush.bf16.msra.mxu0 0
    %8438 = vmatpush.bf16.msra.mxu0 %v8429
    %8439 = vmatmul.bf16.gmra.mxu0 %v8426
    %v8440 = vpop.f32.mrf.mxu0
    %v8441 = vadd.f32 0.0, %v8440
    %v8442 = vpop.f32.mrf.mxu0
    %8443 = vdwg.mxu0
    %8446 = vrot.lane.b32.xlu0 %v7589, 16
    %v8447 = vpop.permute.xlu0 %8446
    %8448 = vrot.lane.b32.xlu0 %v7613, 16
    %v8449 = vpop.permute.xlu0 %8448
    %8454 = vrot.lane.b32.xlu0 %v7730, 32
    %v8455 = vpop.permute.xlu0 %8454
    %8456 = vrot.lane.b32.xlu0 %v7751, 32
    %v8457 = vpop.permute.xlu0 %8456
    %8462 = vrot.lane.b32.xlu0 %v7868, 48
    %v8463 = vpop.permute.xlu0 %8462
    %8464 = vrot.lane.b32.xlu0 %v7889, 48
    %v8465 = vpop.permute.xlu0 %8464
    %8470 = vrot.lane.b32.xlu0 %v8006, 64
    %v8471 = vpop.permute.xlu0 %8470
    %8472 = vrot.lane.b32.xlu0 %v8027, 64
    %v8473 = vpop.permute.xlu0 %8472
    %8478 = vrot.lane.b32.xlu0 %v8144, 80
    %v8479 = vpop.permute.xlu0 %8478
    %8480 = vrot.lane.b32.xlu0 %v8165, 80
    %v8481 = vpop.permute.xlu0 %8480
    %8486 = vrot.lane.b32.xlu0 %v8282, 96
    %v8487 = vpop.permute.xlu0 %8486
    %8488 = vrot.lane.b32.xlu0 %v8303, 96
    %v8489 = vpop.permute.xlu0 %8488
    %8494 = vrot.lane.b32.xlu0 %v8420, 112
    %v8495 = vpop.permute.xlu0 %8494
    %8496 = vrot.lane.b32.xlu0 %v8441, 112
    %v8497 = vpop.permute.xlu0 %8496
    %v8500 = vsel %vm571, %v7438, %v8447
    %v8501 = vsel %vm571, %v7457, %v8449
    %v8502 = vsel %vm1740, %v8500, %v8455
    %v8503 = vsel %vm1740, %v8501, %v8457
    %v8504 = vsel %vm1743, %v8502, %v8463
    %v8505 = vsel %vm1743, %v8503, %v8465
    %v8506 = vsel %vm1746, %v8504, %v8471
    %v8507 = vsel %vm1746, %v8505, %v8473
    %v8508 = vsel %vm1749, %v8506, %v8479
    %v8509 = vsel %vm1749, %v8507, %v8481
    %v8510 = vsel %vm1752, %v8508, %v8487
    %v8511 = vsel %vm1752, %v8509, %v8489
    %v8512 = vsel %vm1755, %v8510, %v8495
    %v8513 = vsel %vm1755, %v8511, %v8497
    %v8514 = vpack.c.bf16 %v8513, %v8512
    %s8515 = scalar_lea.vmem [#allocation9], 192
    %v8516 = vld [vmem:[%s8515] sm:$0xf]
    %v8517 = vld [vmem:[%s8515 + $0x4] sm:$0xf]
    %v8518 = vld [vmem:[%s8515 + $0x8] sm:$0xf]
    %v8519 = vld [vmem:[%s8515 + $0xc] sm:$0xf]
    %v8520 = vld [vmem:[%s8515 + $0x10] sm:$0xf]
    %v8521 = vld [vmem:[%s8515 + $0x14] sm:$0xf]
    %v8522 = vld [vmem:[%s8515 + $0x18] sm:$0xf]
    %v8523 = vld [vmem:[%s8515 + $0x1c] sm:$0xf]
    %v8524 = vld [vmem:[%s8515 + $0x20] sm:$0xf]
    %v8525 = vld [vmem:[%s8515 + $0x24] sm:$0xf]
    %v8526 = vld [vmem:[%s8515 + $0x28] sm:$0xf]
    %v8527 = vld [vmem:[%s8515 + $0x2c] sm:$0xf]
    %v8528 = vld [vmem:[%s8515 + $0x30] sm:$0xf]
    %v8529 = vld [vmem:[%s8515 + $0x34] sm:$0xf]
    %v8530 = vld [vmem:[%s8515 + $0x38] sm:$0xf]
    %v8531 = vld [vmem:[%s8515 + $0x3c] sm:$0xf]
    %s8532 = scalar_lea.vmem [#allocation11], 3
    %v8533 = vld [vmem:[%s8532] sm:$0x1]
    %v8535 = vperm.slane %v8533, 0
    %v8553 = vunpack.c.l.b16 %v8516
    %v8554 = vunpack.c.l.b16 %v8517
    %v8555 = vunpack.c.l.b16 %v8518
    %v8556 = vunpack.c.l.b16 %v8519
    %v8557 = vunpack.c.l.b16 %v8520
    %v8558 = vunpack.c.l.b16 %v8521
    %v8559 = vunpack.c.l.b16 %v8522
    %v8560 = vunpack.c.l.b16 %v8523
    %v8561 = vunpack.c.l.b16 %v8524
    %v8562 = vunpack.c.l.b16 %v8525
    %v8563 = vunpack.c.l.b16 %v8526
    %v8564 = vunpack.c.l.b16 %v8527
    %v8565 = vunpack.c.l.b16 %v8528
    %v8566 = vunpack.c.l.b16 %v8529
    %v8567 = vunpack.c.l.b16 %v8530
    %v8568 = vunpack.c.l.b16 %v8531
    %v8569 = vpack.c.b16 %v8554, %v8553
    %v8570 = vpack.c.b16 %v8556, %v8555
    %v8571 = vpack.c.b16 %v8558, %v8557
    %v8572 = vpack.c.b16 %v8560, %v8559
    %v8573 = vpack.c.b16 %v8562, %v8561
    %v8574 = vpack.c.b16 %v8564, %v8563
    %v8575 = vpack.c.b16 %v8566, %v8565
    %v8576 = vpack.c.b16 %v8568, %v8567
    %8585 = vmatpush.bf16.msra.mxu0 %v8576
    %8586 = vmatpush.bf16.msra.mxu0 %v8575
    %8587 = vmatpush.bf16.msra.mxu0 %v8574
    %8588 = vmatpush.bf16.msra.mxu0 %v8573
    %8589 = vmatpush.bf16.msra.mxu0 %v8572
    %8590 = vmatpush.bf16.msra.mxu0 %v8571
    %8591 = vmatpush.bf16.msra.mxu0 %v8570
    %8592 = vmatpush.bf16.msra.mxu0 %v8569
    %8593 = vmatmul.bf16.gmra.mxu0 %v8514
    %v8594 = vpop.f32.mrf.mxu0
    %v8595 = vadd.f32 %v8535, %v8594
    %v8596 = vpop.f32.mrf.mxu0
    %v8597 = vadd.f32 %v8535, %v8596
    %8598 = vdwg.mxu0
    %v8599 = vadd.f32 %v7111, %v8595
    %v8600 = vadd.f32 %v7112, %v8597
    %s8601 = scalar_lea.vmem [#allocation12], 3
    %v8602 = vld [vmem:[%s8601] sm:$0x1]
    %s8603 = scalar_lea.vmem [#allocation14], 3
    %v8604 = vld [vmem:[%s8603] sm:$0x1]
    %8605 = vadd.xlane.f32.xlu0 %v8599
    %v8606 = vpop.xlane.xlu0 %8605
    %8607 = vadd.xlane.f32.xlu0 %v8600
    %v8608 = vpop.xlane.xlu0 %8607
    %v8609 = vmul.f32 %v8606, %v1855
    %v8610 = vmul.f32 %v8608, %v1855
    %v8611 = vsub.f32 %v8599, %v8609
    %v8612 = vsub.f32 %v8600, %v8610
    %v8613 = vmul.f32 %v8611, %v8611
    %v8614 = vmul.f32 %v8612, %v8612
    %8615 = vadd.xlane.f32.xlu0 %v8613
    %v8616 = vpop.xlane.xlu0 %8615
    %8617 = vadd.xlane.f32.xlu0 %v8614
    %v8618 = vpop.xlane.xlu0 %8617
    %v8619 = vmul.f32 %v8616, %v1855
    %v8620 = vmul.f32 %v8618, %v1855
    %v8621 = vadd.f32 %v8619, 1e-12
    %v8622 = vadd.f32 %v8620, 1e-12
    %v8623 = vrsqrt.pop %v8621
    %v8624 = vmul.f32 %v8623, %v8621
    %v8625 = vmul.f32 %v8624, %v8623
    %v8626 = vmul.f32 0.5, %v8625
    %v8627 = vsub.f32 1.5, %v8626
    %v8628 = vmul.f32 %v8623, %v8627
    %vm8629 = vweird.f32 %v8621
    %vm8630 = vweird.f32 %v8623
    %vm8631 = vmor %vm8629, %vm8630
    %v8632 = vsel %vm8631, %v8623, %v8628
    %v8633 = vrsqrt.pop %v8622
    %v8634 = vmul.f32 %v8633, %v8622
    %v8635 = vmul.f32 %v8634, %v8633
    %v8636 = vmul.f32 0.5, %v8635
    %v8637 = vsub.f32 1.5, %v8636
    %v8638 = vmul.f32 %v8633, %v8637
    %vm8639 = vweird.f32 %v8622
    %vm8640 = vweird.f32 %v8633
    %vm8641 = vmor %vm8639, %vm8640
    %v8642 = vsel %vm8641, %v8633, %v8638
    %v8643 = vmul.f32 %v8611, %v8632
    %v8644 = vmul.f32 %v8612, %v8642
    %v8646 = vperm.slane %v8602, 0
    %v8648 = vmul.f32 %v8643, %v8646
    %v8649 = vmul.f32 %v8644, %v8646
    %v8651 = vperm.slane %v8604, 0
    %v8653 = vadd.f32 %v8648, %v8651
    %v8654 = vadd.f32 %v8649, %v8651
    %v8655 = vpack.c.bf16 %v8654, %v8653
    %s8656 = scalar_lea.vmem [#allocation15], 768
    %v8657 = vld [vmem:[%s8656] sm:$0xff]
    %v8658 = vld [vmem:[%s8656 + $0x8] sm:$0xff]
    %v8659 = vld [vmem:[%s8656 + $0x10] sm:$0xff]
    %v8660 = vld [vmem:[%s8656 + $0x18] sm:$0xff]
    %v8661 = vld [vmem:[%s8656 + $0x20] sm:$0xff]
    %v8662 = vld [vmem:[%s8656 + $0x28] sm:$0xff]
    %v8663 = vld [vmem:[%s8656 + $0x30] sm:$0xff]
    %v8664 = vld [vmem:[%s8656 + $0x38] sm:$0xff]
    %v8665 = vld [vmem:[%s8656 + $0x40] sm:$0xff]
    %v8666 = vld [vmem:[%s8656 + $0x48] sm:$0xff]
    %v8667 = vld [vmem:[%s8656 + $0x50] sm:$0xff]
    %v8668 = vld [vmem:[%s8656 + $0x58] sm:$0xff]
    %v8669 = vld [vmem:[%s8656 + $0x60] sm:$0xff]
    %v8670 = vld [vmem:[%s8656 + $0x68] sm:$0xff]
    %v8671 = vld [vmem:[%s8656 + $0x70] sm:$0xff]
    %v8672 = vld [vmem:[%s8656 + $0x78] sm:$0xff]
    %v8673 = vld [vmem:[%s8656 + $0x80] sm:$0xff]
    %v8674 = vld [vmem:[%s8656 + $0x88] sm:$0xff]
    %v8675 = vld [vmem:[%s8656 + $0x90] sm:$0xff]
    %v8676 = vld [vmem:[%s8656 + $0x98] sm:$0xff]
    %v8677 = vld [vmem:[%s8656 + $0xa0] sm:$0xff]
    %v8678 = vld [vmem:[%s8656 + $0xa8] sm:$0xff]
    %v8679 = vld [vmem:[%s8656 + $0xb0] sm:$0xff]
    %v8680 = vld [vmem:[%s8656 + $0xb8] sm:$0xff]
    %v8681 = vld [vmem:[%s8656 + $0xc0] sm:$0xff]
    %v8682 = vld [vmem:[%s8656 + $0xc8] sm:$0xff]
    %v8683 = vld [vmem:[%s8656 + $0xd0] sm:$0xff]
    %v8684 = vld [vmem:[%s8656 + $0xd8] sm:$0xff]
    %v8685 = vld [vmem:[%s8656 + $0xe0] sm:$0xff]
    %v8686 = vld [vmem:[%s8656 + $0xe8] sm:$0xff]
    %v8687 = vld [vmem:[%s8656 + $0xf0] sm:$0xff]
    %v8688 = vld [vmem:[%s8656 + $0xf8] sm:$0xff]
    %s8689 = scalar_lea.vmem %s10, 12
    %v8690 = vld [vmem:[%s8689] sm:$0xf]
    %v8692 = vperm.slane %v8690, 0
    %v8693 = vperm.slane %v8690, 1
    %v8694 = vperm.slane %v8690, 2
    %v8695 = vperm.slane %v8690, 3
    %v8732 = vunpack.c.l.b16 %v8657
    %v8733 = vunpack.c.h.b16 %v8657
    %v8734 = vunpack.c.l.b16 %v8658
    %v8735 = vunpack.c.h.b16 %v8658
    %v8736 = vunpack.c.l.b16 %v8659
    %v8737 = vunpack.c.h.b16 %v8659
    %v8738 = vunpack.c.l.b16 %v8660
    %v8739 = vunpack.c.h.b16 %v8660
    %v8740 = vunpack.c.l.b16 %v8661
    %v8741 = vunpack.c.h.b16 %v8661
    %v8742 = vunpack.c.l.b16 %v8662
    %v8743 = vunpack.c.h.b16 %v8662
    %v8744 = vunpack.c.l.b16 %v8663
    %v8745 = vunpack.c.h.b16 %v8663
    %v8746 = vunpack.c.l.b16 %v8664
    %v8747 = vunpack.c.h.b16 %v8664
    %v8748 = vunpack.c.l.b16 %v8665
    %v8749 = vunpack.c.h.b16 %v8665
    %v8750 = vunpack.c.l.b16 %v8666
    %v8751 = vunpack.c.h.b16 %v8666
    %v8752 = vunpack.c.l.b16 %v8667
    %v8753 = vunpack.c.h.b16 %v8667
    %v8754 = vunpack.c.l.b16 %v8668
    %v8755 = vunpack.c.h.b16 %v8668
    %v8756 = vunpack.c.l.b16 %v8669
    %v8757 = vunpack.c.h.b16 %v8669
    %v8758 = vunpack.c.l.b16 %v8670
    %v8759 = vunpack.c.h.b16 %v8670
    %v8760 = vunpack.c.l.b16 %v8671
    %v8761 = vunpack.c.h.b16 %v8671
    %v8762 = vunpack.c.l.b16 %v8672
    %v8763 = vunpack.c.h.b16 %v8672
    %v8764 = vunpack.c.l.b16 %v8673
    %v8765 = vunpack.c.h.b16 %v8673
    %v8766 = vunpack.c.l.b16 %v8674
    %v8767 = vunpack.c.h.b16 %v8674
    %v8768 = vunpack.c.l.b16 %v8675
    %v8769 = vunpack.c.h.b16 %v8675
    %v8770 = vunpack.c.l.b16 %v8676
    %v8771 = vunpack.c.h.b16 %v8676
    %v8772 = vunpack.c.l.b16 %v8677
    %v8773 = vunpack.c.h.b16 %v8677
    %v8774 = vunpack.c.l.b16 %v8678
    %v8775 = vunpack.c.h.b16 %v8678
    %v8776 = vunpack.c.l.b16 %v8679
    %v8777 = vunpack.c.h.b16 %v8679
    %v8778 = vunpack.c.l.b16 %v8680
    %v8779 = vunpack.c.h.b16 %v8680
    %v8780 = vunpack.c.l.b16 %v8681
    %v8781 = vunpack.c.h.b16 %v8681
    %v8782 = vunpack.c.l.b16 %v8682
    %v8783 = vunpack.c.h.b16 %v8682
    %v8784 = vunpack.c.l.b16 %v8683
    %v8785 = vunpack.c.h.b16 %v8683
    %v8786 = vunpack.c.l.b16 %v8684
    %v8787 = vunpack.c.h.b16 %v8684
    %v8788 = vunpack.c.l.b16 %v8685
    %v8789 = vunpack.c.h.b16 %v8685
    %v8790 = vunpack.c.l.b16 %v8686
    %v8791 = vunpack.c.h.b16 %v8686
    %v8792 = vunpack.c.l.b16 %v8687
    %v8793 = vunpack.c.h.b16 %v8687
    %v8794 = vunpack.c.l.b16 %v8688
    %v8795 = vunpack.c.h.b16 %v8688
    %v8796 = vpack.c.b16 %v8736, %v8732
    %v8797 = vpack.c.b16 %v8737, %v8733
    %v8798 = vpack.c.b16 %v8738, %v8734
    %v8799 = vpack.c.b16 %v8739, %v8735
    %v8800 = vpack.c.b16 %v8744, %v8740
    %v8801 = vpack.c.b16 %v8745, %v8741
    %v8802 = vpack.c.b16 %v8746, %v8742
    %v8803 = vpack.c.b16 %v8747, %v8743
    %v8804 = vpack.c.b16 %v8752, %v8748
    %v8805 = vpack.c.b16 %v8753, %v8749
    %v8806 = vpack.c.b16 %v8754, %v8750
    %v8807 = vpack.c.b16 %v8755, %v8751
    %v8808 = vpack.c.b16 %v8760, %v8756
    %v8809 = vpack.c.b16 %v8761, %v8757
    %v8810 = vpack.c.b16 %v8762, %v8758
    %v8811 = vpack.c.b16 %v8763, %v8759
    %v8812 = vpack.c.b16 %v8768, %v8764
    %v8813 = vpack.c.b16 %v8769, %v8765
    %v8814 = vpack.c.b16 %v8770, %v8766
    %v8815 = vpack.c.b16 %v8771, %v8767
    %v8816 = vpack.c.b16 %v8776, %v8772
    %v8817 = vpack.c.b16 %v8777, %v8773
    %v8818 = vpack.c.b16 %v8778, %v8774
    %v8819 = vpack.c.b16 %v8779, %v8775
    %v8820 = vpack.c.b16 %v8784, %v8780
    %v8821 = vpack.c.b16 %v8785, %v8781
    %v8822 = vpack.c.b16 %v8786, %v8782
    %v8823 = vpack.c.b16 %v8787, %v8783
    %v8824 = vpack.c.b16 %v8792, %v8788
    %v8825 = vpack.c.b16 %v8793, %v8789
    %v8826 = vpack.c.b16 %v8794, %v8790
    %v8827 = vpack.c.b16 %v8795, %v8791
    %8860 = vmatpush.bf16.msra.mxu0 %v8824
    %8861 = vmatpush.bf16.msra.mxu0 %v8820
    %8862 = vmatpush.bf16.msra.mxu0 %v8816
    %8863 = vmatpush.bf16.msra.mxu0 %v8812
    %8864 = vmatpush.bf16.msra.mxu0 %v8808
    %8865 = vmatpush.bf16.msra.mxu0 %v8804
    %8866 = vmatpush.bf16.msra.mxu0 %v8800
    %8867 = vmatpush.bf16.msra.mxu0 %v8796
    %8868 = vmatmul.bf16.gmra.mxu0 %v8655
    %v8869 = vpop.f32.mrf.mxu0
    %v8870 = vadd.f32 %v8692, %v8869
    %v8871 = vpop.f32.mrf.mxu0
    %v8872 = vadd.f32 %v8692, %v8871
    %8873 = vdwg.mxu0
    %8874 = vmatpush.bf16.msra.mxu0 %v8825
    %8875 = vmatpush.bf16.msra.mxu0 %v8821
    %8876 = vmatpush.bf16.msra.mxu0 %v8817
    %8877 = vmatpush.bf16.msra.mxu0 %v8813
    %8878 = vmatpush.bf16.msra.mxu0 %v8809
    %8879 = vmatpush.bf16.msra.mxu0 %v8805
    %8880 = vmatpush.bf16.msra.mxu0 %v8801
    %8881 = vmatpush.bf16.msra.mxu0 %v8797
    %8882 = vmatmul.bf16.gmra.mxu0 %v8655
    %v8883 = vpop.f32.mrf.mxu0
    %v8884 = vadd.f32 %v8693, %v8883
    %v8885 = vpop.f32.mrf.mxu0
    %v8886 = vadd.f32 %v8693, %v8885
    %8887 = vdwg.mxu0
    %8888 = vmatpush.bf16.msra.mxu0 %v8826
    %8889 = vmatpush.bf16.msra.mxu0 %v8822
    %8890 = vmatpush.bf16.msra.mxu0 %v8818
    %8891 = vmatpush.bf16.msra.mxu0 %v8814
    %8892 = vmatpush.bf16.msra.mxu0 %v8810
    %8893 = vmatpush.bf16.msra.mxu0 %v8806
    %8894 = vmatpush.bf16.msra.mxu0 %v8802
    %8895 = vmatpush.bf16.msra.mxu0 %v8798
    %8896 = vmatmul.bf16.gmra.mxu0 %v8655
    %v8897 = vpop.f32.mrf.mxu0
    %v8898 = vadd.f32 %v8694, %v8897
    %v8899 = vpop.f32.mrf.mxu0
    %v8900 = vadd.f32 %v8694, %v8899
    %8901 = vdwg.mxu0
    %8902 = vmatpush.bf16.msra.mxu0 %v8827
    %8903 = vmatpush.bf16.msra.mxu0 %v8823
    %8904 = vmatpush.bf16.msra.mxu0 %v8819
    %8905 = vmatpush.bf16.msra.mxu0 %v8815
    %8906 = vmatpush.bf16.msra.mxu0 %v8811
    %8907 = vmatpush.bf16.msra.mxu0 %v8807
    %8908 = vmatpush.bf16.msra.mxu0 %v8803
    %8909 = vmatpush.bf16.msra.mxu0 %v8799
    %8910 = vmatmul.bf16.gmra.mxu0 %v8655
    %v8911 = vpop.f32.mrf.mxu0
    %v8912 = vadd.f32 %v8695, %v8911
    %v8913 = vpop.f32.mrf.mxu0
    %v8914 = vadd.f32 %v8695, %v8913
    %8915 = vdwg.mxu0
    %v8916 = vmul.f32 %v8870, %v8870
    %v8917 = vmul.f32 %v8884, %v8884
    %v8918 = vmul.f32 %v8898, %v8898
    %v8919 = vmul.f32 %v8912, %v8912
    %v8920 = vmul.f32 %v8872, %v8872
    %v8921 = vmul.f32 %v8886, %v8886
    %v8922 = vmul.f32 %v8900, %v8900
    %v8923 = vmul.f32 %v8914, %v8914
    %v8924 = vmul.f32 %v8870, %v8916
    %v8925 = vmul.f32 %v8884, %v8917
    %v8926 = vmul.f32 %v8898, %v8918
    %v8927 = vmul.f32 %v8912, %v8919
    %v8928 = vmul.f32 %v8872, %v8920
    %v8929 = vmul.f32 %v8886, %v8921
    %v8930 = vmul.f32 %v8900, %v8922
    %v8931 = vmul.f32 %v8914, %v8923
    %v8932 = vmul.f32 %v8924, 0.044715
    %v8933 = vmul.f32 %v8925, 0.044715
    %v8934 = vmul.f32 %v8926, 0.044715
    %v8935 = vmul.f32 %v8927, 0.044715
    %v8936 = vmul.f32 %v8928, 0.044715
    %v8937 = vmul.f32 %v8929, 0.044715
    %v8938 = vmul.f32 %v8930, 0.044715
    %v8939 = vmul.f32 %v8931, 0.044715
    %v8940 = vadd.f32 %v8870, %v8932
    %v8941 = vadd.f32 %v8884, %v8933
    %v8942 = vadd.f32 %v8898, %v8934
    %v8943 = vadd.f32 %v8912, %v8935
    %v8944 = vadd.f32 %v8872, %v8936
    %v8945 = vadd.f32 %v8886, %v8937
    %v8946 = vadd.f32 %v8900, %v8938
    %v8947 = vadd.f32 %v8914, %v8939
    %v8948 = vmul.f32 %v8940, 0.7978846
    %v8949 = vmul.f32 %v8941, 0.7978846
    %v8950 = vmul.f32 %v8942, 0.7978846
    %v8951 = vmul.f32 %v8943, 0.7978846
    %v8952 = vmul.f32 %v8944, 0.7978846
    %v8953 = vmul.f32 %v8945, 0.7978846
    %v8954 = vmul.f32 %v8946, 0.7978846
    %v8955 = vmul.f32 %v8947, 0.7978846
    %v8956 = vtanh.pop %v8948
    %v8957 = vtanh.pop %v8949
    %v8958 = vtanh.pop %v8950
    %v8959 = vtanh.pop %v8951
    %v8960 = vtanh.pop %v8952
    %v8961 = vtanh.pop %v8953
    %v8962 = vtanh.pop %v8954
    %v8963 = vtanh.pop %v8955
    %v8964 = vadd.f32 %v8956, 1.0
    %v8965 = vadd.f32 %v8957, 1.0
    %v8966 = vadd.f32 %v8958, 1.0
    %v8967 = vadd.f32 %v8959, 1.0
    %v8968 = vadd.f32 %v8960, 1.0
    %v8969 = vadd.f32 %v8961, 1.0
    %v8970 = vadd.f32 %v8962, 1.0
    %v8971 = vadd.f32 %v8963, 1.0
    %v8972 = vmul.f32 %v8964, 0.5
    %v8973 = vmul.f32 %v8965, 0.5
    %v8974 = vmul.f32 %v8966, 0.5
    %v8975 = vmul.f32 %v8967, 0.5
    %v8976 = vmul.f32 %v8968, 0.5
    %v8977 = vmul.f32 %v8969, 0.5
    %v8978 = vmul.f32 %v8970, 0.5
    %v8979 = vmul.f32 %v8971, 0.5
    %v8980 = vmul.f32 %v8870, %v8972
    %v8981 = vmul.f32 %v8884, %v8973
    %v8982 = vmul.f32 %v8898, %v8974
    %v8983 = vmul.f32 %v8912, %v8975
    %v8984 = vmul.f32 %v8872, %v8976
    %v8985 = vmul.f32 %v8886, %v8977
    %v8986 = vmul.f32 %v8900, %v8978
    %v8987 = vmul.f32 %v8914, %v8979
    %v8988 = vpack.c.bf16 %v8984, %v8980
    %v8989 = vpack.c.bf16 %v8985, %v8981
    %v8990 = vpack.c.bf16 %v8986, %v8982
    %v8991 = vpack.c.bf16 %v8987, %v8983
    %s8992 = scalar_lea.vmem [#allocation17], 768
    %v8993 = vld [vmem:[%s8992] sm:$0xf]
    %v8994 = vld [vmem:[%s8992 + $0x4] sm:$0xf]
    %v8995 = vld [vmem:[%s8992 + $0x8] sm:$0xf]
    %v8996 = vld [vmem:[%s8992 + $0xc] sm:$0xf]
    %v8997 = vld [vmem:[%s8992 + $0x10] sm:$0xf]
    %v8998 = vld [vmem:[%s8992 + $0x14] sm:$0xf]
    %v8999 = vld [vmem:[%s8992 + $0x18] sm:$0xf]
    %v9000 = vld [vmem:[%s8992 + $0x1c] sm:$0xf]
    %v9001 = vld [vmem:[%s8992 + $0x20] sm:$0xf]
    %v9002 = vld [vmem:[%s8992 + $0x24] sm:$0xf]
    %v9003 = vld [vmem:[%s8992 + $0x28] sm:$0xf]
    %v9004 = vld [vmem:[%s8992 + $0x2c] sm:$0xf]
    %v9005 = vld [vmem:[%s8992 + $0x30] sm:$0xf]
    %v9006 = vld [vmem:[%s8992 + $0x34] sm:$0xf]
    %v9007 = vld [vmem:[%s8992 + $0x38] sm:$0xf]
    %v9008 = vld [vmem:[%s8992 + $0x3c] sm:$0xf]
    %v9009 = vld [vmem:[%s8992 + $0x40] sm:$0xf]
    %v9010 = vld [vmem:[%s8992 + $0x44] sm:$0xf]
    %v9011 = vld [vmem:[%s8992 + $0x48] sm:$0xf]
    %v9012 = vld [vmem:[%s8992 + $0x4c] sm:$0xf]
    %v9013 = vld [vmem:[%s8992 + $0x50] sm:$0xf]
    %v9014 = vld [vmem:[%s8992 + $0x54] sm:$0xf]
    %v9015 = vld [vmem:[%s8992 + $0x58] sm:$0xf]
    %v9016 = vld [vmem:[%s8992 + $0x5c] sm:$0xf]
    %v9017 = vld [vmem:[%s8992 + $0x60] sm:$0xf]
    %v9018 = vld [vmem:[%s8992 + $0x64] sm:$0xf]
    %v9019 = vld [vmem:[%s8992 + $0x68] sm:$0xf]
    %v9020 = vld [vmem:[%s8992 + $0x6c] sm:$0xf]
    %v9021 = vld [vmem:[%s8992 + $0x70] sm:$0xf]
    %v9022 = vld [vmem:[%s8992 + $0x74] sm:$0xf]
    %v9023 = vld [vmem:[%s8992 + $0x78] sm:$0xf]
    %v9024 = vld [vmem:[%s8992 + $0x7c] sm:$0xf]
    %v9025 = vld [vmem:[%s8992 + $0x80] sm:$0xf]
    %v9026 = vld [vmem:[%s8992 + $0x84] sm:$0xf]
    %v9027 = vld [vmem:[%s8992 + $0x88] sm:$0xf]
    %v9028 = vld [vmem:[%s8992 + $0x8c] sm:$0xf]
    %v9029 = vld [vmem:[%s8992 + $0x90] sm:$0xf]
    %v9030 = vld [vmem:[%s8992 + $0x94] sm:$0xf]
    %v9031 = vld [vmem:[%s8992 + $0x98] sm:$0xf]
    %v9032 = vld [vmem:[%s8992 + $0x9c] sm:$0xf]
    %v9033 = vld [vmem:[%s8992 + $0xa0] sm:$0xf]
    %v9034 = vld [vmem:[%s8992 + $0xa4] sm:$0xf]
    %v9035 = vld [vmem:[%s8992 + $0xa8] sm:$0xf]
    %v9036 = vld [vmem:[%s8992 + $0xac] sm:$0xf]
    %v9037 = vld [vmem:[%s8992 + $0xb0] sm:$0xf]
    %v9038 = vld [vmem:[%s8992 + $0xb4] sm:$0xf]
    %v9039 = vld [vmem:[%s8992 + $0xb8] sm:$0xf]
    %v9040 = vld [vmem:[%s8992 + $0xbc] sm:$0xf]
    %v9041 = vld [vmem:[%s8992 + $0xc0] sm:$0xf]
    %v9042 = vld [vmem:[%s8992 + $0xc4] sm:$0xf]
    %v9043 = vld [vmem:[%s8992 + $0xc8] sm:$0xf]
    %v9044 = vld [vmem:[%s8992 + $0xcc] sm:$0xf]
    %v9045 = vld [vmem:[%s8992 + $0xd0] sm:$0xf]
    %v9046 = vld [vmem:[%s8992 + $0xd4] sm:$0xf]
    %v9047 = vld [vmem:[%s8992 + $0xd8] sm:$0xf]
    %v9048 = vld [vmem:[%s8992 + $0xdc] sm:$0xf]
    %v9049 = vld [vmem:[%s8992 + $0xe0] sm:$0xf]
    %v9050 = vld [vmem:[%s8992 + $0xe4] sm:$0xf]
    %v9051 = vld [vmem:[%s8992 + $0xe8] sm:$0xf]
    %v9052 = vld [vmem:[%s8992 + $0xec] sm:$0xf]
    %v9053 = vld [vmem:[%s8992 + $0xf0] sm:$0xf]
    %v9054 = vld [vmem:[%s8992 + $0xf4] sm:$0xf]
    %v9055 = vld [vmem:[%s8992 + $0xf8] sm:$0xf]
    %v9056 = vld [vmem:[%s8992 + $0xfc] sm:$0xf]
    %s9057 = scalar_lea.vmem %s12, 3
    %v9058 = vld [vmem:[%s9057] sm:$0x1]
    %v9060 = vperm.slane %v9058, 0
    %v9126 = vunpack.c.l.b16 %v8993
    %v9127 = vunpack.c.l.b16 %v8994
    %v9128 = vunpack.c.l.b16 %v8995
    %v9129 = vunpack.c.l.b16 %v8996
    %v9130 = vunpack.c.l.b16 %v8997
    %v9131 = vunpack.c.l.b16 %v8998
    %v9132 = vunpack.c.l.b16 %v8999
    %v9133 = vunpack.c.l.b16 %v9000
    %v9134 = vunpack.c.l.b16 %v9001
    %v9135 = vunpack.c.l.b16 %v9002
    %v9136 = vunpack.c.l.b16 %v9003
    %v9137 = vunpack.c.l.b16 %v9004
    %v9138 = vunpack.c.l.b16 %v9005
    %v9139 = vunpack.c.l.b16 %v9006
    %v9140 = vunpack.c.l.b16 %v9007
    %v9141 = vunpack.c.l.b16 %v9008
    %v9142 = vunpack.c.l.b16 %v9009
    %v9143 = vunpack.c.l.b16 %v9010
    %v9144 = vunpack.c.l.b16 %v9011
    %v9145 = vunpack.c.l.b16 %v9012
    %v9146 = vunpack.c.l.b16 %v9013
    %v9147 = vunpack.c.l.b16 %v9014
    %v9148 = vunpack.c.l.b16 %v9015
    %v9149 = vunpack.c.l.b16 %v9016
    %v9150 = vunpack.c.l.b16 %v9017
    %v9151 = vunpack.c.l.b16 %v9018
    %v9152 = vunpack.c.l.b16 %v9019
    %v9153 = vunpack.c.l.b16 %v9020
    %v9154 = vunpack.c.l.b16 %v9021
    %v9155 = vunpack.c.l.b16 %v9022
    %v9156 = vunpack.c.l.b16 %v9023
    %v9157 = vunpack.c.l.b16 %v9024
    %v9158 = vunpack.c.l.b16 %v9025
    %v9159 = vunpack.c.l.b16 %v9026
    %v9160 = vunpack.c.l.b16 %v9027
    %v9161 = vunpack.c.l.b16 %v9028
    %v9162 = vunpack.c.l.b16 %v9029
    %v9163 = vunpack.c.l.b16 %v9030
    %v9164 = vunpack.c.l.b16 %v9031
    %v9165 = vunpack.c.l.b16 %v9032
    %v9166 = vunpack.c.l.b16 %v9033
    %v9167 = vunpack.c.l.b16 %v9034
    %v9168 = vunpack.c.l.b16 %v9035
    %v9169 = vunpack.c.l.b16 %v9036
    %v9170 = vunpack.c.l.b16 %v9037
    %v9171 = vunpack.c.l.b16 %v9038
    %v9172 = vunpack.c.l.b16 %v9039
    %v9173 = vunpack.c.l.b16 %v9040
    %v9174 = vunpack.c.l.b16 %v9041
    %v9175 = vunpack.c.l.b16 %v9042
    %v9176 = vunpack.c.l.b16 %v9043
    %v9177 = vunpack.c.l.b16 %v9044
    %v9178 = vunpack.c.l.b16 %v9045
    %v9179 = vunpack.c.l.b16 %v9046
    %v9180 = vunpack.c.l.b16 %v9047
    %v9181 = vunpack.c.l.b16 %v9048
    %v9182 = vunpack.c.l.b16 %v9049
    %v9183 = vunpack.c.l.b16 %v9050
    %v9184 = vunpack.c.l.b16 %v9051
    %v9185 = vunpack.c.l.b16 %v9052
    %v9186 = vunpack.c.l.b16 %v9053
    %v9187 = vunpack.c.l.b16 %v9054
    %v9188 = vunpack.c.l.b16 %v9055
    %v9189 = vunpack.c.l.b16 %v9056
    %v9190 = vpack.c.b16 %v9127, %v9126
    %v9191 = vpack.c.b16 %v9129, %v9128
    %v9192 = vpack.c.b16 %v9131, %v9130
    %v9193 = vpack.c.b16 %v9133, %v9132
    %v9194 = vpack.c.b16 %v9135, %v9134
    %v9195 = vpack.c.b16 %v9137, %v9136
    %v9196 = vpack.c.b16 %v9139, %v9138
    %v9197 = vpack.c.b16 %v9141, %v9140
    %v9198 = vpack.c.b16 %v9143, %v9142
    %v9199 = vpack.c.b16 %v9145, %v9144
    %v9200 = vpack.c.b16 %v9147, %v9146
    %v9201 = vpack.c.b16 %v9149, %v9148
    %v9202 = vpack.c.b16 %v9151, %v9150
    %v9203 = vpack.c.b16 %v9153, %v9152
    %v9204 = vpack.c.b16 %v9155, %v9154
    %v9205 = vpack.c.b16 %v9157, %v9156
    %v9206 = vpack.c.b16 %v9159, %v9158
    %v9207 = vpack.c.b16 %v9161, %v9160
    %v9208 = vpack.c.b16 %v9163, %v9162
    %v9209 = vpack.c.b16 %v9165, %v9164
    %v9210 = vpack.c.b16 %v9167, %v9166
    %v9211 = vpack.c.b16 %v9169, %v9168
    %v9212 = vpack.c.b16 %v9171, %v9170
    %v9213 = vpack.c.b16 %v9173, %v9172
    %v9214 = vpack.c.b16 %v9175, %v9174
    %v9215 = vpack.c.b16 %v9177, %v9176
    %v9216 = vpack.c.b16 %v9179, %v9178
    %v9217 = vpack.c.b16 %v9181, %v9180
    %v9218 = vpack.c.b16 %v9183, %v9182
    %v9219 = vpack.c.b16 %v9185, %v9184
    %v9220 = vpack.c.b16 %v9187, %v9186
    %v9221 = vpack.c.b16 %v9189, %v9188
    %9254 = vmatpush.bf16.msra.mxu0 %v9197
    %9255 = vmatpush.bf16.msra.mxu0 %v9196
    %9256 = vmatpush.bf16.msra.mxu0 %v9195
    %9257 = vmatpush.bf16.msra.mxu0 %v9194
    %9258 = vmatpush.bf16.msra.mxu0 %v9193
    %9259 = vmatpush.bf16.msra.mxu0 %v9192
    %9260 = vmatpush.bf16.msra.mxu0 %v9191
    %9261 = vmatpush.bf16.msra.mxu0 %v9190
    %9262 = vmatmul.bf16.gmra.mxu0 %v8988
    %v9263 = vpop.f32.mrf.mxu0
    %v9264 = vadd.f32 %v9060, %v9263
    %v9265 = vpop.f32.mrf.mxu0
    %v9266 = vadd.f32 %v9060, %v9265
    %9267 = vdwg.mxu0
    %9268 = vmatpush.bf16.msra.mxu0 %v9205
    %9269 = vmatpush.bf16.msra.mxu0 %v9204
    %9270 = vmatpush.bf16.msra.mxu0 %v9203
    %9271 = vmatpush.bf16.msra.mxu0 %v9202
    %9272 = vmatpush.bf16.msra.mxu0 %v9201
    %9273 = vmatpush.bf16.msra.mxu0 %v9200
    %9274 = vmatpush.bf16.msra.mxu0 %v9199
    %9275 = vmatpush.bf16.msra.mxu0 %v9198
    %9276 = vmatmul.bf16.gmra.mxu0 %v8989
    %v9277 = vpop.f32.mrf.mxu0
    %v9278 = vadd.f32 %v9264, %v9277
    %v9279 = vpop.f32.mrf.mxu0
    %v9280 = vadd.f32 %v9266, %v9279
    %9281 = vdwg.mxu0
    %9282 = vmatpush.bf16.msra.mxu0 %v9213
    %9283 = vmatpush.bf16.msra.mxu0 %v9212
    %9284 = vmatpush.bf16.msra.mxu0 %v9211
    %9285 = vmatpush.bf16.msra.mxu0 %v9210
    %9286 = vmatpush.bf16.msra.mxu0 %v9209
    %9287 = vmatpush.bf16.msra.mxu0 %v9208
    %9288 = vmatpush.bf16.msra.mxu0 %v9207
    %9289 = vmatpush.bf16.msra.mxu0 %v9206
    %9290 = vmatmul.bf16.gmra.mxu0 %v8990
    %v9291 = vpop.f32.mrf.mxu0
    %v9292 = vadd.f32 %v9278, %v9291
    %v9293 = vpop.f32.mrf.mxu0
    %v9294 = vadd.f32 %v9280, %v9293
    %9295 = vdwg.mxu0
    %9296 = vmatpush.bf16.msra.mxu0 %v9221
    %9297 = vmatpush.bf16.msra.mxu0 %v9220
    %9298 = vmatpush.bf16.msra.mxu0 %v9219
    %9299 = vmatpush.bf16.msra.mxu0 %v9218
    %9300 = vmatpush.bf16.msra.mxu0 %v9217
    %9301 = vmatpush.bf16.msra.mxu0 %v9216
    %9302 = vmatpush.bf16.msra.mxu0 %v9215
    %9303 = vmatpush.bf16.msra.mxu0 %v9214
    %9304 = vmatmul.bf16.gmra.mxu0 %v8991
    %v9305 = vpop.f32.mrf.mxu0
    %v9306 = vadd.f32 %v9292, %v9305
    %v9307 = vpop.f32.mrf.mxu0
    %v9308 = vadd.f32 %v9294, %v9307
    %9309 = vdwg.mxu0
    %v9310 = vadd.f32 %v8653, %v9306
    %v9311 = vadd.f32 %v8654, %v9308
    %s9312 = scalar_lea.vmem [#allocation18], 3
    %v9313 = vld [vmem:[%s9312] sm:$0x1]
    %s9314 = scalar_lea.vmem %s14, 3
    %v9315 = vld [vmem:[%s9314] sm:$0x1]
    %9316 = vadd.xlane.f32.xlu0 %v9310
    %v9317 = vpop.xlane.xlu0 %9316
    %9318 = vadd.xlane.f32.xlu0 %v9311
    %v9319 = vpop.xlane.xlu0 %9318
    %v9320 = vmul.f32 %v9317, %v1855
    %v9321 = vmul.f32 %v9319, %v1855
    %v9322 = vsub.f32 %v9310, %v9320
    %v9323 = vsub.f32 %v9311, %v9321
    %v9324 = vmul.f32 %v9322, %v9322
    %v9325 = vmul.f32 %v9323, %v9323
    %9326 = vadd.xlane.f32.xlu0 %v9324
    %v9327 = vpop.xlane.xlu0 %9326
    %9328 = vadd.xlane.f32.xlu0 %v9325
    %v9329 = vpop.xlane.xlu0 %9328
    %v9330 = vmul.f32 %v9327, %v1855
    %v9331 = vmul.f32 %v9329, %v1855
    %v9332 = vadd.f32 %v9330, 1e-12
    %v9333 = vadd.f32 %v9331, 1e-12
    %v9334 = vrsqrt.pop %v9332
    %v9335 = vmul.f32 %v9334, %v9332
    %v9336 = vmul.f32 %v9335, %v9334
    %v9337 = vmul.f32 0.5, %v9336
    %v9338 = vsub.f32 1.5, %v9337
    %v9339 = vmul.f32 %v9334, %v9338
    %vm9340 = vweird.f32 %v9332
    %vm9341 = vweird.f32 %v9334
    %vm9342 = vmor %vm9340, %vm9341
    %v9343 = vsel %vm9342, %v9334, %v9339
    %v9344 = vrsqrt.pop %v9333
    %v9345 = vmul.f32 %v9344, %v9333
    %v9346 = vmul.f32 %v9345, %v9344
    %v9347 = vmul.f32 0.5, %v9346
    %v9348 = vsub.f32 1.5, %v9347
    %v9349 = vmul.f32 %v9344, %v9348
    %vm9350 = vweird.f32 %v9333
    %vm9351 = vweird.f32 %v9344
    %vm9352 = vmor %vm9350, %vm9351
    %v9353 = vsel %vm9352, %v9344, %v9349
    %v9354 = vmul.f32 %v9322, %v9343
    %v9355 = vmul.f32 %v9323, %v9353
    %v9357 = vperm.slane %v9313, 0
    %v9359 = vmul.f32 %v9354, %v9357
    %v9360 = vmul.f32 %v9355, %v9357
    %v9362 = vperm.slane %v9315, 0
    %v9364 = vadd.f32 %v9359, %v9362
    %v9365 = vadd.f32 %v9360, %v9362
    %v9366 = vld [vmem:[%s15] sm:$0x1]
    %v9368 = vperm.slane %v9366, 0
    %v9370 = vmul.f32 %v9364, %v9368
    %v9371 = vmul.f32 %v9365, %v9368
    %9372 = vadd.xlane.f32.xlu0 %v9370
    %v9373 = vpop.xlane.xlu0 %9372
    %9374 = vadd.xlane.f32.xlu0 %v9371
    %v9375 = vpop.xlane.xlu0 %9374
    %v9376 = vrot.slane %v9373, 4
    %v9377 = vmax.f32 %v9373, %v9376
    %v9378 = vrot.slane %v9377, 2
    %v9379 = vmax.f32 %v9377, %v9378
    %v9380 = vrot.slane %v9379, 1
    %v9381 = vmax.f32 %v9379, %v9380
    %v9382 = vrot.slane %v9375, 4
    %v9383 = vmax.f32 %v9375, %v9382
    %v9384 = vrot.slane %v9383, 2
    %v9385 = vmax.f32 %v9383, %v9384
    %v9386 = vrot.slane %v9385, 1
    %v9387 = vmax.f32 %v9385, %v9386
    %v9388 = vsub.f32 %v9373, %v9381
    %v9389 = vsub.f32 %v9375, %v9387
    %v9390 = vmul.f32 %v9388, 1.442695
    %v9391 = vpow.pop %v9390
    %v9392 = vmul.f32 %v9389, 1.442695
    %v9393 = vpow.pop %v9392
    %v9394 = vrot.slane %v9391, 4
    %v9395 = vadd.f32 %v9391, %v9394
    %v9396 = vrot.slane %v9395, 2
    %v9397 = vadd.f32 %v9395, %v9396
    %v9398 = vrot.slane %v9397, 1
    %v9399 = vadd.f32 %v9397, %v9398
    %v9400 = vrot.slane %v9393, 4
    %v9401 = vadd.f32 %v9393, %v9400
    %v9402 = vrot.slane %v9401, 2
    %v9403 = vadd.f32 %v9401, %v9402
    %v9404 = vrot.slane %v9403, 1
    %v9405 = vadd.f32 %v9403, %v9404
    %v9406 = vrcp.pop %v9399
    %v9407 = vmul.f32 %v9399, %v9406
    %v9408 = vsub.f32 1.0, %v9407
    %v9409 = vmul.f32 %v9406, %v9408
    %v9410 = vadd.f32 %v9406, %v9409
    %vm9411 = vweird.f32 %v9399
    %vm9412 = vweird.f32 %v9406
    %vm9413 = vmor %vm9411, %vm9412
    %v9414 = vsel %vm9413, %v9406, %v9410
    %v9415 = vand.u32 2147483647, %v9399
    %vm9416 = vcmp.eq.f32.partialorder %v9415, 8.507059e+37
    %v9417 = vand.u32 %v9399, 2147483648
    %v9418 = vor.u32 1.1754944e-38, %v9417
    %v9419 = vsel %vm9416, %v9418, %v9414
    %v9420 = vmul.f32 %v9391, %v9419
    %v9421 = vrcp.pop %v9405
    %v9422 = vmul.f32 %v9405, %v9421
    %v9423 = vsub.f32 1.0, %v9422
    %v9424 = vmul.f32 %v9421, %v9423
    %v9425 = vadd.f32 %v9421, %v9424
    %vm9426 = vweird.f32 %v9405
    %vm9427 = vweird.f32 %v9421
    %vm9428 = vmor %vm9426, %vm9427
    %v9429 = vsel %vm9428, %v9421, %v9425
    %v9430 = vand.u32 2147483647, %v9405
    %vm9431 = vcmp.eq.f32.partialorder %v9430, 8.507059e+37
    %v9432 = vand.u32 %v9405, 2147483648
    %v9433 = vor.u32 1.1754944e-38, %v9432
    %v9434 = vsel %vm9431, %v9433, %v9429
    %v9435 = vmul.f32 %v9393, %v9434
    %v9436 = vmul.f32 %v9364, %v9420
    %v9437 = vmul.f32 %v9365, %v9435
    %v9438 = vrot.slane %v9436, 4
    %v9439 = vadd.f32 %v9436, %v9438
    %v9440 = vrot.slane %v9439, 2
    %v9441 = vadd.f32 %v9439, %v9440
    %v9442 = vrot.slane %v9441, 1
    %v9443 = vadd.f32 %v9441, %v9442
    %v9444 = vrot.slane %v9437, 4
    %v9445 = vadd.f32 %v9437, %v9444
    %v9446 = vrot.slane %v9445, 2
    %v9447 = vadd.f32 %v9445, %v9446
    %v9448 = vrot.slane %v9447, 1
    %v9449 = vadd.f32 %v9447, %v9448
    %v9450 = vpack.c.bf16 %v9443, %v9443
    %v9451 = vpack.c.bf16 %v9449, %v9449
    %v9452 = vld [vmem:[%s16] sm:$0xf]
    %v9453 = vld [vmem:[%s16 + $0x4] sm:$0xf]
    %v9454 = vld [vmem:[%s16 + $0x8] sm:$0xf]
    %v9455 = vld [vmem:[%s16 + $0xc] sm:$0xf]
    %v9456 = vld [vmem:[%s16 + $0x10] sm:$0xf]
    %v9457 = vld [vmem:[%s16 + $0x14] sm:$0xf]
    %v9458 = vld [vmem:[%s16 + $0x18] sm:$0xf]
    %v9459 = vld [vmem:[%s16 + $0x1c] sm:$0xf]
    %v9460 = vld [vmem:[%s16 + $0x20] sm:$0xf]
    %v9461 = vld [vmem:[%s16 + $0x24] sm:$0xf]
    %v9462 = vld [vmem:[%s16 + $0x28] sm:$0xf]
    %v9463 = vld [vmem:[%s16 + $0x2c] sm:$0xf]
    %v9464 = vld [vmem:[%s16 + $0x30] sm:$0xf]
    %v9465 = vld [vmem:[%s16 + $0x34] sm:$0xf]
    %v9466 = vld [vmem:[%s16 + $0x38] sm:$0xf]
    %v9467 = vld [vmem:[%s16 + $0x3c] sm:$0xf]
    %v9468 = vld [vmem:[%s17] sm:$0x1]
    %v9470 = vperm.slane %v9468, 0
    %v9474 = vunpack.c.l.b16 %v9450
    %v9475 = vunpack.c.l.b16 %v9451
    %vm9476 = vcmask 1041409
    %v9477 = vsel %vm9476, %v9475, %v9474
    %v9478 = vpack.c.b16 %v9477, %v9477
    %v9496 = vunpack.c.l.b16 %v9452
    %v9497 = vunpack.c.l.b16 %v9453
    %v9498 = vunpack.c.l.b16 %v9454
    %v9499 = vunpack.c.l.b16 %v9455
    %v9500 = vunpack.c.l.b16 %v9456
    %v9501 = vunpack.c.l.b16 %v9457
    %v9502 = vunpack.c.l.b16 %v9458
    %v9503 = vunpack.c.l.b16 %v9459
    %v9504 = vunpack.c.l.b16 %v9460
    %v9505 = vunpack.c.l.b16 %v9461
    %v9506 = vunpack.c.l.b16 %v9462
    %v9507 = vunpack.c.l.b16 %v9463
    %v9508 = vunpack.c.l.b16 %v9464
    %v9509 = vunpack.c.l.b16 %v9465
    %v9510 = vunpack.c.l.b16 %v9466
    %v9511 = vunpack.c.l.b16 %v9467
    %v9512 = vpack.c.b16 %v9497, %v9496
    %v9513 = vpack.c.b16 %v9499, %v9498
    %v9514 = vpack.c.b16 %v9501, %v9500
    %v9515 = vpack.c.b16 %v9503, %v9502
    %v9516 = vpack.c.b16 %v9505, %v9504
    %v9517 = vpack.c.b16 %v9507, %v9506
    %v9518 = vpack.c.b16 %v9509, %v9508
    %v9519 = vpack.c.b16 %v9511, %v9510
    %9528 = vmatpush.bf16.msra.mxu0 %v9519
    %9529 = vmatpush.bf16.msra.mxu0 %v9518
    %9530 = vmatpush.bf16.msra.mxu0 %v9517
    %9531 = vmatpush.bf16.msra.mxu0 %v9516
    %9532 = vmatpush.bf16.msra.mxu0 %v9515
    %9533 = vmatpush.bf16.msra.mxu0 %v9514
    %9534 = vmatpush.bf16.msra.mxu0 %v9513
    %9535 = vmatpush.bf16.msra.mxu0 %v9512
    %9536 = vmatmul.bf16.gmra.mxu0 %v9478
    %v9537 = vpop.f32.mrf.mxu0
    %v9538 = vadd.f32 %v9470, %v9537
    %v9539 = vpop.f32.mrf.mxu0
    %9540 = vdwg.mxu0
    %s9541 = sld [smem:[#allocation20]]
    %vm9542 = vcmp.ge.f32.partialorder %v9538, 0.0
    %v9543 = vstv %s9541
    %v9544 = vmul.f32 %v9538, %v9543
    %v9545 = vsel %vm9542, %v9538, %v9544
    %v9546 = vld [vmem:[%s18] sm:$0x1]
    %v9548 = vperm.slane %v9546, 0
    %v9550 = vmul.f32 %v9545, %v9548
    %vm9551 = vcmask 517120
    %v9552 = vsel %vm9551, %v9550, 0.0
    %9553 = vadd.xlane.f32.xlu0 %v9552
    %v9554 = vpop.xlane.xlu0 %9553
    %s9555 = sld [smem:[#allocation20 + $0x1]]
    %v9556 = vstv %s9555
    %v9557 = vadd.f32 %v9554, %v9556
    %9558 = vst [vmem:[#allocation21] sm:$0x3] %v9557
    // Predicated region
    $region126: #{tpu_custom_call.1} parent=1 // pred_check
      _
    $region127: #{tpu_custom_call.1} parent=1 // pred_check_branch
      %9560 = sbr.rel (0) target = $region129
    $region128: #{tpu_custom_call.1} parent=1 // pred_region
      %9562 = vsyncadd [#allocation4], 0
      %s9564 = sshll.u32 [#allocation21], 4
      %s9565 = int_to_ptr.vmem [resolvable:$true] %s9564
      %s9566 = sshll.u32 %s20, 4
      %s9567 = int_to_ptr.hbm [resolvable:$true] %s9566
      %9569 = dma.vmem_to_hbm [thread:$0]  %s9565, 32, %s9567, [#allocation4]
    $region129: #{tpu_custom_call.1} parent=1 // pred_fallthru
      _
    // Predicated region
    $region130: #{tpu_custom_call.1} parent=1 // pred_check
      _
    $region131: #{tpu_custom_call.1} parent=1 // pred_check_branch
      %9571 = sbr.rel (0) target = $region133
    $region132: #{tpu_custom_call.1} parent=1 // pred_region
      %9573 = dma.done [#allocation4], 32
    $region133: #{tpu_custom_call.1} parent=1 // pred_fallthru
      _
    %9574 = vsyncpa [#allocation3], 1
    %9575 = vsyncpa [#allocation7], 1
    %9576 = vsyncpa [#allocation10], 1
    %9577 = vsyncpa [#allocation13], 1
    %9578 = vsyncpa [#allocation16], 1
    %9579 = vsyncpa [#allocation19], 1
    %9580 = vsyncpa [#allocation4], 1
    %9581 = vsyncpa [#allocation5], 1

</llo_original>
